<compile_context>
chip_gen: v5e
topology: v5e:2x2
jax: 0.10.0
libtpu: 0.0.40
codegen_flags: <defaults>
</compile_context>

<pallas_src>
import functools

import numpy as np
import jax
import jax.numpy as jnp
from jax.experimental import pallas as pl
from jax.experimental.pallas import tpu as pltpu

_VMEM_LIMIT = 32 * 1024 * 1024  # explicit scoped-VMEM budget, safe on v5e/v6e/v7x


# ---------------------------------------------------------------------------
# One-time parameter / constant preparation (outside the forward pass)
# ---------------------------------------------------------------------------
def adaptive_pool_matrix(H, W, out_h=4, out_w=4):
    """Pt[h*W+w, oh*out_w+ow] = 1/count if (h, w) lies in adaptive cell (oh, ow)."""
    P = np.zeros((H * W, out_h * out_w), dtype=np.float32)
    for oh in range(out_h):
        hs = (oh * H) // out_h
        he = -(-((oh + 1) * H) // out_h)          # ceil
        for ow in range(out_w):
            ws = (ow * W) // out_w
            we = -(-((ow + 1) * W) // out_w)      # ceil
            cnt = float((he - hs) * (we - ws))
            for h in range(hs, he):
                for w in range(ws, we):
                    P[h * W + w, oh * out_w + ow] = 1.0 / cnt
    return jnp.asarray(P)


def prepare_params(params, H, W, *, weight_dtype=jnp.bfloat16):
    """Cache all weight transforms so the forward pass does no per-call prep."""
    conv_w = jnp.asarray(params["conv_w"], jnp.float32)          # (128, C, 1, 1)
    w1 = jnp.asarray(params["w1"], jnp.float32)                  # (hidden, 2048)
    b1 = jnp.asarray(params["b1"], jnp.float32)                  # (hidden,)
    w2 = jnp.asarray(params["w2"], jnp.float32)                  # (classes, hidden)
    b2 = jnp.asarray(params["b2"], jnp.float32)                  # (classes,)

    C = conv_w.shape[1]
    hidden, in_features = w1.shape
    num_classes = w2.shape[0]
    assert in_features == 16 * 128, "Inception_Aux expects 2048 = 128 * 4 * 4 features"

    # Kernel 1 emits features in s-major order (feature = s*128 + k); permute
    # w1's input dim from PyTorch's flatten order (k*16 + s) to match, so no
    # activation re-transpose is needed between the two kernels.
    w1t = w1.T.reshape(128, 16, hidden).transpose(1, 0, 2).reshape(in_features, hidden)

    padded_classes = ((num_classes + 127) // 128) * 128          # lane-dense output
    w2t = jnp.zeros((hidden, padded_classes), jnp.float32).at[:, :num_classes].set(w2.T)
    b2p = jnp.zeros((1, padded_classes), jnp.float32).at[:, :num_classes].set(b2[None, :])

    return dict(
        pt=adaptive_pool_matrix(H, W),                           # (HW, 16)       f32
        wc=conv_w.reshape(128, C).T,                             # (C, 128)       f32
        w1t=w1t.astype(weight_dtype),                            # (2048, hidden) bf16
        b1=b1.reshape(1, hidden),                                # (1, hidden)    f32
        w2t=w2t.astype(weight_dtype),                            # (hidden, pcls) bf16
        b2=b2p,                                                  # (1, pcls)      f32
        C=C, hidden=hidden, in_features=in_features,
        num_classes=num_classes, padded_classes=padded_classes,
        weight_dtype=weight_dtype,
    )


# ---------------------------------------------------------------------------
# Tiling heuristics
# ---------------------------------------------------------------------------
def _pick_batch_block(N, C, HW, budget_bytes=8 << 20):
    """Batch elements per kernel-1 grid step (amortize per-step overhead)."""
    per_elem = C * HW * 4                          # f32 x block; x2 for double-buffer
    for cand in (16, 8, 4, 2):
        if N % cand == 0 and 2 * cand * per_elem <= budget_bytes and (cand * C) % 8 == 0:
            return cand
    if C % 8 == 0 or N == 1:
        return 1
    return N                                       # full-array block is always legal


def _pick_row_tile(N):
    """Kernel-2 batch-row tile; >=2 tiles when possible so v7x's 2nd core helps."""
    if N % 8 != 0 or N < 16:
        return N
    cap = min(N // 2, 256)
    cap -= cap % 8
    for t in range(cap, 7, -8):
        if N % t == 0:
            return t
    return N


def _pick_hidden_tile(hidden, in_features, padded_classes, weight_bytes,
                      budget_bytes=16 << 20):
    """Largest hidden tile whose double-buffered w1/w2 blocks fit the budget."""
    for tile in (hidden, 512, 256, 128):
        if hidden % tile != 0:
            continue
        if 2 * tile * (in_features + padded_classes) * weight_bytes <= budget_bytes:
            return tile
    return hidden


# ---------------------------------------------------------------------------
# Kernel 1: adaptive avg-pool (matmul w/ pooling matrix) + 1x1 conv + ReLU
#           B_BLK batch elements per grid step, lane-dense (B_BLK*16, 128) store
# ---------------------------------------------------------------------------
def _pool_conv_relu_kernel(x_ref, pt_ref, wc_ref, y_ref, *, bblk, C):
    # x_ref : (bblk*C, HW)    bblk batch elems, channel-major (plain reshape of x)
    # pt_ref: (HW, 16)        adaptive-avg-pool matrix
    # wc_ref: (C, 128)        1x1 conv weight, transposed (no bias)
    # y_ref : (bblk*16, 128)  relu(conv(pool(x))), s-major rows -- lane-dense store
    pooled = jnp.dot(x_ref[...], pt_ref[...],
                     preferred_element_type=jnp.float32)              # (bblk*C, 16)
    # transpose each tiny per-batch (C, 16) tile -> (16, C)  (XLU slot, cheap)
    pooled_t = jnp.concatenate(
        [pooled[b * C:(b + 1) * C, :].T for b in range(bblk)], axis=0)  # (bblk*16, C)
    y = jnp.dot(pooled_t, wc_ref[...],
                preferred_element_type=jnp.float32)                   # (bblk*16, 128)
    y_ref[...] = jnp.maximum(y, 0.0)


# ---------------------------------------------------------------------------
# Kernel 2: linear_1 + ReLU + (dropout: eval no-op) + linear_2
#   grid = (row_tiles [parallel], hidden_tiles [arbitrary/reduction])
#   out_ref is resident across the reduction axis; init with b2, accumulate.
# ---------------------------------------------------------------------------
def _mlp_head_kernel(feats_ref, w1t_ref, b1_ref, w2t_ref, b2_ref, out_ref,
                     *, compute_dtype):
    j = pl.program_id(1)

    @pl.when(j == 0)
    def _():
        out_ref[...] = jnp.broadcast_to(b2_ref[...], out_ref.shape)

    h = jnp.dot(feats_ref[...].astype(compute_dtype), w1t_ref[...],
                preferred_element_type=jnp.float32)                   # (rows, h_tile)
    h = jnp.maximum(h + b1_ref[...], 0.0)
    out_ref[...] += jnp.dot(h.astype(compute_dtype), w2t_ref[...],
                            preferred_element_type=jnp.float32)       # (rows, pcls)


# ---------------------------------------------------------------------------
# Forward wrapper
# ---------------------------------------------------------------------------
def inception_aux_forward(x, prep):
    N, C, H, W = x.shape
    assert C == prep["C"]
    HW = H * W
    hidden = prep["hidden"]
    in_features = prep["in_features"]
    padded_classes = prep["padded_classes"]
    weight_dtype = prep["weight_dtype"]
    weight_bytes = np.dtype(weight_dtype).itemsize

    # ---- kernel 1: pool + 1x1 conv + ReLU ----------------------------------
    x2d = x.reshape(N * C, HW)                    # pure reshape view, no transpose
    bblk = _pick_batch_block(N, C, HW)

    feats2d = pl.pallas_call(
        functools.partial(_pool_conv_relu_kernel, bblk=bblk, C=C),
        out_shape=jax.ShapeDtypeStruct((N * 16, 128), jnp.float32),
        grid_spec=pltpu.PrefetchScalarGridSpec(
            num_scalar_prefetch=0,
            grid=(N // bblk,),
            in_specs=[
                pl.BlockSpec((bblk * C, HW), lambda n: (n, 0)),
                pl.BlockSpec((HW, 16), lambda n: (0, 0)),
                pl.BlockSpec((C, 128), lambda n: (0, 0)),
            ],
            out_specs=pl.BlockSpec((bblk * 16, 128), lambda n: (n, 0)),
        ),
        compiler_params=pltpu.CompilerParams(
            dimension_semantics=("parallel",),
            vmem_limit_bytes=_VMEM_LIMIT),
    )(x2d, prep["pt"], prep["wc"])

    # s-major feature order; w1t was permuted offline -> bitcast reshape only.
    feats = feats2d.reshape(N, in_features)

    # ---- kernel 2: MLP head -------------------------------------------------
    row_tile = _pick_row_tile(N)
    hidden_tile = _pick_hidden_tile(hidden, in_features, padded_classes, weight_bytes)
    n_row_tiles = N // row_tile
    n_hidden_tiles = hidden // hidden_tile

    out_pad = pl.pallas_call(
        functools.partial(_mlp_head_kernel, compute_dtype=weight_dtype),
        out_shape=jax.ShapeDtypeStruct((N, padded_classes), jnp.float32),
        grid_spec=pltpu.PrefetchScalarGridSpec(
            num_scalar_prefetch=0,
            grid=(n_row_tiles, n_hidden_tiles),
            in_specs=[
                pl.BlockSpec((row_tile, in_features), lambda i, j: (i, 0)),
                pl.BlockSpec((in_features, hidden_tile), lambda i, j: (0, j)),
                pl.BlockSpec((1, hidden_tile), lambda i, j: (0, j)),
                pl.BlockSpec((hidden_tile, padded_classes), lambda i, j: (j, 0)),
                pl.BlockSpec((1, padded_classes), lambda i, j: (0, 0)),
            ],
            out_specs=pl.BlockSpec((row_tile, padded_classes), lambda i, j: (i, 0)),
        ),
        compiler_params=pltpu.CompilerParams(
            dimension_semantics=("parallel", "arbitrary"),
            vmem_limit_bytes=_VMEM_LIMIT),
    )(feats, prep["w1t"], prep["b1"], prep["w2t"], prep["b2"])

    return out_pad[:, :prep["num_classes"]]


# ---------------------------------------------------------------------------
# Pure-JAX reference (mirrors the PyTorch eval-mode forward)
#   linear_weight_dtype lets the check account for the kernel's bf16 weight
#   streaming (weights rounded to bf16, math in f32 HIGHEST).
#   NOTE: reshape+mean pooling equals AdaptiveAvgPool2d only when H, W % 4 == 0;
#   the kernel's pooling matrix handles the general case.
# ---------------------------------------------------------------------------
def reference_forward(x, params, *, linear_weight_dtype=jnp.float32):
    N, C, H, W = x.shape
    hp = jax.lax.Precision.HIGHEST
    pooled = x.reshape(N, C, 4, H // 4, 4, W // 4).mean(axis=(3, 5))     # (N, C, 4, 4)
    y = jax.nn.relu(jnp.einsum("kc,nchw->nkhw",
                               params["conv_w"].reshape(128, C), pooled, precision=hp))
    f = y.reshape(N, -1)                                                 # (N, 2048)
    w1 = params["w1"].astype(linear_weight_dtype).astype(jnp.float32)
    w2 = params["w2"].astype(linear_weight_dtype).astype(jnp.float32)
    h = jax.nn.relu(jnp.dot(f, w1.T, precision=hp) + params["b1"])
    return jnp.dot(h, w2.T, precision=hp) + params["b2"]


# ---------------------------------------------------------------------------
if __name__ == "__main__":
    N, C, H, W = 2, 16, 16, 16        # small shapes; pool->4x4, conv->128 => 2048 feats
    num_classes = 10

    key = jax.random.PRNGKey(0)
    k = jax.random.split(key, 6)
    params = {
        "conv_w": jax.random.normal(k[0], (128, C, 1, 1), jnp.float32) * 0.05,
        "w1": jax.random.normal(k[1], (1024, 2048), jnp.float32) * 0.02,
        "b1": jax.random.normal(k[2], (1024,), jnp.float32) * 0.01,
        "w2": jax.random.normal(k[3], (num_classes, 1024), jnp.float32) * 0.02,
        "b2": jax.random.normal(k[4], (num_classes,), jnp.float32) * 0.01,
    }
    x = jax.random.normal(k[5], (N, C, H, W), jnp.float32)

    prep = prepare_params(params, H, W)                 # one-time weight transforms
    forward = jax.jit(functools.partial(inception_aux_forward, prep=prep))

    out = jax.block_until_ready(forward(x))

    ref = reference_forward(x, params, linear_weight_dtype=jnp.bfloat16)
    assert out.shape == (N, num_classes), out.shape
    max_err = np.max(np.abs(np.asarray(out) - np.asarray(ref)))
    assert np.allclose(np.asarray(out), np.asarray(ref), rtol=5e-3, atol=5e-3), max_err
    print("KERNEL_OK")
</pallas_src>

<mosaic_0001>
module attributes {stable_mosaic.version = 11 : i64} {
  func.func @_pool_conv_relu_kernel(%arg0: i32, %arg1: memref<32x256xf32, #tpu.memory_space<vmem>>, %arg2: memref<256x16xf32, #tpu.memory_space<vmem>>, %arg3: memref<16x128xf32, #tpu.memory_space<vmem>>, %arg4: memref<32x128xf32, #tpu.memory_space<vmem>>) attributes {dimension_semantics = [#tpu.dimension_semantics<parallel>], iteration_bounds = array<i64: 1>, scalar_prefetch = 0 : i64, scratch_operands = 0 : i64, tpu.core_type = #tpu.core_type<tc>, window_params = [{transform_indices = @transform_0, window_bounds = array<i64: 32, 256>}, {pipeline_mode = #tpu.pipeline_mode<synchronous>, transform_indices = @transform_1, window_bounds = array<i64: 256, 16>}, {pipeline_mode = #tpu.pipeline_mode<synchronous>, transform_indices = @transform_2, window_bounds = array<i64: 16, 128>}, {transform_indices = @transform_3, window_bounds = array<i64: 32, 128>}]} {
    %c0 = arith.constant 0 : index
    %c0_0 = arith.constant 0 : index
    %0 = vector.load %arg1[%c0, %c0_0] : memref<32x256xf32, #tpu.memory_space<vmem>>, vector<32x256xf32>
    %c0_1 = arith.constant 0 : index
    %c0_2 = arith.constant 0 : index
    %1 = vector.load %arg2[%c0_1, %c0_2] : memref<256x16xf32, #tpu.memory_space<vmem>>, vector<256x16xf32>
    %cst = arith.constant dense<0.000000e+00> : vector<32x16xf32>
    %2 = tpu.matmul %0, %1, %cst {dimension_numbers = #tpu.dot_dimension_numbers<[1], [0], [0], [1], [0, 0, 1, 1], [], []>} : vector<32x256xf32>, vector<256x16xf32>, vector<32x16xf32> -> vector<32x16xf32>
    %3 = vector.extract_strided_slice %2 {offsets = [0, 0], sizes = [16, 16], strides = [1, 1]} : vector<32x16xf32> to vector<16x16xf32>
    %4 = tpu.transpose %3, [1, 0] : vector<16x16xf32> -> vector<16x16xf32>
    %5 = vector.extract_strided_slice %2 {offsets = [16, 0], sizes = [16, 16], strides = [1, 1]} : vector<32x16xf32> to vector<16x16xf32>
    %6 = tpu.transpose %5, [1, 0] : vector<16x16xf32> -> vector<16x16xf32>
    %7 = tpu.concatenate %4, %6 in 0 : vector<16x16xf32>, vector<16x16xf32> -> vector<32x16xf32>
    %c0_3 = arith.constant 0 : index
    %c0_4 = arith.constant 0 : index
    %8 = vector.load %arg3[%c0_3, %c0_4] : memref<16x128xf32, #tpu.memory_space<vmem>>, vector<16x128xf32>
    %cst_5 = arith.constant dense<0.000000e+00> : vector<32x128xf32>
    %9 = tpu.matmul %7, %8, %cst_5 {dimension_numbers = #tpu.dot_dimension_numbers<[1], [0], [0], [1], [0, 0, 1, 1], [], []>} : vector<32x16xf32>, vector<16x128xf32>, vector<32x128xf32> -> vector<32x128xf32>
    %cst_6 = arith.constant 0.000000e+00 : f32
    %10 = vector.broadcast %cst_6 : f32 to vector<32x128xf32>
    %11 = arith.maximumf %9, %10 : vector<32x128xf32>
    %c0_7 = arith.constant 0 : index
    %c0_8 = arith.constant 0 : index
    %12 = vector.load %arg4[%c0_7, %c0_8] : memref<32x128xf32, #tpu.memory_space<vmem>>, vector<32x128xf32>
    tpu.vector_store %arg4[%c0_7, %c0_8], %11 {strides = array<i32>} : memref<32x128xf32, #tpu.memory_space<vmem>>, vector<32x128xf32>,
    return
  }
  func.func @transform_0(%arg0: i32) -> (i32, i32) {
    %c0_i32 = arith.constant 0 : i32
    %c0_i32_0 = arith.constant 0 : i32
    return %arg0, %c0_i32 : i32, i32
  }
  func.func @transform_1(%arg0: i32) -> (i32, i32) {
    %c0_i32 = arith.constant 0 : i32
    %c0_i32_0 = arith.constant 0 : i32
    %c0_i32_1 = arith.constant 0 : i32
    return %c0_i32, %c0_i32_0 : i32, i32
  }
  func.func @transform_2(%arg0: i32) -> (i32, i32) {
    %c0_i32 = arith.constant 0 : i32
    %c0_i32_0 = arith.constant 0 : i32
    %c0_i32_1 = arith.constant 0 : i32
    return %c0_i32, %c0_i32_0 : i32, i32
  }
  func.func @transform_3(%arg0: i32) -> (i32, i32) {
    %c0_i32 = arith.constant 0 : i32
    %c0_i32_0 = arith.constant 0 : i32
    return %arg0, %c0_i32 : i32, i32
  }
}

module attributes {stable_mosaic.version = 11 : i64} {
  func.func @_mlp_head_kernel(%arg0: i32, %arg1: i32, %arg2: memref<2x2048xf32, #tpu.memory_space<vmem>>, %arg3: memref<2048x1024xbf16, #tpu.memory_space<vmem>>, %arg4: memref<1x1024xf32, #tpu.memory_space<vmem>>, %arg5: memref<1024x128xbf16, #tpu.memory_space<vmem>>, %arg6: memref<1x128xf32, #tpu.memory_space<vmem>>, %arg7: memref<2x128xf32, #tpu.memory_space<vmem>>) attributes {dimension_semantics = [#tpu.dimension_semantics<parallel>, #tpu.dimension_semantics<arbitrary>], iteration_bounds = array<i64: 1, 1>, scalar_prefetch = 0 : i64, scratch_operands = 0 : i64, tpu.core_type = #tpu.core_type<tc>, window_params = [{transform_indices = @transform_0, window_bounds = array<i64: 2, 2048>}, {transform_indices = @transform_1, window_bounds = array<i64: 2048, 1024>}, {transform_indices = @transform_2, window_bounds = array<i64: 1, 1024>}, {transform_indices = @transform_3, window_bounds = array<i64: 1024, 128>}, {pipeline_mode = #tpu.pipeline_mode<synchronous>, transform_indices = @transform_4, window_bounds = array<i64: 1, 128>}, {transform_indices = @transform_5, window_bounds = array<i64: 2, 128>}]} {
    %c0_i32 = arith.constant 0 : i32
    %0 = arith.cmpi eq, %arg1, %c0_i32 : i32
    %1 = arith.extui %0 : i1 to i32
    %c0_i32_0 = arith.constant 0 : i32
    %2 = arith.cmpi ne, %1, %c0_i32_0 : i32
    scf.if %2 {
      %c0_14 = arith.constant 0 : index
      %c0_15 = arith.constant 0 : index
      %18 = vector.load %arg6[%c0_14, %c0_15] : memref<1x128xf32, #tpu.memory_space<vmem>>, vector<1x128xf32>
      %19 = vector.shape_cast %18 : vector<1x128xf32> to vector<1x128xf32>
      %20 = vector.broadcast %19 : vector<1x128xf32> to vector<2x128xf32>
      %c0_16 = arith.constant 0 : index
      %c0_17 = arith.constant 0 : index
      %21 = vector.load %arg7[%c0_16, %c0_17] : memref<2x128xf32, #tpu.memory_space<vmem>>, vector<2x128xf32>
      tpu.vector_store %arg7[%c0_16, %c0_17], %20 {strides = array<i32>} : memref<2x128xf32, #tpu.memory_space<vmem>>, vector<2x128xf32>,
    } else {
    }
    %c0 = arith.constant 0 : index
    %c0_1 = arith.constant 0 : index
    %3 = vector.load %arg2[%c0, %c0_1] : memref<2x2048xf32, #tpu.memory_space<vmem>>, vector<2x2048xf32>
    %4 = arith.truncf %3 : vector<2x2048xf32> to vector<2x2048xbf16>
    %c0_2 = arith.constant 0 : index
    %c0_3 = arith.constant 0 : index
    %5 = vector.load %arg3[%c0_2, %c0_3] : memref<2048x1024xbf16, #tpu.memory_space<vmem>>, vector<2048x1024xbf16>
    %cst = arith.constant dense<0.000000e+00> : vector<2x1024xf32>
    %6 = tpu.matmul %4, %5, %cst {dimension_numbers = #tpu.dot_dimension_numbers<[1], [0], [0], [1], [0, 0, 1, 1], [], []>} : vector<2x2048xbf16>, vector<2048x1024xbf16>, vector<2x1024xf32> -> vector<2x1024xf32>
    %c0_4 = arith.constant 0 : index
    %c0_5 = arith.constant 0 : index
    %7 = vector.load %arg4[%c0_4, %c0_5] : memref<1x1024xf32, #tpu.memory_space<vmem>>, vector<1x1024xf32>
    %8 = vector.broadcast %7 : vector<1x1024xf32> to vector<2x1024xf32>
    %9 = arith.addf %6, %8 : vector<2x1024xf32>
    %cst_6 = arith.constant 0.000000e+00 : f32
    %10 = vector.broadcast %cst_6 : f32 to vector<2x1024xf32>
    %11 = arith.maximumf %9, %10 : vector<2x1024xf32>
    %c0_7 = arith.constant 0 : index
    %c0_8 = arith.constant 0 : index
    %12 = vector.load %arg7[%c0_7, %c0_8] : memref<2x128xf32, #tpu.memory_space<vmem>>, vector<2x128xf32>
    %13 = arith.truncf %11 : vector<2x1024xf32> to vector<2x1024xbf16>
    %c0_9 = arith.constant 0 : index
    %c0_10 = arith.constant 0 : index
    %14 = vector.load %arg5[%c0_9, %c0_10] : memref<1024x128xbf16, #tpu.memory_space<vmem>>, vector<1024x128xbf16>
    %cst_11 = arith.constant dense<0.000000e+00> : vector<2x128xf32>
    %15 = tpu.matmul %13, %14, %cst_11 {dimension_numbers = #tpu.dot_dimension_numbers<[1], [0], [0], [1], [0, 0, 1, 1], [], []>} : vector<2x1024xbf16>, vector<1024x128xbf16>, vector<2x128xf32> -> vector<2x128xf32>
    %16 = arith.addf %12, %15 : vector<2x128xf32>
    %c0_12 = arith.constant 0 : index
    %c0_13 = arith.constant 0 : index
    %17 = vector.load %arg7[%c0_12, %c0_13] : memref<2x128xf32, #tpu.memory_space<vmem>>, vector<2x128xf32>
    tpu.vector_store %arg7[%c0_12, %c0_13], %16 {strides = array<i32>} : memref<2x128xf32, #tpu.memory_space<vmem>>, vector<2x128xf32>,
    return
  }
  func.func @transform_0(%arg0: i32, %arg1: i32) -> (i32, i32) {
    %c0_i32 = arith.constant 0 : i32
    %c0_i32_0 = arith.constant 0 : i32
    return %arg0, %c0_i32 : i32, i32
  }
  func.func @transform_1(%arg0: i32, %arg1: i32) -> (i32, i32) {
    %c0_i32 = arith.constant 0 : i32
    %c0_i32_0 = arith.constant 0 : i32
    return %c0_i32, %arg1 : i32, i32
  }
  func.func @transform_2(%arg0: i32, %arg1: i32) -> (i32, i32) {
    %c0_i32 = arith.constant 0 : i32
    %c0_i32_0 = arith.constant 0 : i32
    return %c0_i32, %arg1 : i32, i32
  }
  func.func @transform_3(%arg0: i32, %arg1: i32) -> (i32, i32) {
    %c0_i32 = arith.constant 0 : i32
    %c0_i32_0 = arith.constant 0 : i32
    return %arg1, %c0_i32 : i32, i32
  }
  func.func @transform_4(%arg0: i32, %arg1: i32) -> (i32, i32) {
    %c0_i32 = arith.constant 0 : i32
    %c0_i32_0 = arith.constant 0 : i32
    %c0_i32_1 = arith.constant 0 : i32
    return %c0_i32, %c0_i32_0 : i32, i32
  }
  func.func @transform_5(%arg0: i32, %arg1: i32) -> (i32, i32) {
    %c0_i32 = arith.constant 0 : i32
    %c0_i32_0 = arith.constant 0 : i32
    return %arg0, %c0_i32 : i32, i32
  }
}

</mosaic_0001>

<llo_original>
// kernel: inception_aux_forward.2
$region0: #{inception_aux_forward.2}
  #allocation0 [shape = 'u32[]', space=smem, size = 0x4, offset = 0x4, fixed_abs, tag = 'smem constant byte address 0x4 - core index']
  #allocation1 [shape = 'u32[72,128]{1,0:T(1,128)}', space=vmem, size = 0x9000, scoped, tag = 'internal scratch']
  %s0 = inlined_call_operand.vmem [shape: f32[32,256], index: 0, kind: input, shape index: {}]
  %s1 = inlined_call_operand.hbm [shape: f32[256,16], index: 1, kind: input, shape index: {}]
  %s2 = inlined_call_operand.hbm [shape: f32[16,128], index: 2, kind: input, shape index: {}]
  %s3 = inlined_call_operand.vmem [shape: f32[32,128], index: 3, kind: output, shape index: {}]
  %s4 = sld [smem:[#allocation0]]
  $region30: #{inception_aux_forward.2} parent=0
    _
  %s6 = ssub.s32 1, %s4
  %s7 = scalar_select 0, %s6, %s4
  $region1: #{inception_aux_forward.2} parent=0
    #allocation2 [shape = 'u8[131072]{0}', space=vmem, size = 0x20000, scoped, tag = 'input window, operand 1, single buffered']
    #allocation3 [shape = 's32[1]{0}', space=sflag, size = 0x4, scoped, tag = 'scoped memory for inception_aux_forward.2']
    #allocation4 [shape = 'u8[8192]{0}', space=vmem, size = 0x2000, scoped, tag = 'input window, operand 2, single buffered']
    #allocation5 [shape = 's32[1]{0}', space=sflag, size = 0x4, scoped, tag = 'scoped memory for inception_aux_forward.2']
    %8 = vsyncpa [#allocation3], 0
    %9 = vsyncpa [#allocation5], 0
    // Predicated region
    $region2: #{inception_aux_forward.2} parent=1 // pred_check
      _
    $region3: #{inception_aux_forward.2} parent=1 // pred_check_branch
      %11 = sbr.rel (0) target = $region5
    $region4: #{inception_aux_forward.2} parent=1 // pred_region
      _
    $region5: #{inception_aux_forward.2} parent=1 // pred_fallthru
      _
    // Predicated region
    $region6: #{inception_aux_forward.2} parent=1 // pred_check
      _
    $region7: #{inception_aux_forward.2} parent=1 // pred_check_branch
      %13 = sbr.rel (0) target = $region9
    $region8: #{inception_aux_forward.2} parent=1 // pred_region
      %15 = vsyncadd [#allocation3], 0
      %s16 = sshll.u32 %s1, 4
      %s17 = int_to_ptr.hbm [resolvable:$true] %s16
      %s18 = sshll.u32 [#allocation2], 4
      %s19 = int_to_ptr.vmem [resolvable:$true] %s18
      %24 = dma.hbm_to_vmem [thread:$0]  %s17, 4096, %s19, [#allocation3], 128, 128, 8
    $region9: #{inception_aux_forward.2} parent=1 // pred_fallthru
      _
    // Predicated region
    $region10: #{inception_aux_forward.2} parent=1 // pred_check
      _
    $region11: #{inception_aux_forward.2} parent=1 // pred_check_branch
      %26 = sbr.rel (0) target = $region13
    $region12: #{inception_aux_forward.2} parent=1 // pred_region
      %28 = vsyncadd [#allocation5], 0
      %s29 = sshll.u32 %s2, 4
      %s30 = int_to_ptr.hbm [resolvable:$true] %s29
      %s31 = sshll.u32 [#allocation4], 4
      %s32 = int_to_ptr.vmem [resolvable:$true] %s31
      %37 = dma.hbm_to_vmem [thread:$0]  %s30, 256, %s32, [#allocation5], 128, 128, 8
    $region13: #{inception_aux_forward.2} parent=1 // pred_fallthru
      _
    // Predicated region
    $region14: #{inception_aux_forward.2} parent=1 // pred_check
      _
    $region15: #{inception_aux_forward.2} parent=1 // pred_check_branch
      %39 = sbr.rel (0) target = $region17
    $region16: #{inception_aux_forward.2} parent=1 // pred_region
      %41 = dma.done [#allocation3], 4096
    $region17: #{inception_aux_forward.2} parent=1 // pred_fallthru
      _
    // Predicated region
    $region18: #{inception_aux_forward.2} parent=1 // pred_check
      _
    $region19: #{inception_aux_forward.2} parent=1 // pred_check_branch
      %43 = sbr.rel (0) target = $region21
    $region20: #{inception_aux_forward.2} parent=1 // pred_region
      %45 = dma.done [#allocation5], 256
    $region21: #{inception_aux_forward.2} parent=1 // pred_fallthru
      _
    %v46 = vld [vmem:[%s0] sm:$0xff]
    %v47 = vld [vmem:[%s0 + $0x8] sm:$0xff]
    %v48 = vld [vmem:[%s0 + $0x10] sm:$0xff]
    %v49 = vld [vmem:[%s0 + $0x18] sm:$0xff]
    %v50 = vld [vmem:[%s0 + $0x20] sm:$0xff]
    %v51 = vld [vmem:[%s0 + $0x28] sm:$0xff]
    %v52 = vld [vmem:[%s0 + $0x30] sm:$0xff]
    %v53 = vld [vmem:[%s0 + $0x38] sm:$0xff]
    %v54 = vld [vmem:[#allocation2] sm:$0xff]
    %v55 = vld [vmem:[#allocation2 + $0x8] sm:$0xff]
    %v56 = vld [vmem:[#allocation2 + $0x10] sm:$0xff]
    %v57 = vld [vmem:[#allocation2 + $0x18] sm:$0xff]
    %v58 = vld [vmem:[#allocation2 + $0x20] sm:$0xff]
    %v59 = vld [vmem:[#allocation2 + $0x28] sm:$0xff]
    %v60 = vld [vmem:[#allocation2 + $0x30] sm:$0xff]
    %v61 = vld [vmem:[#allocation2 + $0x38] sm:$0xff]
    %v62 = vld [vmem:[#allocation2 + $0x40] sm:$0xff]
    %v63 = vld [vmem:[#allocation2 + $0x48] sm:$0xff]
    %v64 = vld [vmem:[#allocation2 + $0x50] sm:$0xff]
    %v65 = vld [vmem:[#allocation2 + $0x58] sm:$0xff]
    %v66 = vld [vmem:[#allocation2 + $0x60] sm:$0xff]
    %v67 = vld [vmem:[#allocation2 + $0x68] sm:$0xff]
    %v68 = vld [vmem:[#allocation2 + $0x70] sm:$0xff]
    %v69 = vld [vmem:[#allocation2 + $0x78] sm:$0xff]
    %v70 = vld [vmem:[#allocation2 + $0x80] sm:$0xff]
    %v71 = vld [vmem:[#allocation2 + $0x88] sm:$0xff]
    %v72 = vld [vmem:[#allocation2 + $0x90] sm:$0xff]
    %v73 = vld [vmem:[#allocation2 + $0x98] sm:$0xff]
    %v74 = vld [vmem:[#allocation2 + $0xa0] sm:$0xff]
    %v75 = vld [vmem:[#allocation2 + $0xa8] sm:$0xff]
    %v76 = vld [vmem:[#allocation2 + $0xb0] sm:$0xff]
    %v77 = vld [vmem:[#allocation2 + $0xb8] sm:$0xff]
    %v78 = vld [vmem:[#allocation2 + $0xc0] sm:$0xff]
    %v79 = vld [vmem:[#allocation2 + $0xc8] sm:$0xff]
    %v80 = vld [vmem:[#allocation2 + $0xd0] sm:$0xff]
    %v81 = vld [vmem:[#allocation2 + $0xd8] sm:$0xff]
    %v82 = vld [vmem:[#allocation2 + $0xe0] sm:$0xff]
    %v83 = vld [vmem:[#allocation2 + $0xe8] sm:$0xff]
    %v84 = vld [vmem:[#allocation2 + $0xf0] sm:$0xff]
    %v85 = vld [vmem:[#allocation2 + $0xf8] sm:$0xff]
    %86 = vmatpush.msra.mxu0 %v69
    %87 = vmatpush.msra.mxu0 %v68
    %88 = vmatpush.msra.mxu0 %v67
    %89 = vmatpush.msra.mxu0 %v66
    %90 = vmatpush.msra.mxu0 %v65
    %91 = vmatpush.msra.mxu0 %v64
    %92 = vmatpush.msra.mxu0 %v63
    %93 = vmatpush.msra.mxu0 %v62
    %94 = vmatpush.msra.mxu0 %v61
    %95 = vmatpush.msra.mxu0 %v60
    %96 = vmatpush.msra.mxu0 %v59
    %97 = vmatpush.msra.mxu0 %v58
    %98 = vmatpush.msra.mxu0 %v57
    %99 = vmatpush.msra.mxu0 %v56
    %100 = vmatpush.msra.mxu0 %v55
    %101 = vmatpush.msra.mxu0 %v54
    %102 = vmatmul.f32.gmra.mxu0 %v46
    %v103 = vpop.f32.mrf.mxu0
    %v104 = vadd.f32 0.0, %v103
    %105 = vmatmul.f32.gmra.mxu0 %v48
    %v106 = vpop.f32.mrf.mxu0
    %v107 = vadd.f32 0.0, %v106
    %108 = vmatmul.f32.gmra.mxu0 %v50
    %v109 = vpop.f32.mrf.mxu0
    %v110 = vadd.f32 0.0, %v109
    %111 = vmatmul.f32.gmra.mxu0 %v52
    %v112 = vpop.f32.mrf.mxu0
    %v113 = vadd.f32 0.0, %v112
    %114 = vdwg.mxu0
    %115 = vmatpush.msra.mxu0 %v85
    %116 = vmatpush.msra.mxu0 %v84
    %117 = vmatpush.msra.mxu0 %v83
    %118 = vmatpush.msra.mxu0 %v82
    %119 = vmatpush.msra.mxu0 %v81
    %120 = vmatpush.msra.mxu0 %v80
    %121 = vmatpush.msra.mxu0 %v79
    %122 = vmatpush.msra.mxu0 %v78
    %123 = vmatpush.msra.mxu0 %v77
    %124 = vmatpush.msra.mxu0 %v76
    %125 = vmatpush.msra.mxu0 %v75
    %126 = vmatpush.msra.mxu0 %v74
    %127 = vmatpush.msra.mxu0 %v73
    %128 = vmatpush.msra.mxu0 %v72
    %129 = vmatpush.msra.mxu0 %v71
    %130 = vmatpush.msra.mxu0 %v70
    %131 = vmatmul.f32.gmra.mxu0 %v47
    %v132 = vpop.f32.mrf.mxu0
    %v133 = vadd.f32 %v104, %v132
    %134 = vmatmul.f32.gmra.mxu0 %v49
    %v135 = vpop.f32.mrf.mxu0
    %v136 = vadd.f32 %v107, %v135
    %137 = vmatmul.f32.gmra.mxu0 %v51
    %v138 = vpop.f32.mrf.mxu0
    %v139 = vadd.f32 %v110, %v138
    %140 = vmatmul.f32.gmra.mxu0 %v53
    %v141 = vpop.f32.mrf.mxu0
    %v142 = vadd.f32 %v113, %v141
    %143 = vdwg.mxu0
    %144 = vxpose.xlu0.b32.start [1/16] %v133, 128
    %145 = vxpose.xlu0.b32.cont [2/16] %v136, 128
    %146 = vxpose.xlu0.b32.cont [3/16] 0.0, 128
    %147 = vxpose.xlu0.b32.cont [4/16] 0.0, 128
    %148 = vxpose.xlu0.b32.cont [5/16] 0.0, 128
    %149 = vxpose.xlu0.b32.cont [6/16] 0.0, 128
    %150 = vxpose.xlu0.b32.cont [7/16] 0.0, 128
    %151 = vxpose.xlu0.b32.cont [8/16] 0.0, 128
    %152 = vxpose.xlu0.b32.cont [9/16] 0.0, 128
    %153 = vxpose.xlu0.b32.cont [10/16] 0.0, 128
    %154 = vxpose.xlu0.b32.cont [11/16] 0.0, 128
    %155 = vxpose.xlu0.b32.cont [12/16] 0.0, 128
    %156 = vxpose.xlu0.b32.cont [13/16] 0.0, 128
    %157 = vxpose.xlu0.b32.cont [14/16] 0.0, 128
    %158 = vxpose.xlu0.b32.cont [15/16] 0.0, 128
    %159 = vxpose.xlu0.b32.end [16/16] 0.0, 128
    %v160 = vpop.trf.xlu0
    %v161 = vpop.trf.xlu0
    %v162 = vpop.trf.xlu0
    %v163 = vpop.trf.xlu0
    %v164 = vpop.trf.xlu0
    %v165 = vpop.trf.xlu0
    %v166 = vpop.trf.xlu0
    %v167 = vpop.trf.xlu0
    %v168 = vpop.trf.xlu0
    %v169 = vpop.trf.xlu0
    %v170 = vpop.trf.xlu0
    %v171 = vpop.trf.xlu0
    %v172 = vpop.trf.xlu0
    %v173 = vpop.trf.xlu0
    %v174 = vpop.trf.xlu0
    %v175 = vpop.trf.xlu0
    %176 = vxpose.xlu0.b32.start [1/16] %v139, 128
    %177 = vxpose.xlu0.b32.cont [2/16] %v142, 128
    %178 = vxpose.xlu0.b32.cont [3/16] 0.0, 128
    %179 = vxpose.xlu0.b32.cont [4/16] 0.0, 128
    %180 = vxpose.xlu0.b32.cont [5/16] 0.0, 128
    %181 = vxpose.xlu0.b32.cont [6/16] 0.0, 128
    %182 = vxpose.xlu0.b32.cont [7/16] 0.0, 128
    %183 = vxpose.xlu0.b32.cont [8/16] 0.0, 128
    %184 = vxpose.xlu0.b32.cont [9/16] 0.0, 128
    %185 = vxpose.xlu0.b32.cont [10/16] 0.0, 128
    %186 = vxpose.xlu0.b32.cont [11/16] 0.0, 128
    %187 = vxpose.xlu0.b32.cont [12/16] 0.0, 128
    %188 = vxpose.xlu0.b32.cont [13/16] 0.0, 128
    %189 = vxpose.xlu0.b32.cont [14/16] 0.0, 128
    %190 = vxpose.xlu0.b32.cont [15/16] 0.0, 128
    %191 = vxpose.xlu0.b32.end [16/16] 0.0, 128
    %v192 = vpop.trf.xlu0
    %v193 = vpop.trf.xlu0
    %v194 = vpop.trf.xlu0
    %v195 = vpop.trf.xlu0
    %v196 = vpop.trf.xlu0
    %v197 = vpop.trf.xlu0
    %v198 = vpop.trf.xlu0
    %v199 = vpop.trf.xlu0
    %v200 = vpop.trf.xlu0
    %v201 = vpop.trf.xlu0
    %v202 = vpop.trf.xlu0
    %v203 = vpop.trf.xlu0
    %v204 = vpop.trf.xlu0
    %v205 = vpop.trf.xlu0
    %v206 = vpop.trf.xlu0
    %v207 = vpop.trf.xlu0
    %v208 = vld [vmem:[#allocation4] sm:$0xff]
    %v209 = vld [vmem:[#allocation4 + $0x8] sm:$0xff]
    %vm210 = vcmask 130048
    %v212 = vsel %vm210, %v160, 0
    %v215 = vsel %vm210, %v161, 0
    %v218 = vsel %vm210, %v192, 0
    %v221 = vsel %vm210, %v193, 0
    %223 = vmatpush.msra.mxu0 0.0
    %224 = vmatpush.msra.mxu0 0.0
    %225 = vmatpush.msra.mxu0 0.0
    %226 = vmatpush.msra.mxu0 0.0
    %227 = vmatpush.msra.mxu0 0.0
    %228 = vmatpush.msra.mxu0 0.0
    %229 = vmatpush.msra.mxu0 0.0
    %230 = vmatpush.msra.mxu0 0.0
    %231 = vmatpush.msra.mxu0 0.0
    %232 = vmatpush.msra.mxu0 0.0
    %233 = vmatpush.msra.mxu0 0.0
    %234 = vmatpush.msra.mxu0 0.0
    %235 = vmatpush.msra.mxu0 0.0
    %236 = vmatpush.msra.mxu0 0.0
    %237 = vmatpush.msra.mxu0 %v209
    %238 = vmatpush.msra.mxu0 %v208
    %239 = vmatmul.f32.gmra.mxu0 %v212
    %v240 = vpop.f32.mrf.mxu0
    %v241 = vadd.f32 0.0, %v240
    %242 = vmatmul.f32.gmra.mxu0 %v215
    %v243 = vpop.f32.mrf.mxu0
    %v244 = vadd.f32 0.0, %v243
    %245 = vmatmul.f32.gmra.mxu0 %v218
    %v246 = vpop.f32.mrf.mxu0
    %v247 = vadd.f32 0.0, %v246
    %248 = vmatmul.f32.gmra.mxu0 %v221
    %v249 = vpop.f32.mrf.mxu0
    %v250 = vadd.f32 0.0, %v249
    %251 = vdwg.mxu0
    %v252 = vmax.f32 %v241, 0.0
    %v253 = vmax.f32 %v244, 0.0
    %v254 = vmax.f32 %v247, 0.0
    %v255 = vmax.f32 %v250, 0.0
    %256 = vst [vmem:[%s3] sm:$0xff] %v252
    %257 = vst [vmem:[%s3 + $0x8] sm:$0xff] %v253
    %258 = vst [vmem:[%s3 + $0x10] sm:$0xff] %v254
    %259 = vst [vmem:[%s3 + $0x18] sm:$0xff] %v255
    // Predicated region
    $region22: #{inception_aux_forward.2} parent=1 // pred_check
      _
    $region23: #{inception_aux_forward.2} parent=1 // pred_check_branch
      %261 = sbr.rel (0) target = $region25
    $region24: #{inception_aux_forward.2} parent=1 // pred_region
      _
    $region25: #{inception_aux_forward.2} parent=1 // pred_fallthru
      _
    // Predicated region
    $region26: #{inception_aux_forward.2} parent=1 // pred_check
      _
    $region27: #{inception_aux_forward.2} parent=1 // pred_check_branch
      %263 = sbr.rel (0) target = $region29
    $region28: #{inception_aux_forward.2} parent=1 // pred_region
      _
    $region29: #{inception_aux_forward.2} parent=1 // pred_fallthru
      _
    %264 = vsyncpa [#allocation3], 1
    %265 = vsyncpa [#allocation5], 1

// kernel: inception_aux_forward.3
$region0: #{inception_aux_forward.3}
  #allocation0 [shape = 'u32[]', space=smem, size = 0x4, offset = 0x4, fixed_abs, tag = 'smem constant byte address 0x4 - core index']
  #allocation1 [shape = 'u32[72,128]{1,0:T(1,128)}', space=vmem, size = 0x9000, scoped, tag = 'internal scratch']
  %s0 = inlined_call_operand.vmem [shape: f32[2,2048], index: 0, kind: input, shape index: {}]
  %s1 = inlined_call_operand.hbm [shape: bf16[2048,1024], index: 1, kind: input, shape index: {}]
  %s2 = inlined_call_operand.hbm [shape: f32[1,1024], index: 2, kind: input, shape index: {}]
  %s3 = inlined_call_operand.hbm [shape: bf16[1024,128], index: 3, kind: input, shape index: {}]
  %s4 = inlined_call_operand.hbm [shape: f32[1,128], index: 4, kind: input, shape index: {}]
  %s5 = inlined_call_operand.hbm [shape: f32[2,128], index: 5, kind: output, shape index: {}]
  %s6 = sld [smem:[#allocation0]]
  $region50: #{inception_aux_forward.3} parent=0
    _
  %s8 = ssub.s32 1, %s6
  %s9 = scalar_select 0, %s8, %s6
  $region1: #{inception_aux_forward.3} parent=0
    #allocation2 [shape = 'u8[4194304]{0}', space=vmem, size = 0x400000, scoped, tag = 'input window, operand 1, single buffered']
    #allocation3 [shape = 's32[1]{0}', space=sflag, size = 0x4, scoped, tag = 'scoped memory for inception_aux_forward.3']
    #allocation4 [shape = 's32[1]{0}', space=sflag, size = 0x4, scoped, tag = 'scoped memory for inception_aux_forward.3']
    #allocation5 [shape = 'u8[4096]{0}', space=vmem, size = 0x1000, scoped, tag = 'input window, operand 2, single buffered']
    #allocation6 [shape = 's32[1]{0}', space=sflag, size = 0x4, scoped, tag = 'scoped memory for inception_aux_forward.3']
    #allocation7 [shape = 'u8[262144]{0}', space=vmem, size = 0x40000, scoped, tag = 'input window, operand 3, single buffered']
    #allocation8 [shape = 'u8[512]{0}', space=vmem, size = 0x400, scoped, tag = 'input window, operand 4, single buffered']
    #allocation9 [shape = 's32[1]{0}', space=sflag, size = 0x4, scoped, tag = 'scoped memory for inception_aux_forward.3']
    #allocation10 [shape = 'u8[1024]{0}', space=vmem, size = 0x400, scoped, tag = 'output window, operand 0, single buffered']
    %10 = vsyncpa [#allocation3], 0
    %11 = vsyncpa [#allocation6], 0
    %12 = vsyncpa [#allocation9], 0
    %13 = vsyncpa [#allocation4], 0
    // Predicated region
    $region2: #{inception_aux_forward.3} parent=1 // pred_check
      _
    $region3: #{inception_aux_forward.3} parent=1 // pred_check_branch
      %15 = sbr.rel (0) target = $region5
    $region4: #{inception_aux_forward.3} parent=1 // pred_region
      _
    $region5: #{inception_aux_forward.3} parent=1 // pred_fallthru
      _
    // Predicated region
    $region6: #{inception_aux_forward.3} parent=1 // pred_check
      _
    $region7: #{inception_aux_forward.3} parent=1 // pred_check_branch
      %17 = sbr.rel (0) target = $region9
    $region8: #{inception_aux_forward.3} parent=1 // pred_region
      %19 = vsyncadd [#allocation3], 0
      %s20 = sshll.u32 %s1, 4
      %s21 = int_to_ptr.hbm [resolvable:$true] %s20
      %s22 = sshll.u32 [#allocation2], 4
      %s23 = int_to_ptr.vmem [resolvable:$true] %s22
      %28 = dma.hbm_to_vmem [thread:$0]  %s21, 131072, %s23, [#allocation3], 512, 512, 32
    $region9: #{inception_aux_forward.3} parent=1 // pred_fallthru
      _
    // Predicated region
    $region10: #{inception_aux_forward.3} parent=1 // pred_check
      _
    $region11: #{inception_aux_forward.3} parent=1 // pred_check_branch
      %30 = sbr.rel (0) target = $region13
    $region12: #{inception_aux_forward.3} parent=1 // pred_region
      %32 = vsyncadd [#allocation6], 0
      %s34 = sshll.u32 %s2, 4
      %s35 = int_to_ptr.hbm [resolvable:$true] %s34
      %s36 = sshll.u32 [#allocation5], 4
      %s37 = int_to_ptr.vmem [resolvable:$true] %s36
      %39 = dma.hbm_to_vmem [thread:$0]  %s35, 128, %s37, [#allocation6]
    $region13: #{inception_aux_forward.3} parent=1 // pred_fallthru
      _
    // Predicated region
    $region14: #{inception_aux_forward.3} parent=1 // pred_check
      _
    $region15: #{inception_aux_forward.3} parent=1 // pred_check_branch
      %41 = sbr.rel (0) target = $region17
    $region16: #{inception_aux_forward.3} parent=1 // pred_region
      %43 = vsyncadd [#allocation6], 0
      %s44 = sshll.u32 %s3, 4
      %s45 = int_to_ptr.hbm [resolvable:$true] %s44
      %s46 = sshll.u32 [#allocation7], 4
      %s47 = int_to_ptr.vmem [resolvable:$true] %s46
      %52 = dma.hbm_to_vmem [thread:$0]  %s45, 8192, %s47, [#allocation6], 64, 64, 4
    $region17: #{inception_aux_forward.3} parent=1 // pred_fallthru
      _
    // Predicated region
    $region18: #{inception_aux_forward.3} parent=1 // pred_check
      _
    $region19: #{inception_aux_forward.3} parent=1 // pred_check_branch
      %54 = sbr.rel (0) target = $region21
    $region20: #{inception_aux_forward.3} parent=1 // pred_region
      %56 = vsyncadd [#allocation9], 0
      %s58 = sshll.u32 %s4, 4
      %s59 = int_to_ptr.hbm [resolvable:$true] %s58
      %s60 = sshll.u32 [#allocation8], 4
      %s61 = int_to_ptr.vmem [resolvable:$true] %s60
      %63 = dma.hbm_to_vmem [thread:$0]  %s59, 16, %s61, [#allocation9]
    $region21: #{inception_aux_forward.3} parent=1 // pred_fallthru
      _
    // Predicated region
    $region22: #{inception_aux_forward.3} parent=1 // pred_check
      _
    $region23: #{inception_aux_forward.3} parent=1 // pred_check_branch
      %65 = sbr.rel (0) target = $region25
    $region24: #{inception_aux_forward.3} parent=1 // pred_region
      %67 = dma.done [#allocation3], 131072
    $region25: #{inception_aux_forward.3} parent=1 // pred_fallthru
      _
    // Predicated region
    $region26: #{inception_aux_forward.3} parent=1 // pred_check
      _
    $region27: #{inception_aux_forward.3} parent=1 // pred_check_branch
      %69 = sbr.rel (0) target = $region29
    $region28: #{inception_aux_forward.3} parent=1 // pred_region
      %71 = dma.done [#allocation6], 128
    $region29: #{inception_aux_forward.3} parent=1 // pred_fallthru
      _
    // Predicated region
    $region30: #{inception_aux_forward.3} parent=1 // pred_check
      _
    $region31: #{inception_aux_forward.3} parent=1 // pred_check_branch
      %73 = sbr.rel (0) target = $region33
    $region32: #{inception_aux_forward.3} parent=1 // pred_region
      %75 = dma.done [#allocation6], 8192
    $region33: #{inception_aux_forward.3} parent=1 // pred_fallthru
      _
    // Predicated region
    $region34: #{inception_aux_forward.3} parent=1 // pred_check
      _
    $region35: #{inception_aux_forward.3} parent=1 // pred_check_branch
      %77 = sbr.rel (0) target = $region37
    $region36: #{inception_aux_forward.3} parent=1 // pred_region
      %79 = dma.done [#allocation9], 16
    $region37: #{inception_aux_forward.3} parent=1 // pred_fallthru
      _
    %p80 = scmp.eq.s32.totalorder 0, 0
    // Predicated region
    $region38: #{inception_aux_forward.3} parent=1 // pred_check
      %p81 = pneg %p80
    $region39: #{inception_aux_forward.3} parent=1 // pred_check_branch
      %83 = sbr.rel (%p81) target = $region41
    $region40: #{inception_aux_forward.3} parent=1 // pred_region
      %v84 = vld [vmem:[#allocation8] sm:$0x1]
      %v86 = vperm.slane %v84, 0
      %88 = vst [vmem:[#allocation10] sm:$0x3] %v86
    $region41: #{inception_aux_forward.3} parent=1 // pred_fallthru
      _
    %v89 = vld [vmem:[%s0] sm:$0xff]
    %v90 = vld [vmem:[%s0 + $0x8] sm:$0xff]
    %v91 = vld [vmem:[%s0 + $0x10] sm:$0xff]
    %v92 = vld [vmem:[%s0 + $0x18] sm:$0xff]
    %97 = vst [vmem:[#allocation1] ss:$4 sm:$0xff] %v89
    %s98 = scalar_lea.vmem [#allocation1], 32
    %99 = vst [vmem:[%s98] ss:$4 sm:$0xff] %v90
    %v100 = vld.sshfl [vmem:[#allocation1] sm:$0xff pattern:$0x73625140]
    %v101 = vld.sshfl [vmem:[#allocation1 + $0x8] sm:$0xff pattern:$0x73625140]
    %v102 = vld.sshfl [vmem:[#allocation1 + $0x10] sm:$0xff pattern:$0x73625140]
    %v103 = vld.sshfl [vmem:[#allocation1 + $0x18] sm:$0xff pattern:$0x73625140]
    %v104 = vld.sshfl [vmem:[#allocation1 + $0x20] sm:$0xff pattern:$0x73625140]
    %v105 = vld.sshfl [vmem:[#allocation1 + $0x28] sm:$0xff pattern:$0x73625140]
    %v106 = vld.sshfl [vmem:[#allocation1 + $0x30] sm:$0xff pattern:$0x73625140]
    %v107 = vld.sshfl [vmem:[#allocation1 + $0x38] sm:$0xff pattern:$0x73625140]
    %108 = vst [vmem:[#allocation1] ss:$4 sm:$0xff] %v91
    %109 = vst [vmem:[%s98] ss:$4 sm:$0xff] %v92
    %v110 = vld.sshfl [vmem:[#allocation1] sm:$0xff pattern:$0x73625140]
    %v111 = vld.sshfl [vmem:[#allocation1 + $0x8] sm:$0xff pattern:$0x73625140]
    %v112 = vld.sshfl [vmem:[#allocation1 + $0x10] sm:$0xff pattern:$0x73625140]
    %v113 = vld.sshfl [vmem:[#allocation1 + $0x18] sm:$0xff pattern:$0x73625140]
    %v114 = vld.sshfl [vmem:[#allocation1 + $0x20] sm:$0xff pattern:$0x73625140]
    %v115 = vld.sshfl [vmem:[#allocation1 + $0x28] sm:$0xff pattern:$0x73625140]
    %v116 = vld.sshfl [vmem:[#allocation1 + $0x30] sm:$0xff pattern:$0x73625140]
    %v117 = vld.sshfl [vmem:[#allocation1 + $0x38] sm:$0xff pattern:$0x73625140]
    %v134 = vpack.c.bf16 %v100, %v100
    %v135 = vpack.c.bf16 %v101, %v101
    %v136 = vpack.c.bf16 %v102, %v102
    %v137 = vpack.c.bf16 %v103, %v103
    %v138 = vpack.c.bf16 %v104, %v104
    %v139 = vpack.c.bf16 %v105, %v105
    %v140 = vpack.c.bf16 %v106, %v106
    %v141 = vpack.c.bf16 %v107, %v107
    %v142 = vpack.c.bf16 %v110, %v110
    %v143 = vpack.c.bf16 %v111, %v111
    %v144 = vpack.c.bf16 %v112, %v112
    %v145 = vpack.c.bf16 %v113, %v113
    %v146 = vpack.c.bf16 %v114, %v114
    %v147 = vpack.c.bf16 %v115, %v115
    %v148 = vpack.c.bf16 %v116, %v116
    %v149 = vpack.c.bf16 %v117, %v117
    %v150 = vld [vmem:[#allocation2] sm:$0xff]
    %v151 = vld [vmem:[#allocation2 + $0x8] sm:$0xff]
    %v152 = vld [vmem:[#allocation2 + $0x10] sm:$0xff]
    %v153 = vld [vmem:[#allocation2 + $0x18] sm:$0xff]
    %v154 = vld [vmem:[#allocation2 + $0x20] sm:$0xff]
    %v155 = vld [vmem:[#allocation2 + $0x28] sm:$0xff]
    %v156 = vld [vmem:[#allocation2 + $0x30] sm:$0xff]
    %v157 = vld [vmem:[#allocation2 + $0x38] sm:$0xff]
    %v158 = vld [vmem:[#allocation2 + $0x40] sm:$0xff]
    %v159 = vld [vmem:[#allocation2 + $0x48] sm:$0xff]
    %v160 = vld [vmem:[#allocation2 + $0x50] sm:$0xff]
    %v161 = vld [vmem:[#allocation2 + $0x58] sm:$0xff]
    %v162 = vld [vmem:[#allocation2 + $0x60] sm:$0xff]
    %v163 = vld [vmem:[#allocation2 + $0x68] sm:$0xff]
    %v164 = vld [vmem:[#allocation2 + $0x70] sm:$0xff]
    %v165 = vld [vmem:[#allocation2 + $0x78] sm:$0xff]
    %v166 = vld [vmem:[#allocation2 + $0x80] sm:$0xff]
    %v167 = vld [vmem:[#allocation2 + $0x88] sm:$0xff]
    %v168 = vld [vmem:[#allocation2 + $0x90] sm:$0xff]
    %v169 = vld [vmem:[#allocation2 + $0x98] sm:$0xff]
    %v170 = vld [vmem:[#allocation2 + $0xa0] sm:$0xff]
    %v171 = vld [vmem:[#allocation2 + $0xa8] sm:$0xff]
    %v172 = vld [vmem:[#allocation2 + $0xb0] sm:$0xff]
    %v173 = vld [vmem:[#allocation2 + $0xb8] sm:$0xff]
    %v174 = vld [vmem:[#allocation2 + $0xc0] sm:$0xff]
    %v175 = vld [vmem:[#allocation2 + $0xc8] sm:$0xff]
    %v176 = vld [vmem:[#allocation2 + $0xd0] sm:$0xff]
    %v177 = vld [vmem:[#allocation2 + $0xd8] sm:$0xff]
    %v178 = vld [vmem:[#allocation2 + $0xe0] sm:$0xff]
    %v179 = vld [vmem:[#allocation2 + $0xe8] sm:$0xff]
    %v180 = vld [vmem:[#allocation2 + $0xf0] sm:$0xff]
    %v181 = vld [vmem:[#allocation2 + $0xf8] sm:$0xff]
    %v182 = vld [vmem:[#allocation2 + $0x100] sm:$0xff]
    %v183 = vld [vmem:[#allocation2 + $0x108] sm:$0xff]
    %v184 = vld [vmem:[#allocation2 + $0x110] sm:$0xff]
    %v185 = vld [vmem:[#allocation2 + $0x118] sm:$0xff]
    %v186 = vld [vmem:[#allocation2 + $0x120] sm:$0xff]
    %v187 = vld [vmem:[#allocation2 + $0x128] sm:$0xff]
    %v188 = vld [vmem:[#allocation2 + $0x130] sm:$0xff]
    %v189 = vld [vmem:[#allocation2 + $0x138] sm:$0xff]
    %v190 = vld [vmem:[#allocation2 + $0x140] sm:$0xff]
    %v191 = vld [vmem:[#allocation2 + $0x148] sm:$0xff]
    %v192 = vld [vmem:[#allocation2 + $0x150] sm:$0xff]
    %v193 = vld [vmem:[#allocation2 + $0x158] sm:$0xff]
    %v194 = vld [vmem:[#allocation2 + $0x160] sm:$0xff]
    %v195 = vld [vmem:[#allocation2 + $0x168] sm:$0xff]
    %v196 = vld [vmem:[#allocation2 + $0x170] sm:$0xff]
    %v197 = vld [vmem:[#allocation2 + $0x178] sm:$0xff]
    %v198 = vld [vmem:[#allocation2 + $0x180] sm:$0xff]
    %v199 = vld [vmem:[#allocation2 + $0x188] sm:$0xff]
    %v200 = vld [vmem:[#allocation2 + $0x190] sm:$0xff]
    %v201 = vld [vmem:[#allocation2 + $0x198] sm:$0xff]
    %v202 = vld [vmem:[#allocation2 + $0x1a0] sm:$0xff]
    %v203 = vld [vmem:[#allocation2 + $0x1a8] sm:$0xff]
    %v204 = vld [vmem:[#allocation2 + $0x1b0] sm:$0xff]
    %v205 = vld [vmem:[#allocation2 + $0x1b8] sm:$0xff]
    %v206 = vld [vmem:[#allocation2 + $0x1c0] sm:$0xff]
    %v207 = vld [vmem:[#allocation2 + $0x1c8] sm:$0xff]
    %v208 = vld [vmem:[#allocation2 + $0x1d0] sm:$0xff]
    %v209 = vld [vmem:[#allocation2 + $0x1d8] sm:$0xff]
    %v210 = vld [vmem:[#allocation2 + $0x1e0] sm:$0xff]
    %v211 = vld [vmem:[#allocation2 + $0x1e8] sm:$0xff]
    %v212 = vld [vmem:[#allocation2 + $0x1f0] sm:$0xff]
    %v213 = vld [vmem:[#allocation2 + $0x1f8] sm:$0xff]
    %v214 = vld [vmem:[#allocation2 + $0x200] sm:$0xff]
    %v215 = vld [vmem:[#allocation2 + $0x208] sm:$0xff]
    %v216 = vld [vmem:[#allocation2 + $0x210] sm:$0xff]
    %v217 = vld [vmem:[#allocation2 + $0x218] sm:$0xff]
    %v218 = vld [vmem:[#allocation2 + $0x220] sm:$0xff]
    %v219 = vld [vmem:[#allocation2 + $0x228] sm:$0xff]
    %v220 = vld [vmem:[#allocation2 + $0x230] sm:$0xff]
    %v221 = vld [vmem:[#allocation2 + $0x238] sm:$0xff]
    %v222 = vld [vmem:[#allocation2 + $0x240] sm:$0xff]
    %v223 = vld [vmem:[#allocation2 + $0x248] sm:$0xff]
    %v224 = vld [vmem:[#allocation2 + $0x250] sm:$0xff]
    %v225 = vld [vmem:[#allocation2 + $0x258] sm:$0xff]
    %v226 = vld [vmem:[#allocation2 + $0x260] sm:$0xff]
    %v227 = vld [vmem:[#allocation2 + $0x268] sm:$0xff]
    %v228 = vld [vmem:[#allocation2 + $0x270] sm:$0xff]
    %v229 = vld [vmem:[#allocation2 + $0x278] sm:$0xff]
    %v230 = vld [vmem:[#allocation2 + $0x280] sm:$0xff]
    %v231 = vld [vmem:[#allocation2 + $0x288] sm:$0xff]
    %v232 = vld [vmem:[#allocation2 + $0x290] sm:$0xff]
    %v233 = vld [vmem:[#allocation2 + $0x298] sm:$0xff]
    %v234 = vld [vmem:[#allocation2 + $0x2a0] sm:$0xff]
    %v235 = vld [vmem:[#allocation2 + $0x2a8] sm:$0xff]
    %v236 = vld [vmem:[#allocation2 + $0x2b0] sm:$0xff]
    %v237 = vld [vmem:[#allocation2 + $0x2b8] sm:$0xff]
    %v238 = vld [vmem:[#allocation2 + $0x2c0] sm:$0xff]
    %v239 = vld [vmem:[#allocation2 + $0x2c8] sm:$0xff]
    %v240 = vld [vmem:[#allocation2 + $0x2d0] sm:$0xff]
    %v241 = vld [vmem:[#allocation2 + $0x2d8] sm:$0xff]
    %v242 = vld [vmem:[#allocation2 + $0x2e0] sm:$0xff]
    %v243 = vld [vmem:[#allocation2 + $0x2e8] sm:$0xff]
    %v244 = vld [vmem:[#allocation2 + $0x2f0] sm:$0xff]
    %v245 = vld [vmem:[#allocation2 + $0x2f8] sm:$0xff]
    %v246 = vld [vmem:[#allocation2 + $0x300] sm:$0xff]
    %v247 = vld [vmem:[#allocation2 + $0x308] sm:$0xff]
    %v248 = vld [vmem:[#allocation2 + $0x310] sm:$0xff]
    %v249 = vld [vmem:[#allocation2 + $0x318] sm:$0xff]
    %v250 = vld [vmem:[#allocation2 + $0x320] sm:$0xff]
    %v251 = vld [vmem:[#allocation2 + $0x328] sm:$0xff]
    %v252 = vld [vmem:[#allocation2 + $0x330] sm:$0xff]
    %v253 = vld [vmem:[#allocation2 + $0x338] sm:$0xff]
    %v254 = vld [vmem:[#allocation2 + $0x340] sm:$0xff]
    %v255 = vld [vmem:[#allocation2 + $0x348] sm:$0xff]
    %v256 = vld [vmem:[#allocation2 + $0x350] sm:$0xff]
    %v257 = vld [vmem:[#allocation2 + $0x358] sm:$0xff]
    %v258 = vld [vmem:[#allocation2 + $0x360] sm:$0xff]
    %v259 = vld [vmem:[#allocation2 + $0x368] sm:$0xff]
    %v260 = vld [vmem:[#allocation2 + $0x370] sm:$0xff]
    %v261 = vld [vmem:[#allocation2 + $0x378] sm:$0xff]
    %v262 = vld [vmem:[#allocation2 + $0x380] sm:$0xff]
    %v263 = vld [vmem:[#allocation2 + $0x388] sm:$0xff]
    %v264 = vld [vmem:[#allocation2 + $0x390] sm:$0xff]
    %v265 = vld [vmem:[#allocation2 + $0x398] sm:$0xff]
    %v266 = vld [vmem:[#allocation2 + $0x3a0] sm:$0xff]
    %v267 = vld [vmem:[#allocation2 + $0x3a8] sm:$0xff]
    %v268 = vld [vmem:[#allocation2 + $0x3b0] sm:$0xff]
    %v269 = vld [vmem:[#allocation2 + $0x3b8] sm:$0xff]
    %v270 = vld [vmem:[#allocation2 + $0x3c0] sm:$0xff]
    %v271 = vld [vmem:[#allocation2 + $0x3c8] sm:$0xff]
    %v272 = vld [vmem:[#allocation2 + $0x3d0] sm:$0xff]
    %v273 = vld [vmem:[#allocation2 + $0x3d8] sm:$0xff]
    %v274 = vld [vmem:[#allocation2 + $0x3e0] sm:$0xff]
    %v275 = vld [vmem:[#allocation2 + $0x3e8] sm:$0xff]
    %v276 = vld [vmem:[#allocation2 + $0x3f0] sm:$0xff]
    %v277 = vld [vmem:[#allocation2 + $0x3f8] sm:$0xff]
    %v278 = vld [vmem:[#allocation2 + $0x400] sm:$0xff]
    %v279 = vld [vmem:[#allocation2 + $0x408] sm:$0xff]
    %v280 = vld [vmem:[#allocation2 + $0x410] sm:$0xff]
    %v281 = vld [vmem:[#allocation2 + $0x418] sm:$0xff]
    %v282 = vld [vmem:[#allocation2 + $0x420] sm:$0xff]
    %v283 = vld [vmem:[#allocation2 + $0x428] sm:$0xff]
    %v284 = vld [vmem:[#allocation2 + $0x430] sm:$0xff]
    %v285 = vld [vmem:[#allocation2 + $0x438] sm:$0xff]
    %v286 = vld [vmem:[#allocation2 + $0x440] sm:$0xff]
    %v287 = vld [vmem:[#allocation2 + $0x448] sm:$0xff]
    %v288 = vld [vmem:[#allocation2 + $0x450] sm:$0xff]
    %v289 = vld [vmem:[#allocation2 + $0x458] sm:$0xff]
    %v290 = vld [vmem:[#allocation2 + $0x460] sm:$0xff]
    %v291 = vld [vmem:[#allocation2 + $0x468] sm:$0xff]
    %v292 = vld [vmem:[#allocation2 + $0x470] sm:$0xff]
    %v293 = vld [vmem:[#allocation2 + $0x478] sm:$0xff]
    %v294 = vld [vmem:[#allocation2 + $0x480] sm:$0xff]
    %v295 = vld [vmem:[#allocation2 + $0x488] sm:$0xff]
    %v296 = vld [vmem:[#allocation2 + $0x490] sm:$0xff]
    %v297 = vld [vmem:[#allocation2 + $0x498] sm:$0xff]
    %v298 = vld [vmem:[#allocation2 + $0x4a0] sm:$0xff]
    %v299 = vld [vmem:[#allocation2 + $0x4a8] sm:$0xff]
    %v300 = vld [vmem:[#allocation2 + $0x4b0] sm:$0xff]
    %v301 = vld [vmem:[#allocation2 + $0x4b8] sm:$0xff]
    %v302 = vld [vmem:[#allocation2 + $0x4c0] sm:$0xff]
    %v303 = vld [vmem:[#allocation2 + $0x4c8] sm:$0xff]
    %v304 = vld [vmem:[#allocation2 + $0x4d0] sm:$0xff]
    %v305 = vld [vmem:[#allocation2 + $0x4d8] sm:$0xff]
    %v306 = vld [vmem:[#allocation2 + $0x4e0] sm:$0xff]
    %v307 = vld [vmem:[#allocation2 + $0x4e8] sm:$0xff]
    %v308 = vld [vmem:[#allocation2 + $0x4f0] sm:$0xff]
    %v309 = vld [vmem:[#allocation2 + $0x4f8] sm:$0xff]
    %v310 = vld [vmem:[#allocation2 + $0x500] sm:$0xff]
    %v311 = vld [vmem:[#allocation2 + $0x508] sm:$0xff]
    %v312 = vld [vmem:[#allocation2 + $0x510] sm:$0xff]
    %v313 = vld [vmem:[#allocation2 + $0x518] sm:$0xff]
    %v314 = vld [vmem:[#allocation2 + $0x520] sm:$0xff]
    %v315 = vld [vmem:[#allocation2 + $0x528] sm:$0xff]
    %v316 = vld [vmem:[#allocation2 + $0x530] sm:$0xff]
    %v317 = vld [vmem:[#allocation2 + $0x538] sm:$0xff]
    %v318 = vld [vmem:[#allocation2 + $0x540] sm:$0xff]
    %v319 = vld [vmem:[#allocation2 + $0x548] sm:$0xff]
    %v320 = vld [vmem:[#allocation2 + $0x550] sm:$0xff]
    %v321 = vld [vmem:[#allocation2 + $0x558] sm:$0xff]
    %v322 = vld [vmem:[#allocation2 + $0x560] sm:$0xff]
    %v323 = vld [vmem:[#allocation2 + $0x568] sm:$0xff]
    %v324 = vld [vmem:[#allocation2 + $0x570] sm:$0xff]
    %v325 = vld [vmem:[#allocation2 + $0x578] sm:$0xff]
    %v326 = vld [vmem:[#allocation2 + $0x580] sm:$0xff]
    %v327 = vld [vmem:[#allocation2 + $0x588] sm:$0xff]
    %v328 = vld [vmem:[#allocation2 + $0x590] sm:$0xff]
    %v329 = vld [vmem:[#allocation2 + $0x598] sm:$0xff]
    %v330 = vld [vmem:[#allocation2 + $0x5a0] sm:$0xff]
    %v331 = vld [vmem:[#allocation2 + $0x5a8] sm:$0xff]
    %v332 = vld [vmem:[#allocation2 + $0x5b0] sm:$0xff]
    %v333 = vld [vmem:[#allocation2 + $0x5b8] sm:$0xff]
    %v334 = vld [vmem:[#allocation2 + $0x5c0] sm:$0xff]
    %v335 = vld [vmem:[#allocation2 + $0x5c8] sm:$0xff]
    %v336 = vld [vmem:[#allocation2 + $0x5d0] sm:$0xff]
    %v337 = vld [vmem:[#allocation2 + $0x5d8] sm:$0xff]
    %v338 = vld [vmem:[#allocation2 + $0x5e0] sm:$0xff]
    %v339 = vld [vmem:[#allocation2 + $0x5e8] sm:$0xff]
    %v340 = vld [vmem:[#allocation2 + $0x5f0] sm:$0xff]
    %v341 = vld [vmem:[#allocation2 + $0x5f8] sm:$0xff]
    %v342 = vld [vmem:[#allocation2 + $0x600] sm:$0xff]
    %v343 = vld [vmem:[#allocation2 + $0x608] sm:$0xff]
    %v344 = vld [vmem:[#allocation2 + $0x610] sm:$0xff]
    %v345 = vld [vmem:[#allocation2 + $0x618] sm:$0xff]
    %v346 = vld [vmem:[#allocation2 + $0x620] sm:$0xff]
    %v347 = vld [vmem:[#allocation2 + $0x628] sm:$0xff]
    %v348 = vld [vmem:[#allocation2 + $0x630] sm:$0xff]
    %v349 = vld [vmem:[#allocation2 + $0x638] sm:$0xff]
    %v350 = vld [vmem:[#allocation2 + $0x640] sm:$0xff]
    %v351 = vld [vmem:[#allocation2 + $0x648] sm:$0xff]
    %v352 = vld [vmem:[#allocation2 + $0x650] sm:$0xff]
    %v353 = vld [vmem:[#allocation2 + $0x658] sm:$0xff]
    %v354 = vld [vmem:[#allocation2 + $0x660] sm:$0xff]
    %v355 = vld [vmem:[#allocation2 + $0x668] sm:$0xff]
    %v356 = vld [vmem:[#allocation2 + $0x670] sm:$0xff]
    %v357 = vld [vmem:[#allocation2 + $0x678] sm:$0xff]
    %v358 = vld [vmem:[#allocation2 + $0x680] sm:$0xff]
    %v359 = vld [vmem:[#allocation2 + $0x688] sm:$0xff]
    %v360 = vld [vmem:[#allocation2 + $0x690] sm:$0xff]
    %v361 = vld [vmem:[#allocation2 + $0x698] sm:$0xff]
    %v362 = vld [vmem:[#allocation2 + $0x6a0] sm:$0xff]
    %v363 = vld [vmem:[#allocation2 + $0x6a8] sm:$0xff]
    %v364 = vld [vmem:[#allocation2 + $0x6b0] sm:$0xff]
    %v365 = vld [vmem:[#allocation2 + $0x6b8] sm:$0xff]
    %v366 = vld [vmem:[#allocation2 + $0x6c0] sm:$0xff]
    %v367 = vld [vmem:[#allocation2 + $0x6c8] sm:$0xff]
    %v368 = vld [vmem:[#allocation2 + $0x6d0] sm:$0xff]
    %v369 = vld [vmem:[#allocation2 + $0x6d8] sm:$0xff]
    %v370 = vld [vmem:[#allocation2 + $0x6e0] sm:$0xff]
    %v371 = vld [vmem:[#allocation2 + $0x6e8] sm:$0xff]
    %v372 = vld [vmem:[#allocation2 + $0x6f0] sm:$0xff]
    %v373 = vld [vmem:[#allocation2 + $0x6f8] sm:$0xff]
    %v374 = vld [vmem:[#allocation2 + $0x700] sm:$0xff]
    %v375 = vld [vmem:[#allocation2 + $0x708] sm:$0xff]
    %v376 = vld [vmem:[#allocation2 + $0x710] sm:$0xff]
    %v377 = vld [vmem:[#allocation2 + $0x718] sm:$0xff]
    %v378 = vld [vmem:[#allocation2 + $0x720] sm:$0xff]
    %v379 = vld [vmem:[#allocation2 + $0x728] sm:$0xff]
    %v380 = vld [vmem:[#allocation2 + $0x730] sm:$0xff]
    %v381 = vld [vmem:[#allocation2 + $0x738] sm:$0xff]
    %v382 = vld [vmem:[#allocation2 + $0x740] sm:$0xff]
    %v383 = vld [vmem:[#allocation2 + $0x748] sm:$0xff]
    %v384 = vld [vmem:[#allocation2 + $0x750] sm:$0xff]
    %v385 = vld [vmem:[#allocation2 + $0x758] sm:$0xff]
    %v386 = vld [vmem:[#allocation2 + $0x760] sm:$0xff]
    %v387 = vld [vmem:[#allocation2 + $0x768] sm:$0xff]
    %v388 = vld [vmem:[#allocation2 + $0x770] sm:$0xff]
    %v389 = vld [vmem:[#allocation2 + $0x778] sm:$0xff]
    %v390 = vld [vmem:[#allocation2 + $0x780] sm:$0xff]
    %v391 = vld [vmem:[#allocation2 + $0x788] sm:$0xff]
    %v392 = vld [vmem:[#allocation2 + $0x790] sm:$0xff]
    %v393 = vld [vmem:[#allocation2 + $0x798] sm:$0xff]
    %v394 = vld [vmem:[#allocation2 + $0x7a0] sm:$0xff]
    %v395 = vld [vmem:[#allocation2 + $0x7a8] sm:$0xff]
    %v396 = vld [vmem:[#allocation2 + $0x7b0] sm:$0xff]
    %v397 = vld [vmem:[#allocation2 + $0x7b8] sm:$0xff]
    %v398 = vld [vmem:[#allocation2 + $0x7c0] sm:$0xff]
    %v399 = vld [vmem:[#allocation2 + $0x7c8] sm:$0xff]
    %v400 = vld [vmem:[#allocation2 + $0x7d0] sm:$0xff]
    %v401 = vld [vmem:[#allocation2 + $0x7d8] sm:$0xff]
    %v402 = vld [vmem:[#allocation2 + $0x7e0] sm:$0xff]
    %v403 = vld [vmem:[#allocation2 + $0x7e8] sm:$0xff]
    %v404 = vld [vmem:[#allocation2 + $0x7f0] sm:$0xff]
    %v405 = vld [vmem:[#allocation2 + $0x7f8] sm:$0xff]
    %v406 = vld [vmem:[#allocation2 + $0x800] sm:$0xff]
    %v407 = vld [vmem:[#allocation2 + $0x808] sm:$0xff]
    %v408 = vld [vmem:[#allocation2 + $0x810] sm:$0xff]
    %v409 = vld [vmem:[#allocation2 + $0x818] sm:$0xff]
    %v410 = vld [vmem:[#allocation2 + $0x820] sm:$0xff]
    %v411 = vld [vmem:[#allocation2 + $0x828] sm:$0xff]
    %v412 = vld [vmem:[#allocation2 + $0x830] sm:$0xff]
    %v413 = vld [vmem:[#allocation2 + $0x838] sm:$0xff]
    %v414 = vld [vmem:[#allocation2 + $0x840] sm:$0xff]
    %v415 = vld [vmem:[#allocation2 + $0x848] sm:$0xff]
    %v416 = vld [vmem:[#allocation2 + $0x850] sm:$0xff]
    %v417 = vld [vmem:[#allocation2 + $0x858] sm:$0xff]
    %v418 = vld [vmem:[#allocation2 + $0x860] sm:$0xff]
    %v419 = vld [vmem:[#allocation2 + $0x868] sm:$0xff]
    %v420 = vld [vmem:[#allocation2 + $0x870] sm:$0xff]
    %v421 = vld [vmem:[#allocation2 + $0x878] sm:$0xff]
    %v422 = vld [vmem:[#allocation2 + $0x880] sm:$0xff]
    %v423 = vld [vmem:[#allocation2 + $0x888] sm:$0xff]
    %v424 = vld [vmem:[#allocation2 + $0x890] sm:$0xff]
    %v425 = vld [vmem:[#allocation2 + $0x898] sm:$0xff]
    %v426 = vld [vmem:[#allocation2 + $0x8a0] sm:$0xff]
    %v427 = vld [vmem:[#allocation2 + $0x8a8] sm:$0xff]
    %v428 = vld [vmem:[#allocation2 + $0x8b0] sm:$0xff]
    %v429 = vld [vmem:[#allocation2 + $0x8b8] sm:$0xff]
    %v430 = vld [vmem:[#allocation2 + $0x8c0] sm:$0xff]
    %v431 = vld [vmem:[#allocation2 + $0x8c8] sm:$0xff]
    %v432 = vld [vmem:[#allocation2 + $0x8d0] sm:$0xff]
    %v433 = vld [vmem:[#allocation2 + $0x8d8] sm:$0xff]
    %v434 = vld [vmem:[#allocation2 + $0x8e0] sm:$0xff]
    %v435 = vld [vmem:[#allocation2 + $0x8e8] sm:$0xff]
    %v436 = vld [vmem:[#allocation2 + $0x8f0] sm:$0xff]
    %v437 = vld [vmem:[#allocation2 + $0x8f8] sm:$0xff]
    %v438 = vld [vmem:[#allocation2 + $0x900] sm:$0xff]
    %v439 = vld [vmem:[#allocation2 + $0x908] sm:$0xff]
    %v440 = vld [vmem:[#allocation2 + $0x910] sm:$0xff]
    %v441 = vld [vmem:[#allocation2 + $0x918] sm:$0xff]
    %v442 = vld [vmem:[#allocation2 + $0x920] sm:$0xff]
    %v443 = vld [vmem:[#allocation2 + $0x928] sm:$0xff]
    %v444 = vld [vmem:[#allocation2 + $0x930] sm:$0xff]
    %v445 = vld [vmem:[#allocation2 + $0x938] sm:$0xff]
    %v446 = vld [vmem:[#allocation2 + $0x940] sm:$0xff]
    %v447 = vld [vmem:[#allocation2 + $0x948] sm:$0xff]
    %v448 = vld [vmem:[#allocation2 + $0x950] sm:$0xff]
    %v449 = vld [vmem:[#allocation2 + $0x958] sm:$0xff]
    %v450 = vld [vmem:[#allocation2 + $0x960] sm:$0xff]
    %v451 = vld [vmem:[#allocation2 + $0x968] sm:$0xff]
    %v452 = vld [vmem:[#allocation2 + $0x970] sm:$0xff]
    %v453 = vld [vmem:[#allocation2 + $0x978] sm:$0xff]
    %v454 = vld [vmem:[#allocation2 + $0x980] sm:$0xff]
    %v455 = vld [vmem:[#allocation2 + $0x988] sm:$0xff]
    %v456 = vld [vmem:[#allocation2 + $0x990] sm:$0xff]
    %v457 = vld [vmem:[#allocation2 + $0x998] sm:$0xff]
    %v458 = vld [vmem:[#allocation2 + $0x9a0] sm:$0xff]
    %v459 = vld [vmem:[#allocation2 + $0x9a8] sm:$0xff]
    %v460 = vld [vmem:[#allocation2 + $0x9b0] sm:$0xff]
    %v461 = vld [vmem:[#allocation2 + $0x9b8] sm:$0xff]
    %v462 = vld [vmem:[#allocation2 + $0x9c0] sm:$0xff]
    %v463 = vld [vmem:[#allocation2 + $0x9c8] sm:$0xff]
    %v464 = vld [vmem:[#allocation2 + $0x9d0] sm:$0xff]
    %v465 = vld [vmem:[#allocation2 + $0x9d8] sm:$0xff]
    %v466 = vld [vmem:[#allocation2 + $0x9e0] sm:$0xff]
    %v467 = vld [vmem:[#allocation2 + $0x9e8] sm:$0xff]
    %v468 = vld [vmem:[#allocation2 + $0x9f0] sm:$0xff]
    %v469 = vld [vmem:[#allocation2 + $0x9f8] sm:$0xff]
    %v470 = vld [vmem:[#allocation2 + $0xa00] sm:$0xff]
    %v471 = vld [vmem:[#allocation2 + $0xa08] sm:$0xff]
    %v472 = vld [vmem:[#allocation2 + $0xa10] sm:$0xff]
    %v473 = vld [vmem:[#allocation2 + $0xa18] sm:$0xff]
    %v474 = vld [vmem:[#allocation2 + $0xa20] sm:$0xff]
    %v475 = vld [vmem:[#allocation2 + $0xa28] sm:$0xff]
    %v476 = vld [vmem:[#allocation2 + $0xa30] sm:$0xff]
    %v477 = vld [vmem:[#allocation2 + $0xa38] sm:$0xff]
    %v478 = vld [vmem:[#allocation2 + $0xa40] sm:$0xff]
    %v479 = vld [vmem:[#allocation2 + $0xa48] sm:$0xff]
    %v480 = vld [vmem:[#allocation2 + $0xa50] sm:$0xff]
    %v481 = vld [vmem:[#allocation2 + $0xa58] sm:$0xff]
    %v482 = vld [vmem:[#allocation2 + $0xa60] sm:$0xff]
    %v483 = vld [vmem:[#allocation2 + $0xa68] sm:$0xff]
    %v484 = vld [vmem:[#allocation2 + $0xa70] sm:$0xff]
    %v485 = vld [vmem:[#allocation2 + $0xa78] sm:$0xff]
    %v486 = vld [vmem:[#allocation2 + $0xa80] sm:$0xff]
    %v487 = vld [vmem:[#allocation2 + $0xa88] sm:$0xff]
    %v488 = vld [vmem:[#allocation2 + $0xa90] sm:$0xff]
    %v489 = vld [vmem:[#allocation2 + $0xa98] sm:$0xff]
    %v490 = vld [vmem:[#allocation2 + $0xaa0] sm:$0xff]
    %v491 = vld [vmem:[#allocation2 + $0xaa8] sm:$0xff]
    %v492 = vld [vmem:[#allocation2 + $0xab0] sm:$0xff]
    %v493 = vld [vmem:[#allocation2 + $0xab8] sm:$0xff]
    %v494 = vld [vmem:[#allocation2 + $0xac0] sm:$0xff]
    %v495 = vld [vmem:[#allocation2 + $0xac8] sm:$0xff]
    %v496 = vld [vmem:[#allocation2 + $0xad0] sm:$0xff]
    %v497 = vld [vmem:[#allocation2 + $0xad8] sm:$0xff]
    %v498 = vld [vmem:[#allocation2 + $0xae0] sm:$0xff]
    %v499 = vld [vmem:[#allocation2 + $0xae8] sm:$0xff]
    %v500 = vld [vmem:[#allocation2 + $0xaf0] sm:$0xff]
    %v501 = vld [vmem:[#allocation2 + $0xaf8] sm:$0xff]
    %v502 = vld [vmem:[#allocation2 + $0xb00] sm:$0xff]
    %v503 = vld [vmem:[#allocation2 + $0xb08] sm:$0xff]
    %v504 = vld [vmem:[#allocation2 + $0xb10] sm:$0xff]
    %v505 = vld [vmem:[#allocation2 + $0xb18] sm:$0xff]
    %v506 = vld [vmem:[#allocation2 + $0xb20] sm:$0xff]
    %v507 = vld [vmem:[#allocation2 + $0xb28] sm:$0xff]
    %v508 = vld [vmem:[#allocation2 + $0xb30] sm:$0xff]
    %v509 = vld [vmem:[#allocation2 + $0xb38] sm:$0xff]
    %v510 = vld [vmem:[#allocation2 + $0xb40] sm:$0xff]
    %v511 = vld [vmem:[#allocation2 + $0xb48] sm:$0xff]
    %v512 = vld [vmem:[#allocation2 + $0xb50] sm:$0xff]
    %v513 = vld [vmem:[#allocation2 + $0xb58] sm:$0xff]
    %v514 = vld [vmem:[#allocation2 + $0xb60] sm:$0xff]
    %v515 = vld [vmem:[#allocation2 + $0xb68] sm:$0xff]
    %v516 = vld [vmem:[#allocation2 + $0xb70] sm:$0xff]
    %v517 = vld [vmem:[#allocation2 + $0xb78] sm:$0xff]
    %v518 = vld [vmem:[#allocation2 + $0xb80] sm:$0xff]
    %v519 = vld [vmem:[#allocation2 + $0xb88] sm:$0xff]
    %v520 = vld [vmem:[#allocation2 + $0xb90] sm:$0xff]
    %v521 = vld [vmem:[#allocation2 + $0xb98] sm:$0xff]
    %v522 = vld [vmem:[#allocation2 + $0xba0] sm:$0xff]
    %v523 = vld [vmem:[#allocation2 + $0xba8] sm:$0xff]
    %v524 = vld [vmem:[#allocation2 + $0xbb0] sm:$0xff]
    %v525 = vld [vmem:[#allocation2 + $0xbb8] sm:$0xff]
    %v526 = vld [vmem:[#allocation2 + $0xbc0] sm:$0xff]
    %v527 = vld [vmem:[#allocation2 + $0xbc8] sm:$0xff]
    %v528 = vld [vmem:[#allocation2 + $0xbd0] sm:$0xff]
    %v529 = vld [vmem:[#allocation2 + $0xbd8] sm:$0xff]
    %v530 = vld [vmem:[#allocation2 + $0xbe0] sm:$0xff]
    %v531 = vld [vmem:[#allocation2 + $0xbe8] sm:$0xff]
    %v532 = vld [vmem:[#allocation2 + $0xbf0] sm:$0xff]
    %v533 = vld [vmem:[#allocation2 + $0xbf8] sm:$0xff]
    %v534 = vld [vmem:[#allocation2 + $0xc00] sm:$0xff]
    %v535 = vld [vmem:[#allocation2 + $0xc08] sm:$0xff]
    %v536 = vld [vmem:[#allocation2 + $0xc10] sm:$0xff]
    %v537 = vld [vmem:[#allocation2 + $0xc18] sm:$0xff]
    %v538 = vld [vmem:[#allocation2 + $0xc20] sm:$0xff]
    %v539 = vld [vmem:[#allocation2 + $0xc28] sm:$0xff]
    %v540 = vld [vmem:[#allocation2 + $0xc30] sm:$0xff]
    %v541 = vld [vmem:[#allocation2 + $0xc38] sm:$0xff]
    %v542 = vld [vmem:[#allocation2 + $0xc40] sm:$0xff]
    %v543 = vld [vmem:[#allocation2 + $0xc48] sm:$0xff]
    %v544 = vld [vmem:[#allocation2 + $0xc50] sm:$0xff]
    %v545 = vld [vmem:[#allocation2 + $0xc58] sm:$0xff]
    %v546 = vld [vmem:[#allocation2 + $0xc60] sm:$0xff]
    %v547 = vld [vmem:[#allocation2 + $0xc68] sm:$0xff]
    %v548 = vld [vmem:[#allocation2 + $0xc70] sm:$0xff]
    %v549 = vld [vmem:[#allocation2 + $0xc78] sm:$0xff]
    %v550 = vld [vmem:[#allocation2 + $0xc80] sm:$0xff]
    %v551 = vld [vmem:[#allocation2 + $0xc88] sm:$0xff]
    %v552 = vld [vmem:[#allocation2 + $0xc90] sm:$0xff]
    %v553 = vld [vmem:[#allocation2 + $0xc98] sm:$0xff]
    %v554 = vld [vmem:[#allocation2 + $0xca0] sm:$0xff]
    %v555 = vld [vmem:[#allocation2 + $0xca8] sm:$0xff]
    %v556 = vld [vmem:[#allocation2 + $0xcb0] sm:$0xff]
    %v557 = vld [vmem:[#allocation2 + $0xcb8] sm:$0xff]
    %v558 = vld [vmem:[#allocation2 + $0xcc0] sm:$0xff]
    %v559 = vld [vmem:[#allocation2 + $0xcc8] sm:$0xff]
    %v560 = vld [vmem:[#allocation2 + $0xcd0] sm:$0xff]
    %v561 = vld [vmem:[#allocation2 + $0xcd8] sm:$0xff]
    %v562 = vld [vmem:[#allocation2 + $0xce0] sm:$0xff]
    %v563 = vld [vmem:[#allocation2 + $0xce8] sm:$0xff]
    %v564 = vld [vmem:[#allocation2 + $0xcf0] sm:$0xff]
    %v565 = vld [vmem:[#allocation2 + $0xcf8] sm:$0xff]
    %v566 = vld [vmem:[#allocation2 + $0xd00] sm:$0xff]
    %v567 = vld [vmem:[#allocation2 + $0xd08] sm:$0xff]
    %v568 = vld [vmem:[#allocation2 + $0xd10] sm:$0xff]
    %v569 = vld [vmem:[#allocation2 + $0xd18] sm:$0xff]
    %v570 = vld [vmem:[#allocation2 + $0xd20] sm:$0xff]
    %v571 = vld [vmem:[#allocation2 + $0xd28] sm:$0xff]
    %v572 = vld [vmem:[#allocation2 + $0xd30] sm:$0xff]
    %v573 = vld [vmem:[#allocation2 + $0xd38] sm:$0xff]
    %v574 = vld [vmem:[#allocation2 + $0xd40] sm:$0xff]
    %v575 = vld [vmem:[#allocation2 + $0xd48] sm:$0xff]
    %v576 = vld [vmem:[#allocation2 + $0xd50] sm:$0xff]
    %v577 = vld [vmem:[#allocation2 + $0xd58] sm:$0xff]
    %v578 = vld [vmem:[#allocation2 + $0xd60] sm:$0xff]
    %v579 = vld [vmem:[#allocation2 + $0xd68] sm:$0xff]
    %v580 = vld [vmem:[#allocation2 + $0xd70] sm:$0xff]
    %v581 = vld [vmem:[#allocation2 + $0xd78] sm:$0xff]
    %v582 = vld [vmem:[#allocation2 + $0xd80] sm:$0xff]
    %v583 = vld [vmem:[#allocation2 + $0xd88] sm:$0xff]
    %v584 = vld [vmem:[#allocation2 + $0xd90] sm:$0xff]
    %v585 = vld [vmem:[#allocation2 + $0xd98] sm:$0xff]
    %v586 = vld [vmem:[#allocation2 + $0xda0] sm:$0xff]
    %v587 = vld [vmem:[#allocation2 + $0xda8] sm:$0xff]
    %v588 = vld [vmem:[#allocation2 + $0xdb0] sm:$0xff]
    %v589 = vld [vmem:[#allocation2 + $0xdb8] sm:$0xff]
    %v590 = vld [vmem:[#allocation2 + $0xdc0] sm:$0xff]
    %v591 = vld [vmem:[#allocation2 + $0xdc8] sm:$0xff]
    %v592 = vld [vmem:[#allocation2 + $0xdd0] sm:$0xff]
    %v593 = vld [vmem:[#allocation2 + $0xdd8] sm:$0xff]
    %v594 = vld [vmem:[#allocation2 + $0xde0] sm:$0xff]
    %v595 = vld [vmem:[#allocation2 + $0xde8] sm:$0xff]
    %v596 = vld [vmem:[#allocation2 + $0xdf0] sm:$0xff]
    %v597 = vld [vmem:[#allocation2 + $0xdf8] sm:$0xff]
    %v598 = vld [vmem:[#allocation2 + $0xe00] sm:$0xff]
    %v599 = vld [vmem:[#allocation2 + $0xe08] sm:$0xff]
    %v600 = vld [vmem:[#allocation2 + $0xe10] sm:$0xff]
    %v601 = vld [vmem:[#allocation2 + $0xe18] sm:$0xff]
    %v602 = vld [vmem:[#allocation2 + $0xe20] sm:$0xff]
    %v603 = vld [vmem:[#allocation2 + $0xe28] sm:$0xff]
    %v604 = vld [vmem:[#allocation2 + $0xe30] sm:$0xff]
    %v605 = vld [vmem:[#allocation2 + $0xe38] sm:$0xff]
    %v606 = vld [vmem:[#allocation2 + $0xe40] sm:$0xff]
    %v607 = vld [vmem:[#allocation2 + $0xe48] sm:$0xff]
    %v608 = vld [vmem:[#allocation2 + $0xe50] sm:$0xff]
    %v609 = vld [vmem:[#allocation2 + $0xe58] sm:$0xff]
    %v610 = vld [vmem:[#allocation2 + $0xe60] sm:$0xff]
    %v611 = vld [vmem:[#allocation2 + $0xe68] sm:$0xff]
    %v612 = vld [vmem:[#allocation2 + $0xe70] sm:$0xff]
    %v613 = vld [vmem:[#allocation2 + $0xe78] sm:$0xff]
    %v614 = vld [vmem:[#allocation2 + $0xe80] sm:$0xff]
    %v615 = vld [vmem:[#allocation2 + $0xe88] sm:$0xff]
    %v616 = vld [vmem:[#allocation2 + $0xe90] sm:$0xff]
    %v617 = vld [vmem:[#allocation2 + $0xe98] sm:$0xff]
    %v618 = vld [vmem:[#allocation2 + $0xea0] sm:$0xff]
    %v619 = vld [vmem:[#allocation2 + $0xea8] sm:$0xff]
    %v620 = vld [vmem:[#allocation2 + $0xeb0] sm:$0xff]
    %v621 = vld [vmem:[#allocation2 + $0xeb8] sm:$0xff]
    %v622 = vld [vmem:[#allocation2 + $0xec0] sm:$0xff]
    %v623 = vld [vmem:[#allocation2 + $0xec8] sm:$0xff]
    %v624 = vld [vmem:[#allocation2 + $0xed0] sm:$0xff]
    %v625 = vld [vmem:[#allocation2 + $0xed8] sm:$0xff]
    %v626 = vld [vmem:[#allocation2 + $0xee0] sm:$0xff]
    %v627 = vld [vmem:[#allocation2 + $0xee8] sm:$0xff]
    %v628 = vld [vmem:[#allocation2 + $0xef0] sm:$0xff]
    %v629 = vld [vmem:[#allocation2 + $0xef8] sm:$0xff]
    %v630 = vld [vmem:[#allocation2 + $0xf00] sm:$0xff]
    %v631 = vld [vmem:[#allocation2 + $0xf08] sm:$0xff]
    %v632 = vld [vmem:[#allocation2 + $0xf10] sm:$0xff]
    %v633 = vld [vmem:[#allocation2 + $0xf18] sm:$0xff]
    %v634 = vld [vmem:[#allocation2 + $0xf20] sm:$0xff]
    %v635 = vld [vmem:[#allocation2 + $0xf28] sm:$0xff]
    %v636 = vld [vmem:[#allocation2 + $0xf30] sm:$0xff]
    %v637 = vld [vmem:[#allocation2 + $0xf38] sm:$0xff]
    %v638 = vld [vmem:[#allocation2 + $0xf40] sm:$0xff]
    %v639 = vld [vmem:[#allocation2 + $0xf48] sm:$0xff]
    %v640 = vld [vmem:[#allocation2 + $0xf50] sm:$0xff]
    %v641 = vld [vmem:[#allocation2 + $0xf58] sm:$0xff]
    %v642 = vld [vmem:[#allocation2 + $0xf60] sm:$0xff]
    %v643 = vld [vmem:[#allocation2 + $0xf68] sm:$0xff]
    %v644 = vld [vmem:[#allocation2 + $0xf70] sm:$0xff]
    %v645 = vld [vmem:[#allocation2 + $0xf78] sm:$0xff]
    %v646 = vld [vmem:[#allocation2 + $0xf80] sm:$0xff]
    %v647 = vld [vmem:[#allocation2 + $0xf88] sm:$0xff]
    %v648 = vld [vmem:[#allocation2 + $0xf90] sm:$0xff]
    %v649 = vld [vmem:[#allocation2 + $0xf98] sm:$0xff]
    %v650 = vld [vmem:[#allocation2 + $0xfa0] sm:$0xff]
    %v651 = vld [vmem:[#allocation2 + $0xfa8] sm:$0xff]
    %v652 = vld [vmem:[#allocation2 + $0xfb0] sm:$0xff]
    %v653 = vld [vmem:[#allocation2 + $0xfb8] sm:$0xff]
    %v654 = vld [vmem:[#allocation2 + $0xfc0] sm:$0xff]
    %v655 = vld [vmem:[#allocation2 + $0xfc8] sm:$0xff]
    %v656 = vld [vmem:[#allocation2 + $0xfd0] sm:$0xff]
    %v657 = vld [vmem:[#allocation2 + $0xfd8] sm:$0xff]
    %v658 = vld [vmem:[#allocation2 + $0xfe0] sm:$0xff]
    %v659 = vld [vmem:[#allocation2 + $0xfe8] sm:$0xff]
    %v660 = vld [vmem:[#allocation2 + $0xff0] sm:$0xff]
    %v661 = vld [vmem:[#allocation2 + $0xff8] sm:$0xff]
    %v662 = vld [vmem:[#allocation2 + $0x1000] sm:$0xff]
    %v663 = vld [vmem:[#allocation2 + $0x1008] sm:$0xff]
    %v664 = vld [vmem:[#allocation2 + $0x1010] sm:$0xff]
    %v665 = vld [vmem:[#allocation2 + $0x1018] sm:$0xff]
    %v666 = vld [vmem:[#allocation2 + $0x1020] sm:$0xff]
    %v667 = vld [vmem:[#allocation2 + $0x1028] sm:$0xff]
    %v668 = vld [vmem:[#allocation2 + $0x1030] sm:$0xff]
    %v669 = vld [vmem:[#allocation2 + $0x1038] sm:$0xff]
    %v670 = vld [vmem:[#allocation2 + $0x1040] sm:$0xff]
    %v671 = vld [vmem:[#allocation2 + $0x1048] sm:$0xff]
    %v672 = vld [vmem:[#allocation2 + $0x1050] sm:$0xff]
    %v673 = vld [vmem:[#allocation2 + $0x1058] sm:$0xff]
    %v674 = vld [vmem:[#allocation2 + $0x1060] sm:$0xff]
    %v675 = vld [vmem:[#allocation2 + $0x1068] sm:$0xff]
    %v676 = vld [vmem:[#allocation2 + $0x1070] sm:$0xff]
    %v677 = vld [vmem:[#allocation2 + $0x1078] sm:$0xff]
    %v678 = vld [vmem:[#allocation2 + $0x1080] sm:$0xff]
    %v679 = vld [vmem:[#allocation2 + $0x1088] sm:$0xff]
    %v680 = vld [vmem:[#allocation2 + $0x1090] sm:$0xff]
    %v681 = vld [vmem:[#allocation2 + $0x1098] sm:$0xff]
    %v682 = vld [vmem:[#allocation2 + $0x10a0] sm:$0xff]
    %v683 = vld [vmem:[#allocation2 + $0x10a8] sm:$0xff]
    %v684 = vld [vmem:[#allocation2 + $0x10b0] sm:$0xff]
    %v685 = vld [vmem:[#allocation2 + $0x10b8] sm:$0xff]
    %v686 = vld [vmem:[#allocation2 + $0x10c0] sm:$0xff]
    %v687 = vld [vmem:[#allocation2 + $0x10c8] sm:$0xff]
    %v688 = vld [vmem:[#allocation2 + $0x10d0] sm:$0xff]
    %v689 = vld [vmem:[#allocation2 + $0x10d8] sm:$0xff]
    %v690 = vld [vmem:[#allocation2 + $0x10e0] sm:$0xff]
    %v691 = vld [vmem:[#allocation2 + $0x10e8] sm:$0xff]
    %v692 = vld [vmem:[#allocation2 + $0x10f0] sm:$0xff]
    %v693 = vld [vmem:[#allocation2 + $0x10f8] sm:$0xff]
    %v694 = vld [vmem:[#allocation2 + $0x1100] sm:$0xff]
    %v695 = vld [vmem:[#allocation2 + $0x1108] sm:$0xff]
    %v696 = vld [vmem:[#allocation2 + $0x1110] sm:$0xff]
    %v697 = vld [vmem:[#allocation2 + $0x1118] sm:$0xff]
    %v698 = vld [vmem:[#allocation2 + $0x1120] sm:$0xff]
    %v699 = vld [vmem:[#allocation2 + $0x1128] sm:$0xff]
    %v700 = vld [vmem:[#allocation2 + $0x1130] sm:$0xff]
    %v701 = vld [vmem:[#allocation2 + $0x1138] sm:$0xff]
    %v702 = vld [vmem:[#allocation2 + $0x1140] sm:$0xff]
    %v703 = vld [vmem:[#allocation2 + $0x1148] sm:$0xff]
    %v704 = vld [vmem:[#allocation2 + $0x1150] sm:$0xff]
    %v705 = vld [vmem:[#allocation2 + $0x1158] sm:$0xff]
    %v706 = vld [vmem:[#allocation2 + $0x1160] sm:$0xff]
    %v707 = vld [vmem:[#allocation2 + $0x1168] sm:$0xff]
    %v708 = vld [vmem:[#allocation2 + $0x1170] sm:$0xff]
    %v709 = vld [vmem:[#allocation2 + $0x1178] sm:$0xff]
    %v710 = vld [vmem:[#allocation2 + $0x1180] sm:$0xff]
    %v711 = vld [vmem:[#allocation2 + $0x1188] sm:$0xff]
    %v712 = vld [vmem:[#allocation2 + $0x1190] sm:$0xff]
    %v713 = vld [vmem:[#allocation2 + $0x1198] sm:$0xff]
    %v714 = vld [vmem:[#allocation2 + $0x11a0] sm:$0xff]
    %v715 = vld [vmem:[#allocation2 + $0x11a8] sm:$0xff]
    %v716 = vld [vmem:[#allocation2 + $0x11b0] sm:$0xff]
    %v717 = vld [vmem:[#allocation2 + $0x11b8] sm:$0xff]
    %v718 = vld [vmem:[#allocation2 + $0x11c0] sm:$0xff]
    %v719 = vld [vmem:[#allocation2 + $0x11c8] sm:$0xff]
    %v720 = vld [vmem:[#allocation2 + $0x11d0] sm:$0xff]
    %v721 = vld [vmem:[#allocation2 + $0x11d8] sm:$0xff]
    %v722 = vld [vmem:[#allocation2 + $0x11e0] sm:$0xff]
    %v723 = vld [vmem:[#allocation2 + $0x11e8] sm:$0xff]
    %v724 = vld [vmem:[#allocation2 + $0x11f0] sm:$0xff]
    %v725 = vld [vmem:[#allocation2 + $0x11f8] sm:$0xff]
    %v726 = vld [vmem:[#allocation2 + $0x1200] sm:$0xff]
    %v727 = vld [vmem:[#allocation2 + $0x1208] sm:$0xff]
    %v728 = vld [vmem:[#allocation2 + $0x1210] sm:$0xff]
    %v729 = vld [vmem:[#allocation2 + $0x1218] sm:$0xff]
    %v730 = vld [vmem:[#allocation2 + $0x1220] sm:$0xff]
    %v731 = vld [vmem:[#allocation2 + $0x1228] sm:$0xff]
    %v732 = vld [vmem:[#allocation2 + $0x1230] sm:$0xff]
    %v733 = vld [vmem:[#allocation2 + $0x1238] sm:$0xff]
    %v734 = vld [vmem:[#allocation2 + $0x1240] sm:$0xff]
    %v735 = vld [vmem:[#allocation2 + $0x1248] sm:$0xff]
    %v736 = vld [vmem:[#allocation2 + $0x1250] sm:$0xff]
    %v737 = vld [vmem:[#allocation2 + $0x1258] sm:$0xff]
    %v738 = vld [vmem:[#allocation2 + $0x1260] sm:$0xff]
    %v739 = vld [vmem:[#allocation2 + $0x1268] sm:$0xff]
    %v740 = vld [vmem:[#allocation2 + $0x1270] sm:$0xff]
    %v741 = vld [vmem:[#allocation2 + $0x1278] sm:$0xff]
    %v742 = vld [vmem:[#allocation2 + $0x1280] sm:$0xff]
    %v743 = vld [vmem:[#allocation2 + $0x1288] sm:$0xff]
    %v744 = vld [vmem:[#allocation2 + $0x1290] sm:$0xff]
    %v745 = vld [vmem:[#allocation2 + $0x1298] sm:$0xff]
    %v746 = vld [vmem:[#allocation2 + $0x12a0] sm:$0xff]
    %v747 = vld [vmem:[#allocation2 + $0x12a8] sm:$0xff]
    %v748 = vld [vmem:[#allocation2 + $0x12b0] sm:$0xff]
    %v749 = vld [vmem:[#allocation2 + $0x12b8] sm:$0xff]
    %v750 = vld [vmem:[#allocation2 + $0x12c0] sm:$0xff]
    %v751 = vld [vmem:[#allocation2 + $0x12c8] sm:$0xff]
    %v752 = vld [vmem:[#allocation2 + $0x12d0] sm:$0xff]
    %v753 = vld [vmem:[#allocation2 + $0x12d8] sm:$0xff]
    %v754 = vld [vmem:[#allocation2 + $0x12e0] sm:$0xff]
    %v755 = vld [vmem:[#allocation2 + $0x12e8] sm:$0xff]
    %v756 = vld [vmem:[#allocation2 + $0x12f0] sm:$0xff]
    %v757 = vld [vmem:[#allocation2 + $0x12f8] sm:$0xff]
    %v758 = vld [vmem:[#allocation2 + $0x1300] sm:$0xff]
    %v759 = vld [vmem:[#allocation2 + $0x1308] sm:$0xff]
    %v760 = vld [vmem:[#allocation2 + $0x1310] sm:$0xff]
    %v761 = vld [vmem:[#allocation2 + $0x1318] sm:$0xff]
    %v762 = vld [vmem:[#allocation2 + $0x1320] sm:$0xff]
    %v763 = vld [vmem:[#allocation2 + $0x1328] sm:$0xff]
    %v764 = vld [vmem:[#allocation2 + $0x1330] sm:$0xff]
    %v765 = vld [vmem:[#allocation2 + $0x1338] sm:$0xff]
    %v766 = vld [vmem:[#allocation2 + $0x1340] sm:$0xff]
    %v767 = vld [vmem:[#allocation2 + $0x1348] sm:$0xff]
    %v768 = vld [vmem:[#allocation2 + $0x1350] sm:$0xff]
    %v769 = vld [vmem:[#allocation2 + $0x1358] sm:$0xff]
    %v770 = vld [vmem:[#allocation2 + $0x1360] sm:$0xff]
    %v771 = vld [vmem:[#allocation2 + $0x1368] sm:$0xff]
    %v772 = vld [vmem:[#allocation2 + $0x1370] sm:$0xff]
    %v773 = vld [vmem:[#allocation2 + $0x1378] sm:$0xff]
    %v774 = vld [vmem:[#allocation2 + $0x1380] sm:$0xff]
    %v775 = vld [vmem:[#allocation2 + $0x1388] sm:$0xff]
    %v776 = vld [vmem:[#allocation2 + $0x1390] sm:$0xff]
    %v777 = vld [vmem:[#allocation2 + $0x1398] sm:$0xff]
    %v778 = vld [vmem:[#allocation2 + $0x13a0] sm:$0xff]
    %v779 = vld [vmem:[#allocation2 + $0x13a8] sm:$0xff]
    %v780 = vld [vmem:[#allocation2 + $0x13b0] sm:$0xff]
    %v781 = vld [vmem:[#allocation2 + $0x13b8] sm:$0xff]
    %v782 = vld [vmem:[#allocation2 + $0x13c0] sm:$0xff]
    %v783 = vld [vmem:[#allocation2 + $0x13c8] sm:$0xff]
    %v784 = vld [vmem:[#allocation2 + $0x13d0] sm:$0xff]
    %v785 = vld [vmem:[#allocation2 + $0x13d8] sm:$0xff]
    %v786 = vld [vmem:[#allocation2 + $0x13e0] sm:$0xff]
    %v787 = vld [vmem:[#allocation2 + $0x13e8] sm:$0xff]
    %v788 = vld [vmem:[#allocation2 + $0x13f0] sm:$0xff]
    %v789 = vld [vmem:[#allocation2 + $0x13f8] sm:$0xff]
    %v790 = vld [vmem:[#allocation2 + $0x1400] sm:$0xff]
    %v791 = vld [vmem:[#allocation2 + $0x1408] sm:$0xff]
    %v792 = vld [vmem:[#allocation2 + $0x1410] sm:$0xff]
    %v793 = vld [vmem:[#allocation2 + $0x1418] sm:$0xff]
    %v794 = vld [vmem:[#allocation2 + $0x1420] sm:$0xff]
    %v795 = vld [vmem:[#allocation2 + $0x1428] sm:$0xff]
    %v796 = vld [vmem:[#allocation2 + $0x1430] sm:$0xff]
    %v797 = vld [vmem:[#allocation2 + $0x1438] sm:$0xff]
    %v798 = vld [vmem:[#allocation2 + $0x1440] sm:$0xff]
    %v799 = vld [vmem:[#allocation2 + $0x1448] sm:$0xff]
    %v800 = vld [vmem:[#allocation2 + $0x1450] sm:$0xff]
    %v801 = vld [vmem:[#allocation2 + $0x1458] sm:$0xff]
    %v802 = vld [vmem:[#allocation2 + $0x1460] sm:$0xff]
    %v803 = vld [vmem:[#allocation2 + $0x1468] sm:$0xff]
    %v804 = vld [vmem:[#allocation2 + $0x1470] sm:$0xff]
    %v805 = vld [vmem:[#allocation2 + $0x1478] sm:$0xff]
    %v806 = vld [vmem:[#allocation2 + $0x1480] sm:$0xff]
    %v807 = vld [vmem:[#allocation2 + $0x1488] sm:$0xff]
    %v808 = vld [vmem:[#allocation2 + $0x1490] sm:$0xff]
    %v809 = vld [vmem:[#allocation2 + $0x1498] sm:$0xff]
    %v810 = vld [vmem:[#allocation2 + $0x14a0] sm:$0xff]
    %v811 = vld [vmem:[#allocation2 + $0x14a8] sm:$0xff]
    %v812 = vld [vmem:[#allocation2 + $0x14b0] sm:$0xff]
    %v813 = vld [vmem:[#allocation2 + $0x14b8] sm:$0xff]
    %v814 = vld [vmem:[#allocation2 + $0x14c0] sm:$0xff]
    %v815 = vld [vmem:[#allocation2 + $0x14c8] sm:$0xff]
    %v816 = vld [vmem:[#allocation2 + $0x14d0] sm:$0xff]
    %v817 = vld [vmem:[#allocation2 + $0x14d8] sm:$0xff]
    %v818 = vld [vmem:[#allocation2 + $0x14e0] sm:$0xff]
    %v819 = vld [vmem:[#allocation2 + $0x14e8] sm:$0xff]
    %v820 = vld [vmem:[#allocation2 + $0x14f0] sm:$0xff]
    %v821 = vld [vmem:[#allocation2 + $0x14f8] sm:$0xff]
    %v822 = vld [vmem:[#allocation2 + $0x1500] sm:$0xff]
    %v823 = vld [vmem:[#allocation2 + $0x1508] sm:$0xff]
    %v824 = vld [vmem:[#allocation2 + $0x1510] sm:$0xff]
    %v825 = vld [vmem:[#allocation2 + $0x1518] sm:$0xff]
    %v826 = vld [vmem:[#allocation2 + $0x1520] sm:$0xff]
    %v827 = vld [vmem:[#allocation2 + $0x1528] sm:$0xff]
    %v828 = vld [vmem:[#allocation2 + $0x1530] sm:$0xff]
    %v829 = vld [vmem:[#allocation2 + $0x1538] sm:$0xff]
    %v830 = vld [vmem:[#allocation2 + $0x1540] sm:$0xff]
    %v831 = vld [vmem:[#allocation2 + $0x1548] sm:$0xff]
    %v832 = vld [vmem:[#allocation2 + $0x1550] sm:$0xff]
    %v833 = vld [vmem:[#allocation2 + $0x1558] sm:$0xff]
    %v834 = vld [vmem:[#allocation2 + $0x1560] sm:$0xff]
    %v835 = vld [vmem:[#allocation2 + $0x1568] sm:$0xff]
    %v836 = vld [vmem:[#allocation2 + $0x1570] sm:$0xff]
    %v837 = vld [vmem:[#allocation2 + $0x1578] sm:$0xff]
    %v838 = vld [vmem:[#allocation2 + $0x1580] sm:$0xff]
    %v839 = vld [vmem:[#allocation2 + $0x1588] sm:$0xff]
    %v840 = vld [vmem:[#allocation2 + $0x1590] sm:$0xff]
    %v841 = vld [vmem:[#allocation2 + $0x1598] sm:$0xff]
    %v842 = vld [vmem:[#allocation2 + $0x15a0] sm:$0xff]
    %v843 = vld [vmem:[#allocation2 + $0x15a8] sm:$0xff]
    %v844 = vld [vmem:[#allocation2 + $0x15b0] sm:$0xff]
    %v845 = vld [vmem:[#allocation2 + $0x15b8] sm:$0xff]
    %v846 = vld [vmem:[#allocation2 + $0x15c0] sm:$0xff]
    %v847 = vld [vmem:[#allocation2 + $0x15c8] sm:$0xff]
    %v848 = vld [vmem:[#allocation2 + $0x15d0] sm:$0xff]
    %v849 = vld [vmem:[#allocation2 + $0x15d8] sm:$0xff]
    %v850 = vld [vmem:[#allocation2 + $0x15e0] sm:$0xff]
    %v851 = vld [vmem:[#allocation2 + $0x15e8] sm:$0xff]
    %v852 = vld [vmem:[#allocation2 + $0x15f0] sm:$0xff]
    %v853 = vld [vmem:[#allocation2 + $0x15f8] sm:$0xff]
    %v854 = vld [vmem:[#allocation2 + $0x1600] sm:$0xff]
    %v855 = vld [vmem:[#allocation2 + $0x1608] sm:$0xff]
    %v856 = vld [vmem:[#allocation2 + $0x1610] sm:$0xff]
    %v857 = vld [vmem:[#allocation2 + $0x1618] sm:$0xff]
    %v858 = vld [vmem:[#allocation2 + $0x1620] sm:$0xff]
    %v859 = vld [vmem:[#allocation2 + $0x1628] sm:$0xff]
    %v860 = vld [vmem:[#allocation2 + $0x1630] sm:$0xff]
    %v861 = vld [vmem:[#allocation2 + $0x1638] sm:$0xff]
    %v862 = vld [vmem:[#allocation2 + $0x1640] sm:$0xff]
    %v863 = vld [vmem:[#allocation2 + $0x1648] sm:$0xff]
    %v864 = vld [vmem:[#allocation2 + $0x1650] sm:$0xff]
    %v865 = vld [vmem:[#allocation2 + $0x1658] sm:$0xff]
    %v866 = vld [vmem:[#allocation2 + $0x1660] sm:$0xff]
    %v867 = vld [vmem:[#allocation2 + $0x1668] sm:$0xff]
    %v868 = vld [vmem:[#allocation2 + $0x1670] sm:$0xff]
    %v869 = vld [vmem:[#allocation2 + $0x1678] sm:$0xff]
    %v870 = vld [vmem:[#allocation2 + $0x1680] sm:$0xff]
    %v871 = vld [vmem:[#allocation2 + $0x1688] sm:$0xff]
    %v872 = vld [vmem:[#allocation2 + $0x1690] sm:$0xff]
    %v873 = vld [vmem:[#allocation2 + $0x1698] sm:$0xff]
    %v874 = vld [vmem:[#allocation2 + $0x16a0] sm:$0xff]
    %v875 = vld [vmem:[#allocation2 + $0x16a8] sm:$0xff]
    %v876 = vld [vmem:[#allocation2 + $0x16b0] sm:$0xff]
    %v877 = vld [vmem:[#allocation2 + $0x16b8] sm:$0xff]
    %v878 = vld [vmem:[#allocation2 + $0x16c0] sm:$0xff]
    %v879 = vld [vmem:[#allocation2 + $0x16c8] sm:$0xff]
    %v880 = vld [vmem:[#allocation2 + $0x16d0] sm:$0xff]
    %v881 = vld [vmem:[#allocation2 + $0x16d8] sm:$0xff]
    %v882 = vld [vmem:[#allocation2 + $0x16e0] sm:$0xff]
    %v883 = vld [vmem:[#allocation2 + $0x16e8] sm:$0xff]
    %v884 = vld [vmem:[#allocation2 + $0x16f0] sm:$0xff]
    %v885 = vld [vmem:[#allocation2 + $0x16f8] sm:$0xff]
    %v886 = vld [vmem:[#allocation2 + $0x1700] sm:$0xff]
    %v887 = vld [vmem:[#allocation2 + $0x1708] sm:$0xff]
    %v888 = vld [vmem:[#allocation2 + $0x1710] sm:$0xff]
    %v889 = vld [vmem:[#allocation2 + $0x1718] sm:$0xff]
    %v890 = vld [vmem:[#allocation2 + $0x1720] sm:$0xff]
    %v891 = vld [vmem:[#allocation2 + $0x1728] sm:$0xff]
    %v892 = vld [vmem:[#allocation2 + $0x1730] sm:$0xff]
    %v893 = vld [vmem:[#allocation2 + $0x1738] sm:$0xff]
    %v894 = vld [vmem:[#allocation2 + $0x1740] sm:$0xff]
    %v895 = vld [vmem:[#allocation2 + $0x1748] sm:$0xff]
    %v896 = vld [vmem:[#allocation2 + $0x1750] sm:$0xff]
    %v897 = vld [vmem:[#allocation2 + $0x1758] sm:$0xff]
    %v898 = vld [vmem:[#allocation2 + $0x1760] sm:$0xff]
    %v899 = vld [vmem:[#allocation2 + $0x1768] sm:$0xff]
    %v900 = vld [vmem:[#allocation2 + $0x1770] sm:$0xff]
    %v901 = vld [vmem:[#allocation2 + $0x1778] sm:$0xff]
    %v902 = vld [vmem:[#allocation2 + $0x1780] sm:$0xff]
    %v903 = vld [vmem:[#allocation2 + $0x1788] sm:$0xff]
    %v904 = vld [vmem:[#allocation2 + $0x1790] sm:$0xff]
    %v905 = vld [vmem:[#allocation2 + $0x1798] sm:$0xff]
    %v906 = vld [vmem:[#allocation2 + $0x17a0] sm:$0xff]
    %v907 = vld [vmem:[#allocation2 + $0x17a8] sm:$0xff]
    %v908 = vld [vmem:[#allocation2 + $0x17b0] sm:$0xff]
    %v909 = vld [vmem:[#allocation2 + $0x17b8] sm:$0xff]
    %v910 = vld [vmem:[#allocation2 + $0x17c0] sm:$0xff]
    %v911 = vld [vmem:[#allocation2 + $0x17c8] sm:$0xff]
    %v912 = vld [vmem:[#allocation2 + $0x17d0] sm:$0xff]
    %v913 = vld [vmem:[#allocation2 + $0x17d8] sm:$0xff]
    %v914 = vld [vmem:[#allocation2 + $0x17e0] sm:$0xff]
    %v915 = vld [vmem:[#allocation2 + $0x17e8] sm:$0xff]
    %v916 = vld [vmem:[#allocation2 + $0x17f0] sm:$0xff]
    %v917 = vld [vmem:[#allocation2 + $0x17f8] sm:$0xff]
    %v918 = vld [vmem:[#allocation2 + $0x1800] sm:$0xff]
    %v919 = vld [vmem:[#allocation2 + $0x1808] sm:$0xff]
    %v920 = vld [vmem:[#allocation2 + $0x1810] sm:$0xff]
    %v921 = vld [vmem:[#allocation2 + $0x1818] sm:$0xff]
    %v922 = vld [vmem:[#allocation2 + $0x1820] sm:$0xff]
    %v923 = vld [vmem:[#allocation2 + $0x1828] sm:$0xff]
    %v924 = vld [vmem:[#allocation2 + $0x1830] sm:$0xff]
    %v925 = vld [vmem:[#allocation2 + $0x1838] sm:$0xff]
    %v926 = vld [vmem:[#allocation2 + $0x1840] sm:$0xff]
    %v927 = vld [vmem:[#allocation2 + $0x1848] sm:$0xff]
    %v928 = vld [vmem:[#allocation2 + $0x1850] sm:$0xff]
    %v929 = vld [vmem:[#allocation2 + $0x1858] sm:$0xff]
    %v930 = vld [vmem:[#allocation2 + $0x1860] sm:$0xff]
    %v931 = vld [vmem:[#allocation2 + $0x1868] sm:$0xff]
    %v932 = vld [vmem:[#allocation2 + $0x1870] sm:$0xff]
    %v933 = vld [vmem:[#allocation2 + $0x1878] sm:$0xff]
    %v934 = vld [vmem:[#allocation2 + $0x1880] sm:$0xff]
    %v935 = vld [vmem:[#allocation2 + $0x1888] sm:$0xff]
    %v936 = vld [vmem:[#allocation2 + $0x1890] sm:$0xff]
    %v937 = vld [vmem:[#allocation2 + $0x1898] sm:$0xff]
    %v938 = vld [vmem:[#allocation2 + $0x18a0] sm:$0xff]
    %v939 = vld [vmem:[#allocation2 + $0x18a8] sm:$0xff]
    %v940 = vld [vmem:[#allocation2 + $0x18b0] sm:$0xff]
    %v941 = vld [vmem:[#allocation2 + $0x18b8] sm:$0xff]
    %v942 = vld [vmem:[#allocation2 + $0x18c0] sm:$0xff]
    %v943 = vld [vmem:[#allocation2 + $0x18c8] sm:$0xff]
    %v944 = vld [vmem:[#allocation2 + $0x18d0] sm:$0xff]
    %v945 = vld [vmem:[#allocation2 + $0x18d8] sm:$0xff]
    %v946 = vld [vmem:[#allocation2 + $0x18e0] sm:$0xff]
    %v947 = vld [vmem:[#allocation2 + $0x18e8] sm:$0xff]
    %v948 = vld [vmem:[#allocation2 + $0x18f0] sm:$0xff]
    %v949 = vld [vmem:[#allocation2 + $0x18f8] sm:$0xff]
    %v950 = vld [vmem:[#allocation2 + $0x1900] sm:$0xff]
    %v951 = vld [vmem:[#allocation2 + $0x1908] sm:$0xff]
    %v952 = vld [vmem:[#allocation2 + $0x1910] sm:$0xff]
    %v953 = vld [vmem:[#allocation2 + $0x1918] sm:$0xff]
    %v954 = vld [vmem:[#allocation2 + $0x1920] sm:$0xff]
    %v955 = vld [vmem:[#allocation2 + $0x1928] sm:$0xff]
    %v956 = vld [vmem:[#allocation2 + $0x1930] sm:$0xff]
    %v957 = vld [vmem:[#allocation2 + $0x1938] sm:$0xff]
    %v958 = vld [vmem:[#allocation2 + $0x1940] sm:$0xff]
    %v959 = vld [vmem:[#allocation2 + $0x1948] sm:$0xff]
    %v960 = vld [vmem:[#allocation2 + $0x1950] sm:$0xff]
    %v961 = vld [vmem:[#allocation2 + $0x1958] sm:$0xff]
    %v962 = vld [vmem:[#allocation2 + $0x1960] sm:$0xff]
    %v963 = vld [vmem:[#allocation2 + $0x1968] sm:$0xff]
    %v964 = vld [vmem:[#allocation2 + $0x1970] sm:$0xff]
    %v965 = vld [vmem:[#allocation2 + $0x1978] sm:$0xff]
    %v966 = vld [vmem:[#allocation2 + $0x1980] sm:$0xff]
    %v967 = vld [vmem:[#allocation2 + $0x1988] sm:$0xff]
    %v968 = vld [vmem:[#allocation2 + $0x1990] sm:$0xff]
    %v969 = vld [vmem:[#allocation2 + $0x1998] sm:$0xff]
    %v970 = vld [vmem:[#allocation2 + $0x19a0] sm:$0xff]
    %v971 = vld [vmem:[#allocation2 + $0x19a8] sm:$0xff]
    %v972 = vld [vmem:[#allocation2 + $0x19b0] sm:$0xff]
    %v973 = vld [vmem:[#allocation2 + $0x19b8] sm:$0xff]
    %v974 = vld [vmem:[#allocation2 + $0x19c0] sm:$0xff]
    %v975 = vld [vmem:[#allocation2 + $0x19c8] sm:$0xff]
    %v976 = vld [vmem:[#allocation2 + $0x19d0] sm:$0xff]
    %v977 = vld [vmem:[#allocation2 + $0x19d8] sm:$0xff]
    %v978 = vld [vmem:[#allocation2 + $0x19e0] sm:$0xff]
    %v979 = vld [vmem:[#allocation2 + $0x19e8] sm:$0xff]
    %v980 = vld [vmem:[#allocation2 + $0x19f0] sm:$0xff]
    %v981 = vld [vmem:[#allocation2 + $0x19f8] sm:$0xff]
    %v982 = vld [vmem:[#allocation2 + $0x1a00] sm:$0xff]
    %v983 = vld [vmem:[#allocation2 + $0x1a08] sm:$0xff]
    %v984 = vld [vmem:[#allocation2 + $0x1a10] sm:$0xff]
    %v985 = vld [vmem:[#allocation2 + $0x1a18] sm:$0xff]
    %v986 = vld [vmem:[#allocation2 + $0x1a20] sm:$0xff]
    %v987 = vld [vmem:[#allocation2 + $0x1a28] sm:$0xff]
    %v988 = vld [vmem:[#allocation2 + $0x1a30] sm:$0xff]
    %v989 = vld [vmem:[#allocation2 + $0x1a38] sm:$0xff]
    %v990 = vld [vmem:[#allocation2 + $0x1a40] sm:$0xff]
    %v991 = vld [vmem:[#allocation2 + $0x1a48] sm:$0xff]
    %v992 = vld [vmem:[#allocation2 + $0x1a50] sm:$0xff]
    %v993 = vld [vmem:[#allocation2 + $0x1a58] sm:$0xff]
    %v994 = vld [vmem:[#allocation2 + $0x1a60] sm:$0xff]
    %v995 = vld [vmem:[#allocation2 + $0x1a68] sm:$0xff]
    %v996 = vld [vmem:[#allocation2 + $0x1a70] sm:$0xff]
    %v997 = vld [vmem:[#allocation2 + $0x1a78] sm:$0xff]
    %v998 = vld [vmem:[#allocation2 + $0x1a80] sm:$0xff]
    %v999 = vld [vmem:[#allocation2 + $0x1a88] sm:$0xff]
    %v1000 = vld [vmem:[#allocation2 + $0x1a90] sm:$0xff]
    %v1001 = vld [vmem:[#allocation2 + $0x1a98] sm:$0xff]
    %v1002 = vld [vmem:[#allocation2 + $0x1aa0] sm:$0xff]
    %v1003 = vld [vmem:[#allocation2 + $0x1aa8] sm:$0xff]
    %v1004 = vld [vmem:[#allocation2 + $0x1ab0] sm:$0xff]
    %v1005 = vld [vmem:[#allocation2 + $0x1ab8] sm:$0xff]
    %v1006 = vld [vmem:[#allocation2 + $0x1ac0] sm:$0xff]
    %v1007 = vld [vmem:[#allocation2 + $0x1ac8] sm:$0xff]
    %v1008 = vld [vmem:[#allocation2 + $0x1ad0] sm:$0xff]
    %v1009 = vld [vmem:[#allocation2 + $0x1ad8] sm:$0xff]
    %v1010 = vld [vmem:[#allocation2 + $0x1ae0] sm:$0xff]
    %v1011 = vld [vmem:[#allocation2 + $0x1ae8] sm:$0xff]
    %v1012 = vld [vmem:[#allocation2 + $0x1af0] sm:$0xff]
    %v1013 = vld [vmem:[#allocation2 + $0x1af8] sm:$0xff]
    %v1014 = vld [vmem:[#allocation2 + $0x1b00] sm:$0xff]
    %v1015 = vld [vmem:[#allocation2 + $0x1b08] sm:$0xff]
    %v1016 = vld [vmem:[#allocation2 + $0x1b10] sm:$0xff]
    %v1017 = vld [vmem:[#allocation2 + $0x1b18] sm:$0xff]
    %v1018 = vld [vmem:[#allocation2 + $0x1b20] sm:$0xff]
    %v1019 = vld [vmem:[#allocation2 + $0x1b28] sm:$0xff]
    %v1020 = vld [vmem:[#allocation2 + $0x1b30] sm:$0xff]
    %v1021 = vld [vmem:[#allocation2 + $0x1b38] sm:$0xff]
    %v1022 = vld [vmem:[#allocation2 + $0x1b40] sm:$0xff]
    %v1023 = vld [vmem:[#allocation2 + $0x1b48] sm:$0xff]
    %v1024 = vld [vmem:[#allocation2 + $0x1b50] sm:$0xff]
    %v1025 = vld [vmem:[#allocation2 + $0x1b58] sm:$0xff]
    %v1026 = vld [vmem:[#allocation2 + $0x1b60] sm:$0xff]
    %v1027 = vld [vmem:[#allocation2 + $0x1b68] sm:$0xff]
    %v1028 = vld [vmem:[#allocation2 + $0x1b70] sm:$0xff]
    %v1029 = vld [vmem:[#allocation2 + $0x1b78] sm:$0xff]
    %v1030 = vld [vmem:[#allocation2 + $0x1b80] sm:$0xff]
    %v1031 = vld [vmem:[#allocation2 + $0x1b88] sm:$0xff]
    %v1032 = vld [vmem:[#allocation2 + $0x1b90] sm:$0xff]
    %v1033 = vld [vmem:[#allocation2 + $0x1b98] sm:$0xff]
    %v1034 = vld [vmem:[#allocation2 + $0x1ba0] sm:$0xff]
    %v1035 = vld [vmem:[#allocation2 + $0x1ba8] sm:$0xff]
    %v1036 = vld [vmem:[#allocation2 + $0x1bb0] sm:$0xff]
    %v1037 = vld [vmem:[#allocation2 + $0x1bb8] sm:$0xff]
    %v1038 = vld [vmem:[#allocation2 + $0x1bc0] sm:$0xff]
    %v1039 = vld [vmem:[#allocation2 + $0x1bc8] sm:$0xff]
    %v1040 = vld [vmem:[#allocation2 + $0x1bd0] sm:$0xff]
    %v1041 = vld [vmem:[#allocation2 + $0x1bd8] sm:$0xff]
    %v1042 = vld [vmem:[#allocation2 + $0x1be0] sm:$0xff]
    %v1043 = vld [vmem:[#allocation2 + $0x1be8] sm:$0xff]
    %v1044 = vld [vmem:[#allocation2 + $0x1bf0] sm:$0xff]
    %v1045 = vld [vmem:[#allocation2 + $0x1bf8] sm:$0xff]
    %v1046 = vld [vmem:[#allocation2 + $0x1c00] sm:$0xff]
    %v1047 = vld [vmem:[#allocation2 + $0x1c08] sm:$0xff]
    %v1048 = vld [vmem:[#allocation2 + $0x1c10] sm:$0xff]
    %v1049 = vld [vmem:[#allocation2 + $0x1c18] sm:$0xff]
    %v1050 = vld [vmem:[#allocation2 + $0x1c20] sm:$0xff]
    %v1051 = vld [vmem:[#allocation2 + $0x1c28] sm:$0xff]
    %v1052 = vld [vmem:[#allocation2 + $0x1c30] sm:$0xff]
    %v1053 = vld [vmem:[#allocation2 + $0x1c38] sm:$0xff]
    %v1054 = vld [vmem:[#allocation2 + $0x1c40] sm:$0xff]
    %v1055 = vld [vmem:[#allocation2 + $0x1c48] sm:$0xff]
    %v1056 = vld [vmem:[#allocation2 + $0x1c50] sm:$0xff]
    %v1057 = vld [vmem:[#allocation2 + $0x1c58] sm:$0xff]
    %v1058 = vld [vmem:[#allocation2 + $0x1c60] sm:$0xff]
    %v1059 = vld [vmem:[#allocation2 + $0x1c68] sm:$0xff]
    %v1060 = vld [vmem:[#allocation2 + $0x1c70] sm:$0xff]
    %v1061 = vld [vmem:[#allocation2 + $0x1c78] sm:$0xff]
    %v1062 = vld [vmem:[#allocation2 + $0x1c80] sm:$0xff]
    %v1063 = vld [vmem:[#allocation2 + $0x1c88] sm:$0xff]
    %v1064 = vld [vmem:[#allocation2 + $0x1c90] sm:$0xff]
    %v1065 = vld [vmem:[#allocation2 + $0x1c98] sm:$0xff]
    %v1066 = vld [vmem:[#allocation2 + $0x1ca0] sm:$0xff]
    %v1067 = vld [vmem:[#allocation2 + $0x1ca8] sm:$0xff]
    %v1068 = vld [vmem:[#allocation2 + $0x1cb0] sm:$0xff]
    %v1069 = vld [vmem:[#allocation2 + $0x1cb8] sm:$0xff]
    %v1070 = vld [vmem:[#allocation2 + $0x1cc0] sm:$0xff]
    %v1071 = vld [vmem:[#allocation2 + $0x1cc8] sm:$0xff]
    %v1072 = vld [vmem:[#allocation2 + $0x1cd0] sm:$0xff]
    %v1073 = vld [vmem:[#allocation2 + $0x1cd8] sm:$0xff]
    %v1074 = vld [vmem:[#allocation2 + $0x1ce0] sm:$0xff]
    %v1075 = vld [vmem:[#allocation2 + $0x1ce8] sm:$0xff]
    %v1076 = vld [vmem:[#allocation2 + $0x1cf0] sm:$0xff]
    %v1077 = vld [vmem:[#allocation2 + $0x1cf8] sm:$0xff]
    %v1078 = vld [vmem:[#allocation2 + $0x1d00] sm:$0xff]
    %v1079 = vld [vmem:[#allocation2 + $0x1d08] sm:$0xff]
    %v1080 = vld [vmem:[#allocation2 + $0x1d10] sm:$0xff]
    %v1081 = vld [vmem:[#allocation2 + $0x1d18] sm:$0xff]
    %v1082 = vld [vmem:[#allocation2 + $0x1d20] sm:$0xff]
    %v1083 = vld [vmem:[#allocation2 + $0x1d28] sm:$0xff]
    %v1084 = vld [vmem:[#allocation2 + $0x1d30] sm:$0xff]
    %v1085 = vld [vmem:[#allocation2 + $0x1d38] sm:$0xff]
    %v1086 = vld [vmem:[#allocation2 + $0x1d40] sm:$0xff]
    %v1087 = vld [vmem:[#allocation2 + $0x1d48] sm:$0xff]
    %v1088 = vld [vmem:[#allocation2 + $0x1d50] sm:$0xff]
    %v1089 = vld [vmem:[#allocation2 + $0x1d58] sm:$0xff]
    %v1090 = vld [vmem:[#allocation2 + $0x1d60] sm:$0xff]
    %v1091 = vld [vmem:[#allocation2 + $0x1d68] sm:$0xff]
    %v1092 = vld [vmem:[#allocation2 + $0x1d70] sm:$0xff]
    %v1093 = vld [vmem:[#allocation2 + $0x1d78] sm:$0xff]
    %v1094 = vld [vmem:[#allocation2 + $0x1d80] sm:$0xff]
    %v1095 = vld [vmem:[#allocation2 + $0x1d88] sm:$0xff]
    %v1096 = vld [vmem:[#allocation2 + $0x1d90] sm:$0xff]
    %v1097 = vld [vmem:[#allocation2 + $0x1d98] sm:$0xff]
    %v1098 = vld [vmem:[#allocation2 + $0x1da0] sm:$0xff]
    %v1099 = vld [vmem:[#allocation2 + $0x1da8] sm:$0xff]
    %v1100 = vld [vmem:[#allocation2 + $0x1db0] sm:$0xff]
    %v1101 = vld [vmem:[#allocation2 + $0x1db8] sm:$0xff]
    %v1102 = vld [vmem:[#allocation2 + $0x1dc0] sm:$0xff]
    %v1103 = vld [vmem:[#allocation2 + $0x1dc8] sm:$0xff]
    %v1104 = vld [vmem:[#allocation2 + $0x1dd0] sm:$0xff]
    %v1105 = vld [vmem:[#allocation2 + $0x1dd8] sm:$0xff]
    %v1106 = vld [vmem:[#allocation2 + $0x1de0] sm:$0xff]
    %v1107 = vld [vmem:[#allocation2 + $0x1de8] sm:$0xff]
    %v1108 = vld [vmem:[#allocation2 + $0x1df0] sm:$0xff]
    %v1109 = vld [vmem:[#allocation2 + $0x1df8] sm:$0xff]
    %v1110 = vld [vmem:[#allocation2 + $0x1e00] sm:$0xff]
    %v1111 = vld [vmem:[#allocation2 + $0x1e08] sm:$0xff]
    %v1112 = vld [vmem:[#allocation2 + $0x1e10] sm:$0xff]
    %v1113 = vld [vmem:[#allocation2 + $0x1e18] sm:$0xff]
    %v1114 = vld [vmem:[#allocation2 + $0x1e20] sm:$0xff]
    %v1115 = vld [vmem:[#allocation2 + $0x1e28] sm:$0xff]
    %v1116 = vld [vmem:[#allocation2 + $0x1e30] sm:$0xff]
    %v1117 = vld [vmem:[#allocation2 + $0x1e38] sm:$0xff]
    %v1118 = vld [vmem:[#allocation2 + $0x1e40] sm:$0xff]
    %v1119 = vld [vmem:[#allocation2 + $0x1e48] sm:$0xff]
    %v1120 = vld [vmem:[#allocation2 + $0x1e50] sm:$0xff]
    %v1121 = vld [vmem:[#allocation2 + $0x1e58] sm:$0xff]
    %v1122 = vld [vmem:[#allocation2 + $0x1e60] sm:$0xff]
    %v1123 = vld [vmem:[#allocation2 + $0x1e68] sm:$0xff]
    %v1124 = vld [vmem:[#allocation2 + $0x1e70] sm:$0xff]
    %v1125 = vld [vmem:[#allocation2 + $0x1e78] sm:$0xff]
    %v1126 = vld [vmem:[#allocation2 + $0x1e80] sm:$0xff]
    %v1127 = vld [vmem:[#allocation2 + $0x1e88] sm:$0xff]
    %v1128 = vld [vmem:[#allocation2 + $0x1e90] sm:$0xff]
    %v1129 = vld [vmem:[#allocation2 + $0x1e98] sm:$0xff]
    %v1130 = vld [vmem:[#allocation2 + $0x1ea0] sm:$0xff]
    %v1131 = vld [vmem:[#allocation2 + $0x1ea8] sm:$0xff]
    %v1132 = vld [vmem:[#allocation2 + $0x1eb0] sm:$0xff]
    %v1133 = vld [vmem:[#allocation2 + $0x1eb8] sm:$0xff]
    %v1134 = vld [vmem:[#allocation2 + $0x1ec0] sm:$0xff]
    %v1135 = vld [vmem:[#allocation2 + $0x1ec8] sm:$0xff]
    %v1136 = vld [vmem:[#allocation2 + $0x1ed0] sm:$0xff]
    %v1137 = vld [vmem:[#allocation2 + $0x1ed8] sm:$0xff]
    %v1138 = vld [vmem:[#allocation2 + $0x1ee0] sm:$0xff]
    %v1139 = vld [vmem:[#allocation2 + $0x1ee8] sm:$0xff]
    %v1140 = vld [vmem:[#allocation2 + $0x1ef0] sm:$0xff]
    %v1141 = vld [vmem:[#allocation2 + $0x1ef8] sm:$0xff]
    %v1142 = vld [vmem:[#allocation2 + $0x1f00] sm:$0xff]
    %v1143 = vld [vmem:[#allocation2 + $0x1f08] sm:$0xff]
    %v1144 = vld [vmem:[#allocation2 + $0x1f10] sm:$0xff]
    %v1145 = vld [vmem:[#allocation2 + $0x1f18] sm:$0xff]
    %v1146 = vld [vmem:[#allocation2 + $0x1f20] sm:$0xff]
    %v1147 = vld [vmem:[#allocation2 + $0x1f28] sm:$0xff]
    %v1148 = vld [vmem:[#allocation2 + $0x1f30] sm:$0xff]
    %v1149 = vld [vmem:[#allocation2 + $0x1f38] sm:$0xff]
    %v1150 = vld [vmem:[#allocation2 + $0x1f40] sm:$0xff]
    %v1151 = vld [vmem:[#allocation2 + $0x1f48] sm:$0xff]
    %v1152 = vld [vmem:[#allocation2 + $0x1f50] sm:$0xff]
    %v1153 = vld [vmem:[#allocation2 + $0x1f58] sm:$0xff]
    %v1154 = vld [vmem:[#allocation2 + $0x1f60] sm:$0xff]
    %v1155 = vld [vmem:[#allocation2 + $0x1f68] sm:$0xff]
    %v1156 = vld [vmem:[#allocation2 + $0x1f70] sm:$0xff]
    %v1157 = vld [vmem:[#allocation2 + $0x1f78] sm:$0xff]
    %v1158 = vld [vmem:[#allocation2 + $0x1f80] sm:$0xff]
    %v1159 = vld [vmem:[#allocation2 + $0x1f88] sm:$0xff]
    %v1160 = vld [vmem:[#allocation2 + $0x1f90] sm:$0xff]
    %v1161 = vld [vmem:[#allocation2 + $0x1f98] sm:$0xff]
    %v1162 = vld [vmem:[#allocation2 + $0x1fa0] sm:$0xff]
    %v1163 = vld [vmem:[#allocation2 + $0x1fa8] sm:$0xff]
    %v1164 = vld [vmem:[#allocation2 + $0x1fb0] sm:$0xff]
    %v1165 = vld [vmem:[#allocation2 + $0x1fb8] sm:$0xff]
    %v1166 = vld [vmem:[#allocation2 + $0x1fc0] sm:$0xff]
    %v1167 = vld [vmem:[#allocation2 + $0x1fc8] sm:$0xff]
    %v1168 = vld [vmem:[#allocation2 + $0x1fd0] sm:$0xff]
    %v1169 = vld [vmem:[#allocation2 + $0x1fd8] sm:$0xff]
    %v1170 = vld [vmem:[#allocation2 + $0x1fe0] sm:$0xff]
    %v1171 = vld [vmem:[#allocation2 + $0x1fe8] sm:$0xff]
    %v1172 = vld [vmem:[#allocation2 + $0x1ff0] sm:$0xff]
    %v1173 = vld [vmem:[#allocation2 + $0x1ff8] sm:$0xff]
    %v1174 = vld [vmem:[#allocation5] sm:$0xff]
    %v1176 = vperm.slane %v1174, 0
    %v1177 = vperm.slane %v1174, 1
    %v1178 = vperm.slane %v1174, 2
    %v1179 = vperm.slane %v1174, 3
    %v1180 = vperm.slane %v1174, 4
    %v1181 = vperm.slane %v1174, 5
    %v1182 = vperm.slane %v1174, 6
    %v1183 = vperm.slane %v1174, 7
    %v2216 = vunpack.c.l.b16 %v150
    %v2217 = vunpack.c.h.b16 %v150
    %v2218 = vunpack.c.l.b16 %v151
    %v2219 = vunpack.c.h.b16 %v151
    %v2220 = vunpack.c.l.b16 %v152
    %v2221 = vunpack.c.h.b16 %v152
    %v2222 = vunpack.c.l.b16 %v153
    %v2223 = vunpack.c.h.b16 %v153
    %v2224 = vunpack.c.l.b16 %v154
    %v2225 = vunpack.c.h.b16 %v154
    %v2226 = vunpack.c.l.b16 %v155
    %v2227 = vunpack.c.h.b16 %v155
    %v2228 = vunpack.c.l.b16 %v156
    %v2229 = vunpack.c.h.b16 %v156
    %v2230 = vunpack.c.l.b16 %v157
    %v2231 = vunpack.c.h.b16 %v157
    %v2232 = vunpack.c.l.b16 %v158
    %v2233 = vunpack.c.h.b16 %v158
    %v2234 = vunpack.c.l.b16 %v159
    %v2235 = vunpack.c.h.b16 %v159
    %v2236 = vunpack.c.l.b16 %v160
    %v2237 = vunpack.c.h.b16 %v160
    %v2238 = vunpack.c.l.b16 %v161
    %v2239 = vunpack.c.h.b16 %v161
    %v2240 = vunpack.c.l.b16 %v162
    %v2241 = vunpack.c.h.b16 %v162
    %v2242 = vunpack.c.l.b16 %v163
    %v2243 = vunpack.c.h.b16 %v163
    %v2244 = vunpack.c.l.b16 %v164
    %v2245 = vunpack.c.h.b16 %v164
    %v2246 = vunpack.c.l.b16 %v165
    %v2247 = vunpack.c.h.b16 %v165
    %v2248 = vunpack.c.l.b16 %v166
    %v2249 = vunpack.c.h.b16 %v166
    %v2250 = vunpack.c.l.b16 %v167
    %v2251 = vunpack.c.h.b16 %v167
    %v2252 = vunpack.c.l.b16 %v168
    %v2253 = vunpack.c.h.b16 %v168
    %v2254 = vunpack.c.l.b16 %v169
    %v2255 = vunpack.c.h.b16 %v169
    %v2256 = vunpack.c.l.b16 %v170
    %v2257 = vunpack.c.h.b16 %v170
    %v2258 = vunpack.c.l.b16 %v171
    %v2259 = vunpack.c.h.b16 %v171
    %v2260 = vunpack.c.l.b16 %v172
    %v2261 = vunpack.c.h.b16 %v172
    %v2262 = vunpack.c.l.b16 %v173
    %v2263 = vunpack.c.h.b16 %v173
    %v2264 = vunpack.c.l.b16 %v174
    %v2265 = vunpack.c.h.b16 %v174
    %v2266 = vunpack.c.l.b16 %v175
    %v2267 = vunpack.c.h.b16 %v175
    %v2268 = vunpack.c.l.b16 %v176
    %v2269 = vunpack.c.h.b16 %v176
    %v2270 = vunpack.c.l.b16 %v177
    %v2271 = vunpack.c.h.b16 %v177
    %v2272 = vunpack.c.l.b16 %v178
    %v2273 = vunpack.c.h.b16 %v178
    %v2274 = vunpack.c.l.b16 %v179
    %v2275 = vunpack.c.h.b16 %v179
    %v2276 = vunpack.c.l.b16 %v180
    %v2277 = vunpack.c.h.b16 %v180
    %v2278 = vunpack.c.l.b16 %v181
    %v2279 = vunpack.c.h.b16 %v181
    %v2280 = vunpack.c.l.b16 %v182
    %v2281 = vunpack.c.h.b16 %v182
    %v2282 = vunpack.c.l.b16 %v183
    %v2283 = vunpack.c.h.b16 %v183
    %v2284 = vunpack.c.l.b16 %v184
    %v2285 = vunpack.c.h.b16 %v184
    %v2286 = vunpack.c.l.b16 %v185
    %v2287 = vunpack.c.h.b16 %v185
    %v2288 = vunpack.c.l.b16 %v186
    %v2289 = vunpack.c.h.b16 %v186
    %v2290 = vunpack.c.l.b16 %v187
    %v2291 = vunpack.c.h.b16 %v187
    %v2292 = vunpack.c.l.b16 %v188
    %v2293 = vunpack.c.h.b16 %v188
    %v2294 = vunpack.c.l.b16 %v189
    %v2295 = vunpack.c.h.b16 %v189
    %v2296 = vunpack.c.l.b16 %v190
    %v2297 = vunpack.c.h.b16 %v190
    %v2298 = vunpack.c.l.b16 %v191
    %v2299 = vunpack.c.h.b16 %v191
    %v2300 = vunpack.c.l.b16 %v192
    %v2301 = vunpack.c.h.b16 %v192
    %v2302 = vunpack.c.l.b16 %v193
    %v2303 = vunpack.c.h.b16 %v193
    %v2304 = vunpack.c.l.b16 %v194
    %v2305 = vunpack.c.h.b16 %v194
    %v2306 = vunpack.c.l.b16 %v195
    %v2307 = vunpack.c.h.b16 %v195
    %v2308 = vunpack.c.l.b16 %v196
    %v2309 = vunpack.c.h.b16 %v196
    %v2310 = vunpack.c.l.b16 %v197
    %v2311 = vunpack.c.h.b16 %v197
    %v2312 = vunpack.c.l.b16 %v198
    %v2313 = vunpack.c.h.b16 %v198
    %v2314 = vunpack.c.l.b16 %v199
    %v2315 = vunpack.c.h.b16 %v199
    %v2316 = vunpack.c.l.b16 %v200
    %v2317 = vunpack.c.h.b16 %v200
    %v2318 = vunpack.c.l.b16 %v201
    %v2319 = vunpack.c.h.b16 %v201
    %v2320 = vunpack.c.l.b16 %v202
    %v2321 = vunpack.c.h.b16 %v202
    %v2322 = vunpack.c.l.b16 %v203
    %v2323 = vunpack.c.h.b16 %v203
    %v2324 = vunpack.c.l.b16 %v204
    %v2325 = vunpack.c.h.b16 %v204
    %v2326 = vunpack.c.l.b16 %v205
    %v2327 = vunpack.c.h.b16 %v205
    %v2328 = vunpack.c.l.b16 %v206
    %v2329 = vunpack.c.h.b16 %v206
    %v2330 = vunpack.c.l.b16 %v207
    %v2331 = vunpack.c.h.b16 %v207
    %v2332 = vunpack.c.l.b16 %v208
    %v2333 = vunpack.c.h.b16 %v208
    %v2334 = vunpack.c.l.b16 %v209
    %v2335 = vunpack.c.h.b16 %v209
    %v2336 = vunpack.c.l.b16 %v210
    %v2337 = vunpack.c.h.b16 %v210
    %v2338 = vunpack.c.l.b16 %v211
    %v2339 = vunpack.c.h.b16 %v211
    %v2340 = vunpack.c.l.b16 %v212
    %v2341 = vunpack.c.h.b16 %v212
    %v2342 = vunpack.c.l.b16 %v213
    %v2343 = vunpack.c.h.b16 %v213
    %v2344 = vunpack.c.l.b16 %v214
    %v2345 = vunpack.c.h.b16 %v214
    %v2346 = vunpack.c.l.b16 %v215
    %v2347 = vunpack.c.h.b16 %v215
    %v2348 = vunpack.c.l.b16 %v216
    %v2349 = vunpack.c.h.b16 %v216
    %v2350 = vunpack.c.l.b16 %v217
    %v2351 = vunpack.c.h.b16 %v217
    %v2352 = vunpack.c.l.b16 %v218
    %v2353 = vunpack.c.h.b16 %v218
    %v2354 = vunpack.c.l.b16 %v219
    %v2355 = vunpack.c.h.b16 %v219
    %v2356 = vunpack.c.l.b16 %v220
    %v2357 = vunpack.c.h.b16 %v220
    %v2358 = vunpack.c.l.b16 %v221
    %v2359 = vunpack.c.h.b16 %v221
    %v2360 = vunpack.c.l.b16 %v222
    %v2361 = vunpack.c.h.b16 %v222
    %v2362 = vunpack.c.l.b16 %v223
    %v2363 = vunpack.c.h.b16 %v223
    %v2364 = vunpack.c.l.b16 %v224
    %v2365 = vunpack.c.h.b16 %v224
    %v2366 = vunpack.c.l.b16 %v225
    %v2367 = vunpack.c.h.b16 %v225
    %v2368 = vunpack.c.l.b16 %v226
    %v2369 = vunpack.c.h.b16 %v226
    %v2370 = vunpack.c.l.b16 %v227
    %v2371 = vunpack.c.h.b16 %v227
    %v2372 = vunpack.c.l.b16 %v228
    %v2373 = vunpack.c.h.b16 %v228
    %v2374 = vunpack.c.l.b16 %v229
    %v2375 = vunpack.c.h.b16 %v229
    %v2376 = vunpack.c.l.b16 %v230
    %v2377 = vunpack.c.h.b16 %v230
    %v2378 = vunpack.c.l.b16 %v231
    %v2379 = vunpack.c.h.b16 %v231
    %v2380 = vunpack.c.l.b16 %v232
    %v2381 = vunpack.c.h.b16 %v232
    %v2382 = vunpack.c.l.b16 %v233
    %v2383 = vunpack.c.h.b16 %v233
    %v2384 = vunpack.c.l.b16 %v234
    %v2385 = vunpack.c.h.b16 %v234
    %v2386 = vunpack.c.l.b16 %v235
    %v2387 = vunpack.c.h.b16 %v235
    %v2388 = vunpack.c.l.b16 %v236
    %v2389 = vunpack.c.h.b16 %v236
    %v2390 = vunpack.c.l.b16 %v237
    %v2391 = vunpack.c.h.b16 %v237
    %v2392 = vunpack.c.l.b16 %v238
    %v2393 = vunpack.c.h.b16 %v238
    %v2394 = vunpack.c.l.b16 %v239
    %v2395 = vunpack.c.h.b16 %v239
    %v2396 = vunpack.c.l.b16 %v240
    %v2397 = vunpack.c.h.b16 %v240
    %v2398 = vunpack.c.l.b16 %v241
    %v2399 = vunpack.c.h.b16 %v241
    %v2400 = vunpack.c.l.b16 %v242
    %v2401 = vunpack.c.h.b16 %v242
    %v2402 = vunpack.c.l.b16 %v243
    %v2403 = vunpack.c.h.b16 %v243
    %v2404 = vunpack.c.l.b16 %v244
    %v2405 = vunpack.c.h.b16 %v244
    %v2406 = vunpack.c.l.b16 %v245
    %v2407 = vunpack.c.h.b16 %v245
    %v2408 = vunpack.c.l.b16 %v246
    %v2409 = vunpack.c.h.b16 %v246
    %v2410 = vunpack.c.l.b16 %v247
    %v2411 = vunpack.c.h.b16 %v247
    %v2412 = vunpack.c.l.b16 %v248
    %v2413 = vunpack.c.h.b16 %v248
    %v2414 = vunpack.c.l.b16 %v249
    %v2415 = vunpack.c.h.b16 %v249
    %v2416 = vunpack.c.l.b16 %v250
    %v2417 = vunpack.c.h.b16 %v250
    %v2418 = vunpack.c.l.b16 %v251
    %v2419 = vunpack.c.h.b16 %v251
    %v2420 = vunpack.c.l.b16 %v252
    %v2421 = vunpack.c.h.b16 %v252
    %v2422 = vunpack.c.l.b16 %v253
    %v2423 = vunpack.c.h.b16 %v253
    %v2424 = vunpack.c.l.b16 %v254
    %v2425 = vunpack.c.h.b16 %v254
    %v2426 = vunpack.c.l.b16 %v255
    %v2427 = vunpack.c.h.b16 %v255
    %v2428 = vunpack.c.l.b16 %v256
    %v2429 = vunpack.c.h.b16 %v256
    %v2430 = vunpack.c.l.b16 %v257
    %v2431 = vunpack.c.h.b16 %v257
    %v2432 = vunpack.c.l.b16 %v258
    %v2433 = vunpack.c.h.b16 %v258
    %v2434 = vunpack.c.l.b16 %v259
    %v2435 = vunpack.c.h.b16 %v259
    %v2436 = vunpack.c.l.b16 %v260
    %v2437 = vunpack.c.h.b16 %v260
    %v2438 = vunpack.c.l.b16 %v261
    %v2439 = vunpack.c.h.b16 %v261
    %v2440 = vunpack.c.l.b16 %v262
    %v2441 = vunpack.c.h.b16 %v262
    %v2442 = vunpack.c.l.b16 %v263
    %v2443 = vunpack.c.h.b16 %v263
    %v2444 = vunpack.c.l.b16 %v264
    %v2445 = vunpack.c.h.b16 %v264
    %v2446 = vunpack.c.l.b16 %v265
    %v2447 = vunpack.c.h.b16 %v265
    %v2448 = vunpack.c.l.b16 %v266
    %v2449 = vunpack.c.h.b16 %v266
    %v2450 = vunpack.c.l.b16 %v267
    %v2451 = vunpack.c.h.b16 %v267
    %v2452 = vunpack.c.l.b16 %v268
    %v2453 = vunpack.c.h.b16 %v268
    %v2454 = vunpack.c.l.b16 %v269
    %v2455 = vunpack.c.h.b16 %v269
    %v2456 = vunpack.c.l.b16 %v270
    %v2457 = vunpack.c.h.b16 %v270
    %v2458 = vunpack.c.l.b16 %v271
    %v2459 = vunpack.c.h.b16 %v271
    %v2460 = vunpack.c.l.b16 %v272
    %v2461 = vunpack.c.h.b16 %v272
    %v2462 = vunpack.c.l.b16 %v273
    %v2463 = vunpack.c.h.b16 %v273
    %v2464 = vunpack.c.l.b16 %v274
    %v2465 = vunpack.c.h.b16 %v274
    %v2466 = vunpack.c.l.b16 %v275
    %v2467 = vunpack.c.h.b16 %v275
    %v2468 = vunpack.c.l.b16 %v276
    %v2469 = vunpack.c.h.b16 %v276
    %v2470 = vunpack.c.l.b16 %v277
    %v2471 = vunpack.c.h.b16 %v277
    %v2472 = vunpack.c.l.b16 %v278
    %v2473 = vunpack.c.h.b16 %v278
    %v2474 = vunpack.c.l.b16 %v279
    %v2475 = vunpack.c.h.b16 %v279
    %v2476 = vunpack.c.l.b16 %v280
    %v2477 = vunpack.c.h.b16 %v280
    %v2478 = vunpack.c.l.b16 %v281
    %v2479 = vunpack.c.h.b16 %v281
    %v2480 = vunpack.c.l.b16 %v282
    %v2481 = vunpack.c.h.b16 %v282
    %v2482 = vunpack.c.l.b16 %v283
    %v2483 = vunpack.c.h.b16 %v283
    %v2484 = vunpack.c.l.b16 %v284
    %v2485 = vunpack.c.h.b16 %v284
    %v2486 = vunpack.c.l.b16 %v285
    %v2487 = vunpack.c.h.b16 %v285
    %v2488 = vunpack.c.l.b16 %v286
    %v2489 = vunpack.c.h.b16 %v286
    %v2490 = vunpack.c.l.b16 %v287
    %v2491 = vunpack.c.h.b16 %v287
    %v2492 = vunpack.c.l.b16 %v288
    %v2493 = vunpack.c.h.b16 %v288
    %v2494 = vunpack.c.l.b16 %v289
    %v2495 = vunpack.c.h.b16 %v289
    %v2496 = vunpack.c.l.b16 %v290
    %v2497 = vunpack.c.h.b16 %v290
    %v2498 = vunpack.c.l.b16 %v291
    %v2499 = vunpack.c.h.b16 %v291
    %v2500 = vunpack.c.l.b16 %v292
    %v2501 = vunpack.c.h.b16 %v292
    %v2502 = vunpack.c.l.b16 %v293
    %v2503 = vunpack.c.h.b16 %v293
    %v2504 = vunpack.c.l.b16 %v294
    %v2505 = vunpack.c.h.b16 %v294
    %v2506 = vunpack.c.l.b16 %v295
    %v2507 = vunpack.c.h.b16 %v295
    %v2508 = vunpack.c.l.b16 %v296
    %v2509 = vunpack.c.h.b16 %v296
    %v2510 = vunpack.c.l.b16 %v297
    %v2511 = vunpack.c.h.b16 %v297
    %v2512 = vunpack.c.l.b16 %v298
    %v2513 = vunpack.c.h.b16 %v298
    %v2514 = vunpack.c.l.b16 %v299
    %v2515 = vunpack.c.h.b16 %v299
    %v2516 = vunpack.c.l.b16 %v300
    %v2517 = vunpack.c.h.b16 %v300
    %v2518 = vunpack.c.l.b16 %v301
    %v2519 = vunpack.c.h.b16 %v301
    %v2520 = vunpack.c.l.b16 %v302
    %v2521 = vunpack.c.h.b16 %v302
    %v2522 = vunpack.c.l.b16 %v303
    %v2523 = vunpack.c.h.b16 %v303
    %v2524 = vunpack.c.l.b16 %v304
    %v2525 = vunpack.c.h.b16 %v304
    %v2526 = vunpack.c.l.b16 %v305
    %v2527 = vunpack.c.h.b16 %v305
    %v2528 = vunpack.c.l.b16 %v306
    %v2529 = vunpack.c.h.b16 %v306
    %v2530 = vunpack.c.l.b16 %v307
    %v2531 = vunpack.c.h.b16 %v307
    %v2532 = vunpack.c.l.b16 %v308
    %v2533 = vunpack.c.h.b16 %v308
    %v2534 = vunpack.c.l.b16 %v309
    %v2535 = vunpack.c.h.b16 %v309
    %v2536 = vunpack.c.l.b16 %v310
    %v2537 = vunpack.c.h.b16 %v310
    %v2538 = vunpack.c.l.b16 %v311
    %v2539 = vunpack.c.h.b16 %v311
    %v2540 = vunpack.c.l.b16 %v312
    %v2541 = vunpack.c.h.b16 %v312
    %v2542 = vunpack.c.l.b16 %v313
    %v2543 = vunpack.c.h.b16 %v313
    %v2544 = vunpack.c.l.b16 %v314
    %v2545 = vunpack.c.h.b16 %v314
    %v2546 = vunpack.c.l.b16 %v315
    %v2547 = vunpack.c.h.b16 %v315
    %v2548 = vunpack.c.l.b16 %v316
    %v2549 = vunpack.c.h.b16 %v316
    %v2550 = vunpack.c.l.b16 %v317
    %v2551 = vunpack.c.h.b16 %v317
    %v2552 = vunpack.c.l.b16 %v318
    %v2553 = vunpack.c.h.b16 %v318
    %v2554 = vunpack.c.l.b16 %v319
    %v2555 = vunpack.c.h.b16 %v319
    %v2556 = vunpack.c.l.b16 %v320
    %v2557 = vunpack.c.h.b16 %v320
    %v2558 = vunpack.c.l.b16 %v321
    %v2559 = vunpack.c.h.b16 %v321
    %v2560 = vunpack.c.l.b16 %v322
    %v2561 = vunpack.c.h.b16 %v322
    %v2562 = vunpack.c.l.b16 %v323
    %v2563 = vunpack.c.h.b16 %v323
    %v2564 = vunpack.c.l.b16 %v324
    %v2565 = vunpack.c.h.b16 %v324
    %v2566 = vunpack.c.l.b16 %v325
    %v2567 = vunpack.c.h.b16 %v325
    %v2568 = vunpack.c.l.b16 %v326
    %v2569 = vunpack.c.h.b16 %v326
    %v2570 = vunpack.c.l.b16 %v327
    %v2571 = vunpack.c.h.b16 %v327
    %v2572 = vunpack.c.l.b16 %v328
    %v2573 = vunpack.c.h.b16 %v328
    %v2574 = vunpack.c.l.b16 %v329
    %v2575 = vunpack.c.h.b16 %v329
    %v2576 = vunpack.c.l.b16 %v330
    %v2577 = vunpack.c.h.b16 %v330
    %v2578 = vunpack.c.l.b16 %v331
    %v2579 = vunpack.c.h.b16 %v331
    %v2580 = vunpack.c.l.b16 %v332
    %v2581 = vunpack.c.h.b16 %v332
    %v2582 = vunpack.c.l.b16 %v333
    %v2583 = vunpack.c.h.b16 %v333
    %v2584 = vunpack.c.l.b16 %v334
    %v2585 = vunpack.c.h.b16 %v334
    %v2586 = vunpack.c.l.b16 %v335
    %v2587 = vunpack.c.h.b16 %v335
    %v2588 = vunpack.c.l.b16 %v336
    %v2589 = vunpack.c.h.b16 %v336
    %v2590 = vunpack.c.l.b16 %v337
    %v2591 = vunpack.c.h.b16 %v337
    %v2592 = vunpack.c.l.b16 %v338
    %v2593 = vunpack.c.h.b16 %v338
    %v2594 = vunpack.c.l.b16 %v339
    %v2595 = vunpack.c.h.b16 %v339
    %v2596 = vunpack.c.l.b16 %v340
    %v2597 = vunpack.c.h.b16 %v340
    %v2598 = vunpack.c.l.b16 %v341
    %v2599 = vunpack.c.h.b16 %v341
    %v2600 = vunpack.c.l.b16 %v342
    %v2601 = vunpack.c.h.b16 %v342
    %v2602 = vunpack.c.l.b16 %v343
    %v2603 = vunpack.c.h.b16 %v343
    %v2604 = vunpack.c.l.b16 %v344
    %v2605 = vunpack.c.h.b16 %v344
    %v2606 = vunpack.c.l.b16 %v345
    %v2607 = vunpack.c.h.b16 %v345
    %v2608 = vunpack.c.l.b16 %v346
    %v2609 = vunpack.c.h.b16 %v346
    %v2610 = vunpack.c.l.b16 %v347
    %v2611 = vunpack.c.h.b16 %v347
    %v2612 = vunpack.c.l.b16 %v348
    %v2613 = vunpack.c.h.b16 %v348
    %v2614 = vunpack.c.l.b16 %v349
    %v2615 = vunpack.c.h.b16 %v349
    %v2616 = vunpack.c.l.b16 %v350
    %v2617 = vunpack.c.h.b16 %v350
    %v2618 = vunpack.c.l.b16 %v351
    %v2619 = vunpack.c.h.b16 %v351
    %v2620 = vunpack.c.l.b16 %v352
    %v2621 = vunpack.c.h.b16 %v352
    %v2622 = vunpack.c.l.b16 %v353
    %v2623 = vunpack.c.h.b16 %v353
    %v2624 = vunpack.c.l.b16 %v354
    %v2625 = vunpack.c.h.b16 %v354
    %v2626 = vunpack.c.l.b16 %v355
    %v2627 = vunpack.c.h.b16 %v355
    %v2628 = vunpack.c.l.b16 %v356
    %v2629 = vunpack.c.h.b16 %v356
    %v2630 = vunpack.c.l.b16 %v357
    %v2631 = vunpack.c.h.b16 %v357
    %v2632 = vunpack.c.l.b16 %v358
    %v2633 = vunpack.c.h.b16 %v358
    %v2634 = vunpack.c.l.b16 %v359
    %v2635 = vunpack.c.h.b16 %v359
    %v2636 = vunpack.c.l.b16 %v360
    %v2637 = vunpack.c.h.b16 %v360
    %v2638 = vunpack.c.l.b16 %v361
    %v2639 = vunpack.c.h.b16 %v361
    %v2640 = vunpack.c.l.b16 %v362
    %v2641 = vunpack.c.h.b16 %v362
    %v2642 = vunpack.c.l.b16 %v363
    %v2643 = vunpack.c.h.b16 %v363
    %v2644 = vunpack.c.l.b16 %v364
    %v2645 = vunpack.c.h.b16 %v364
    %v2646 = vunpack.c.l.b16 %v365
    %v2647 = vunpack.c.h.b16 %v365
    %v2648 = vunpack.c.l.b16 %v366
    %v2649 = vunpack.c.h.b16 %v366
    %v2650 = vunpack.c.l.b16 %v367
    %v2651 = vunpack.c.h.b16 %v367
    %v2652 = vunpack.c.l.b16 %v368
    %v2653 = vunpack.c.h.b16 %v368
    %v2654 = vunpack.c.l.b16 %v369
    %v2655 = vunpack.c.h.b16 %v369
    %v2656 = vunpack.c.l.b16 %v370
    %v2657 = vunpack.c.h.b16 %v370
    %v2658 = vunpack.c.l.b16 %v371
    %v2659 = vunpack.c.h.b16 %v371
    %v2660 = vunpack.c.l.b16 %v372
    %v2661 = vunpack.c.h.b16 %v372
    %v2662 = vunpack.c.l.b16 %v373
    %v2663 = vunpack.c.h.b16 %v373
    %v2664 = vunpack.c.l.b16 %v374
    %v2665 = vunpack.c.h.b16 %v374
    %v2666 = vunpack.c.l.b16 %v375
    %v2667 = vunpack.c.h.b16 %v375
    %v2668 = vunpack.c.l.b16 %v376
    %v2669 = vunpack.c.h.b16 %v376
    %v2670 = vunpack.c.l.b16 %v377
    %v2671 = vunpack.c.h.b16 %v377
    %v2672 = vunpack.c.l.b16 %v378
    %v2673 = vunpack.c.h.b16 %v378
    %v2674 = vunpack.c.l.b16 %v379
    %v2675 = vunpack.c.h.b16 %v379
    %v2676 = vunpack.c.l.b16 %v380
    %v2677 = vunpack.c.h.b16 %v380
    %v2678 = vunpack.c.l.b16 %v381
    %v2679 = vunpack.c.h.b16 %v381
    %v2680 = vunpack.c.l.b16 %v382
    %v2681 = vunpack.c.h.b16 %v382
    %v2682 = vunpack.c.l.b16 %v383
    %v2683 = vunpack.c.h.b16 %v383
    %v2684 = vunpack.c.l.b16 %v384
    %v2685 = vunpack.c.h.b16 %v384
    %v2686 = vunpack.c.l.b16 %v385
    %v2687 = vunpack.c.h.b16 %v385
    %v2688 = vunpack.c.l.b16 %v386
    %v2689 = vunpack.c.h.b16 %v386
    %v2690 = vunpack.c.l.b16 %v387
    %v2691 = vunpack.c.h.b16 %v387
    %v2692 = vunpack.c.l.b16 %v388
    %v2693 = vunpack.c.h.b16 %v388
    %v2694 = vunpack.c.l.b16 %v389
    %v2695 = vunpack.c.h.b16 %v389
    %v2696 = vunpack.c.l.b16 %v390
    %v2697 = vunpack.c.h.b16 %v390
    %v2698 = vunpack.c.l.b16 %v391
    %v2699 = vunpack.c.h.b16 %v391
    %v2700 = vunpack.c.l.b16 %v392
    %v2701 = vunpack.c.h.b16 %v392
    %v2702 = vunpack.c.l.b16 %v393
    %v2703 = vunpack.c.h.b16 %v393
    %v2704 = vunpack.c.l.b16 %v394
    %v2705 = vunpack.c.h.b16 %v394
    %v2706 = vunpack.c.l.b16 %v395
    %v2707 = vunpack.c.h.b16 %v395
    %v2708 = vunpack.c.l.b16 %v396
    %v2709 = vunpack.c.h.b16 %v396
    %v2710 = vunpack.c.l.b16 %v397
    %v2711 = vunpack.c.h.b16 %v397
    %v2712 = vunpack.c.l.b16 %v398
    %v2713 = vunpack.c.h.b16 %v398
    %v2714 = vunpack.c.l.b16 %v399
    %v2715 = vunpack.c.h.b16 %v399
    %v2716 = vunpack.c.l.b16 %v400
    %v2717 = vunpack.c.h.b16 %v400
    %v2718 = vunpack.c.l.b16 %v401
    %v2719 = vunpack.c.h.b16 %v401
    %v2720 = vunpack.c.l.b16 %v402
    %v2721 = vunpack.c.h.b16 %v402
    %v2722 = vunpack.c.l.b16 %v403
    %v2723 = vunpack.c.h.b16 %v403
    %v2724 = vunpack.c.l.b16 %v404
    %v2725 = vunpack.c.h.b16 %v404
    %v2726 = vunpack.c.l.b16 %v405
    %v2727 = vunpack.c.h.b16 %v405
    %v2728 = vunpack.c.l.b16 %v406
    %v2729 = vunpack.c.h.b16 %v406
    %v2730 = vunpack.c.l.b16 %v407
    %v2731 = vunpack.c.h.b16 %v407
    %v2732 = vunpack.c.l.b16 %v408
    %v2733 = vunpack.c.h.b16 %v408
    %v2734 = vunpack.c.l.b16 %v409
    %v2735 = vunpack.c.h.b16 %v409
    %v2736 = vunpack.c.l.b16 %v410
    %v2737 = vunpack.c.h.b16 %v410
    %v2738 = vunpack.c.l.b16 %v411
    %v2739 = vunpack.c.h.b16 %v411
    %v2740 = vunpack.c.l.b16 %v412
    %v2741 = vunpack.c.h.b16 %v412
    %v2742 = vunpack.c.l.b16 %v413
    %v2743 = vunpack.c.h.b16 %v413
    %v2744 = vunpack.c.l.b16 %v414
    %v2745 = vunpack.c.h.b16 %v414
    %v2746 = vunpack.c.l.b16 %v415
    %v2747 = vunpack.c.h.b16 %v415
    %v2748 = vunpack.c.l.b16 %v416
    %v2749 = vunpack.c.h.b16 %v416
    %v2750 = vunpack.c.l.b16 %v417
    %v2751 = vunpack.c.h.b16 %v417
    %v2752 = vunpack.c.l.b16 %v418
    %v2753 = vunpack.c.h.b16 %v418
    %v2754 = vunpack.c.l.b16 %v419
    %v2755 = vunpack.c.h.b16 %v419
    %v2756 = vunpack.c.l.b16 %v420
    %v2757 = vunpack.c.h.b16 %v420
    %v2758 = vunpack.c.l.b16 %v421
    %v2759 = vunpack.c.h.b16 %v421
    %v2760 = vunpack.c.l.b16 %v422
    %v2761 = vunpack.c.h.b16 %v422
    %v2762 = vunpack.c.l.b16 %v423
    %v2763 = vunpack.c.h.b16 %v423
    %v2764 = vunpack.c.l.b16 %v424
    %v2765 = vunpack.c.h.b16 %v424
    %v2766 = vunpack.c.l.b16 %v425
    %v2767 = vunpack.c.h.b16 %v425
    %v2768 = vunpack.c.l.b16 %v426
    %v2769 = vunpack.c.h.b16 %v426
    %v2770 = vunpack.c.l.b16 %v427
    %v2771 = vunpack.c.h.b16 %v427
    %v2772 = vunpack.c.l.b16 %v428
    %v2773 = vunpack.c.h.b16 %v428
    %v2774 = vunpack.c.l.b16 %v429
    %v2775 = vunpack.c.h.b16 %v429
    %v2776 = vunpack.c.l.b16 %v430
    %v2777 = vunpack.c.h.b16 %v430
    %v2778 = vunpack.c.l.b16 %v431
    %v2779 = vunpack.c.h.b16 %v431
    %v2780 = vunpack.c.l.b16 %v432
    %v2781 = vunpack.c.h.b16 %v432
    %v2782 = vunpack.c.l.b16 %v433
    %v2783 = vunpack.c.h.b16 %v433
    %v2784 = vunpack.c.l.b16 %v434
    %v2785 = vunpack.c.h.b16 %v434
    %v2786 = vunpack.c.l.b16 %v435
    %v2787 = vunpack.c.h.b16 %v435
    %v2788 = vunpack.c.l.b16 %v436
    %v2789 = vunpack.c.h.b16 %v436
    %v2790 = vunpack.c.l.b16 %v437
    %v2791 = vunpack.c.h.b16 %v437
    %v2792 = vunpack.c.l.b16 %v438
    %v2793 = vunpack.c.h.b16 %v438
    %v2794 = vunpack.c.l.b16 %v439
    %v2795 = vunpack.c.h.b16 %v439
    %v2796 = vunpack.c.l.b16 %v440
    %v2797 = vunpack.c.h.b16 %v440
    %v2798 = vunpack.c.l.b16 %v441
    %v2799 = vunpack.c.h.b16 %v441
    %v2800 = vunpack.c.l.b16 %v442
    %v2801 = vunpack.c.h.b16 %v442
    %v2802 = vunpack.c.l.b16 %v443
    %v2803 = vunpack.c.h.b16 %v443
    %v2804 = vunpack.c.l.b16 %v444
    %v2805 = vunpack.c.h.b16 %v444
    %v2806 = vunpack.c.l.b16 %v445
    %v2807 = vunpack.c.h.b16 %v445
    %v2808 = vunpack.c.l.b16 %v446
    %v2809 = vunpack.c.h.b16 %v446
    %v2810 = vunpack.c.l.b16 %v447
    %v2811 = vunpack.c.h.b16 %v447
    %v2812 = vunpack.c.l.b16 %v448
    %v2813 = vunpack.c.h.b16 %v448
    %v2814 = vunpack.c.l.b16 %v449
    %v2815 = vunpack.c.h.b16 %v449
    %v2816 = vunpack.c.l.b16 %v450
    %v2817 = vunpack.c.h.b16 %v450
    %v2818 = vunpack.c.l.b16 %v451
    %v2819 = vunpack.c.h.b16 %v451
    %v2820 = vunpack.c.l.b16 %v452
    %v2821 = vunpack.c.h.b16 %v452
    %v2822 = vunpack.c.l.b16 %v453
    %v2823 = vunpack.c.h.b16 %v453
    %v2824 = vunpack.c.l.b16 %v454
    %v2825 = vunpack.c.h.b16 %v454
    %v2826 = vunpack.c.l.b16 %v455
    %v2827 = vunpack.c.h.b16 %v455
    %v2828 = vunpack.c.l.b16 %v456
    %v2829 = vunpack.c.h.b16 %v456
    %v2830 = vunpack.c.l.b16 %v457
    %v2831 = vunpack.c.h.b16 %v457
    %v2832 = vunpack.c.l.b16 %v458
    %v2833 = vunpack.c.h.b16 %v458
    %v2834 = vunpack.c.l.b16 %v459
    %v2835 = vunpack.c.h.b16 %v459
    %v2836 = vunpack.c.l.b16 %v460
    %v2837 = vunpack.c.h.b16 %v460
    %v2838 = vunpack.c.l.b16 %v461
    %v2839 = vunpack.c.h.b16 %v461
    %v2840 = vunpack.c.l.b16 %v462
    %v2841 = vunpack.c.h.b16 %v462
    %v2842 = vunpack.c.l.b16 %v463
    %v2843 = vunpack.c.h.b16 %v463
    %v2844 = vunpack.c.l.b16 %v464
    %v2845 = vunpack.c.h.b16 %v464
    %v2846 = vunpack.c.l.b16 %v465
    %v2847 = vunpack.c.h.b16 %v465
    %v2848 = vunpack.c.l.b16 %v466
    %v2849 = vunpack.c.h.b16 %v466
    %v2850 = vunpack.c.l.b16 %v467
    %v2851 = vunpack.c.h.b16 %v467
    %v2852 = vunpack.c.l.b16 %v468
    %v2853 = vunpack.c.h.b16 %v468
    %v2854 = vunpack.c.l.b16 %v469
    %v2855 = vunpack.c.h.b16 %v469
    %v2856 = vunpack.c.l.b16 %v470
    %v2857 = vunpack.c.h.b16 %v470
    %v2858 = vunpack.c.l.b16 %v471
    %v2859 = vunpack.c.h.b16 %v471
    %v2860 = vunpack.c.l.b16 %v472
    %v2861 = vunpack.c.h.b16 %v472
    %v2862 = vunpack.c.l.b16 %v473
    %v2863 = vunpack.c.h.b16 %v473
    %v2864 = vunpack.c.l.b16 %v474
    %v2865 = vunpack.c.h.b16 %v474
    %v2866 = vunpack.c.l.b16 %v475
    %v2867 = vunpack.c.h.b16 %v475
    %v2868 = vunpack.c.l.b16 %v476
    %v2869 = vunpack.c.h.b16 %v476
    %v2870 = vunpack.c.l.b16 %v477
    %v2871 = vunpack.c.h.b16 %v477
    %v2872 = vunpack.c.l.b16 %v478
    %v2873 = vunpack.c.h.b16 %v478
    %v2874 = vunpack.c.l.b16 %v479
    %v2875 = vunpack.c.h.b16 %v479
    %v2876 = vunpack.c.l.b16 %v480
    %v2877 = vunpack.c.h.b16 %v480
    %v2878 = vunpack.c.l.b16 %v481
    %v2879 = vunpack.c.h.b16 %v481
    %v2880 = vunpack.c.l.b16 %v482
    %v2881 = vunpack.c.h.b16 %v482
    %v2882 = vunpack.c.l.b16 %v483
    %v2883 = vunpack.c.h.b16 %v483
    %v2884 = vunpack.c.l.b16 %v484
    %v2885 = vunpack.c.h.b16 %v484
    %v2886 = vunpack.c.l.b16 %v485
    %v2887 = vunpack.c.h.b16 %v485
    %v2888 = vunpack.c.l.b16 %v486
    %v2889 = vunpack.c.h.b16 %v486
    %v2890 = vunpack.c.l.b16 %v487
    %v2891 = vunpack.c.h.b16 %v487
    %v2892 = vunpack.c.l.b16 %v488
    %v2893 = vunpack.c.h.b16 %v488
    %v2894 = vunpack.c.l.b16 %v489
    %v2895 = vunpack.c.h.b16 %v489
    %v2896 = vunpack.c.l.b16 %v490
    %v2897 = vunpack.c.h.b16 %v490
    %v2898 = vunpack.c.l.b16 %v491
    %v2899 = vunpack.c.h.b16 %v491
    %v2900 = vunpack.c.l.b16 %v492
    %v2901 = vunpack.c.h.b16 %v492
    %v2902 = vunpack.c.l.b16 %v493
    %v2903 = vunpack.c.h.b16 %v493
    %v2904 = vunpack.c.l.b16 %v494
    %v2905 = vunpack.c.h.b16 %v494
    %v2906 = vunpack.c.l.b16 %v495
    %v2907 = vunpack.c.h.b16 %v495
    %v2908 = vunpack.c.l.b16 %v496
    %v2909 = vunpack.c.h.b16 %v496
    %v2910 = vunpack.c.l.b16 %v497
    %v2911 = vunpack.c.h.b16 %v497
    %v2912 = vunpack.c.l.b16 %v498
    %v2913 = vunpack.c.h.b16 %v498
    %v2914 = vunpack.c.l.b16 %v499
    %v2915 = vunpack.c.h.b16 %v499
    %v2916 = vunpack.c.l.b16 %v500
    %v2917 = vunpack.c.h.b16 %v500
    %v2918 = vunpack.c.l.b16 %v501
    %v2919 = vunpack.c.h.b16 %v501
    %v2920 = vunpack.c.l.b16 %v502
    %v2921 = vunpack.c.h.b16 %v502
    %v2922 = vunpack.c.l.b16 %v503
    %v2923 = vunpack.c.h.b16 %v503
    %v2924 = vunpack.c.l.b16 %v504
    %v2925 = vunpack.c.h.b16 %v504
    %v2926 = vunpack.c.l.b16 %v505
    %v2927 = vunpack.c.h.b16 %v505
    %v2928 = vunpack.c.l.b16 %v506
    %v2929 = vunpack.c.h.b16 %v506
    %v2930 = vunpack.c.l.b16 %v507
    %v2931 = vunpack.c.h.b16 %v507
    %v2932 = vunpack.c.l.b16 %v508
    %v2933 = vunpack.c.h.b16 %v508
    %v2934 = vunpack.c.l.b16 %v509
    %v2935 = vunpack.c.h.b16 %v509
    %v2936 = vunpack.c.l.b16 %v510
    %v2937 = vunpack.c.h.b16 %v510
    %v2938 = vunpack.c.l.b16 %v511
    %v2939 = vunpack.c.h.b16 %v511
    %v2940 = vunpack.c.l.b16 %v512
    %v2941 = vunpack.c.h.b16 %v512
    %v2942 = vunpack.c.l.b16 %v513
    %v2943 = vunpack.c.h.b16 %v513
    %v2944 = vunpack.c.l.b16 %v514
    %v2945 = vunpack.c.h.b16 %v514
    %v2946 = vunpack.c.l.b16 %v515
    %v2947 = vunpack.c.h.b16 %v515
    %v2948 = vunpack.c.l.b16 %v516
    %v2949 = vunpack.c.h.b16 %v516
    %v2950 = vunpack.c.l.b16 %v517
    %v2951 = vunpack.c.h.b16 %v517
    %v2952 = vunpack.c.l.b16 %v518
    %v2953 = vunpack.c.h.b16 %v518
    %v2954 = vunpack.c.l.b16 %v519
    %v2955 = vunpack.c.h.b16 %v519
    %v2956 = vunpack.c.l.b16 %v520
    %v2957 = vunpack.c.h.b16 %v520
    %v2958 = vunpack.c.l.b16 %v521
    %v2959 = vunpack.c.h.b16 %v521
    %v2960 = vunpack.c.l.b16 %v522
    %v2961 = vunpack.c.h.b16 %v522
    %v2962 = vunpack.c.l.b16 %v523
    %v2963 = vunpack.c.h.b16 %v523
    %v2964 = vunpack.c.l.b16 %v524
    %v2965 = vunpack.c.h.b16 %v524
    %v2966 = vunpack.c.l.b16 %v525
    %v2967 = vunpack.c.h.b16 %v525
    %v2968 = vunpack.c.l.b16 %v526
    %v2969 = vunpack.c.h.b16 %v526
    %v2970 = vunpack.c.l.b16 %v527
    %v2971 = vunpack.c.h.b16 %v527
    %v2972 = vunpack.c.l.b16 %v528
    %v2973 = vunpack.c.h.b16 %v528
    %v2974 = vunpack.c.l.b16 %v529
    %v2975 = vunpack.c.h.b16 %v529
    %v2976 = vunpack.c.l.b16 %v530
    %v2977 = vunpack.c.h.b16 %v530
    %v2978 = vunpack.c.l.b16 %v531
    %v2979 = vunpack.c.h.b16 %v531
    %v2980 = vunpack.c.l.b16 %v532
    %v2981 = vunpack.c.h.b16 %v532
    %v2982 = vunpack.c.l.b16 %v533
    %v2983 = vunpack.c.h.b16 %v533
    %v2984 = vunpack.c.l.b16 %v534
    %v2985 = vunpack.c.h.b16 %v534
    %v2986 = vunpack.c.l.b16 %v535
    %v2987 = vunpack.c.h.b16 %v535
    %v2988 = vunpack.c.l.b16 %v536
    %v2989 = vunpack.c.h.b16 %v536
    %v2990 = vunpack.c.l.b16 %v537
    %v2991 = vunpack.c.h.b16 %v537
    %v2992 = vunpack.c.l.b16 %v538
    %v2993 = vunpack.c.h.b16 %v538
    %v2994 = vunpack.c.l.b16 %v539
    %v2995 = vunpack.c.h.b16 %v539
    %v2996 = vunpack.c.l.b16 %v540
    %v2997 = vunpack.c.h.b16 %v540
    %v2998 = vunpack.c.l.b16 %v541
    %v2999 = vunpack.c.h.b16 %v541
    %v3000 = vunpack.c.l.b16 %v542
    %v3001 = vunpack.c.h.b16 %v542
    %v3002 = vunpack.c.l.b16 %v543
    %v3003 = vunpack.c.h.b16 %v543
    %v3004 = vunpack.c.l.b16 %v544
    %v3005 = vunpack.c.h.b16 %v544
    %v3006 = vunpack.c.l.b16 %v545
    %v3007 = vunpack.c.h.b16 %v545
    %v3008 = vunpack.c.l.b16 %v546
    %v3009 = vunpack.c.h.b16 %v546
    %v3010 = vunpack.c.l.b16 %v547
    %v3011 = vunpack.c.h.b16 %v547
    %v3012 = vunpack.c.l.b16 %v548
    %v3013 = vunpack.c.h.b16 %v548
    %v3014 = vunpack.c.l.b16 %v549
    %v3015 = vunpack.c.h.b16 %v549
    %v3016 = vunpack.c.l.b16 %v550
    %v3017 = vunpack.c.h.b16 %v550
    %v3018 = vunpack.c.l.b16 %v551
    %v3019 = vunpack.c.h.b16 %v551
    %v3020 = vunpack.c.l.b16 %v552
    %v3021 = vunpack.c.h.b16 %v552
    %v3022 = vunpack.c.l.b16 %v553
    %v3023 = vunpack.c.h.b16 %v553
    %v3024 = vunpack.c.l.b16 %v554
    %v3025 = vunpack.c.h.b16 %v554
    %v3026 = vunpack.c.l.b16 %v555
    %v3027 = vunpack.c.h.b16 %v555
    %v3028 = vunpack.c.l.b16 %v556
    %v3029 = vunpack.c.h.b16 %v556
    %v3030 = vunpack.c.l.b16 %v557
    %v3031 = vunpack.c.h.b16 %v557
    %v3032 = vunpack.c.l.b16 %v558
    %v3033 = vunpack.c.h.b16 %v558
    %v3034 = vunpack.c.l.b16 %v559
    %v3035 = vunpack.c.h.b16 %v559
    %v3036 = vunpack.c.l.b16 %v560
    %v3037 = vunpack.c.h.b16 %v560
    %v3038 = vunpack.c.l.b16 %v561
    %v3039 = vunpack.c.h.b16 %v561
    %v3040 = vunpack.c.l.b16 %v562
    %v3041 = vunpack.c.h.b16 %v562
    %v3042 = vunpack.c.l.b16 %v563
    %v3043 = vunpack.c.h.b16 %v563
    %v3044 = vunpack.c.l.b16 %v564
    %v3045 = vunpack.c.h.b16 %v564
    %v3046 = vunpack.c.l.b16 %v565
    %v3047 = vunpack.c.h.b16 %v565
    %v3048 = vunpack.c.l.b16 %v566
    %v3049 = vunpack.c.h.b16 %v566
    %v3050 = vunpack.c.l.b16 %v567
    %v3051 = vunpack.c.h.b16 %v567
    %v3052 = vunpack.c.l.b16 %v568
    %v3053 = vunpack.c.h.b16 %v568
    %v3054 = vunpack.c.l.b16 %v569
    %v3055 = vunpack.c.h.b16 %v569
    %v3056 = vunpack.c.l.b16 %v570
    %v3057 = vunpack.c.h.b16 %v570
    %v3058 = vunpack.c.l.b16 %v571
    %v3059 = vunpack.c.h.b16 %v571
    %v3060 = vunpack.c.l.b16 %v572
    %v3061 = vunpack.c.h.b16 %v572
    %v3062 = vunpack.c.l.b16 %v573
    %v3063 = vunpack.c.h.b16 %v573
    %v3064 = vunpack.c.l.b16 %v574
    %v3065 = vunpack.c.h.b16 %v574
    %v3066 = vunpack.c.l.b16 %v575
    %v3067 = vunpack.c.h.b16 %v575
    %v3068 = vunpack.c.l.b16 %v576
    %v3069 = vunpack.c.h.b16 %v576
    %v3070 = vunpack.c.l.b16 %v577
    %v3071 = vunpack.c.h.b16 %v577
    %v3072 = vunpack.c.l.b16 %v578
    %v3073 = vunpack.c.h.b16 %v578
    %v3074 = vunpack.c.l.b16 %v579
    %v3075 = vunpack.c.h.b16 %v579
    %v3076 = vunpack.c.l.b16 %v580
    %v3077 = vunpack.c.h.b16 %v580
    %v3078 = vunpack.c.l.b16 %v581
    %v3079 = vunpack.c.h.b16 %v581
    %v3080 = vunpack.c.l.b16 %v582
    %v3081 = vunpack.c.h.b16 %v582
    %v3082 = vunpack.c.l.b16 %v583
    %v3083 = vunpack.c.h.b16 %v583
    %v3084 = vunpack.c.l.b16 %v584
    %v3085 = vunpack.c.h.b16 %v584
    %v3086 = vunpack.c.l.b16 %v585
    %v3087 = vunpack.c.h.b16 %v585
    %v3088 = vunpack.c.l.b16 %v586
    %v3089 = vunpack.c.h.b16 %v586
    %v3090 = vunpack.c.l.b16 %v587
    %v3091 = vunpack.c.h.b16 %v587
    %v3092 = vunpack.c.l.b16 %v588
    %v3093 = vunpack.c.h.b16 %v588
    %v3094 = vunpack.c.l.b16 %v589
    %v3095 = vunpack.c.h.b16 %v589
    %v3096 = vunpack.c.l.b16 %v590
    %v3097 = vunpack.c.h.b16 %v590
    %v3098 = vunpack.c.l.b16 %v591
    %v3099 = vunpack.c.h.b16 %v591
    %v3100 = vunpack.c.l.b16 %v592
    %v3101 = vunpack.c.h.b16 %v592
    %v3102 = vunpack.c.l.b16 %v593
    %v3103 = vunpack.c.h.b16 %v593
    %v3104 = vunpack.c.l.b16 %v594
    %v3105 = vunpack.c.h.b16 %v594
    %v3106 = vunpack.c.l.b16 %v595
    %v3107 = vunpack.c.h.b16 %v595
    %v3108 = vunpack.c.l.b16 %v596
    %v3109 = vunpack.c.h.b16 %v596
    %v3110 = vunpack.c.l.b16 %v597
    %v3111 = vunpack.c.h.b16 %v597
    %v3112 = vunpack.c.l.b16 %v598
    %v3113 = vunpack.c.h.b16 %v598
    %v3114 = vunpack.c.l.b16 %v599
    %v3115 = vunpack.c.h.b16 %v599
    %v3116 = vunpack.c.l.b16 %v600
    %v3117 = vunpack.c.h.b16 %v600
    %v3118 = vunpack.c.l.b16 %v601
    %v3119 = vunpack.c.h.b16 %v601
    %v3120 = vunpack.c.l.b16 %v602
    %v3121 = vunpack.c.h.b16 %v602
    %v3122 = vunpack.c.l.b16 %v603
    %v3123 = vunpack.c.h.b16 %v603
    %v3124 = vunpack.c.l.b16 %v604
    %v3125 = vunpack.c.h.b16 %v604
    %v3126 = vunpack.c.l.b16 %v605
    %v3127 = vunpack.c.h.b16 %v605
    %v3128 = vunpack.c.l.b16 %v606
    %v3129 = vunpack.c.h.b16 %v606
    %v3130 = vunpack.c.l.b16 %v607
    %v3131 = vunpack.c.h.b16 %v607
    %v3132 = vunpack.c.l.b16 %v608
    %v3133 = vunpack.c.h.b16 %v608
    %v3134 = vunpack.c.l.b16 %v609
    %v3135 = vunpack.c.h.b16 %v609
    %v3136 = vunpack.c.l.b16 %v610
    %v3137 = vunpack.c.h.b16 %v610
    %v3138 = vunpack.c.l.b16 %v611
    %v3139 = vunpack.c.h.b16 %v611
    %v3140 = vunpack.c.l.b16 %v612
    %v3141 = vunpack.c.h.b16 %v612
    %v3142 = vunpack.c.l.b16 %v613
    %v3143 = vunpack.c.h.b16 %v613
    %v3144 = vunpack.c.l.b16 %v614
    %v3145 = vunpack.c.h.b16 %v614
    %v3146 = vunpack.c.l.b16 %v615
    %v3147 = vunpack.c.h.b16 %v615
    %v3148 = vunpack.c.l.b16 %v616
    %v3149 = vunpack.c.h.b16 %v616
    %v3150 = vunpack.c.l.b16 %v617
    %v3151 = vunpack.c.h.b16 %v617
    %v3152 = vunpack.c.l.b16 %v618
    %v3153 = vunpack.c.h.b16 %v618
    %v3154 = vunpack.c.l.b16 %v619
    %v3155 = vunpack.c.h.b16 %v619
    %v3156 = vunpack.c.l.b16 %v620
    %v3157 = vunpack.c.h.b16 %v620
    %v3158 = vunpack.c.l.b16 %v621
    %v3159 = vunpack.c.h.b16 %v621
    %v3160 = vunpack.c.l.b16 %v622
    %v3161 = vunpack.c.h.b16 %v622
    %v3162 = vunpack.c.l.b16 %v623
    %v3163 = vunpack.c.h.b16 %v623
    %v3164 = vunpack.c.l.b16 %v624
    %v3165 = vunpack.c.h.b16 %v624
    %v3166 = vunpack.c.l.b16 %v625
    %v3167 = vunpack.c.h.b16 %v625
    %v3168 = vunpack.c.l.b16 %v626
    %v3169 = vunpack.c.h.b16 %v626
    %v3170 = vunpack.c.l.b16 %v627
    %v3171 = vunpack.c.h.b16 %v627
    %v3172 = vunpack.c.l.b16 %v628
    %v3173 = vunpack.c.h.b16 %v628
    %v3174 = vunpack.c.l.b16 %v629
    %v3175 = vunpack.c.h.b16 %v629
    %v3176 = vunpack.c.l.b16 %v630
    %v3177 = vunpack.c.h.b16 %v630
    %v3178 = vunpack.c.l.b16 %v631
    %v3179 = vunpack.c.h.b16 %v631
    %v3180 = vunpack.c.l.b16 %v632
    %v3181 = vunpack.c.h.b16 %v632
    %v3182 = vunpack.c.l.b16 %v633
    %v3183 = vunpack.c.h.b16 %v633
    %v3184 = vunpack.c.l.b16 %v634
    %v3185 = vunpack.c.h.b16 %v634
    %v3186 = vunpack.c.l.b16 %v635
    %v3187 = vunpack.c.h.b16 %v635
    %v3188 = vunpack.c.l.b16 %v636
    %v3189 = vunpack.c.h.b16 %v636
    %v3190 = vunpack.c.l.b16 %v637
    %v3191 = vunpack.c.h.b16 %v637
    %v3192 = vunpack.c.l.b16 %v638
    %v3193 = vunpack.c.h.b16 %v638
    %v3194 = vunpack.c.l.b16 %v639
    %v3195 = vunpack.c.h.b16 %v639
    %v3196 = vunpack.c.l.b16 %v640
    %v3197 = vunpack.c.h.b16 %v640
    %v3198 = vunpack.c.l.b16 %v641
    %v3199 = vunpack.c.h.b16 %v641
    %v3200 = vunpack.c.l.b16 %v642
    %v3201 = vunpack.c.h.b16 %v642
    %v3202 = vunpack.c.l.b16 %v643
    %v3203 = vunpack.c.h.b16 %v643
    %v3204 = vunpack.c.l.b16 %v644
    %v3205 = vunpack.c.h.b16 %v644
    %v3206 = vunpack.c.l.b16 %v645
    %v3207 = vunpack.c.h.b16 %v645
    %v3208 = vunpack.c.l.b16 %v646
    %v3209 = vunpack.c.h.b16 %v646
    %v3210 = vunpack.c.l.b16 %v647
    %v3211 = vunpack.c.h.b16 %v647
    %v3212 = vunpack.c.l.b16 %v648
    %v3213 = vunpack.c.h.b16 %v648
    %v3214 = vunpack.c.l.b16 %v649
    %v3215 = vunpack.c.h.b16 %v649
    %v3216 = vunpack.c.l.b16 %v650
    %v3217 = vunpack.c.h.b16 %v650
    %v3218 = vunpack.c.l.b16 %v651
    %v3219 = vunpack.c.h.b16 %v651
    %v3220 = vunpack.c.l.b16 %v652
    %v3221 = vunpack.c.h.b16 %v652
    %v3222 = vunpack.c.l.b16 %v653
    %v3223 = vunpack.c.h.b16 %v653
    %v3224 = vunpack.c.l.b16 %v654
    %v3225 = vunpack.c.h.b16 %v654
    %v3226 = vunpack.c.l.b16 %v655
    %v3227 = vunpack.c.h.b16 %v655
    %v3228 = vunpack.c.l.b16 %v656
    %v3229 = vunpack.c.h.b16 %v656
    %v3230 = vunpack.c.l.b16 %v657
    %v3231 = vunpack.c.h.b16 %v657
    %v3232 = vunpack.c.l.b16 %v658
    %v3233 = vunpack.c.h.b16 %v658
    %v3234 = vunpack.c.l.b16 %v659
    %v3235 = vunpack.c.h.b16 %v659
    %v3236 = vunpack.c.l.b16 %v660
    %v3237 = vunpack.c.h.b16 %v660
    %v3238 = vunpack.c.l.b16 %v661
    %v3239 = vunpack.c.h.b16 %v661
    %v3240 = vunpack.c.l.b16 %v662
    %v3241 = vunpack.c.h.b16 %v662
    %v3242 = vunpack.c.l.b16 %v663
    %v3243 = vunpack.c.h.b16 %v663
    %v3244 = vunpack.c.l.b16 %v664
    %v3245 = vunpack.c.h.b16 %v664
    %v3246 = vunpack.c.l.b16 %v665
    %v3247 = vunpack.c.h.b16 %v665
    %v3248 = vunpack.c.l.b16 %v666
    %v3249 = vunpack.c.h.b16 %v666
    %v3250 = vunpack.c.l.b16 %v667
    %v3251 = vunpack.c.h.b16 %v667
    %v3252 = vunpack.c.l.b16 %v668
    %v3253 = vunpack.c.h.b16 %v668
    %v3254 = vunpack.c.l.b16 %v669
    %v3255 = vunpack.c.h.b16 %v669
    %v3256 = vunpack.c.l.b16 %v670
    %v3257 = vunpack.c.h.b16 %v670
    %v3258 = vunpack.c.l.b16 %v671
    %v3259 = vunpack.c.h.b16 %v671
    %v3260 = vunpack.c.l.b16 %v672
    %v3261 = vunpack.c.h.b16 %v672
    %v3262 = vunpack.c.l.b16 %v673
    %v3263 = vunpack.c.h.b16 %v673
    %v3264 = vunpack.c.l.b16 %v674
    %v3265 = vunpack.c.h.b16 %v674
    %v3266 = vunpack.c.l.b16 %v675
    %v3267 = vunpack.c.h.b16 %v675
    %v3268 = vunpack.c.l.b16 %v676
    %v3269 = vunpack.c.h.b16 %v676
    %v3270 = vunpack.c.l.b16 %v677
    %v3271 = vunpack.c.h.b16 %v677
    %v3272 = vunpack.c.l.b16 %v678
    %v3273 = vunpack.c.h.b16 %v678
    %v3274 = vunpack.c.l.b16 %v679
    %v3275 = vunpack.c.h.b16 %v679
    %v3276 = vunpack.c.l.b16 %v680
    %v3277 = vunpack.c.h.b16 %v680
    %v3278 = vunpack.c.l.b16 %v681
    %v3279 = vunpack.c.h.b16 %v681
    %v3280 = vunpack.c.l.b16 %v682
    %v3281 = vunpack.c.h.b16 %v682
    %v3282 = vunpack.c.l.b16 %v683
    %v3283 = vunpack.c.h.b16 %v683
    %v3284 = vunpack.c.l.b16 %v684
    %v3285 = vunpack.c.h.b16 %v684
    %v3286 = vunpack.c.l.b16 %v685
    %v3287 = vunpack.c.h.b16 %v685
    %v3288 = vunpack.c.l.b16 %v686
    %v3289 = vunpack.c.h.b16 %v686
    %v3290 = vunpack.c.l.b16 %v687
    %v3291 = vunpack.c.h.b16 %v687
    %v3292 = vunpack.c.l.b16 %v688
    %v3293 = vunpack.c.h.b16 %v688
    %v3294 = vunpack.c.l.b16 %v689
    %v3295 = vunpack.c.h.b16 %v689
    %v3296 = vunpack.c.l.b16 %v690
    %v3297 = vunpack.c.h.b16 %v690
    %v3298 = vunpack.c.l.b16 %v691
    %v3299 = vunpack.c.h.b16 %v691
    %v3300 = vunpack.c.l.b16 %v692
    %v3301 = vunpack.c.h.b16 %v692
    %v3302 = vunpack.c.l.b16 %v693
    %v3303 = vunpack.c.h.b16 %v693
    %v3304 = vunpack.c.l.b16 %v694
    %v3305 = vunpack.c.h.b16 %v694
    %v3306 = vunpack.c.l.b16 %v695
    %v3307 = vunpack.c.h.b16 %v695
    %v3308 = vunpack.c.l.b16 %v696
    %v3309 = vunpack.c.h.b16 %v696
    %v3310 = vunpack.c.l.b16 %v697
    %v3311 = vunpack.c.h.b16 %v697
    %v3312 = vunpack.c.l.b16 %v698
    %v3313 = vunpack.c.h.b16 %v698
    %v3314 = vunpack.c.l.b16 %v699
    %v3315 = vunpack.c.h.b16 %v699
    %v3316 = vunpack.c.l.b16 %v700
    %v3317 = vunpack.c.h.b16 %v700
    %v3318 = vunpack.c.l.b16 %v701
    %v3319 = vunpack.c.h.b16 %v701
    %v3320 = vunpack.c.l.b16 %v702
    %v3321 = vunpack.c.h.b16 %v702
    %v3322 = vunpack.c.l.b16 %v703
    %v3323 = vunpack.c.h.b16 %v703
    %v3324 = vunpack.c.l.b16 %v704
    %v3325 = vunpack.c.h.b16 %v704
    %v3326 = vunpack.c.l.b16 %v705
    %v3327 = vunpack.c.h.b16 %v705
    %v3328 = vunpack.c.l.b16 %v706
    %v3329 = vunpack.c.h.b16 %v706
    %v3330 = vunpack.c.l.b16 %v707
    %v3331 = vunpack.c.h.b16 %v707
    %v3332 = vunpack.c.l.b16 %v708
    %v3333 = vunpack.c.h.b16 %v708
    %v3334 = vunpack.c.l.b16 %v709
    %v3335 = vunpack.c.h.b16 %v709
    %v3336 = vunpack.c.l.b16 %v710
    %v3337 = vunpack.c.h.b16 %v710
    %v3338 = vunpack.c.l.b16 %v711
    %v3339 = vunpack.c.h.b16 %v711
    %v3340 = vunpack.c.l.b16 %v712
    %v3341 = vunpack.c.h.b16 %v712
    %v3342 = vunpack.c.l.b16 %v713
    %v3343 = vunpack.c.h.b16 %v713
    %v3344 = vunpack.c.l.b16 %v714
    %v3345 = vunpack.c.h.b16 %v714
    %v3346 = vunpack.c.l.b16 %v715
    %v3347 = vunpack.c.h.b16 %v715
    %v3348 = vunpack.c.l.b16 %v716
    %v3349 = vunpack.c.h.b16 %v716
    %v3350 = vunpack.c.l.b16 %v717
    %v3351 = vunpack.c.h.b16 %v717
    %v3352 = vunpack.c.l.b16 %v718
    %v3353 = vunpack.c.h.b16 %v718
    %v3354 = vunpack.c.l.b16 %v719
    %v3355 = vunpack.c.h.b16 %v719
    %v3356 = vunpack.c.l.b16 %v720
    %v3357 = vunpack.c.h.b16 %v720
    %v3358 = vunpack.c.l.b16 %v721
    %v3359 = vunpack.c.h.b16 %v721
    %v3360 = vunpack.c.l.b16 %v722
    %v3361 = vunpack.c.h.b16 %v722
    %v3362 = vunpack.c.l.b16 %v723
    %v3363 = vunpack.c.h.b16 %v723
    %v3364 = vunpack.c.l.b16 %v724
    %v3365 = vunpack.c.h.b16 %v724
    %v3366 = vunpack.c.l.b16 %v725
    %v3367 = vunpack.c.h.b16 %v725
    %v3368 = vunpack.c.l.b16 %v726
    %v3369 = vunpack.c.h.b16 %v726
    %v3370 = vunpack.c.l.b16 %v727
    %v3371 = vunpack.c.h.b16 %v727
    %v3372 = vunpack.c.l.b16 %v728
    %v3373 = vunpack.c.h.b16 %v728
    %v3374 = vunpack.c.l.b16 %v729
    %v3375 = vunpack.c.h.b16 %v729
    %v3376 = vunpack.c.l.b16 %v730
    %v3377 = vunpack.c.h.b16 %v730
    %v3378 = vunpack.c.l.b16 %v731
    %v3379 = vunpack.c.h.b16 %v731
    %v3380 = vunpack.c.l.b16 %v732
    %v3381 = vunpack.c.h.b16 %v732
    %v3382 = vunpack.c.l.b16 %v733
    %v3383 = vunpack.c.h.b16 %v733
    %v3384 = vunpack.c.l.b16 %v734
    %v3385 = vunpack.c.h.b16 %v734
    %v3386 = vunpack.c.l.b16 %v735
    %v3387 = vunpack.c.h.b16 %v735
    %v3388 = vunpack.c.l.b16 %v736
    %v3389 = vunpack.c.h.b16 %v736
    %v3390 = vunpack.c.l.b16 %v737
    %v3391 = vunpack.c.h.b16 %v737
    %v3392 = vunpack.c.l.b16 %v738
    %v3393 = vunpack.c.h.b16 %v738
    %v3394 = vunpack.c.l.b16 %v739
    %v3395 = vunpack.c.h.b16 %v739
    %v3396 = vunpack.c.l.b16 %v740
    %v3397 = vunpack.c.h.b16 %v740
    %v3398 = vunpack.c.l.b16 %v741
    %v3399 = vunpack.c.h.b16 %v741
    %v3400 = vunpack.c.l.b16 %v742
    %v3401 = vunpack.c.h.b16 %v742
    %v3402 = vunpack.c.l.b16 %v743
    %v3403 = vunpack.c.h.b16 %v743
    %v3404 = vunpack.c.l.b16 %v744
    %v3405 = vunpack.c.h.b16 %v744
    %v3406 = vunpack.c.l.b16 %v745
    %v3407 = vunpack.c.h.b16 %v745
    %v3408 = vunpack.c.l.b16 %v746
    %v3409 = vunpack.c.h.b16 %v746
    %v3410 = vunpack.c.l.b16 %v747
    %v3411 = vunpack.c.h.b16 %v747
    %v3412 = vunpack.c.l.b16 %v748
    %v3413 = vunpack.c.h.b16 %v748
    %v3414 = vunpack.c.l.b16 %v749
    %v3415 = vunpack.c.h.b16 %v749
    %v3416 = vunpack.c.l.b16 %v750
    %v3417 = vunpack.c.h.b16 %v750
    %v3418 = vunpack.c.l.b16 %v751
    %v3419 = vunpack.c.h.b16 %v751
    %v3420 = vunpack.c.l.b16 %v752
    %v3421 = vunpack.c.h.b16 %v752
    %v3422 = vunpack.c.l.b16 %v753
    %v3423 = vunpack.c.h.b16 %v753
    %v3424 = vunpack.c.l.b16 %v754
    %v3425 = vunpack.c.h.b16 %v754
    %v3426 = vunpack.c.l.b16 %v755
    %v3427 = vunpack.c.h.b16 %v755
    %v3428 = vunpack.c.l.b16 %v756
    %v3429 = vunpack.c.h.b16 %v756
    %v3430 = vunpack.c.l.b16 %v757
    %v3431 = vunpack.c.h.b16 %v757
    %v3432 = vunpack.c.l.b16 %v758
    %v3433 = vunpack.c.h.b16 %v758
    %v3434 = vunpack.c.l.b16 %v759
    %v3435 = vunpack.c.h.b16 %v759
    %v3436 = vunpack.c.l.b16 %v760
    %v3437 = vunpack.c.h.b16 %v760
    %v3438 = vunpack.c.l.b16 %v761
    %v3439 = vunpack.c.h.b16 %v761
    %v3440 = vunpack.c.l.b16 %v762
    %v3441 = vunpack.c.h.b16 %v762
    %v3442 = vunpack.c.l.b16 %v763
    %v3443 = vunpack.c.h.b16 %v763
    %v3444 = vunpack.c.l.b16 %v764
    %v3445 = vunpack.c.h.b16 %v764
    %v3446 = vunpack.c.l.b16 %v765
    %v3447 = vunpack.c.h.b16 %v765
    %v3448 = vunpack.c.l.b16 %v766
    %v3449 = vunpack.c.h.b16 %v766
    %v3450 = vunpack.c.l.b16 %v767
    %v3451 = vunpack.c.h.b16 %v767
    %v3452 = vunpack.c.l.b16 %v768
    %v3453 = vunpack.c.h.b16 %v768
    %v3454 = vunpack.c.l.b16 %v769
    %v3455 = vunpack.c.h.b16 %v769
    %v3456 = vunpack.c.l.b16 %v770
    %v3457 = vunpack.c.h.b16 %v770
    %v3458 = vunpack.c.l.b16 %v771
    %v3459 = vunpack.c.h.b16 %v771
    %v3460 = vunpack.c.l.b16 %v772
    %v3461 = vunpack.c.h.b16 %v772
    %v3462 = vunpack.c.l.b16 %v773
    %v3463 = vunpack.c.h.b16 %v773
    %v3464 = vunpack.c.l.b16 %v774
    %v3465 = vunpack.c.h.b16 %v774
    %v3466 = vunpack.c.l.b16 %v775
    %v3467 = vunpack.c.h.b16 %v775
    %v3468 = vunpack.c.l.b16 %v776
    %v3469 = vunpack.c.h.b16 %v776
    %v3470 = vunpack.c.l.b16 %v777
    %v3471 = vunpack.c.h.b16 %v777
    %v3472 = vunpack.c.l.b16 %v778
    %v3473 = vunpack.c.h.b16 %v778
    %v3474 = vunpack.c.l.b16 %v779
    %v3475 = vunpack.c.h.b16 %v779
    %v3476 = vunpack.c.l.b16 %v780
    %v3477 = vunpack.c.h.b16 %v780
    %v3478 = vunpack.c.l.b16 %v781
    %v3479 = vunpack.c.h.b16 %v781
    %v3480 = vunpack.c.l.b16 %v782
    %v3481 = vunpack.c.h.b16 %v782
    %v3482 = vunpack.c.l.b16 %v783
    %v3483 = vunpack.c.h.b16 %v783
    %v3484 = vunpack.c.l.b16 %v784
    %v3485 = vunpack.c.h.b16 %v784
    %v3486 = vunpack.c.l.b16 %v785
    %v3487 = vunpack.c.h.b16 %v785
    %v3488 = vunpack.c.l.b16 %v786
    %v3489 = vunpack.c.h.b16 %v786
    %v3490 = vunpack.c.l.b16 %v787
    %v3491 = vunpack.c.h.b16 %v787
    %v3492 = vunpack.c.l.b16 %v788
    %v3493 = vunpack.c.h.b16 %v788
    %v3494 = vunpack.c.l.b16 %v789
    %v3495 = vunpack.c.h.b16 %v789
    %v3496 = vunpack.c.l.b16 %v790
    %v3497 = vunpack.c.h.b16 %v790
    %v3498 = vunpack.c.l.b16 %v791
    %v3499 = vunpack.c.h.b16 %v791
    %v3500 = vunpack.c.l.b16 %v792
    %v3501 = vunpack.c.h.b16 %v792
    %v3502 = vunpack.c.l.b16 %v793
    %v3503 = vunpack.c.h.b16 %v793
    %v3504 = vunpack.c.l.b16 %v794
    %v3505 = vunpack.c.h.b16 %v794
    %v3506 = vunpack.c.l.b16 %v795
    %v3507 = vunpack.c.h.b16 %v795
    %v3508 = vunpack.c.l.b16 %v796
    %v3509 = vunpack.c.h.b16 %v796
    %v3510 = vunpack.c.l.b16 %v797
    %v3511 = vunpack.c.h.b16 %v797
    %v3512 = vunpack.c.l.b16 %v798
    %v3513 = vunpack.c.h.b16 %v798
    %v3514 = vunpack.c.l.b16 %v799
    %v3515 = vunpack.c.h.b16 %v799
    %v3516 = vunpack.c.l.b16 %v800
    %v3517 = vunpack.c.h.b16 %v800
    %v3518 = vunpack.c.l.b16 %v801
    %v3519 = vunpack.c.h.b16 %v801
    %v3520 = vunpack.c.l.b16 %v802
    %v3521 = vunpack.c.h.b16 %v802
    %v3522 = vunpack.c.l.b16 %v803
    %v3523 = vunpack.c.h.b16 %v803
    %v3524 = vunpack.c.l.b16 %v804
    %v3525 = vunpack.c.h.b16 %v804
    %v3526 = vunpack.c.l.b16 %v805
    %v3527 = vunpack.c.h.b16 %v805
    %v3528 = vunpack.c.l.b16 %v806
    %v3529 = vunpack.c.h.b16 %v806
    %v3530 = vunpack.c.l.b16 %v807
    %v3531 = vunpack.c.h.b16 %v807
    %v3532 = vunpack.c.l.b16 %v808
    %v3533 = vunpack.c.h.b16 %v808
    %v3534 = vunpack.c.l.b16 %v809
    %v3535 = vunpack.c.h.b16 %v809
    %v3536 = vunpack.c.l.b16 %v810
    %v3537 = vunpack.c.h.b16 %v810
    %v3538 = vunpack.c.l.b16 %v811
    %v3539 = vunpack.c.h.b16 %v811
    %v3540 = vunpack.c.l.b16 %v812
    %v3541 = vunpack.c.h.b16 %v812
    %v3542 = vunpack.c.l.b16 %v813
    %v3543 = vunpack.c.h.b16 %v813
    %v3544 = vunpack.c.l.b16 %v814
    %v3545 = vunpack.c.h.b16 %v814
    %v3546 = vunpack.c.l.b16 %v815
    %v3547 = vunpack.c.h.b16 %v815
    %v3548 = vunpack.c.l.b16 %v816
    %v3549 = vunpack.c.h.b16 %v816
    %v3550 = vunpack.c.l.b16 %v817
    %v3551 = vunpack.c.h.b16 %v817
    %v3552 = vunpack.c.l.b16 %v818
    %v3553 = vunpack.c.h.b16 %v818
    %v3554 = vunpack.c.l.b16 %v819
    %v3555 = vunpack.c.h.b16 %v819
    %v3556 = vunpack.c.l.b16 %v820
    %v3557 = vunpack.c.h.b16 %v820
    %v3558 = vunpack.c.l.b16 %v821
    %v3559 = vunpack.c.h.b16 %v821
    %v3560 = vunpack.c.l.b16 %v822
    %v3561 = vunpack.c.h.b16 %v822
    %v3562 = vunpack.c.l.b16 %v823
    %v3563 = vunpack.c.h.b16 %v823
    %v3564 = vunpack.c.l.b16 %v824
    %v3565 = vunpack.c.h.b16 %v824
    %v3566 = vunpack.c.l.b16 %v825
    %v3567 = vunpack.c.h.b16 %v825
    %v3568 = vunpack.c.l.b16 %v826
    %v3569 = vunpack.c.h.b16 %v826
    %v3570 = vunpack.c.l.b16 %v827
    %v3571 = vunpack.c.h.b16 %v827
    %v3572 = vunpack.c.l.b16 %v828
    %v3573 = vunpack.c.h.b16 %v828
    %v3574 = vunpack.c.l.b16 %v829
    %v3575 = vunpack.c.h.b16 %v829
    %v3576 = vunpack.c.l.b16 %v830
    %v3577 = vunpack.c.h.b16 %v830
    %v3578 = vunpack.c.l.b16 %v831
    %v3579 = vunpack.c.h.b16 %v831
    %v3580 = vunpack.c.l.b16 %v832
    %v3581 = vunpack.c.h.b16 %v832
    %v3582 = vunpack.c.l.b16 %v833
    %v3583 = vunpack.c.h.b16 %v833
    %v3584 = vunpack.c.l.b16 %v834
    %v3585 = vunpack.c.h.b16 %v834
    %v3586 = vunpack.c.l.b16 %v835
    %v3587 = vunpack.c.h.b16 %v835
    %v3588 = vunpack.c.l.b16 %v836
    %v3589 = vunpack.c.h.b16 %v836
    %v3590 = vunpack.c.l.b16 %v837
    %v3591 = vunpack.c.h.b16 %v837
    %v3592 = vunpack.c.l.b16 %v838
    %v3593 = vunpack.c.h.b16 %v838
    %v3594 = vunpack.c.l.b16 %v839
    %v3595 = vunpack.c.h.b16 %v839
    %v3596 = vunpack.c.l.b16 %v840
    %v3597 = vunpack.c.h.b16 %v840
    %v3598 = vunpack.c.l.b16 %v841
    %v3599 = vunpack.c.h.b16 %v841
    %v3600 = vunpack.c.l.b16 %v842
    %v3601 = vunpack.c.h.b16 %v842
    %v3602 = vunpack.c.l.b16 %v843
    %v3603 = vunpack.c.h.b16 %v843
    %v3604 = vunpack.c.l.b16 %v844
    %v3605 = vunpack.c.h.b16 %v844
    %v3606 = vunpack.c.l.b16 %v845
    %v3607 = vunpack.c.h.b16 %v845
    %v3608 = vunpack.c.l.b16 %v846
    %v3609 = vunpack.c.h.b16 %v846
    %v3610 = vunpack.c.l.b16 %v847
    %v3611 = vunpack.c.h.b16 %v847
    %v3612 = vunpack.c.l.b16 %v848
    %v3613 = vunpack.c.h.b16 %v848
    %v3614 = vunpack.c.l.b16 %v849
    %v3615 = vunpack.c.h.b16 %v849
    %v3616 = vunpack.c.l.b16 %v850
    %v3617 = vunpack.c.h.b16 %v850
    %v3618 = vunpack.c.l.b16 %v851
    %v3619 = vunpack.c.h.b16 %v851
    %v3620 = vunpack.c.l.b16 %v852
    %v3621 = vunpack.c.h.b16 %v852
    %v3622 = vunpack.c.l.b16 %v853
    %v3623 = vunpack.c.h.b16 %v853
    %v3624 = vunpack.c.l.b16 %v854
    %v3625 = vunpack.c.h.b16 %v854
    %v3626 = vunpack.c.l.b16 %v855
    %v3627 = vunpack.c.h.b16 %v855
    %v3628 = vunpack.c.l.b16 %v856
    %v3629 = vunpack.c.h.b16 %v856
    %v3630 = vunpack.c.l.b16 %v857
    %v3631 = vunpack.c.h.b16 %v857
    %v3632 = vunpack.c.l.b16 %v858
    %v3633 = vunpack.c.h.b16 %v858
    %v3634 = vunpack.c.l.b16 %v859
    %v3635 = vunpack.c.h.b16 %v859
    %v3636 = vunpack.c.l.b16 %v860
    %v3637 = vunpack.c.h.b16 %v860
    %v3638 = vunpack.c.l.b16 %v861
    %v3639 = vunpack.c.h.b16 %v861
    %v3640 = vunpack.c.l.b16 %v862
    %v3641 = vunpack.c.h.b16 %v862
    %v3642 = vunpack.c.l.b16 %v863
    %v3643 = vunpack.c.h.b16 %v863
    %v3644 = vunpack.c.l.b16 %v864
    %v3645 = vunpack.c.h.b16 %v864
    %v3646 = vunpack.c.l.b16 %v865
    %v3647 = vunpack.c.h.b16 %v865
    %v3648 = vunpack.c.l.b16 %v866
    %v3649 = vunpack.c.h.b16 %v866
    %v3650 = vunpack.c.l.b16 %v867
    %v3651 = vunpack.c.h.b16 %v867
    %v3652 = vunpack.c.l.b16 %v868
    %v3653 = vunpack.c.h.b16 %v868
    %v3654 = vunpack.c.l.b16 %v869
    %v3655 = vunpack.c.h.b16 %v869
    %v3656 = vunpack.c.l.b16 %v870
    %v3657 = vunpack.c.h.b16 %v870
    %v3658 = vunpack.c.l.b16 %v871
    %v3659 = vunpack.c.h.b16 %v871
    %v3660 = vunpack.c.l.b16 %v872
    %v3661 = vunpack.c.h.b16 %v872
    %v3662 = vunpack.c.l.b16 %v873
    %v3663 = vunpack.c.h.b16 %v873
    %v3664 = vunpack.c.l.b16 %v874
    %v3665 = vunpack.c.h.b16 %v874
    %v3666 = vunpack.c.l.b16 %v875
    %v3667 = vunpack.c.h.b16 %v875
    %v3668 = vunpack.c.l.b16 %v876
    %v3669 = vunpack.c.h.b16 %v876
    %v3670 = vunpack.c.l.b16 %v877
    %v3671 = vunpack.c.h.b16 %v877
    %v3672 = vunpack.c.l.b16 %v878
    %v3673 = vunpack.c.h.b16 %v878
    %v3674 = vunpack.c.l.b16 %v879
    %v3675 = vunpack.c.h.b16 %v879
    %v3676 = vunpack.c.l.b16 %v880
    %v3677 = vunpack.c.h.b16 %v880
    %v3678 = vunpack.c.l.b16 %v881
    %v3679 = vunpack.c.h.b16 %v881
    %v3680 = vunpack.c.l.b16 %v882
    %v3681 = vunpack.c.h.b16 %v882
    %v3682 = vunpack.c.l.b16 %v883
    %v3683 = vunpack.c.h.b16 %v883
    %v3684 = vunpack.c.l.b16 %v884
    %v3685 = vunpack.c.h.b16 %v884
    %v3686 = vunpack.c.l.b16 %v885
    %v3687 = vunpack.c.h.b16 %v885
    %v3688 = vunpack.c.l.b16 %v886
    %v3689 = vunpack.c.h.b16 %v886
    %v3690 = vunpack.c.l.b16 %v887
    %v3691 = vunpack.c.h.b16 %v887
    %v3692 = vunpack.c.l.b16 %v888
    %v3693 = vunpack.c.h.b16 %v888
    %v3694 = vunpack.c.l.b16 %v889
    %v3695 = vunpack.c.h.b16 %v889
    %v3696 = vunpack.c.l.b16 %v890
    %v3697 = vunpack.c.h.b16 %v890
    %v3698 = vunpack.c.l.b16 %v891
    %v3699 = vunpack.c.h.b16 %v891
    %v3700 = vunpack.c.l.b16 %v892
    %v3701 = vunpack.c.h.b16 %v892
    %v3702 = vunpack.c.l.b16 %v893
    %v3703 = vunpack.c.h.b16 %v893
    %v3704 = vunpack.c.l.b16 %v894
    %v3705 = vunpack.c.h.b16 %v894
    %v3706 = vunpack.c.l.b16 %v895
    %v3707 = vunpack.c.h.b16 %v895
    %v3708 = vunpack.c.l.b16 %v896
    %v3709 = vunpack.c.h.b16 %v896
    %v3710 = vunpack.c.l.b16 %v897
    %v3711 = vunpack.c.h.b16 %v897
    %v3712 = vunpack.c.l.b16 %v898
    %v3713 = vunpack.c.h.b16 %v898
    %v3714 = vunpack.c.l.b16 %v899
    %v3715 = vunpack.c.h.b16 %v899
    %v3716 = vunpack.c.l.b16 %v900
    %v3717 = vunpack.c.h.b16 %v900
    %v3718 = vunpack.c.l.b16 %v901
    %v3719 = vunpack.c.h.b16 %v901
    %v3720 = vunpack.c.l.b16 %v902
    %v3721 = vunpack.c.h.b16 %v902
    %v3722 = vunpack.c.l.b16 %v903
    %v3723 = vunpack.c.h.b16 %v903
    %v3724 = vunpack.c.l.b16 %v904
    %v3725 = vunpack.c.h.b16 %v904
    %v3726 = vunpack.c.l.b16 %v905
    %v3727 = vunpack.c.h.b16 %v905
    %v3728 = vunpack.c.l.b16 %v906
    %v3729 = vunpack.c.h.b16 %v906
    %v3730 = vunpack.c.l.b16 %v907
    %v3731 = vunpack.c.h.b16 %v907
    %v3732 = vunpack.c.l.b16 %v908
    %v3733 = vunpack.c.h.b16 %v908
    %v3734 = vunpack.c.l.b16 %v909
    %v3735 = vunpack.c.h.b16 %v909
    %v3736 = vunpack.c.l.b16 %v910
    %v3737 = vunpack.c.h.b16 %v910
    %v3738 = vunpack.c.l.b16 %v911
    %v3739 = vunpack.c.h.b16 %v911
    %v3740 = vunpack.c.l.b16 %v912
    %v3741 = vunpack.c.h.b16 %v912
    %v3742 = vunpack.c.l.b16 %v913
    %v3743 = vunpack.c.h.b16 %v913
    %v3744 = vunpack.c.l.b16 %v914
    %v3745 = vunpack.c.h.b16 %v914
    %v3746 = vunpack.c.l.b16 %v915
    %v3747 = vunpack.c.h.b16 %v915
    %v3748 = vunpack.c.l.b16 %v916
    %v3749 = vunpack.c.h.b16 %v916
    %v3750 = vunpack.c.l.b16 %v917
    %v3751 = vunpack.c.h.b16 %v917
    %v3752 = vunpack.c.l.b16 %v918
    %v3753 = vunpack.c.h.b16 %v918
    %v3754 = vunpack.c.l.b16 %v919
    %v3755 = vunpack.c.h.b16 %v919
    %v3756 = vunpack.c.l.b16 %v920
    %v3757 = vunpack.c.h.b16 %v920
    %v3758 = vunpack.c.l.b16 %v921
    %v3759 = vunpack.c.h.b16 %v921
    %v3760 = vunpack.c.l.b16 %v922
    %v3761 = vunpack.c.h.b16 %v922
    %v3762 = vunpack.c.l.b16 %v923
    %v3763 = vunpack.c.h.b16 %v923
    %v3764 = vunpack.c.l.b16 %v924
    %v3765 = vunpack.c.h.b16 %v924
    %v3766 = vunpack.c.l.b16 %v925
    %v3767 = vunpack.c.h.b16 %v925
    %v3768 = vunpack.c.l.b16 %v926
    %v3769 = vunpack.c.h.b16 %v926
    %v3770 = vunpack.c.l.b16 %v927
    %v3771 = vunpack.c.h.b16 %v927
    %v3772 = vunpack.c.l.b16 %v928
    %v3773 = vunpack.c.h.b16 %v928
    %v3774 = vunpack.c.l.b16 %v929
    %v3775 = vunpack.c.h.b16 %v929
    %v3776 = vunpack.c.l.b16 %v930
    %v3777 = vunpack.c.h.b16 %v930
    %v3778 = vunpack.c.l.b16 %v931
    %v3779 = vunpack.c.h.b16 %v931
    %v3780 = vunpack.c.l.b16 %v932
    %v3781 = vunpack.c.h.b16 %v932
    %v3782 = vunpack.c.l.b16 %v933
    %v3783 = vunpack.c.h.b16 %v933
    %v3784 = vunpack.c.l.b16 %v934
    %v3785 = vunpack.c.h.b16 %v934
    %v3786 = vunpack.c.l.b16 %v935
    %v3787 = vunpack.c.h.b16 %v935
    %v3788 = vunpack.c.l.b16 %v936
    %v3789 = vunpack.c.h.b16 %v936
    %v3790 = vunpack.c.l.b16 %v937
    %v3791 = vunpack.c.h.b16 %v937
    %v3792 = vunpack.c.l.b16 %v938
    %v3793 = vunpack.c.h.b16 %v938
    %v3794 = vunpack.c.l.b16 %v939
    %v3795 = vunpack.c.h.b16 %v939
    %v3796 = vunpack.c.l.b16 %v940
    %v3797 = vunpack.c.h.b16 %v940
    %v3798 = vunpack.c.l.b16 %v941
    %v3799 = vunpack.c.h.b16 %v941
    %v3800 = vunpack.c.l.b16 %v942
    %v3801 = vunpack.c.h.b16 %v942
    %v3802 = vunpack.c.l.b16 %v943
    %v3803 = vunpack.c.h.b16 %v943
    %v3804 = vunpack.c.l.b16 %v944
    %v3805 = vunpack.c.h.b16 %v944
    %v3806 = vunpack.c.l.b16 %v945
    %v3807 = vunpack.c.h.b16 %v945
    %v3808 = vunpack.c.l.b16 %v946
    %v3809 = vunpack.c.h.b16 %v946
    %v3810 = vunpack.c.l.b16 %v947
    %v3811 = vunpack.c.h.b16 %v947
    %v3812 = vunpack.c.l.b16 %v948
    %v3813 = vunpack.c.h.b16 %v948
    %v3814 = vunpack.c.l.b16 %v949
    %v3815 = vunpack.c.h.b16 %v949
    %v3816 = vunpack.c.l.b16 %v950
    %v3817 = vunpack.c.h.b16 %v950
    %v3818 = vunpack.c.l.b16 %v951
    %v3819 = vunpack.c.h.b16 %v951
    %v3820 = vunpack.c.l.b16 %v952
    %v3821 = vunpack.c.h.b16 %v952
    %v3822 = vunpack.c.l.b16 %v953
    %v3823 = vunpack.c.h.b16 %v953
    %v3824 = vunpack.c.l.b16 %v954
    %v3825 = vunpack.c.h.b16 %v954
    %v3826 = vunpack.c.l.b16 %v955
    %v3827 = vunpack.c.h.b16 %v955
    %v3828 = vunpack.c.l.b16 %v956
    %v3829 = vunpack.c.h.b16 %v956
    %v3830 = vunpack.c.l.b16 %v957
    %v3831 = vunpack.c.h.b16 %v957
    %v3832 = vunpack.c.l.b16 %v958
    %v3833 = vunpack.c.h.b16 %v958
    %v3834 = vunpack.c.l.b16 %v959
    %v3835 = vunpack.c.h.b16 %v959
    %v3836 = vunpack.c.l.b16 %v960
    %v3837 = vunpack.c.h.b16 %v960
    %v3838 = vunpack.c.l.b16 %v961
    %v3839 = vunpack.c.h.b16 %v961
    %v3840 = vunpack.c.l.b16 %v962
    %v3841 = vunpack.c.h.b16 %v962
    %v3842 = vunpack.c.l.b16 %v963
    %v3843 = vunpack.c.h.b16 %v963
    %v3844 = vunpack.c.l.b16 %v964
    %v3845 = vunpack.c.h.b16 %v964
    %v3846 = vunpack.c.l.b16 %v965
    %v3847 = vunpack.c.h.b16 %v965
    %v3848 = vunpack.c.l.b16 %v966
    %v3849 = vunpack.c.h.b16 %v966
    %v3850 = vunpack.c.l.b16 %v967
    %v3851 = vunpack.c.h.b16 %v967
    %v3852 = vunpack.c.l.b16 %v968
    %v3853 = vunpack.c.h.b16 %v968
    %v3854 = vunpack.c.l.b16 %v969
    %v3855 = vunpack.c.h.b16 %v969
    %v3856 = vunpack.c.l.b16 %v970
    %v3857 = vunpack.c.h.b16 %v970
    %v3858 = vunpack.c.l.b16 %v971
    %v3859 = vunpack.c.h.b16 %v971
    %v3860 = vunpack.c.l.b16 %v972
    %v3861 = vunpack.c.h.b16 %v972
    %v3862 = vunpack.c.l.b16 %v973
    %v3863 = vunpack.c.h.b16 %v973
    %v3864 = vunpack.c.l.b16 %v974
    %v3865 = vunpack.c.h.b16 %v974
    %v3866 = vunpack.c.l.b16 %v975
    %v3867 = vunpack.c.h.b16 %v975
    %v3868 = vunpack.c.l.b16 %v976
    %v3869 = vunpack.c.h.b16 %v976
    %v3870 = vunpack.c.l.b16 %v977
    %v3871 = vunpack.c.h.b16 %v977
    %v3872 = vunpack.c.l.b16 %v978
    %v3873 = vunpack.c.h.b16 %v978
    %v3874 = vunpack.c.l.b16 %v979
    %v3875 = vunpack.c.h.b16 %v979
    %v3876 = vunpack.c.l.b16 %v980
    %v3877 = vunpack.c.h.b16 %v980
    %v3878 = vunpack.c.l.b16 %v981
    %v3879 = vunpack.c.h.b16 %v981
    %v3880 = vunpack.c.l.b16 %v982
    %v3881 = vunpack.c.h.b16 %v982
    %v3882 = vunpack.c.l.b16 %v983
    %v3883 = vunpack.c.h.b16 %v983
    %v3884 = vunpack.c.l.b16 %v984
    %v3885 = vunpack.c.h.b16 %v984
    %v3886 = vunpack.c.l.b16 %v985
    %v3887 = vunpack.c.h.b16 %v985
    %v3888 = vunpack.c.l.b16 %v986
    %v3889 = vunpack.c.h.b16 %v986
    %v3890 = vunpack.c.l.b16 %v987
    %v3891 = vunpack.c.h.b16 %v987
    %v3892 = vunpack.c.l.b16 %v988
    %v3893 = vunpack.c.h.b16 %v988
    %v3894 = vunpack.c.l.b16 %v989
    %v3895 = vunpack.c.h.b16 %v989
    %v3896 = vunpack.c.l.b16 %v990
    %v3897 = vunpack.c.h.b16 %v990
    %v3898 = vunpack.c.l.b16 %v991
    %v3899 = vunpack.c.h.b16 %v991
    %v3900 = vunpack.c.l.b16 %v992
    %v3901 = vunpack.c.h.b16 %v992
    %v3902 = vunpack.c.l.b16 %v993
    %v3903 = vunpack.c.h.b16 %v993
    %v3904 = vunpack.c.l.b16 %v994
    %v3905 = vunpack.c.h.b16 %v994
    %v3906 = vunpack.c.l.b16 %v995
    %v3907 = vunpack.c.h.b16 %v995
    %v3908 = vunpack.c.l.b16 %v996
    %v3909 = vunpack.c.h.b16 %v996
    %v3910 = vunpack.c.l.b16 %v997
    %v3911 = vunpack.c.h.b16 %v997
    %v3912 = vunpack.c.l.b16 %v998
    %v3913 = vunpack.c.h.b16 %v998
    %v3914 = vunpack.c.l.b16 %v999
    %v3915 = vunpack.c.h.b16 %v999
    %v3916 = vunpack.c.l.b16 %v1000
    %v3917 = vunpack.c.h.b16 %v1000
    %v3918 = vunpack.c.l.b16 %v1001
    %v3919 = vunpack.c.h.b16 %v1001
    %v3920 = vunpack.c.l.b16 %v1002
    %v3921 = vunpack.c.h.b16 %v1002
    %v3922 = vunpack.c.l.b16 %v1003
    %v3923 = vunpack.c.h.b16 %v1003
    %v3924 = vunpack.c.l.b16 %v1004
    %v3925 = vunpack.c.h.b16 %v1004
    %v3926 = vunpack.c.l.b16 %v1005
    %v3927 = vunpack.c.h.b16 %v1005
    %v3928 = vunpack.c.l.b16 %v1006
    %v3929 = vunpack.c.h.b16 %v1006
    %v3930 = vunpack.c.l.b16 %v1007
    %v3931 = vunpack.c.h.b16 %v1007
    %v3932 = vunpack.c.l.b16 %v1008
    %v3933 = vunpack.c.h.b16 %v1008
    %v3934 = vunpack.c.l.b16 %v1009
    %v3935 = vunpack.c.h.b16 %v1009
    %v3936 = vunpack.c.l.b16 %v1010
    %v3937 = vunpack.c.h.b16 %v1010
    %v3938 = vunpack.c.l.b16 %v1011
    %v3939 = vunpack.c.h.b16 %v1011
    %v3940 = vunpack.c.l.b16 %v1012
    %v3941 = vunpack.c.h.b16 %v1012
    %v3942 = vunpack.c.l.b16 %v1013
    %v3943 = vunpack.c.h.b16 %v1013
    %v3944 = vunpack.c.l.b16 %v1014
    %v3945 = vunpack.c.h.b16 %v1014
    %v3946 = vunpack.c.l.b16 %v1015
    %v3947 = vunpack.c.h.b16 %v1015
    %v3948 = vunpack.c.l.b16 %v1016
    %v3949 = vunpack.c.h.b16 %v1016
    %v3950 = vunpack.c.l.b16 %v1017
    %v3951 = vunpack.c.h.b16 %v1017
    %v3952 = vunpack.c.l.b16 %v1018
    %v3953 = vunpack.c.h.b16 %v1018
    %v3954 = vunpack.c.l.b16 %v1019
    %v3955 = vunpack.c.h.b16 %v1019
    %v3956 = vunpack.c.l.b16 %v1020
    %v3957 = vunpack.c.h.b16 %v1020
    %v3958 = vunpack.c.l.b16 %v1021
    %v3959 = vunpack.c.h.b16 %v1021
    %v3960 = vunpack.c.l.b16 %v1022
    %v3961 = vunpack.c.h.b16 %v1022
    %v3962 = vunpack.c.l.b16 %v1023
    %v3963 = vunpack.c.h.b16 %v1023
    %v3964 = vunpack.c.l.b16 %v1024
    %v3965 = vunpack.c.h.b16 %v1024
    %v3966 = vunpack.c.l.b16 %v1025
    %v3967 = vunpack.c.h.b16 %v1025
    %v3968 = vunpack.c.l.b16 %v1026
    %v3969 = vunpack.c.h.b16 %v1026
    %v3970 = vunpack.c.l.b16 %v1027
    %v3971 = vunpack.c.h.b16 %v1027
    %v3972 = vunpack.c.l.b16 %v1028
    %v3973 = vunpack.c.h.b16 %v1028
    %v3974 = vunpack.c.l.b16 %v1029
    %v3975 = vunpack.c.h.b16 %v1029
    %v3976 = vunpack.c.l.b16 %v1030
    %v3977 = vunpack.c.h.b16 %v1030
    %v3978 = vunpack.c.l.b16 %v1031
    %v3979 = vunpack.c.h.b16 %v1031
    %v3980 = vunpack.c.l.b16 %v1032
    %v3981 = vunpack.c.h.b16 %v1032
    %v3982 = vunpack.c.l.b16 %v1033
    %v3983 = vunpack.c.h.b16 %v1033
    %v3984 = vunpack.c.l.b16 %v1034
    %v3985 = vunpack.c.h.b16 %v1034
    %v3986 = vunpack.c.l.b16 %v1035
    %v3987 = vunpack.c.h.b16 %v1035
    %v3988 = vunpack.c.l.b16 %v1036
    %v3989 = vunpack.c.h.b16 %v1036
    %v3990 = vunpack.c.l.b16 %v1037
    %v3991 = vunpack.c.h.b16 %v1037
    %v3992 = vunpack.c.l.b16 %v1038
    %v3993 = vunpack.c.h.b16 %v1038
    %v3994 = vunpack.c.l.b16 %v1039
    %v3995 = vunpack.c.h.b16 %v1039
    %v3996 = vunpack.c.l.b16 %v1040
    %v3997 = vunpack.c.h.b16 %v1040
    %v3998 = vunpack.c.l.b16 %v1041
    %v3999 = vunpack.c.h.b16 %v1041
    %v4000 = vunpack.c.l.b16 %v1042
    %v4001 = vunpack.c.h.b16 %v1042
    %v4002 = vunpack.c.l.b16 %v1043
    %v4003 = vunpack.c.h.b16 %v1043
    %v4004 = vunpack.c.l.b16 %v1044
    %v4005 = vunpack.c.h.b16 %v1044
    %v4006 = vunpack.c.l.b16 %v1045
    %v4007 = vunpack.c.h.b16 %v1045
    %v4008 = vunpack.c.l.b16 %v1046
    %v4009 = vunpack.c.h.b16 %v1046
    %v4010 = vunpack.c.l.b16 %v1047
    %v4011 = vunpack.c.h.b16 %v1047
    %v4012 = vunpack.c.l.b16 %v1048
    %v4013 = vunpack.c.h.b16 %v1048
    %v4014 = vunpack.c.l.b16 %v1049
    %v4015 = vunpack.c.h.b16 %v1049
    %v4016 = vunpack.c.l.b16 %v1050
    %v4017 = vunpack.c.h.b16 %v1050
    %v4018 = vunpack.c.l.b16 %v1051
    %v4019 = vunpack.c.h.b16 %v1051
    %v4020 = vunpack.c.l.b16 %v1052
    %v4021 = vunpack.c.h.b16 %v1052
    %v4022 = vunpack.c.l.b16 %v1053
    %v4023 = vunpack.c.h.b16 %v1053
    %v4024 = vunpack.c.l.b16 %v1054
    %v4025 = vunpack.c.h.b16 %v1054
    %v4026 = vunpack.c.l.b16 %v1055
    %v4027 = vunpack.c.h.b16 %v1055
    %v4028 = vunpack.c.l.b16 %v1056
    %v4029 = vunpack.c.h.b16 %v1056
    %v4030 = vunpack.c.l.b16 %v1057
    %v4031 = vunpack.c.h.b16 %v1057
    %v4032 = vunpack.c.l.b16 %v1058
    %v4033 = vunpack.c.h.b16 %v1058
    %v4034 = vunpack.c.l.b16 %v1059
    %v4035 = vunpack.c.h.b16 %v1059
    %v4036 = vunpack.c.l.b16 %v1060
    %v4037 = vunpack.c.h.b16 %v1060
    %v4038 = vunpack.c.l.b16 %v1061
    %v4039 = vunpack.c.h.b16 %v1061
    %v4040 = vunpack.c.l.b16 %v1062
    %v4041 = vunpack.c.h.b16 %v1062
    %v4042 = vunpack.c.l.b16 %v1063
    %v4043 = vunpack.c.h.b16 %v1063
    %v4044 = vunpack.c.l.b16 %v1064
    %v4045 = vunpack.c.h.b16 %v1064
    %v4046 = vunpack.c.l.b16 %v1065
    %v4047 = vunpack.c.h.b16 %v1065
    %v4048 = vunpack.c.l.b16 %v1066
    %v4049 = vunpack.c.h.b16 %v1066
    %v4050 = vunpack.c.l.b16 %v1067
    %v4051 = vunpack.c.h.b16 %v1067
    %v4052 = vunpack.c.l.b16 %v1068
    %v4053 = vunpack.c.h.b16 %v1068
    %v4054 = vunpack.c.l.b16 %v1069
    %v4055 = vunpack.c.h.b16 %v1069
    %v4056 = vunpack.c.l.b16 %v1070
    %v4057 = vunpack.c.h.b16 %v1070
    %v4058 = vunpack.c.l.b16 %v1071
    %v4059 = vunpack.c.h.b16 %v1071
    %v4060 = vunpack.c.l.b16 %v1072
    %v4061 = vunpack.c.h.b16 %v1072
    %v4062 = vunpack.c.l.b16 %v1073
    %v4063 = vunpack.c.h.b16 %v1073
    %v4064 = vunpack.c.l.b16 %v1074
    %v4065 = vunpack.c.h.b16 %v1074
    %v4066 = vunpack.c.l.b16 %v1075
    %v4067 = vunpack.c.h.b16 %v1075
    %v4068 = vunpack.c.l.b16 %v1076
    %v4069 = vunpack.c.h.b16 %v1076
    %v4070 = vunpack.c.l.b16 %v1077
    %v4071 = vunpack.c.h.b16 %v1077
    %v4072 = vunpack.c.l.b16 %v1078
    %v4073 = vunpack.c.h.b16 %v1078
    %v4074 = vunpack.c.l.b16 %v1079
    %v4075 = vunpack.c.h.b16 %v1079
    %v4076 = vunpack.c.l.b16 %v1080
    %v4077 = vunpack.c.h.b16 %v1080
    %v4078 = vunpack.c.l.b16 %v1081
    %v4079 = vunpack.c.h.b16 %v1081
    %v4080 = vunpack.c.l.b16 %v1082
    %v4081 = vunpack.c.h.b16 %v1082
    %v4082 = vunpack.c.l.b16 %v1083
    %v4083 = vunpack.c.h.b16 %v1083
    %v4084 = vunpack.c.l.b16 %v1084
    %v4085 = vunpack.c.h.b16 %v1084
    %v4086 = vunpack.c.l.b16 %v1085
    %v4087 = vunpack.c.h.b16 %v1085
    %v4088 = vunpack.c.l.b16 %v1086
    %v4089 = vunpack.c.h.b16 %v1086
    %v4090 = vunpack.c.l.b16 %v1087
    %v4091 = vunpack.c.h.b16 %v1087
    %v4092 = vunpack.c.l.b16 %v1088
    %v4093 = vunpack.c.h.b16 %v1088
    %v4094 = vunpack.c.l.b16 %v1089
    %v4095 = vunpack.c.h.b16 %v1089
    %v4096 = vunpack.c.l.b16 %v1090
    %v4097 = vunpack.c.h.b16 %v1090
    %v4098 = vunpack.c.l.b16 %v1091
    %v4099 = vunpack.c.h.b16 %v1091
    %v4100 = vunpack.c.l.b16 %v1092
    %v4101 = vunpack.c.h.b16 %v1092
    %v4102 = vunpack.c.l.b16 %v1093
    %v4103 = vunpack.c.h.b16 %v1093
    %v4104 = vunpack.c.l.b16 %v1094
    %v4105 = vunpack.c.h.b16 %v1094
    %v4106 = vunpack.c.l.b16 %v1095
    %v4107 = vunpack.c.h.b16 %v1095
    %v4108 = vunpack.c.l.b16 %v1096
    %v4109 = vunpack.c.h.b16 %v1096
    %v4110 = vunpack.c.l.b16 %v1097
    %v4111 = vunpack.c.h.b16 %v1097
    %v4112 = vunpack.c.l.b16 %v1098
    %v4113 = vunpack.c.h.b16 %v1098
    %v4114 = vunpack.c.l.b16 %v1099
    %v4115 = vunpack.c.h.b16 %v1099
    %v4116 = vunpack.c.l.b16 %v1100
    %v4117 = vunpack.c.h.b16 %v1100
    %v4118 = vunpack.c.l.b16 %v1101
    %v4119 = vunpack.c.h.b16 %v1101
    %v4120 = vunpack.c.l.b16 %v1102
    %v4121 = vunpack.c.h.b16 %v1102
    %v4122 = vunpack.c.l.b16 %v1103
    %v4123 = vunpack.c.h.b16 %v1103
    %v4124 = vunpack.c.l.b16 %v1104
    %v4125 = vunpack.c.h.b16 %v1104
    %v4126 = vunpack.c.l.b16 %v1105
    %v4127 = vunpack.c.h.b16 %v1105
    %v4128 = vunpack.c.l.b16 %v1106
    %v4129 = vunpack.c.h.b16 %v1106
    %v4130 = vunpack.c.l.b16 %v1107
    %v4131 = vunpack.c.h.b16 %v1107
    %v4132 = vunpack.c.l.b16 %v1108
    %v4133 = vunpack.c.h.b16 %v1108
    %v4134 = vunpack.c.l.b16 %v1109
    %v4135 = vunpack.c.h.b16 %v1109
    %v4136 = vunpack.c.l.b16 %v1110
    %v4137 = vunpack.c.h.b16 %v1110
    %v4138 = vunpack.c.l.b16 %v1111
    %v4139 = vunpack.c.h.b16 %v1111
    %v4140 = vunpack.c.l.b16 %v1112
    %v4141 = vunpack.c.h.b16 %v1112
    %v4142 = vunpack.c.l.b16 %v1113
    %v4143 = vunpack.c.h.b16 %v1113
    %v4144 = vunpack.c.l.b16 %v1114
    %v4145 = vunpack.c.h.b16 %v1114
    %v4146 = vunpack.c.l.b16 %v1115
    %v4147 = vunpack.c.h.b16 %v1115
    %v4148 = vunpack.c.l.b16 %v1116
    %v4149 = vunpack.c.h.b16 %v1116
    %v4150 = vunpack.c.l.b16 %v1117
    %v4151 = vunpack.c.h.b16 %v1117
    %v4152 = vunpack.c.l.b16 %v1118
    %v4153 = vunpack.c.h.b16 %v1118
    %v4154 = vunpack.c.l.b16 %v1119
    %v4155 = vunpack.c.h.b16 %v1119
    %v4156 = vunpack.c.l.b16 %v1120
    %v4157 = vunpack.c.h.b16 %v1120
    %v4158 = vunpack.c.l.b16 %v1121
    %v4159 = vunpack.c.h.b16 %v1121
    %v4160 = vunpack.c.l.b16 %v1122
    %v4161 = vunpack.c.h.b16 %v1122
    %v4162 = vunpack.c.l.b16 %v1123
    %v4163 = vunpack.c.h.b16 %v1123
    %v4164 = vunpack.c.l.b16 %v1124
    %v4165 = vunpack.c.h.b16 %v1124
    %v4166 = vunpack.c.l.b16 %v1125
    %v4167 = vunpack.c.h.b16 %v1125
    %v4168 = vunpack.c.l.b16 %v1126
    %v4169 = vunpack.c.h.b16 %v1126
    %v4170 = vunpack.c.l.b16 %v1127
    %v4171 = vunpack.c.h.b16 %v1127
    %v4172 = vunpack.c.l.b16 %v1128
    %v4173 = vunpack.c.h.b16 %v1128
    %v4174 = vunpack.c.l.b16 %v1129
    %v4175 = vunpack.c.h.b16 %v1129
    %v4176 = vunpack.c.l.b16 %v1130
    %v4177 = vunpack.c.h.b16 %v1130
    %v4178 = vunpack.c.l.b16 %v1131
    %v4179 = vunpack.c.h.b16 %v1131
    %v4180 = vunpack.c.l.b16 %v1132
    %v4181 = vunpack.c.h.b16 %v1132
    %v4182 = vunpack.c.l.b16 %v1133
    %v4183 = vunpack.c.h.b16 %v1133
    %v4184 = vunpack.c.l.b16 %v1134
    %v4185 = vunpack.c.h.b16 %v1134
    %v4186 = vunpack.c.l.b16 %v1135
    %v4187 = vunpack.c.h.b16 %v1135
    %v4188 = vunpack.c.l.b16 %v1136
    %v4189 = vunpack.c.h.b16 %v1136
    %v4190 = vunpack.c.l.b16 %v1137
    %v4191 = vunpack.c.h.b16 %v1137
    %v4192 = vunpack.c.l.b16 %v1138
    %v4193 = vunpack.c.h.b16 %v1138
    %v4194 = vunpack.c.l.b16 %v1139
    %v4195 = vunpack.c.h.b16 %v1139
    %v4196 = vunpack.c.l.b16 %v1140
    %v4197 = vunpack.c.h.b16 %v1140
    %v4198 = vunpack.c.l.b16 %v1141
    %v4199 = vunpack.c.h.b16 %v1141
    %v4200 = vunpack.c.l.b16 %v1142
    %v4201 = vunpack.c.h.b16 %v1142
    %v4202 = vunpack.c.l.b16 %v1143
    %v4203 = vunpack.c.h.b16 %v1143
    %v4204 = vunpack.c.l.b16 %v1144
    %v4205 = vunpack.c.h.b16 %v1144
    %v4206 = vunpack.c.l.b16 %v1145
    %v4207 = vunpack.c.h.b16 %v1145
    %v4208 = vunpack.c.l.b16 %v1146
    %v4209 = vunpack.c.h.b16 %v1146
    %v4210 = vunpack.c.l.b16 %v1147
    %v4211 = vunpack.c.h.b16 %v1147
    %v4212 = vunpack.c.l.b16 %v1148
    %v4213 = vunpack.c.h.b16 %v1148
    %v4214 = vunpack.c.l.b16 %v1149
    %v4215 = vunpack.c.h.b16 %v1149
    %v4216 = vunpack.c.l.b16 %v1150
    %v4217 = vunpack.c.h.b16 %v1150
    %v4218 = vunpack.c.l.b16 %v1151
    %v4219 = vunpack.c.h.b16 %v1151
    %v4220 = vunpack.c.l.b16 %v1152
    %v4221 = vunpack.c.h.b16 %v1152
    %v4222 = vunpack.c.l.b16 %v1153
    %v4223 = vunpack.c.h.b16 %v1153
    %v4224 = vunpack.c.l.b16 %v1154
    %v4225 = vunpack.c.h.b16 %v1154
    %v4226 = vunpack.c.l.b16 %v1155
    %v4227 = vunpack.c.h.b16 %v1155
    %v4228 = vunpack.c.l.b16 %v1156
    %v4229 = vunpack.c.h.b16 %v1156
    %v4230 = vunpack.c.l.b16 %v1157
    %v4231 = vunpack.c.h.b16 %v1157
    %v4232 = vunpack.c.l.b16 %v1158
    %v4233 = vunpack.c.h.b16 %v1158
    %v4234 = vunpack.c.l.b16 %v1159
    %v4235 = vunpack.c.h.b16 %v1159
    %v4236 = vunpack.c.l.b16 %v1160
    %v4237 = vunpack.c.h.b16 %v1160
    %v4238 = vunpack.c.l.b16 %v1161
    %v4239 = vunpack.c.h.b16 %v1161
    %v4240 = vunpack.c.l.b16 %v1162
    %v4241 = vunpack.c.h.b16 %v1162
    %v4242 = vunpack.c.l.b16 %v1163
    %v4243 = vunpack.c.h.b16 %v1163
    %v4244 = vunpack.c.l.b16 %v1164
    %v4245 = vunpack.c.h.b16 %v1164
    %v4246 = vunpack.c.l.b16 %v1165
    %v4247 = vunpack.c.h.b16 %v1165
    %v4248 = vunpack.c.l.b16 %v1166
    %v4249 = vunpack.c.h.b16 %v1166
    %v4250 = vunpack.c.l.b16 %v1167
    %v4251 = vunpack.c.h.b16 %v1167
    %v4252 = vunpack.c.l.b16 %v1168
    %v4253 = vunpack.c.h.b16 %v1168
    %v4254 = vunpack.c.l.b16 %v1169
    %v4255 = vunpack.c.h.b16 %v1169
    %v4256 = vunpack.c.l.b16 %v1170
    %v4257 = vunpack.c.h.b16 %v1170
    %v4258 = vunpack.c.l.b16 %v1171
    %v4259 = vunpack.c.h.b16 %v1171
    %v4260 = vunpack.c.l.b16 %v1172
    %v4261 = vunpack.c.h.b16 %v1172
    %v4262 = vunpack.c.l.b16 %v1173
    %v4263 = vunpack.c.h.b16 %v1173
    %v4264 = vpack.c.b16 %v2224, %v2216
    %v4265 = vpack.c.b16 %v2225, %v2217
    %v4266 = vpack.c.b16 %v2226, %v2218
    %v4267 = vpack.c.b16 %v2227, %v2219
    %v4268 = vpack.c.b16 %v2228, %v2220
    %v4269 = vpack.c.b16 %v2229, %v2221
    %v4270 = vpack.c.b16 %v2230, %v2222
    %v4271 = vpack.c.b16 %v2231, %v2223
    %v4272 = vpack.c.b16 %v2240, %v2232
    %v4273 = vpack.c.b16 %v2241, %v2233
    %v4274 = vpack.c.b16 %v2242, %v2234
    %v4275 = vpack.c.b16 %v2243, %v2235
    %v4276 = vpack.c.b16 %v2244, %v2236
    %v4277 = vpack.c.b16 %v2245, %v2237
    %v4278 = vpack.c.b16 %v2246, %v2238
    %v4279 = vpack.c.b16 %v2247, %v2239
    %v4280 = vpack.c.b16 %v2256, %v2248
    %v4281 = vpack.c.b16 %v2257, %v2249
    %v4282 = vpack.c.b16 %v2258, %v2250
    %v4283 = vpack.c.b16 %v2259, %v2251
    %v4284 = vpack.c.b16 %v2260, %v2252
    %v4285 = vpack.c.b16 %v2261, %v2253
    %v4286 = vpack.c.b16 %v2262, %v2254
    %v4287 = vpack.c.b16 %v2263, %v2255
    %v4288 = vpack.c.b16 %v2272, %v2264
    %v4289 = vpack.c.b16 %v2273, %v2265
    %v4290 = vpack.c.b16 %v2274, %v2266
    %v4291 = vpack.c.b16 %v2275, %v2267
    %v4292 = vpack.c.b16 %v2276, %v2268
    %v4293 = vpack.c.b16 %v2277, %v2269
    %v4294 = vpack.c.b16 %v2278, %v2270
    %v4295 = vpack.c.b16 %v2279, %v2271
    %v4296 = vpack.c.b16 %v2288, %v2280
    %v4297 = vpack.c.b16 %v2289, %v2281
    %v4298 = vpack.c.b16 %v2290, %v2282
    %v4299 = vpack.c.b16 %v2291, %v2283
    %v4300 = vpack.c.b16 %v2292, %v2284
    %v4301 = vpack.c.b16 %v2293, %v2285
    %v4302 = vpack.c.b16 %v2294, %v2286
    %v4303 = vpack.c.b16 %v2295, %v2287
    %v4304 = vpack.c.b16 %v2304, %v2296
    %v4305 = vpack.c.b16 %v2305, %v2297
    %v4306 = vpack.c.b16 %v2306, %v2298
    %v4307 = vpack.c.b16 %v2307, %v2299
    %v4308 = vpack.c.b16 %v2308, %v2300
    %v4309 = vpack.c.b16 %v2309, %v2301
    %v4310 = vpack.c.b16 %v2310, %v2302
    %v4311 = vpack.c.b16 %v2311, %v2303
    %v4312 = vpack.c.b16 %v2320, %v2312
    %v4313 = vpack.c.b16 %v2321, %v2313
    %v4314 = vpack.c.b16 %v2322, %v2314
    %v4315 = vpack.c.b16 %v2323, %v2315
    %v4316 = vpack.c.b16 %v2324, %v2316
    %v4317 = vpack.c.b16 %v2325, %v2317
    %v4318 = vpack.c.b16 %v2326, %v2318
    %v4319 = vpack.c.b16 %v2327, %v2319
    %v4320 = vpack.c.b16 %v2336, %v2328
    %v4321 = vpack.c.b16 %v2337, %v2329
    %v4322 = vpack.c.b16 %v2338, %v2330
    %v4323 = vpack.c.b16 %v2339, %v2331
    %v4324 = vpack.c.b16 %v2340, %v2332
    %v4325 = vpack.c.b16 %v2341, %v2333
    %v4326 = vpack.c.b16 %v2342, %v2334
    %v4327 = vpack.c.b16 %v2343, %v2335
    %v4328 = vpack.c.b16 %v2352, %v2344
    %v4329 = vpack.c.b16 %v2353, %v2345
    %v4330 = vpack.c.b16 %v2354, %v2346
    %v4331 = vpack.c.b16 %v2355, %v2347
    %v4332 = vpack.c.b16 %v2356, %v2348
    %v4333 = vpack.c.b16 %v2357, %v2349
    %v4334 = vpack.c.b16 %v2358, %v2350
    %v4335 = vpack.c.b16 %v2359, %v2351
    %v4336 = vpack.c.b16 %v2368, %v2360
    %v4337 = vpack.c.b16 %v2369, %v2361
    %v4338 = vpack.c.b16 %v2370, %v2362
    %v4339 = vpack.c.b16 %v2371, %v2363
    %v4340 = vpack.c.b16 %v2372, %v2364
    %v4341 = vpack.c.b16 %v2373, %v2365
    %v4342 = vpack.c.b16 %v2374, %v2366
    %v4343 = vpack.c.b16 %v2375, %v2367
    %v4344 = vpack.c.b16 %v2384, %v2376
    %v4345 = vpack.c.b16 %v2385, %v2377
    %v4346 = vpack.c.b16 %v2386, %v2378
    %v4347 = vpack.c.b16 %v2387, %v2379
    %v4348 = vpack.c.b16 %v2388, %v2380
    %v4349 = vpack.c.b16 %v2389, %v2381
    %v4350 = vpack.c.b16 %v2390, %v2382
    %v4351 = vpack.c.b16 %v2391, %v2383
    %v4352 = vpack.c.b16 %v2400, %v2392
    %v4353 = vpack.c.b16 %v2401, %v2393
    %v4354 = vpack.c.b16 %v2402, %v2394
    %v4355 = vpack.c.b16 %v2403, %v2395
    %v4356 = vpack.c.b16 %v2404, %v2396
    %v4357 = vpack.c.b16 %v2405, %v2397
    %v4358 = vpack.c.b16 %v2406, %v2398
    %v4359 = vpack.c.b16 %v2407, %v2399
    %v4360 = vpack.c.b16 %v2416, %v2408
    %v4361 = vpack.c.b16 %v2417, %v2409
    %v4362 = vpack.c.b16 %v2418, %v2410
    %v4363 = vpack.c.b16 %v2419, %v2411
    %v4364 = vpack.c.b16 %v2420, %v2412
    %v4365 = vpack.c.b16 %v2421, %v2413
    %v4366 = vpack.c.b16 %v2422, %v2414
    %v4367 = vpack.c.b16 %v2423, %v2415
    %v4368 = vpack.c.b16 %v2432, %v2424
    %v4369 = vpack.c.b16 %v2433, %v2425
    %v4370 = vpack.c.b16 %v2434, %v2426
    %v4371 = vpack.c.b16 %v2435, %v2427
    %v4372 = vpack.c.b16 %v2436, %v2428
    %v4373 = vpack.c.b16 %v2437, %v2429
    %v4374 = vpack.c.b16 %v2438, %v2430
    %v4375 = vpack.c.b16 %v2439, %v2431
    %v4376 = vpack.c.b16 %v2448, %v2440
    %v4377 = vpack.c.b16 %v2449, %v2441
    %v4378 = vpack.c.b16 %v2450, %v2442
    %v4379 = vpack.c.b16 %v2451, %v2443
    %v4380 = vpack.c.b16 %v2452, %v2444
    %v4381 = vpack.c.b16 %v2453, %v2445
    %v4382 = vpack.c.b16 %v2454, %v2446
    %v4383 = vpack.c.b16 %v2455, %v2447
    %v4384 = vpack.c.b16 %v2464, %v2456
    %v4385 = vpack.c.b16 %v2465, %v2457
    %v4386 = vpack.c.b16 %v2466, %v2458
    %v4387 = vpack.c.b16 %v2467, %v2459
    %v4388 = vpack.c.b16 %v2468, %v2460
    %v4389 = vpack.c.b16 %v2469, %v2461
    %v4390 = vpack.c.b16 %v2470, %v2462
    %v4391 = vpack.c.b16 %v2471, %v2463
    %v4392 = vpack.c.b16 %v2480, %v2472
    %v4393 = vpack.c.b16 %v2481, %v2473
    %v4394 = vpack.c.b16 %v2482, %v2474
    %v4395 = vpack.c.b16 %v2483, %v2475
    %v4396 = vpack.c.b16 %v2484, %v2476
    %v4397 = vpack.c.b16 %v2485, %v2477
    %v4398 = vpack.c.b16 %v2486, %v2478
    %v4399 = vpack.c.b16 %v2487, %v2479
    %v4400 = vpack.c.b16 %v2496, %v2488
    %v4401 = vpack.c.b16 %v2497, %v2489
    %v4402 = vpack.c.b16 %v2498, %v2490
    %v4403 = vpack.c.b16 %v2499, %v2491
    %v4404 = vpack.c.b16 %v2500, %v2492
    %v4405 = vpack.c.b16 %v2501, %v2493
    %v4406 = vpack.c.b16 %v2502, %v2494
    %v4407 = vpack.c.b16 %v2503, %v2495
    %v4408 = vpack.c.b16 %v2512, %v2504
    %v4409 = vpack.c.b16 %v2513, %v2505
    %v4410 = vpack.c.b16 %v2514, %v2506
    %v4411 = vpack.c.b16 %v2515, %v2507
    %v4412 = vpack.c.b16 %v2516, %v2508
    %v4413 = vpack.c.b16 %v2517, %v2509
    %v4414 = vpack.c.b16 %v2518, %v2510
    %v4415 = vpack.c.b16 %v2519, %v2511
    %v4416 = vpack.c.b16 %v2528, %v2520
    %v4417 = vpack.c.b16 %v2529, %v2521
    %v4418 = vpack.c.b16 %v2530, %v2522
    %v4419 = vpack.c.b16 %v2531, %v2523
    %v4420 = vpack.c.b16 %v2532, %v2524
    %v4421 = vpack.c.b16 %v2533, %v2525
    %v4422 = vpack.c.b16 %v2534, %v2526
    %v4423 = vpack.c.b16 %v2535, %v2527
    %v4424 = vpack.c.b16 %v2544, %v2536
    %v4425 = vpack.c.b16 %v2545, %v2537
    %v4426 = vpack.c.b16 %v2546, %v2538
    %v4427 = vpack.c.b16 %v2547, %v2539
    %v4428 = vpack.c.b16 %v2548, %v2540
    %v4429 = vpack.c.b16 %v2549, %v2541
    %v4430 = vpack.c.b16 %v2550, %v2542
    %v4431 = vpack.c.b16 %v2551, %v2543
    %v4432 = vpack.c.b16 %v2560, %v2552
    %v4433 = vpack.c.b16 %v2561, %v2553
    %v4434 = vpack.c.b16 %v2562, %v2554
    %v4435 = vpack.c.b16 %v2563, %v2555
    %v4436 = vpack.c.b16 %v2564, %v2556
    %v4437 = vpack.c.b16 %v2565, %v2557
    %v4438 = vpack.c.b16 %v2566, %v2558
    %v4439 = vpack.c.b16 %v2567, %v2559
    %v4440 = vpack.c.b16 %v2576, %v2568
    %v4441 = vpack.c.b16 %v2577, %v2569
    %v4442 = vpack.c.b16 %v2578, %v2570
    %v4443 = vpack.c.b16 %v2579, %v2571
    %v4444 = vpack.c.b16 %v2580, %v2572
    %v4445 = vpack.c.b16 %v2581, %v2573
    %v4446 = vpack.c.b16 %v2582, %v2574
    %v4447 = vpack.c.b16 %v2583, %v2575
    %v4448 = vpack.c.b16 %v2592, %v2584
    %v4449 = vpack.c.b16 %v2593, %v2585
    %v4450 = vpack.c.b16 %v2594, %v2586
    %v4451 = vpack.c.b16 %v2595, %v2587
    %v4452 = vpack.c.b16 %v2596, %v2588
    %v4453 = vpack.c.b16 %v2597, %v2589
    %v4454 = vpack.c.b16 %v2598, %v2590
    %v4455 = vpack.c.b16 %v2599, %v2591
    %v4456 = vpack.c.b16 %v2608, %v2600
    %v4457 = vpack.c.b16 %v2609, %v2601
    %v4458 = vpack.c.b16 %v2610, %v2602
    %v4459 = vpack.c.b16 %v2611, %v2603
    %v4460 = vpack.c.b16 %v2612, %v2604
    %v4461 = vpack.c.b16 %v2613, %v2605
    %v4462 = vpack.c.b16 %v2614, %v2606
    %v4463 = vpack.c.b16 %v2615, %v2607
    %v4464 = vpack.c.b16 %v2624, %v2616
    %v4465 = vpack.c.b16 %v2625, %v2617
    %v4466 = vpack.c.b16 %v2626, %v2618
    %v4467 = vpack.c.b16 %v2627, %v2619
    %v4468 = vpack.c.b16 %v2628, %v2620
    %v4469 = vpack.c.b16 %v2629, %v2621
    %v4470 = vpack.c.b16 %v2630, %v2622
    %v4471 = vpack.c.b16 %v2631, %v2623
    %v4472 = vpack.c.b16 %v2640, %v2632
    %v4473 = vpack.c.b16 %v2641, %v2633
    %v4474 = vpack.c.b16 %v2642, %v2634
    %v4475 = vpack.c.b16 %v2643, %v2635
    %v4476 = vpack.c.b16 %v2644, %v2636
    %v4477 = vpack.c.b16 %v2645, %v2637
    %v4478 = vpack.c.b16 %v2646, %v2638
    %v4479 = vpack.c.b16 %v2647, %v2639
    %v4480 = vpack.c.b16 %v2656, %v2648
    %v4481 = vpack.c.b16 %v2657, %v2649
    %v4482 = vpack.c.b16 %v2658, %v2650
    %v4483 = vpack.c.b16 %v2659, %v2651
    %v4484 = vpack.c.b16 %v2660, %v2652
    %v4485 = vpack.c.b16 %v2661, %v2653
    %v4486 = vpack.c.b16 %v2662, %v2654
    %v4487 = vpack.c.b16 %v2663, %v2655
    %v4488 = vpack.c.b16 %v2672, %v2664
    %v4489 = vpack.c.b16 %v2673, %v2665
    %v4490 = vpack.c.b16 %v2674, %v2666
    %v4491 = vpack.c.b16 %v2675, %v2667
    %v4492 = vpack.c.b16 %v2676, %v2668
    %v4493 = vpack.c.b16 %v2677, %v2669
    %v4494 = vpack.c.b16 %v2678, %v2670
    %v4495 = vpack.c.b16 %v2679, %v2671
    %v4496 = vpack.c.b16 %v2688, %v2680
    %v4497 = vpack.c.b16 %v2689, %v2681
    %v4498 = vpack.c.b16 %v2690, %v2682
    %v4499 = vpack.c.b16 %v2691, %v2683
    %v4500 = vpack.c.b16 %v2692, %v2684
    %v4501 = vpack.c.b16 %v2693, %v2685
    %v4502 = vpack.c.b16 %v2694, %v2686
    %v4503 = vpack.c.b16 %v2695, %v2687
    %v4504 = vpack.c.b16 %v2704, %v2696
    %v4505 = vpack.c.b16 %v2705, %v2697
    %v4506 = vpack.c.b16 %v2706, %v2698
    %v4507 = vpack.c.b16 %v2707, %v2699
    %v4508 = vpack.c.b16 %v2708, %v2700
    %v4509 = vpack.c.b16 %v2709, %v2701
    %v4510 = vpack.c.b16 %v2710, %v2702
    %v4511 = vpack.c.b16 %v2711, %v2703
    %v4512 = vpack.c.b16 %v2720, %v2712
    %v4513 = vpack.c.b16 %v2721, %v2713
    %v4514 = vpack.c.b16 %v2722, %v2714
    %v4515 = vpack.c.b16 %v2723, %v2715
    %v4516 = vpack.c.b16 %v2724, %v2716
    %v4517 = vpack.c.b16 %v2725, %v2717
    %v4518 = vpack.c.b16 %v2726, %v2718
    %v4519 = vpack.c.b16 %v2727, %v2719
    %v4520 = vpack.c.b16 %v2736, %v2728
    %v4521 = vpack.c.b16 %v2737, %v2729
    %v4522 = vpack.c.b16 %v2738, %v2730
    %v4523 = vpack.c.b16 %v2739, %v2731
    %v4524 = vpack.c.b16 %v2740, %v2732
    %v4525 = vpack.c.b16 %v2741, %v2733
    %v4526 = vpack.c.b16 %v2742, %v2734
    %v4527 = vpack.c.b16 %v2743, %v2735
    %v4528 = vpack.c.b16 %v2752, %v2744
    %v4529 = vpack.c.b16 %v2753, %v2745
    %v4530 = vpack.c.b16 %v2754, %v2746
    %v4531 = vpack.c.b16 %v2755, %v2747
    %v4532 = vpack.c.b16 %v2756, %v2748
    %v4533 = vpack.c.b16 %v2757, %v2749
    %v4534 = vpack.c.b16 %v2758, %v2750
    %v4535 = vpack.c.b16 %v2759, %v2751
    %v4536 = vpack.c.b16 %v2768, %v2760
    %v4537 = vpack.c.b16 %v2769, %v2761
    %v4538 = vpack.c.b16 %v2770, %v2762
    %v4539 = vpack.c.b16 %v2771, %v2763
    %v4540 = vpack.c.b16 %v2772, %v2764
    %v4541 = vpack.c.b16 %v2773, %v2765
    %v4542 = vpack.c.b16 %v2774, %v2766
    %v4543 = vpack.c.b16 %v2775, %v2767
    %v4544 = vpack.c.b16 %v2784, %v2776
    %v4545 = vpack.c.b16 %v2785, %v2777
    %v4546 = vpack.c.b16 %v2786, %v2778
    %v4547 = vpack.c.b16 %v2787, %v2779
    %v4548 = vpack.c.b16 %v2788, %v2780
    %v4549 = vpack.c.b16 %v2789, %v2781
    %v4550 = vpack.c.b16 %v2790, %v2782
    %v4551 = vpack.c.b16 %v2791, %v2783
    %v4552 = vpack.c.b16 %v2800, %v2792
    %v4553 = vpack.c.b16 %v2801, %v2793
    %v4554 = vpack.c.b16 %v2802, %v2794
    %v4555 = vpack.c.b16 %v2803, %v2795
    %v4556 = vpack.c.b16 %v2804, %v2796
    %v4557 = vpack.c.b16 %v2805, %v2797
    %v4558 = vpack.c.b16 %v2806, %v2798
    %v4559 = vpack.c.b16 %v2807, %v2799
    %v4560 = vpack.c.b16 %v2816, %v2808
    %v4561 = vpack.c.b16 %v2817, %v2809
    %v4562 = vpack.c.b16 %v2818, %v2810
    %v4563 = vpack.c.b16 %v2819, %v2811
    %v4564 = vpack.c.b16 %v2820, %v2812
    %v4565 = vpack.c.b16 %v2821, %v2813
    %v4566 = vpack.c.b16 %v2822, %v2814
    %v4567 = vpack.c.b16 %v2823, %v2815
    %v4568 = vpack.c.b16 %v2832, %v2824
    %v4569 = vpack.c.b16 %v2833, %v2825
    %v4570 = vpack.c.b16 %v2834, %v2826
    %v4571 = vpack.c.b16 %v2835, %v2827
    %v4572 = vpack.c.b16 %v2836, %v2828
    %v4573 = vpack.c.b16 %v2837, %v2829
    %v4574 = vpack.c.b16 %v2838, %v2830
    %v4575 = vpack.c.b16 %v2839, %v2831
    %v4576 = vpack.c.b16 %v2848, %v2840
    %v4577 = vpack.c.b16 %v2849, %v2841
    %v4578 = vpack.c.b16 %v2850, %v2842
    %v4579 = vpack.c.b16 %v2851, %v2843
    %v4580 = vpack.c.b16 %v2852, %v2844
    %v4581 = vpack.c.b16 %v2853, %v2845
    %v4582 = vpack.c.b16 %v2854, %v2846
    %v4583 = vpack.c.b16 %v2855, %v2847
    %v4584 = vpack.c.b16 %v2864, %v2856
    %v4585 = vpack.c.b16 %v2865, %v2857
    %v4586 = vpack.c.b16 %v2866, %v2858
    %v4587 = vpack.c.b16 %v2867, %v2859
    %v4588 = vpack.c.b16 %v2868, %v2860
    %v4589 = vpack.c.b16 %v2869, %v2861
    %v4590 = vpack.c.b16 %v2870, %v2862
    %v4591 = vpack.c.b16 %v2871, %v2863
    %v4592 = vpack.c.b16 %v2880, %v2872
    %v4593 = vpack.c.b16 %v2881, %v2873
    %v4594 = vpack.c.b16 %v2882, %v2874
    %v4595 = vpack.c.b16 %v2883, %v2875
    %v4596 = vpack.c.b16 %v2884, %v2876
    %v4597 = vpack.c.b16 %v2885, %v2877
    %v4598 = vpack.c.b16 %v2886, %v2878
    %v4599 = vpack.c.b16 %v2887, %v2879
    %v4600 = vpack.c.b16 %v2896, %v2888
    %v4601 = vpack.c.b16 %v2897, %v2889
    %v4602 = vpack.c.b16 %v2898, %v2890
    %v4603 = vpack.c.b16 %v2899, %v2891
    %v4604 = vpack.c.b16 %v2900, %v2892
    %v4605 = vpack.c.b16 %v2901, %v2893
    %v4606 = vpack.c.b16 %v2902, %v2894
    %v4607 = vpack.c.b16 %v2903, %v2895
    %v4608 = vpack.c.b16 %v2912, %v2904
    %v4609 = vpack.c.b16 %v2913, %v2905
    %v4610 = vpack.c.b16 %v2914, %v2906
    %v4611 = vpack.c.b16 %v2915, %v2907
    %v4612 = vpack.c.b16 %v2916, %v2908
    %v4613 = vpack.c.b16 %v2917, %v2909
    %v4614 = vpack.c.b16 %v2918, %v2910
    %v4615 = vpack.c.b16 %v2919, %v2911
    %v4616 = vpack.c.b16 %v2928, %v2920
    %v4617 = vpack.c.b16 %v2929, %v2921
    %v4618 = vpack.c.b16 %v2930, %v2922
    %v4619 = vpack.c.b16 %v2931, %v2923
    %v4620 = vpack.c.b16 %v2932, %v2924
    %v4621 = vpack.c.b16 %v2933, %v2925
    %v4622 = vpack.c.b16 %v2934, %v2926
    %v4623 = vpack.c.b16 %v2935, %v2927
    %v4624 = vpack.c.b16 %v2944, %v2936
    %v4625 = vpack.c.b16 %v2945, %v2937
    %v4626 = vpack.c.b16 %v2946, %v2938
    %v4627 = vpack.c.b16 %v2947, %v2939
    %v4628 = vpack.c.b16 %v2948, %v2940
    %v4629 = vpack.c.b16 %v2949, %v2941
    %v4630 = vpack.c.b16 %v2950, %v2942
    %v4631 = vpack.c.b16 %v2951, %v2943
    %v4632 = vpack.c.b16 %v2960, %v2952
    %v4633 = vpack.c.b16 %v2961, %v2953
    %v4634 = vpack.c.b16 %v2962, %v2954
    %v4635 = vpack.c.b16 %v2963, %v2955
    %v4636 = vpack.c.b16 %v2964, %v2956
    %v4637 = vpack.c.b16 %v2965, %v2957
    %v4638 = vpack.c.b16 %v2966, %v2958
    %v4639 = vpack.c.b16 %v2967, %v2959
    %v4640 = vpack.c.b16 %v2976, %v2968
    %v4641 = vpack.c.b16 %v2977, %v2969
    %v4642 = vpack.c.b16 %v2978, %v2970
    %v4643 = vpack.c.b16 %v2979, %v2971
    %v4644 = vpack.c.b16 %v2980, %v2972
    %v4645 = vpack.c.b16 %v2981, %v2973
    %v4646 = vpack.c.b16 %v2982, %v2974
    %v4647 = vpack.c.b16 %v2983, %v2975
    %v4648 = vpack.c.b16 %v2992, %v2984
    %v4649 = vpack.c.b16 %v2993, %v2985
    %v4650 = vpack.c.b16 %v2994, %v2986
    %v4651 = vpack.c.b16 %v2995, %v2987
    %v4652 = vpack.c.b16 %v2996, %v2988
    %v4653 = vpack.c.b16 %v2997, %v2989
    %v4654 = vpack.c.b16 %v2998, %v2990
    %v4655 = vpack.c.b16 %v2999, %v2991
    %v4656 = vpack.c.b16 %v3008, %v3000
    %v4657 = vpack.c.b16 %v3009, %v3001
    %v4658 = vpack.c.b16 %v3010, %v3002
    %v4659 = vpack.c.b16 %v3011, %v3003
    %v4660 = vpack.c.b16 %v3012, %v3004
    %v4661 = vpack.c.b16 %v3013, %v3005
    %v4662 = vpack.c.b16 %v3014, %v3006
    %v4663 = vpack.c.b16 %v3015, %v3007
    %v4664 = vpack.c.b16 %v3024, %v3016
    %v4665 = vpack.c.b16 %v3025, %v3017
    %v4666 = vpack.c.b16 %v3026, %v3018
    %v4667 = vpack.c.b16 %v3027, %v3019
    %v4668 = vpack.c.b16 %v3028, %v3020
    %v4669 = vpack.c.b16 %v3029, %v3021
    %v4670 = vpack.c.b16 %v3030, %v3022
    %v4671 = vpack.c.b16 %v3031, %v3023
    %v4672 = vpack.c.b16 %v3040, %v3032
    %v4673 = vpack.c.b16 %v3041, %v3033
    %v4674 = vpack.c.b16 %v3042, %v3034
    %v4675 = vpack.c.b16 %v3043, %v3035
    %v4676 = vpack.c.b16 %v3044, %v3036
    %v4677 = vpack.c.b16 %v3045, %v3037
    %v4678 = vpack.c.b16 %v3046, %v3038
    %v4679 = vpack.c.b16 %v3047, %v3039
    %v4680 = vpack.c.b16 %v3056, %v3048
    %v4681 = vpack.c.b16 %v3057, %v3049
    %v4682 = vpack.c.b16 %v3058, %v3050
    %v4683 = vpack.c.b16 %v3059, %v3051
    %v4684 = vpack.c.b16 %v3060, %v3052
    %v4685 = vpack.c.b16 %v3061, %v3053
    %v4686 = vpack.c.b16 %v3062, %v3054
    %v4687 = vpack.c.b16 %v3063, %v3055
    %v4688 = vpack.c.b16 %v3072, %v3064
    %v4689 = vpack.c.b16 %v3073, %v3065
    %v4690 = vpack.c.b16 %v3074, %v3066
    %v4691 = vpack.c.b16 %v3075, %v3067
    %v4692 = vpack.c.b16 %v3076, %v3068
    %v4693 = vpack.c.b16 %v3077, %v3069
    %v4694 = vpack.c.b16 %v3078, %v3070
    %v4695 = vpack.c.b16 %v3079, %v3071
    %v4696 = vpack.c.b16 %v3088, %v3080
    %v4697 = vpack.c.b16 %v3089, %v3081
    %v4698 = vpack.c.b16 %v3090, %v3082
    %v4699 = vpack.c.b16 %v3091, %v3083
    %v4700 = vpack.c.b16 %v3092, %v3084
    %v4701 = vpack.c.b16 %v3093, %v3085
    %v4702 = vpack.c.b16 %v3094, %v3086
    %v4703 = vpack.c.b16 %v3095, %v3087
    %v4704 = vpack.c.b16 %v3104, %v3096
    %v4705 = vpack.c.b16 %v3105, %v3097
    %v4706 = vpack.c.b16 %v3106, %v3098
    %v4707 = vpack.c.b16 %v3107, %v3099
    %v4708 = vpack.c.b16 %v3108, %v3100
    %v4709 = vpack.c.b16 %v3109, %v3101
    %v4710 = vpack.c.b16 %v3110, %v3102
    %v4711 = vpack.c.b16 %v3111, %v3103
    %v4712 = vpack.c.b16 %v3120, %v3112
    %v4713 = vpack.c.b16 %v3121, %v3113
    %v4714 = vpack.c.b16 %v3122, %v3114
    %v4715 = vpack.c.b16 %v3123, %v3115
    %v4716 = vpack.c.b16 %v3124, %v3116
    %v4717 = vpack.c.b16 %v3125, %v3117
    %v4718 = vpack.c.b16 %v3126, %v3118
    %v4719 = vpack.c.b16 %v3127, %v3119
    %v4720 = vpack.c.b16 %v3136, %v3128
    %v4721 = vpack.c.b16 %v3137, %v3129
    %v4722 = vpack.c.b16 %v3138, %v3130
    %v4723 = vpack.c.b16 %v3139, %v3131
    %v4724 = vpack.c.b16 %v3140, %v3132
    %v4725 = vpack.c.b16 %v3141, %v3133
    %v4726 = vpack.c.b16 %v3142, %v3134
    %v4727 = vpack.c.b16 %v3143, %v3135
    %v4728 = vpack.c.b16 %v3152, %v3144
    %v4729 = vpack.c.b16 %v3153, %v3145
    %v4730 = vpack.c.b16 %v3154, %v3146
    %v4731 = vpack.c.b16 %v3155, %v3147
    %v4732 = vpack.c.b16 %v3156, %v3148
    %v4733 = vpack.c.b16 %v3157, %v3149
    %v4734 = vpack.c.b16 %v3158, %v3150
    %v4735 = vpack.c.b16 %v3159, %v3151
    %v4736 = vpack.c.b16 %v3168, %v3160
    %v4737 = vpack.c.b16 %v3169, %v3161
    %v4738 = vpack.c.b16 %v3170, %v3162
    %v4739 = vpack.c.b16 %v3171, %v3163
    %v4740 = vpack.c.b16 %v3172, %v3164
    %v4741 = vpack.c.b16 %v3173, %v3165
    %v4742 = vpack.c.b16 %v3174, %v3166
    %v4743 = vpack.c.b16 %v3175, %v3167
    %v4744 = vpack.c.b16 %v3184, %v3176
    %v4745 = vpack.c.b16 %v3185, %v3177
    %v4746 = vpack.c.b16 %v3186, %v3178
    %v4747 = vpack.c.b16 %v3187, %v3179
    %v4748 = vpack.c.b16 %v3188, %v3180
    %v4749 = vpack.c.b16 %v3189, %v3181
    %v4750 = vpack.c.b16 %v3190, %v3182
    %v4751 = vpack.c.b16 %v3191, %v3183
    %v4752 = vpack.c.b16 %v3200, %v3192
    %v4753 = vpack.c.b16 %v3201, %v3193
    %v4754 = vpack.c.b16 %v3202, %v3194
    %v4755 = vpack.c.b16 %v3203, %v3195
    %v4756 = vpack.c.b16 %v3204, %v3196
    %v4757 = vpack.c.b16 %v3205, %v3197
    %v4758 = vpack.c.b16 %v3206, %v3198
    %v4759 = vpack.c.b16 %v3207, %v3199
    %v4760 = vpack.c.b16 %v3216, %v3208
    %v4761 = vpack.c.b16 %v3217, %v3209
    %v4762 = vpack.c.b16 %v3218, %v3210
    %v4763 = vpack.c.b16 %v3219, %v3211
    %v4764 = vpack.c.b16 %v3220, %v3212
    %v4765 = vpack.c.b16 %v3221, %v3213
    %v4766 = vpack.c.b16 %v3222, %v3214
    %v4767 = vpack.c.b16 %v3223, %v3215
    %v4768 = vpack.c.b16 %v3232, %v3224
    %v4769 = vpack.c.b16 %v3233, %v3225
    %v4770 = vpack.c.b16 %v3234, %v3226
    %v4771 = vpack.c.b16 %v3235, %v3227
    %v4772 = vpack.c.b16 %v3236, %v3228
    %v4773 = vpack.c.b16 %v3237, %v3229
    %v4774 = vpack.c.b16 %v3238, %v3230
    %v4775 = vpack.c.b16 %v3239, %v3231
    %v4776 = vpack.c.b16 %v3248, %v3240
    %v4777 = vpack.c.b16 %v3249, %v3241
    %v4778 = vpack.c.b16 %v3250, %v3242
    %v4779 = vpack.c.b16 %v3251, %v3243
    %v4780 = vpack.c.b16 %v3252, %v3244
    %v4781 = vpack.c.b16 %v3253, %v3245
    %v4782 = vpack.c.b16 %v3254, %v3246
    %v4783 = vpack.c.b16 %v3255, %v3247
    %v4784 = vpack.c.b16 %v3264, %v3256
    %v4785 = vpack.c.b16 %v3265, %v3257
    %v4786 = vpack.c.b16 %v3266, %v3258
    %v4787 = vpack.c.b16 %v3267, %v3259
    %v4788 = vpack.c.b16 %v3268, %v3260
    %v4789 = vpack.c.b16 %v3269, %v3261
    %v4790 = vpack.c.b16 %v3270, %v3262
    %v4791 = vpack.c.b16 %v3271, %v3263
    %v4792 = vpack.c.b16 %v3280, %v3272
    %v4793 = vpack.c.b16 %v3281, %v3273
    %v4794 = vpack.c.b16 %v3282, %v3274
    %v4795 = vpack.c.b16 %v3283, %v3275
    %v4796 = vpack.c.b16 %v3284, %v3276
    %v4797 = vpack.c.b16 %v3285, %v3277
    %v4798 = vpack.c.b16 %v3286, %v3278
    %v4799 = vpack.c.b16 %v3287, %v3279
    %v4800 = vpack.c.b16 %v3296, %v3288
    %v4801 = vpack.c.b16 %v3297, %v3289
    %v4802 = vpack.c.b16 %v3298, %v3290
    %v4803 = vpack.c.b16 %v3299, %v3291
    %v4804 = vpack.c.b16 %v3300, %v3292
    %v4805 = vpack.c.b16 %v3301, %v3293
    %v4806 = vpack.c.b16 %v3302, %v3294
    %v4807 = vpack.c.b16 %v3303, %v3295
    %v4808 = vpack.c.b16 %v3312, %v3304
    %v4809 = vpack.c.b16 %v3313, %v3305
    %v4810 = vpack.c.b16 %v3314, %v3306
    %v4811 = vpack.c.b16 %v3315, %v3307
    %v4812 = vpack.c.b16 %v3316, %v3308
    %v4813 = vpack.c.b16 %v3317, %v3309
    %v4814 = vpack.c.b16 %v3318, %v3310
    %v4815 = vpack.c.b16 %v3319, %v3311
    %v4816 = vpack.c.b16 %v3328, %v3320
    %v4817 = vpack.c.b16 %v3329, %v3321
    %v4818 = vpack.c.b16 %v3330, %v3322
    %v4819 = vpack.c.b16 %v3331, %v3323
    %v4820 = vpack.c.b16 %v3332, %v3324
    %v4821 = vpack.c.b16 %v3333, %v3325
    %v4822 = vpack.c.b16 %v3334, %v3326
    %v4823 = vpack.c.b16 %v3335, %v3327
    %v4824 = vpack.c.b16 %v3344, %v3336
    %v4825 = vpack.c.b16 %v3345, %v3337
    %v4826 = vpack.c.b16 %v3346, %v3338
    %v4827 = vpack.c.b16 %v3347, %v3339
    %v4828 = vpack.c.b16 %v3348, %v3340
    %v4829 = vpack.c.b16 %v3349, %v3341
    %v4830 = vpack.c.b16 %v3350, %v3342
    %v4831 = vpack.c.b16 %v3351, %v3343
    %v4832 = vpack.c.b16 %v3360, %v3352
    %v4833 = vpack.c.b16 %v3361, %v3353
    %v4834 = vpack.c.b16 %v3362, %v3354
    %v4835 = vpack.c.b16 %v3363, %v3355
    %v4836 = vpack.c.b16 %v3364, %v3356
    %v4837 = vpack.c.b16 %v3365, %v3357
    %v4838 = vpack.c.b16 %v3366, %v3358
    %v4839 = vpack.c.b16 %v3367, %v3359
    %v4840 = vpack.c.b16 %v3376, %v3368
    %v4841 = vpack.c.b16 %v3377, %v3369
    %v4842 = vpack.c.b16 %v3378, %v3370
    %v4843 = vpack.c.b16 %v3379, %v3371
    %v4844 = vpack.c.b16 %v3380, %v3372
    %v4845 = vpack.c.b16 %v3381, %v3373
    %v4846 = vpack.c.b16 %v3382, %v3374
    %v4847 = vpack.c.b16 %v3383, %v3375
    %v4848 = vpack.c.b16 %v3392, %v3384
    %v4849 = vpack.c.b16 %v3393, %v3385
    %v4850 = vpack.c.b16 %v3394, %v3386
    %v4851 = vpack.c.b16 %v3395, %v3387
    %v4852 = vpack.c.b16 %v3396, %v3388
    %v4853 = vpack.c.b16 %v3397, %v3389
    %v4854 = vpack.c.b16 %v3398, %v3390
    %v4855 = vpack.c.b16 %v3399, %v3391
    %v4856 = vpack.c.b16 %v3408, %v3400
    %v4857 = vpack.c.b16 %v3409, %v3401
    %v4858 = vpack.c.b16 %v3410, %v3402
    %v4859 = vpack.c.b16 %v3411, %v3403
    %v4860 = vpack.c.b16 %v3412, %v3404
    %v4861 = vpack.c.b16 %v3413, %v3405
    %v4862 = vpack.c.b16 %v3414, %v3406
    %v4863 = vpack.c.b16 %v3415, %v3407
    %v4864 = vpack.c.b16 %v3424, %v3416
    %v4865 = vpack.c.b16 %v3425, %v3417
    %v4866 = vpack.c.b16 %v3426, %v3418
    %v4867 = vpack.c.b16 %v3427, %v3419
    %v4868 = vpack.c.b16 %v3428, %v3420
    %v4869 = vpack.c.b16 %v3429, %v3421
    %v4870 = vpack.c.b16 %v3430, %v3422
    %v4871 = vpack.c.b16 %v3431, %v3423
    %v4872 = vpack.c.b16 %v3440, %v3432
    %v4873 = vpack.c.b16 %v3441, %v3433
    %v4874 = vpack.c.b16 %v3442, %v3434
    %v4875 = vpack.c.b16 %v3443, %v3435
    %v4876 = vpack.c.b16 %v3444, %v3436
    %v4877 = vpack.c.b16 %v3445, %v3437
    %v4878 = vpack.c.b16 %v3446, %v3438
    %v4879 = vpack.c.b16 %v3447, %v3439
    %v4880 = vpack.c.b16 %v3456, %v3448
    %v4881 = vpack.c.b16 %v3457, %v3449
    %v4882 = vpack.c.b16 %v3458, %v3450
    %v4883 = vpack.c.b16 %v3459, %v3451
    %v4884 = vpack.c.b16 %v3460, %v3452
    %v4885 = vpack.c.b16 %v3461, %v3453
    %v4886 = vpack.c.b16 %v3462, %v3454
    %v4887 = vpack.c.b16 %v3463, %v3455
    %v4888 = vpack.c.b16 %v3472, %v3464
    %v4889 = vpack.c.b16 %v3473, %v3465
    %v4890 = vpack.c.b16 %v3474, %v3466
    %v4891 = vpack.c.b16 %v3475, %v3467
    %v4892 = vpack.c.b16 %v3476, %v3468
    %v4893 = vpack.c.b16 %v3477, %v3469
    %v4894 = vpack.c.b16 %v3478, %v3470
    %v4895 = vpack.c.b16 %v3479, %v3471
    %v4896 = vpack.c.b16 %v3488, %v3480
    %v4897 = vpack.c.b16 %v3489, %v3481
    %v4898 = vpack.c.b16 %v3490, %v3482
    %v4899 = vpack.c.b16 %v3491, %v3483
    %v4900 = vpack.c.b16 %v3492, %v3484
    %v4901 = vpack.c.b16 %v3493, %v3485
    %v4902 = vpack.c.b16 %v3494, %v3486
    %v4903 = vpack.c.b16 %v3495, %v3487
    %v4904 = vpack.c.b16 %v3504, %v3496
    %v4905 = vpack.c.b16 %v3505, %v3497
    %v4906 = vpack.c.b16 %v3506, %v3498
    %v4907 = vpack.c.b16 %v3507, %v3499
    %v4908 = vpack.c.b16 %v3508, %v3500
    %v4909 = vpack.c.b16 %v3509, %v3501
    %v4910 = vpack.c.b16 %v3510, %v3502
    %v4911 = vpack.c.b16 %v3511, %v3503
    %v4912 = vpack.c.b16 %v3520, %v3512
    %v4913 = vpack.c.b16 %v3521, %v3513
    %v4914 = vpack.c.b16 %v3522, %v3514
    %v4915 = vpack.c.b16 %v3523, %v3515
    %v4916 = vpack.c.b16 %v3524, %v3516
    %v4917 = vpack.c.b16 %v3525, %v3517
    %v4918 = vpack.c.b16 %v3526, %v3518
    %v4919 = vpack.c.b16 %v3527, %v3519
    %v4920 = vpack.c.b16 %v3536, %v3528
    %v4921 = vpack.c.b16 %v3537, %v3529
    %v4922 = vpack.c.b16 %v3538, %v3530
    %v4923 = vpack.c.b16 %v3539, %v3531
    %v4924 = vpack.c.b16 %v3540, %v3532
    %v4925 = vpack.c.b16 %v3541, %v3533
    %v4926 = vpack.c.b16 %v3542, %v3534
    %v4927 = vpack.c.b16 %v3543, %v3535
    %v4928 = vpack.c.b16 %v3552, %v3544
    %v4929 = vpack.c.b16 %v3553, %v3545
    %v4930 = vpack.c.b16 %v3554, %v3546
    %v4931 = vpack.c.b16 %v3555, %v3547
    %v4932 = vpack.c.b16 %v3556, %v3548
    %v4933 = vpack.c.b16 %v3557, %v3549
    %v4934 = vpack.c.b16 %v3558, %v3550
    %v4935 = vpack.c.b16 %v3559, %v3551
    %v4936 = vpack.c.b16 %v3568, %v3560
    %v4937 = vpack.c.b16 %v3569, %v3561
    %v4938 = vpack.c.b16 %v3570, %v3562
    %v4939 = vpack.c.b16 %v3571, %v3563
    %v4940 = vpack.c.b16 %v3572, %v3564
    %v4941 = vpack.c.b16 %v3573, %v3565
    %v4942 = vpack.c.b16 %v3574, %v3566
    %v4943 = vpack.c.b16 %v3575, %v3567
    %v4944 = vpack.c.b16 %v3584, %v3576
    %v4945 = vpack.c.b16 %v3585, %v3577
    %v4946 = vpack.c.b16 %v3586, %v3578
    %v4947 = vpack.c.b16 %v3587, %v3579
    %v4948 = vpack.c.b16 %v3588, %v3580
    %v4949 = vpack.c.b16 %v3589, %v3581
    %v4950 = vpack.c.b16 %v3590, %v3582
    %v4951 = vpack.c.b16 %v3591, %v3583
    %v4952 = vpack.c.b16 %v3600, %v3592
    %v4953 = vpack.c.b16 %v3601, %v3593
    %v4954 = vpack.c.b16 %v3602, %v3594
    %v4955 = vpack.c.b16 %v3603, %v3595
    %v4956 = vpack.c.b16 %v3604, %v3596
    %v4957 = vpack.c.b16 %v3605, %v3597
    %v4958 = vpack.c.b16 %v3606, %v3598
    %v4959 = vpack.c.b16 %v3607, %v3599
    %v4960 = vpack.c.b16 %v3616, %v3608
    %v4961 = vpack.c.b16 %v3617, %v3609
    %v4962 = vpack.c.b16 %v3618, %v3610
    %v4963 = vpack.c.b16 %v3619, %v3611
    %v4964 = vpack.c.b16 %v3620, %v3612
    %v4965 = vpack.c.b16 %v3621, %v3613
    %v4966 = vpack.c.b16 %v3622, %v3614
    %v4967 = vpack.c.b16 %v3623, %v3615
    %v4968 = vpack.c.b16 %v3632, %v3624
    %v4969 = vpack.c.b16 %v3633, %v3625
    %v4970 = vpack.c.b16 %v3634, %v3626
    %v4971 = vpack.c.b16 %v3635, %v3627
    %v4972 = vpack.c.b16 %v3636, %v3628
    %v4973 = vpack.c.b16 %v3637, %v3629
    %v4974 = vpack.c.b16 %v3638, %v3630
    %v4975 = vpack.c.b16 %v3639, %v3631
    %v4976 = vpack.c.b16 %v3648, %v3640
    %v4977 = vpack.c.b16 %v3649, %v3641
    %v4978 = vpack.c.b16 %v3650, %v3642
    %v4979 = vpack.c.b16 %v3651, %v3643
    %v4980 = vpack.c.b16 %v3652, %v3644
    %v4981 = vpack.c.b16 %v3653, %v3645
    %v4982 = vpack.c.b16 %v3654, %v3646
    %v4983 = vpack.c.b16 %v3655, %v3647
    %v4984 = vpack.c.b16 %v3664, %v3656
    %v4985 = vpack.c.b16 %v3665, %v3657
    %v4986 = vpack.c.b16 %v3666, %v3658
    %v4987 = vpack.c.b16 %v3667, %v3659
    %v4988 = vpack.c.b16 %v3668, %v3660
    %v4989 = vpack.c.b16 %v3669, %v3661
    %v4990 = vpack.c.b16 %v3670, %v3662
    %v4991 = vpack.c.b16 %v3671, %v3663
    %v4992 = vpack.c.b16 %v3680, %v3672
    %v4993 = vpack.c.b16 %v3681, %v3673
    %v4994 = vpack.c.b16 %v3682, %v3674
    %v4995 = vpack.c.b16 %v3683, %v3675
    %v4996 = vpack.c.b16 %v3684, %v3676
    %v4997 = vpack.c.b16 %v3685, %v3677
    %v4998 = vpack.c.b16 %v3686, %v3678
    %v4999 = vpack.c.b16 %v3687, %v3679
    %v5000 = vpack.c.b16 %v3696, %v3688
    %v5001 = vpack.c.b16 %v3697, %v3689
    %v5002 = vpack.c.b16 %v3698, %v3690
    %v5003 = vpack.c.b16 %v3699, %v3691
    %v5004 = vpack.c.b16 %v3700, %v3692
    %v5005 = vpack.c.b16 %v3701, %v3693
    %v5006 = vpack.c.b16 %v3702, %v3694
    %v5007 = vpack.c.b16 %v3703, %v3695
    %v5008 = vpack.c.b16 %v3712, %v3704
    %v5009 = vpack.c.b16 %v3713, %v3705
    %v5010 = vpack.c.b16 %v3714, %v3706
    %v5011 = vpack.c.b16 %v3715, %v3707
    %v5012 = vpack.c.b16 %v3716, %v3708
    %v5013 = vpack.c.b16 %v3717, %v3709
    %v5014 = vpack.c.b16 %v3718, %v3710
    %v5015 = vpack.c.b16 %v3719, %v3711
    %v5016 = vpack.c.b16 %v3728, %v3720
    %v5017 = vpack.c.b16 %v3729, %v3721
    %v5018 = vpack.c.b16 %v3730, %v3722
    %v5019 = vpack.c.b16 %v3731, %v3723
    %v5020 = vpack.c.b16 %v3732, %v3724
    %v5021 = vpack.c.b16 %v3733, %v3725
    %v5022 = vpack.c.b16 %v3734, %v3726
    %v5023 = vpack.c.b16 %v3735, %v3727
    %v5024 = vpack.c.b16 %v3744, %v3736
    %v5025 = vpack.c.b16 %v3745, %v3737
    %v5026 = vpack.c.b16 %v3746, %v3738
    %v5027 = vpack.c.b16 %v3747, %v3739
    %v5028 = vpack.c.b16 %v3748, %v3740
    %v5029 = vpack.c.b16 %v3749, %v3741
    %v5030 = vpack.c.b16 %v3750, %v3742
    %v5031 = vpack.c.b16 %v3751, %v3743
    %v5032 = vpack.c.b16 %v3760, %v3752
    %v5033 = vpack.c.b16 %v3761, %v3753
    %v5034 = vpack.c.b16 %v3762, %v3754
    %v5035 = vpack.c.b16 %v3763, %v3755
    %v5036 = vpack.c.b16 %v3764, %v3756
    %v5037 = vpack.c.b16 %v3765, %v3757
    %v5038 = vpack.c.b16 %v3766, %v3758
    %v5039 = vpack.c.b16 %v3767, %v3759
    %v5040 = vpack.c.b16 %v3776, %v3768
    %v5041 = vpack.c.b16 %v3777, %v3769
    %v5042 = vpack.c.b16 %v3778, %v3770
    %v5043 = vpack.c.b16 %v3779, %v3771
    %v5044 = vpack.c.b16 %v3780, %v3772
    %v5045 = vpack.c.b16 %v3781, %v3773
    %v5046 = vpack.c.b16 %v3782, %v3774
    %v5047 = vpack.c.b16 %v3783, %v3775
    %v5048 = vpack.c.b16 %v3792, %v3784
    %v5049 = vpack.c.b16 %v3793, %v3785
    %v5050 = vpack.c.b16 %v3794, %v3786
    %v5051 = vpack.c.b16 %v3795, %v3787
    %v5052 = vpack.c.b16 %v3796, %v3788
    %v5053 = vpack.c.b16 %v3797, %v3789
    %v5054 = vpack.c.b16 %v3798, %v3790
    %v5055 = vpack.c.b16 %v3799, %v3791
    %v5056 = vpack.c.b16 %v3808, %v3800
    %v5057 = vpack.c.b16 %v3809, %v3801
    %v5058 = vpack.c.b16 %v3810, %v3802
    %v5059 = vpack.c.b16 %v3811, %v3803
    %v5060 = vpack.c.b16 %v3812, %v3804
    %v5061 = vpack.c.b16 %v3813, %v3805
    %v5062 = vpack.c.b16 %v3814, %v3806
    %v5063 = vpack.c.b16 %v3815, %v3807
    %v5064 = vpack.c.b16 %v3824, %v3816
    %v5065 = vpack.c.b16 %v3825, %v3817
    %v5066 = vpack.c.b16 %v3826, %v3818
    %v5067 = vpack.c.b16 %v3827, %v3819
    %v5068 = vpack.c.b16 %v3828, %v3820
    %v5069 = vpack.c.b16 %v3829, %v3821
    %v5070 = vpack.c.b16 %v3830, %v3822
    %v5071 = vpack.c.b16 %v3831, %v3823
    %v5072 = vpack.c.b16 %v3840, %v3832
    %v5073 = vpack.c.b16 %v3841, %v3833
    %v5074 = vpack.c.b16 %v3842, %v3834
    %v5075 = vpack.c.b16 %v3843, %v3835
    %v5076 = vpack.c.b16 %v3844, %v3836
    %v5077 = vpack.c.b16 %v3845, %v3837
    %v5078 = vpack.c.b16 %v3846, %v3838
    %v5079 = vpack.c.b16 %v3847, %v3839
    %v5080 = vpack.c.b16 %v3856, %v3848
    %v5081 = vpack.c.b16 %v3857, %v3849
    %v5082 = vpack.c.b16 %v3858, %v3850
    %v5083 = vpack.c.b16 %v3859, %v3851
    %v5084 = vpack.c.b16 %v3860, %v3852
    %v5085 = vpack.c.b16 %v3861, %v3853
    %v5086 = vpack.c.b16 %v3862, %v3854
    %v5087 = vpack.c.b16 %v3863, %v3855
    %v5088 = vpack.c.b16 %v3872, %v3864
    %v5089 = vpack.c.b16 %v3873, %v3865
    %v5090 = vpack.c.b16 %v3874, %v3866
    %v5091 = vpack.c.b16 %v3875, %v3867
    %v5092 = vpack.c.b16 %v3876, %v3868
    %v5093 = vpack.c.b16 %v3877, %v3869
    %v5094 = vpack.c.b16 %v3878, %v3870
    %v5095 = vpack.c.b16 %v3879, %v3871
    %v5096 = vpack.c.b16 %v3888, %v3880
    %v5097 = vpack.c.b16 %v3889, %v3881
    %v5098 = vpack.c.b16 %v3890, %v3882
    %v5099 = vpack.c.b16 %v3891, %v3883
    %v5100 = vpack.c.b16 %v3892, %v3884
    %v5101 = vpack.c.b16 %v3893, %v3885
    %v5102 = vpack.c.b16 %v3894, %v3886
    %v5103 = vpack.c.b16 %v3895, %v3887
    %v5104 = vpack.c.b16 %v3904, %v3896
    %v5105 = vpack.c.b16 %v3905, %v3897
    %v5106 = vpack.c.b16 %v3906, %v3898
    %v5107 = vpack.c.b16 %v3907, %v3899
    %v5108 = vpack.c.b16 %v3908, %v3900
    %v5109 = vpack.c.b16 %v3909, %v3901
    %v5110 = vpack.c.b16 %v3910, %v3902
    %v5111 = vpack.c.b16 %v3911, %v3903
    %v5112 = vpack.c.b16 %v3920, %v3912
    %v5113 = vpack.c.b16 %v3921, %v3913
    %v5114 = vpack.c.b16 %v3922, %v3914
    %v5115 = vpack.c.b16 %v3923, %v3915
    %v5116 = vpack.c.b16 %v3924, %v3916
    %v5117 = vpack.c.b16 %v3925, %v3917
    %v5118 = vpack.c.b16 %v3926, %v3918
    %v5119 = vpack.c.b16 %v3927, %v3919
    %v5120 = vpack.c.b16 %v3936, %v3928
    %v5121 = vpack.c.b16 %v3937, %v3929
    %v5122 = vpack.c.b16 %v3938, %v3930
    %v5123 = vpack.c.b16 %v3939, %v3931
    %v5124 = vpack.c.b16 %v3940, %v3932
    %v5125 = vpack.c.b16 %v3941, %v3933
    %v5126 = vpack.c.b16 %v3942, %v3934
    %v5127 = vpack.c.b16 %v3943, %v3935
    %v5128 = vpack.c.b16 %v3952, %v3944
    %v5129 = vpack.c.b16 %v3953, %v3945
    %v5130 = vpack.c.b16 %v3954, %v3946
    %v5131 = vpack.c.b16 %v3955, %v3947
    %v5132 = vpack.c.b16 %v3956, %v3948
    %v5133 = vpack.c.b16 %v3957, %v3949
    %v5134 = vpack.c.b16 %v3958, %v3950
    %v5135 = vpack.c.b16 %v3959, %v3951
    %v5136 = vpack.c.b16 %v3968, %v3960
    %v5137 = vpack.c.b16 %v3969, %v3961
    %v5138 = vpack.c.b16 %v3970, %v3962
    %v5139 = vpack.c.b16 %v3971, %v3963
    %v5140 = vpack.c.b16 %v3972, %v3964
    %v5141 = vpack.c.b16 %v3973, %v3965
    %v5142 = vpack.c.b16 %v3974, %v3966
    %v5143 = vpack.c.b16 %v3975, %v3967
    %v5144 = vpack.c.b16 %v3984, %v3976
    %v5145 = vpack.c.b16 %v3985, %v3977
    %v5146 = vpack.c.b16 %v3986, %v3978
    %v5147 = vpack.c.b16 %v3987, %v3979
    %v5148 = vpack.c.b16 %v3988, %v3980
    %v5149 = vpack.c.b16 %v3989, %v3981
    %v5150 = vpack.c.b16 %v3990, %v3982
    %v5151 = vpack.c.b16 %v3991, %v3983
    %v5152 = vpack.c.b16 %v4000, %v3992
    %v5153 = vpack.c.b16 %v4001, %v3993
    %v5154 = vpack.c.b16 %v4002, %v3994
    %v5155 = vpack.c.b16 %v4003, %v3995
    %v5156 = vpack.c.b16 %v4004, %v3996
    %v5157 = vpack.c.b16 %v4005, %v3997
    %v5158 = vpack.c.b16 %v4006, %v3998
    %v5159 = vpack.c.b16 %v4007, %v3999
    %v5160 = vpack.c.b16 %v4016, %v4008
    %v5161 = vpack.c.b16 %v4017, %v4009
    %v5162 = vpack.c.b16 %v4018, %v4010
    %v5163 = vpack.c.b16 %v4019, %v4011
    %v5164 = vpack.c.b16 %v4020, %v4012
    %v5165 = vpack.c.b16 %v4021, %v4013
    %v5166 = vpack.c.b16 %v4022, %v4014
    %v5167 = vpack.c.b16 %v4023, %v4015
    %v5168 = vpack.c.b16 %v4032, %v4024
    %v5169 = vpack.c.b16 %v4033, %v4025
    %v5170 = vpack.c.b16 %v4034, %v4026
    %v5171 = vpack.c.b16 %v4035, %v4027
    %v5172 = vpack.c.b16 %v4036, %v4028
    %v5173 = vpack.c.b16 %v4037, %v4029
    %v5174 = vpack.c.b16 %v4038, %v4030
    %v5175 = vpack.c.b16 %v4039, %v4031
    %v5176 = vpack.c.b16 %v4048, %v4040
    %v5177 = vpack.c.b16 %v4049, %v4041
    %v5178 = vpack.c.b16 %v4050, %v4042
    %v5179 = vpack.c.b16 %v4051, %v4043
    %v5180 = vpack.c.b16 %v4052, %v4044
    %v5181 = vpack.c.b16 %v4053, %v4045
    %v5182 = vpack.c.b16 %v4054, %v4046
    %v5183 = vpack.c.b16 %v4055, %v4047
    %v5184 = vpack.c.b16 %v4064, %v4056
    %v5185 = vpack.c.b16 %v4065, %v4057
    %v5186 = vpack.c.b16 %v4066, %v4058
    %v5187 = vpack.c.b16 %v4067, %v4059
    %v5188 = vpack.c.b16 %v4068, %v4060
    %v5189 = vpack.c.b16 %v4069, %v4061
    %v5190 = vpack.c.b16 %v4070, %v4062
    %v5191 = vpack.c.b16 %v4071, %v4063
    %v5192 = vpack.c.b16 %v4080, %v4072
    %v5193 = vpack.c.b16 %v4081, %v4073
    %v5194 = vpack.c.b16 %v4082, %v4074
    %v5195 = vpack.c.b16 %v4083, %v4075
    %v5196 = vpack.c.b16 %v4084, %v4076
    %v5197 = vpack.c.b16 %v4085, %v4077
    %v5198 = vpack.c.b16 %v4086, %v4078
    %v5199 = vpack.c.b16 %v4087, %v4079
    %v5200 = vpack.c.b16 %v4096, %v4088
    %v5201 = vpack.c.b16 %v4097, %v4089
    %v5202 = vpack.c.b16 %v4098, %v4090
    %v5203 = vpack.c.b16 %v4099, %v4091
    %v5204 = vpack.c.b16 %v4100, %v4092
    %v5205 = vpack.c.b16 %v4101, %v4093
    %v5206 = vpack.c.b16 %v4102, %v4094
    %v5207 = vpack.c.b16 %v4103, %v4095
    %v5208 = vpack.c.b16 %v4112, %v4104
    %v5209 = vpack.c.b16 %v4113, %v4105
    %v5210 = vpack.c.b16 %v4114, %v4106
    %v5211 = vpack.c.b16 %v4115, %v4107
    %v5212 = vpack.c.b16 %v4116, %v4108
    %v5213 = vpack.c.b16 %v4117, %v4109
    %v5214 = vpack.c.b16 %v4118, %v4110
    %v5215 = vpack.c.b16 %v4119, %v4111
    %v5216 = vpack.c.b16 %v4128, %v4120
    %v5217 = vpack.c.b16 %v4129, %v4121
    %v5218 = vpack.c.b16 %v4130, %v4122
    %v5219 = vpack.c.b16 %v4131, %v4123
    %v5220 = vpack.c.b16 %v4132, %v4124
    %v5221 = vpack.c.b16 %v4133, %v4125
    %v5222 = vpack.c.b16 %v4134, %v4126
    %v5223 = vpack.c.b16 %v4135, %v4127
    %v5224 = vpack.c.b16 %v4144, %v4136
    %v5225 = vpack.c.b16 %v4145, %v4137
    %v5226 = vpack.c.b16 %v4146, %v4138
    %v5227 = vpack.c.b16 %v4147, %v4139
    %v5228 = vpack.c.b16 %v4148, %v4140
    %v5229 = vpack.c.b16 %v4149, %v4141
    %v5230 = vpack.c.b16 %v4150, %v4142
    %v5231 = vpack.c.b16 %v4151, %v4143
    %v5232 = vpack.c.b16 %v4160, %v4152
    %v5233 = vpack.c.b16 %v4161, %v4153
    %v5234 = vpack.c.b16 %v4162, %v4154
    %v5235 = vpack.c.b16 %v4163, %v4155
    %v5236 = vpack.c.b16 %v4164, %v4156
    %v5237 = vpack.c.b16 %v4165, %v4157
    %v5238 = vpack.c.b16 %v4166, %v4158
    %v5239 = vpack.c.b16 %v4167, %v4159
    %v5240 = vpack.c.b16 %v4176, %v4168
    %v5241 = vpack.c.b16 %v4177, %v4169
    %v5242 = vpack.c.b16 %v4178, %v4170
    %v5243 = vpack.c.b16 %v4179, %v4171
    %v5244 = vpack.c.b16 %v4180, %v4172
    %v5245 = vpack.c.b16 %v4181, %v4173
    %v5246 = vpack.c.b16 %v4182, %v4174
    %v5247 = vpack.c.b16 %v4183, %v4175
    %v5248 = vpack.c.b16 %v4192, %v4184
    %v5249 = vpack.c.b16 %v4193, %v4185
    %v5250 = vpack.c.b16 %v4194, %v4186
    %v5251 = vpack.c.b16 %v4195, %v4187
    %v5252 = vpack.c.b16 %v4196, %v4188
    %v5253 = vpack.c.b16 %v4197, %v4189
    %v5254 = vpack.c.b16 %v4198, %v4190
    %v5255 = vpack.c.b16 %v4199, %v4191
    %v5256 = vpack.c.b16 %v4208, %v4200
    %v5257 = vpack.c.b16 %v4209, %v4201
    %v5258 = vpack.c.b16 %v4210, %v4202
    %v5259 = vpack.c.b16 %v4211, %v4203
    %v5260 = vpack.c.b16 %v4212, %v4204
    %v5261 = vpack.c.b16 %v4213, %v4205
    %v5262 = vpack.c.b16 %v4214, %v4206
    %v5263 = vpack.c.b16 %v4215, %v4207
    %v5264 = vpack.c.b16 %v4224, %v4216
    %v5265 = vpack.c.b16 %v4225, %v4217
    %v5266 = vpack.c.b16 %v4226, %v4218
    %v5267 = vpack.c.b16 %v4227, %v4219
    %v5268 = vpack.c.b16 %v4228, %v4220
    %v5269 = vpack.c.b16 %v4229, %v4221
    %v5270 = vpack.c.b16 %v4230, %v4222
    %v5271 = vpack.c.b16 %v4231, %v4223
    %v5272 = vpack.c.b16 %v4240, %v4232
    %v5273 = vpack.c.b16 %v4241, %v4233
    %v5274 = vpack.c.b16 %v4242, %v4234
    %v5275 = vpack.c.b16 %v4243, %v4235
    %v5276 = vpack.c.b16 %v4244, %v4236
    %v5277 = vpack.c.b16 %v4245, %v4237
    %v5278 = vpack.c.b16 %v4246, %v4238
    %v5279 = vpack.c.b16 %v4247, %v4239
    %v5280 = vpack.c.b16 %v4256, %v4248
    %v5281 = vpack.c.b16 %v4257, %v4249
    %v5282 = vpack.c.b16 %v4258, %v4250
    %v5283 = vpack.c.b16 %v4259, %v4251
    %v5284 = vpack.c.b16 %v4260, %v4252
    %v5285 = vpack.c.b16 %v4261, %v4253
    %v5286 = vpack.c.b16 %v4262, %v4254
    %v5287 = vpack.c.b16 %v4263, %v4255
    %6312 = vmatpush.bf16.msra.mxu0 %v4320
    %6313 = vmatpush.bf16.msra.mxu0 %v4312
    %6314 = vmatpush.bf16.msra.mxu0 %v4304
    %6315 = vmatpush.bf16.msra.mxu0 %v4296
    %6316 = vmatpush.bf16.msra.mxu0 %v4288
    %6317 = vmatpush.bf16.msra.mxu0 %v4280
    %6318 = vmatpush.bf16.msra.mxu0 %v4272
    %6319 = vmatpush.bf16.msra.mxu0 %v4264
    %6320 = vmatmul.bf16.gmra.mxu0 %v134
    %v6321 = vpop.f32.mrf.mxu0
    %v6322 = vadd.f32 %v1176, %v6321
    %v6323 = vpop.f32.mrf.mxu0
    %6324 = vdwg.mxu0
    %6325 = vmatpush.bf16.msra.mxu0 %v4384
    %6326 = vmatpush.bf16.msra.mxu0 %v4376
    %6327 = vmatpush.bf16.msra.mxu0 %v4368
    %6328 = vmatpush.bf16.msra.mxu0 %v4360
    %6329 = vmatpush.bf16.msra.mxu0 %v4352
    %6330 = vmatpush.bf16.msra.mxu0 %v4344
    %6331 = vmatpush.bf16.msra.mxu0 %v4336
    %6332 = vmatpush.bf16.msra.mxu0 %v4328
    %6333 = vmatmul.bf16.gmra.mxu0 %v135
    %v6334 = vpop.f32.mrf.mxu0
    %v6335 = vadd.f32 %v6322, %v6334
    %v6336 = vpop.f32.mrf.mxu0
    %6337 = vdwg.mxu0
    %6338 = vmatpush.bf16.msra.mxu0 %v4448
    %6339 = vmatpush.bf16.msra.mxu0 %v4440
    %6340 = vmatpush.bf16.msra.mxu0 %v4432
    %6341 = vmatpush.bf16.msra.mxu0 %v4424
    %6342 = vmatpush.bf16.msra.mxu0 %v4416
    %6343 = vmatpush.bf16.msra.mxu0 %v4408
    %6344 = vmatpush.bf16.msra.mxu0 %v4400
    %6345 = vmatpush.bf16.msra.mxu0 %v4392
    %6346 = vmatmul.bf16.gmra.mxu0 %v136
    %v6347 = vpop.f32.mrf.mxu0
    %v6348 = vadd.f32 %v6335, %v6347
    %v6349 = vpop.f32.mrf.mxu0
    %6350 = vdwg.mxu0
    %6351 = vmatpush.bf16.msra.mxu0 %v4512
    %6352 = vmatpush.bf16.msra.mxu0 %v4504
    %6353 = vmatpush.bf16.msra.mxu0 %v4496
    %6354 = vmatpush.bf16.msra.mxu0 %v4488
    %6355 = vmatpush.bf16.msra.mxu0 %v4480
    %6356 = vmatpush.bf16.msra.mxu0 %v4472
    %6357 = vmatpush.bf16.msra.mxu0 %v4464
    %6358 = vmatpush.bf16.msra.mxu0 %v4456
    %6359 = vmatmul.bf16.gmra.mxu0 %v137
    %v6360 = vpop.f32.mrf.mxu0
    %v6361 = vadd.f32 %v6348, %v6360
    %v6362 = vpop.f32.mrf.mxu0
    %6363 = vdwg.mxu0
    %6364 = vmatpush.bf16.msra.mxu0 %v4576
    %6365 = vmatpush.bf16.msra.mxu0 %v4568
    %6366 = vmatpush.bf16.msra.mxu0 %v4560
    %6367 = vmatpush.bf16.msra.mxu0 %v4552
    %6368 = vmatpush.bf16.msra.mxu0 %v4544
    %6369 = vmatpush.bf16.msra.mxu0 %v4536
    %6370 = vmatpush.bf16.msra.mxu0 %v4528
    %6371 = vmatpush.bf16.msra.mxu0 %v4520
    %6372 = vmatmul.bf16.gmra.mxu0 %v138
    %v6373 = vpop.f32.mrf.mxu0
    %v6374 = vadd.f32 %v6361, %v6373
    %v6375 = vpop.f32.mrf.mxu0
    %6376 = vdwg.mxu0
    %6377 = vmatpush.bf16.msra.mxu0 %v4640
    %6378 = vmatpush.bf16.msra.mxu0 %v4632
    %6379 = vmatpush.bf16.msra.mxu0 %v4624
    %6380 = vmatpush.bf16.msra.mxu0 %v4616
    %6381 = vmatpush.bf16.msra.mxu0 %v4608
    %6382 = vmatpush.bf16.msra.mxu0 %v4600
    %6383 = vmatpush.bf16.msra.mxu0 %v4592
    %6384 = vmatpush.bf16.msra.mxu0 %v4584
    %6385 = vmatmul.bf16.gmra.mxu0 %v139
    %v6386 = vpop.f32.mrf.mxu0
    %v6387 = vadd.f32 %v6374, %v6386
    %v6388 = vpop.f32.mrf.mxu0
    %6389 = vdwg.mxu0
    %6390 = vmatpush.bf16.msra.mxu0 %v4704
    %6391 = vmatpush.bf16.msra.mxu0 %v4696
    %6392 = vmatpush.bf16.msra.mxu0 %v4688
    %6393 = vmatpush.bf16.msra.mxu0 %v4680
    %6394 = vmatpush.bf16.msra.mxu0 %v4672
    %6395 = vmatpush.bf16.msra.mxu0 %v4664
    %6396 = vmatpush.bf16.msra.mxu0 %v4656
    %6397 = vmatpush.bf16.msra.mxu0 %v4648
    %6398 = vmatmul.bf16.gmra.mxu0 %v140
    %v6399 = vpop.f32.mrf.mxu0
    %v6400 = vadd.f32 %v6387, %v6399
    %v6401 = vpop.f32.mrf.mxu0
    %6402 = vdwg.mxu0
    %6403 = vmatpush.bf16.msra.mxu0 %v4768
    %6404 = vmatpush.bf16.msra.mxu0 %v4760
    %6405 = vmatpush.bf16.msra.mxu0 %v4752
    %6406 = vmatpush.bf16.msra.mxu0 %v4744
    %6407 = vmatpush.bf16.msra.mxu0 %v4736
    %6408 = vmatpush.bf16.msra.mxu0 %v4728
    %6409 = vmatpush.bf16.msra.mxu0 %v4720
    %6410 = vmatpush.bf16.msra.mxu0 %v4712
    %6411 = vmatmul.bf16.gmra.mxu0 %v141
    %v6412 = vpop.f32.mrf.mxu0
    %v6413 = vadd.f32 %v6400, %v6412
    %v6414 = vpop.f32.mrf.mxu0
    %6415 = vdwg.mxu0
    %6416 = vmatpush.bf16.msra.mxu0 %v4832
    %6417 = vmatpush.bf16.msra.mxu0 %v4824
    %6418 = vmatpush.bf16.msra.mxu0 %v4816
    %6419 = vmatpush.bf16.msra.mxu0 %v4808
    %6420 = vmatpush.bf16.msra.mxu0 %v4800
    %6421 = vmatpush.bf16.msra.mxu0 %v4792
    %6422 = vmatpush.bf16.msra.mxu0 %v4784
    %6423 = vmatpush.bf16.msra.mxu0 %v4776
    %6424 = vmatmul.bf16.gmra.mxu0 %v142
    %v6425 = vpop.f32.mrf.mxu0
    %v6426 = vadd.f32 %v6413, %v6425
    %v6427 = vpop.f32.mrf.mxu0
    %6428 = vdwg.mxu0
    %6429 = vmatpush.bf16.msra.mxu0 %v4896
    %6430 = vmatpush.bf16.msra.mxu0 %v4888
    %6431 = vmatpush.bf16.msra.mxu0 %v4880
    %6432 = vmatpush.bf16.msra.mxu0 %v4872
    %6433 = vmatpush.bf16.msra.mxu0 %v4864
    %6434 = vmatpush.bf16.msra.mxu0 %v4856
    %6435 = vmatpush.bf16.msra.mxu0 %v4848
    %6436 = vmatpush.bf16.msra.mxu0 %v4840
    %6437 = vmatmul.bf16.gmra.mxu0 %v143
    %v6438 = vpop.f32.mrf.mxu0
    %v6439 = vadd.f32 %v6426, %v6438
    %v6440 = vpop.f32.mrf.mxu0
    %6441 = vdwg.mxu0
    %6442 = vmatpush.bf16.msra.mxu0 %v4960
    %6443 = vmatpush.bf16.msra.mxu0 %v4952
    %6444 = vmatpush.bf16.msra.mxu0 %v4944
    %6445 = vmatpush.bf16.msra.mxu0 %v4936
    %6446 = vmatpush.bf16.msra.mxu0 %v4928
    %6447 = vmatpush.bf16.msra.mxu0 %v4920
    %6448 = vmatpush.bf16.msra.mxu0 %v4912
    %6449 = vmatpush.bf16.msra.mxu0 %v4904
    %6450 = vmatmul.bf16.gmra.mxu0 %v144
    %v6451 = vpop.f32.mrf.mxu0
    %v6452 = vadd.f32 %v6439, %v6451
    %v6453 = vpop.f32.mrf.mxu0
    %6454 = vdwg.mxu0
    %6455 = vmatpush.bf16.msra.mxu0 %v5024
    %6456 = vmatpush.bf16.msra.mxu0 %v5016
    %6457 = vmatpush.bf16.msra.mxu0 %v5008
    %6458 = vmatpush.bf16.msra.mxu0 %v5000
    %6459 = vmatpush.bf16.msra.mxu0 %v4992
    %6460 = vmatpush.bf16.msra.mxu0 %v4984
    %6461 = vmatpush.bf16.msra.mxu0 %v4976
    %6462 = vmatpush.bf16.msra.mxu0 %v4968
    %6463 = vmatmul.bf16.gmra.mxu0 %v145
    %v6464 = vpop.f32.mrf.mxu0
    %v6465 = vadd.f32 %v6452, %v6464
    %v6466 = vpop.f32.mrf.mxu0
    %6467 = vdwg.mxu0
    %6468 = vmatpush.bf16.msra.mxu0 %v5088
    %6469 = vmatpush.bf16.msra.mxu0 %v5080
    %6470 = vmatpush.bf16.msra.mxu0 %v5072
    %6471 = vmatpush.bf16.msra.mxu0 %v5064
    %6472 = vmatpush.bf16.msra.mxu0 %v5056
    %6473 = vmatpush.bf16.msra.mxu0 %v5048
    %6474 = vmatpush.bf16.msra.mxu0 %v5040
    %6475 = vmatpush.bf16.msra.mxu0 %v5032
    %6476 = vmatmul.bf16.gmra.mxu0 %v146
    %v6477 = vpop.f32.mrf.mxu0
    %v6478 = vadd.f32 %v6465, %v6477
    %v6479 = vpop.f32.mrf.mxu0
    %6480 = vdwg.mxu0
    %6481 = vmatpush.bf16.msra.mxu0 %v5152
    %6482 = vmatpush.bf16.msra.mxu0 %v5144
    %6483 = vmatpush.bf16.msra.mxu0 %v5136
    %6484 = vmatpush.bf16.msra.mxu0 %v5128
    %6485 = vmatpush.bf16.msra.mxu0 %v5120
    %6486 = vmatpush.bf16.msra.mxu0 %v5112
    %6487 = vmatpush.bf16.msra.mxu0 %v5104
    %6488 = vmatpush.bf16.msra.mxu0 %v5096
    %6489 = vmatmul.bf16.gmra.mxu0 %v147
    %v6490 = vpop.f32.mrf.mxu0
    %v6491 = vadd.f32 %v6478, %v6490
    %v6492 = vpop.f32.mrf.mxu0
    %6493 = vdwg.mxu0
    %6494 = vmatpush.bf16.msra.mxu0 %v5216
    %6495 = vmatpush.bf16.msra.mxu0 %v5208
    %6496 = vmatpush.bf16.msra.mxu0 %v5200
    %6497 = vmatpush.bf16.msra.mxu0 %v5192
    %6498 = vmatpush.bf16.msra.mxu0 %v5184
    %6499 = vmatpush.bf16.msra.mxu0 %v5176
    %6500 = vmatpush.bf16.msra.mxu0 %v5168
    %6501 = vmatpush.bf16.msra.mxu0 %v5160
    %6502 = vmatmul.bf16.gmra.mxu0 %v148
    %v6503 = vpop.f32.mrf.mxu0
    %v6504 = vadd.f32 %v6491, %v6503
    %v6505 = vpop.f32.mrf.mxu0
    %6506 = vdwg.mxu0
    %6507 = vmatpush.bf16.msra.mxu0 %v5280
    %6508 = vmatpush.bf16.msra.mxu0 %v5272
    %6509 = vmatpush.bf16.msra.mxu0 %v5264
    %6510 = vmatpush.bf16.msra.mxu0 %v5256
    %6511 = vmatpush.bf16.msra.mxu0 %v5248
    %6512 = vmatpush.bf16.msra.mxu0 %v5240
    %6513 = vmatpush.bf16.msra.mxu0 %v5232
    %6514 = vmatpush.bf16.msra.mxu0 %v5224
    %6515 = vmatmul.bf16.gmra.mxu0 %v149
    %v6516 = vpop.f32.mrf.mxu0
    %v6517 = vadd.f32 %v6504, %v6516
    %v6518 = vpop.f32.mrf.mxu0
    %6519 = vdwg.mxu0
    %6520 = vmatpush.bf16.msra.mxu0 %v4321
    %6521 = vmatpush.bf16.msra.mxu0 %v4313
    %6522 = vmatpush.bf16.msra.mxu0 %v4305
    %6523 = vmatpush.bf16.msra.mxu0 %v4297
    %6524 = vmatpush.bf16.msra.mxu0 %v4289
    %6525 = vmatpush.bf16.msra.mxu0 %v4281
    %6526 = vmatpush.bf16.msra.mxu0 %v4273
    %6527 = vmatpush.bf16.msra.mxu0 %v4265
    %6528 = vmatmul.bf16.gmra.mxu0 %v134
    %v6529 = vpop.f32.mrf.mxu0
    %v6530 = vadd.f32 %v1177, %v6529
    %v6531 = vpop.f32.mrf.mxu0
    %6532 = vdwg.mxu0
    %6533 = vmatpush.bf16.msra.mxu0 %v4385
    %6534 = vmatpush.bf16.msra.mxu0 %v4377
    %6535 = vmatpush.bf16.msra.mxu0 %v4369
    %6536 = vmatpush.bf16.msra.mxu0 %v4361
    %6537 = vmatpush.bf16.msra.mxu0 %v4353
    %6538 = vmatpush.bf16.msra.mxu0 %v4345
    %6539 = vmatpush.bf16.msra.mxu0 %v4337
    %6540 = vmatpush.bf16.msra.mxu0 %v4329
    %6541 = vmatmul.bf16.gmra.mxu0 %v135
    %v6542 = vpop.f32.mrf.mxu0
    %v6543 = vadd.f32 %v6530, %v6542
    %v6544 = vpop.f32.mrf.mxu0
    %6545 = vdwg.mxu0
    %6546 = vmatpush.bf16.msra.mxu0 %v4449
    %6547 = vmatpush.bf16.msra.mxu0 %v4441
    %6548 = vmatpush.bf16.msra.mxu0 %v4433
    %6549 = vmatpush.bf16.msra.mxu0 %v4425
    %6550 = vmatpush.bf16.msra.mxu0 %v4417
    %6551 = vmatpush.bf16.msra.mxu0 %v4409
    %6552 = vmatpush.bf16.msra.mxu0 %v4401
    %6553 = vmatpush.bf16.msra.mxu0 %v4393
    %6554 = vmatmul.bf16.gmra.mxu0 %v136
    %v6555 = vpop.f32.mrf.mxu0
    %v6556 = vadd.f32 %v6543, %v6555
    %v6557 = vpop.f32.mrf.mxu0
    %6558 = vdwg.mxu0
    %6559 = vmatpush.bf16.msra.mxu0 %v4513
    %6560 = vmatpush.bf16.msra.mxu0 %v4505
    %6561 = vmatpush.bf16.msra.mxu0 %v4497
    %6562 = vmatpush.bf16.msra.mxu0 %v4489
    %6563 = vmatpush.bf16.msra.mxu0 %v4481
    %6564 = vmatpush.bf16.msra.mxu0 %v4473
    %6565 = vmatpush.bf16.msra.mxu0 %v4465
    %6566 = vmatpush.bf16.msra.mxu0 %v4457
    %6567 = vmatmul.bf16.gmra.mxu0 %v137
    %v6568 = vpop.f32.mrf.mxu0
    %v6569 = vadd.f32 %v6556, %v6568
    %v6570 = vpop.f32.mrf.mxu0
    %6571 = vdwg.mxu0
    %6572 = vmatpush.bf16.msra.mxu0 %v4577
    %6573 = vmatpush.bf16.msra.mxu0 %v4569
    %6574 = vmatpush.bf16.msra.mxu0 %v4561
    %6575 = vmatpush.bf16.msra.mxu0 %v4553
    %6576 = vmatpush.bf16.msra.mxu0 %v4545
    %6577 = vmatpush.bf16.msra.mxu0 %v4537
    %6578 = vmatpush.bf16.msra.mxu0 %v4529
    %6579 = vmatpush.bf16.msra.mxu0 %v4521
    %6580 = vmatmul.bf16.gmra.mxu0 %v138
    %v6581 = vpop.f32.mrf.mxu0
    %v6582 = vadd.f32 %v6569, %v6581
    %v6583 = vpop.f32.mrf.mxu0
    %6584 = vdwg.mxu0
    %6585 = vmatpush.bf16.msra.mxu0 %v4641
    %6586 = vmatpush.bf16.msra.mxu0 %v4633
    %6587 = vmatpush.bf16.msra.mxu0 %v4625
    %6588 = vmatpush.bf16.msra.mxu0 %v4617
    %6589 = vmatpush.bf16.msra.mxu0 %v4609
    %6590 = vmatpush.bf16.msra.mxu0 %v4601
    %6591 = vmatpush.bf16.msra.mxu0 %v4593
    %6592 = vmatpush.bf16.msra.mxu0 %v4585
    %6593 = vmatmul.bf16.gmra.mxu0 %v139
    %v6594 = vpop.f32.mrf.mxu0
    %v6595 = vadd.f32 %v6582, %v6594
    %v6596 = vpop.f32.mrf.mxu0
    %6597 = vdwg.mxu0
    %6598 = vmatpush.bf16.msra.mxu0 %v4705
    %6599 = vmatpush.bf16.msra.mxu0 %v4697
    %6600 = vmatpush.bf16.msra.mxu0 %v4689
    %6601 = vmatpush.bf16.msra.mxu0 %v4681
    %6602 = vmatpush.bf16.msra.mxu0 %v4673
    %6603 = vmatpush.bf16.msra.mxu0 %v4665
    %6604 = vmatpush.bf16.msra.mxu0 %v4657
    %6605 = vmatpush.bf16.msra.mxu0 %v4649
    %6606 = vmatmul.bf16.gmra.mxu0 %v140
    %v6607 = vpop.f32.mrf.mxu0
    %v6608 = vadd.f32 %v6595, %v6607
    %v6609 = vpop.f32.mrf.mxu0
    %6610 = vdwg.mxu0
    %6611 = vmatpush.bf16.msra.mxu0 %v4769
    %6612 = vmatpush.bf16.msra.mxu0 %v4761
    %6613 = vmatpush.bf16.msra.mxu0 %v4753
    %6614 = vmatpush.bf16.msra.mxu0 %v4745
    %6615 = vmatpush.bf16.msra.mxu0 %v4737
    %6616 = vmatpush.bf16.msra.mxu0 %v4729
    %6617 = vmatpush.bf16.msra.mxu0 %v4721
    %6618 = vmatpush.bf16.msra.mxu0 %v4713
    %6619 = vmatmul.bf16.gmra.mxu0 %v141
    %v6620 = vpop.f32.mrf.mxu0
    %v6621 = vadd.f32 %v6608, %v6620
    %v6622 = vpop.f32.mrf.mxu0
    %6623 = vdwg.mxu0
    %6624 = vmatpush.bf16.msra.mxu0 %v4833
    %6625 = vmatpush.bf16.msra.mxu0 %v4825
    %6626 = vmatpush.bf16.msra.mxu0 %v4817
    %6627 = vmatpush.bf16.msra.mxu0 %v4809
    %6628 = vmatpush.bf16.msra.mxu0 %v4801
    %6629 = vmatpush.bf16.msra.mxu0 %v4793
    %6630 = vmatpush.bf16.msra.mxu0 %v4785
    %6631 = vmatpush.bf16.msra.mxu0 %v4777
    %6632 = vmatmul.bf16.gmra.mxu0 %v142
    %v6633 = vpop.f32.mrf.mxu0
    %v6634 = vadd.f32 %v6621, %v6633
    %v6635 = vpop.f32.mrf.mxu0
    %6636 = vdwg.mxu0
    %6637 = vmatpush.bf16.msra.mxu0 %v4897
    %6638 = vmatpush.bf16.msra.mxu0 %v4889
    %6639 = vmatpush.bf16.msra.mxu0 %v4881
    %6640 = vmatpush.bf16.msra.mxu0 %v4873
    %6641 = vmatpush.bf16.msra.mxu0 %v4865
    %6642 = vmatpush.bf16.msra.mxu0 %v4857
    %6643 = vmatpush.bf16.msra.mxu0 %v4849
    %6644 = vmatpush.bf16.msra.mxu0 %v4841
    %6645 = vmatmul.bf16.gmra.mxu0 %v143
    %v6646 = vpop.f32.mrf.mxu0
    %v6647 = vadd.f32 %v6634, %v6646
    %v6648 = vpop.f32.mrf.mxu0
    %6649 = vdwg.mxu0
    %6650 = vmatpush.bf16.msra.mxu0 %v4961
    %6651 = vmatpush.bf16.msra.mxu0 %v4953
    %6652 = vmatpush.bf16.msra.mxu0 %v4945
    %6653 = vmatpush.bf16.msra.mxu0 %v4937
    %6654 = vmatpush.bf16.msra.mxu0 %v4929
    %6655 = vmatpush.bf16.msra.mxu0 %v4921
    %6656 = vmatpush.bf16.msra.mxu0 %v4913
    %6657 = vmatpush.bf16.msra.mxu0 %v4905
    %6658 = vmatmul.bf16.gmra.mxu0 %v144
    %v6659 = vpop.f32.mrf.mxu0
    %v6660 = vadd.f32 %v6647, %v6659
    %v6661 = vpop.f32.mrf.mxu0
    %6662 = vdwg.mxu0
    %6663 = vmatpush.bf16.msra.mxu0 %v5025
    %6664 = vmatpush.bf16.msra.mxu0 %v5017
    %6665 = vmatpush.bf16.msra.mxu0 %v5009
    %6666 = vmatpush.bf16.msra.mxu0 %v5001
    %6667 = vmatpush.bf16.msra.mxu0 %v4993
    %6668 = vmatpush.bf16.msra.mxu0 %v4985
    %6669 = vmatpush.bf16.msra.mxu0 %v4977
    %6670 = vmatpush.bf16.msra.mxu0 %v4969
    %6671 = vmatmul.bf16.gmra.mxu0 %v145
    %v6672 = vpop.f32.mrf.mxu0
    %v6673 = vadd.f32 %v6660, %v6672
    %v6674 = vpop.f32.mrf.mxu0
    %6675 = vdwg.mxu0
    %6676 = vmatpush.bf16.msra.mxu0 %v5089
    %6677 = vmatpush.bf16.msra.mxu0 %v5081
    %6678 = vmatpush.bf16.msra.mxu0 %v5073
    %6679 = vmatpush.bf16.msra.mxu0 %v5065
    %6680 = vmatpush.bf16.msra.mxu0 %v5057
    %6681 = vmatpush.bf16.msra.mxu0 %v5049
    %6682 = vmatpush.bf16.msra.mxu0 %v5041
    %6683 = vmatpush.bf16.msra.mxu0 %v5033
    %6684 = vmatmul.bf16.gmra.mxu0 %v146
    %v6685 = vpop.f32.mrf.mxu0
    %v6686 = vadd.f32 %v6673, %v6685
    %v6687 = vpop.f32.mrf.mxu0
    %6688 = vdwg.mxu0
    %6689 = vmatpush.bf16.msra.mxu0 %v5153
    %6690 = vmatpush.bf16.msra.mxu0 %v5145
    %6691 = vmatpush.bf16.msra.mxu0 %v5137
    %6692 = vmatpush.bf16.msra.mxu0 %v5129
    %6693 = vmatpush.bf16.msra.mxu0 %v5121
    %6694 = vmatpush.bf16.msra.mxu0 %v5113
    %6695 = vmatpush.bf16.msra.mxu0 %v5105
    %6696 = vmatpush.bf16.msra.mxu0 %v5097
    %6697 = vmatmul.bf16.gmra.mxu0 %v147
    %v6698 = vpop.f32.mrf.mxu0
    %v6699 = vadd.f32 %v6686, %v6698
    %v6700 = vpop.f32.mrf.mxu0
    %6701 = vdwg.mxu0
    %6702 = vmatpush.bf16.msra.mxu0 %v5217
    %6703 = vmatpush.bf16.msra.mxu0 %v5209
    %6704 = vmatpush.bf16.msra.mxu0 %v5201
    %6705 = vmatpush.bf16.msra.mxu0 %v5193
    %6706 = vmatpush.bf16.msra.mxu0 %v5185
    %6707 = vmatpush.bf16.msra.mxu0 %v5177
    %6708 = vmatpush.bf16.msra.mxu0 %v5169
    %6709 = vmatpush.bf16.msra.mxu0 %v5161
    %6710 = vmatmul.bf16.gmra.mxu0 %v148
    %v6711 = vpop.f32.mrf.mxu0
    %v6712 = vadd.f32 %v6699, %v6711
    %v6713 = vpop.f32.mrf.mxu0
    %6714 = vdwg.mxu0
    %6715 = vmatpush.bf16.msra.mxu0 %v5281
    %6716 = vmatpush.bf16.msra.mxu0 %v5273
    %6717 = vmatpush.bf16.msra.mxu0 %v5265
    %6718 = vmatpush.bf16.msra.mxu0 %v5257
    %6719 = vmatpush.bf16.msra.mxu0 %v5249
    %6720 = vmatpush.bf16.msra.mxu0 %v5241
    %6721 = vmatpush.bf16.msra.mxu0 %v5233
    %6722 = vmatpush.bf16.msra.mxu0 %v5225
    %6723 = vmatmul.bf16.gmra.mxu0 %v149
    %v6724 = vpop.f32.mrf.mxu0
    %v6725 = vadd.f32 %v6712, %v6724
    %v6726 = vpop.f32.mrf.mxu0
    %6727 = vdwg.mxu0
    %6728 = vmatpush.bf16.msra.mxu0 %v4322
    %6729 = vmatpush.bf16.msra.mxu0 %v4314
    %6730 = vmatpush.bf16.msra.mxu0 %v4306
    %6731 = vmatpush.bf16.msra.mxu0 %v4298
    %6732 = vmatpush.bf16.msra.mxu0 %v4290
    %6733 = vmatpush.bf16.msra.mxu0 %v4282
    %6734 = vmatpush.bf16.msra.mxu0 %v4274
    %6735 = vmatpush.bf16.msra.mxu0 %v4266
    %6736 = vmatmul.bf16.gmra.mxu0 %v134
    %v6737 = vpop.f32.mrf.mxu0
    %v6738 = vadd.f32 %v1178, %v6737
    %v6739 = vpop.f32.mrf.mxu0
    %6740 = vdwg.mxu0
    %6741 = vmatpush.bf16.msra.mxu0 %v4386
    %6742 = vmatpush.bf16.msra.mxu0 %v4378
    %6743 = vmatpush.bf16.msra.mxu0 %v4370
    %6744 = vmatpush.bf16.msra.mxu0 %v4362
    %6745 = vmatpush.bf16.msra.mxu0 %v4354
    %6746 = vmatpush.bf16.msra.mxu0 %v4346
    %6747 = vmatpush.bf16.msra.mxu0 %v4338
    %6748 = vmatpush.bf16.msra.mxu0 %v4330
    %6749 = vmatmul.bf16.gmra.mxu0 %v135
    %v6750 = vpop.f32.mrf.mxu0
    %v6751 = vadd.f32 %v6738, %v6750
    %v6752 = vpop.f32.mrf.mxu0
    %6753 = vdwg.mxu0
    %6754 = vmatpush.bf16.msra.mxu0 %v4450
    %6755 = vmatpush.bf16.msra.mxu0 %v4442
    %6756 = vmatpush.bf16.msra.mxu0 %v4434
    %6757 = vmatpush.bf16.msra.mxu0 %v4426
    %6758 = vmatpush.bf16.msra.mxu0 %v4418
    %6759 = vmatpush.bf16.msra.mxu0 %v4410
    %6760 = vmatpush.bf16.msra.mxu0 %v4402
    %6761 = vmatpush.bf16.msra.mxu0 %v4394
    %6762 = vmatmul.bf16.gmra.mxu0 %v136
    %v6763 = vpop.f32.mrf.mxu0
    %v6764 = vadd.f32 %v6751, %v6763
    %v6765 = vpop.f32.mrf.mxu0
    %6766 = vdwg.mxu0
    %6767 = vmatpush.bf16.msra.mxu0 %v4514
    %6768 = vmatpush.bf16.msra.mxu0 %v4506
    %6769 = vmatpush.bf16.msra.mxu0 %v4498
    %6770 = vmatpush.bf16.msra.mxu0 %v4490
    %6771 = vmatpush.bf16.msra.mxu0 %v4482
    %6772 = vmatpush.bf16.msra.mxu0 %v4474
    %6773 = vmatpush.bf16.msra.mxu0 %v4466
    %6774 = vmatpush.bf16.msra.mxu0 %v4458
    %6775 = vmatmul.bf16.gmra.mxu0 %v137
    %v6776 = vpop.f32.mrf.mxu0
    %v6777 = vadd.f32 %v6764, %v6776
    %v6778 = vpop.f32.mrf.mxu0
    %6779 = vdwg.mxu0
    %6780 = vmatpush.bf16.msra.mxu0 %v4578
    %6781 = vmatpush.bf16.msra.mxu0 %v4570
    %6782 = vmatpush.bf16.msra.mxu0 %v4562
    %6783 = vmatpush.bf16.msra.mxu0 %v4554
    %6784 = vmatpush.bf16.msra.mxu0 %v4546
    %6785 = vmatpush.bf16.msra.mxu0 %v4538
    %6786 = vmatpush.bf16.msra.mxu0 %v4530
    %6787 = vmatpush.bf16.msra.mxu0 %v4522
    %6788 = vmatmul.bf16.gmra.mxu0 %v138
    %v6789 = vpop.f32.mrf.mxu0
    %v6790 = vadd.f32 %v6777, %v6789
    %v6791 = vpop.f32.mrf.mxu0
    %6792 = vdwg.mxu0
    %6793 = vmatpush.bf16.msra.mxu0 %v4642
    %6794 = vmatpush.bf16.msra.mxu0 %v4634
    %6795 = vmatpush.bf16.msra.mxu0 %v4626
    %6796 = vmatpush.bf16.msra.mxu0 %v4618
    %6797 = vmatpush.bf16.msra.mxu0 %v4610
    %6798 = vmatpush.bf16.msra.mxu0 %v4602
    %6799 = vmatpush.bf16.msra.mxu0 %v4594
    %6800 = vmatpush.bf16.msra.mxu0 %v4586
    %6801 = vmatmul.bf16.gmra.mxu0 %v139
    %v6802 = vpop.f32.mrf.mxu0
    %v6803 = vadd.f32 %v6790, %v6802
    %v6804 = vpop.f32.mrf.mxu0
    %6805 = vdwg.mxu0
    %6806 = vmatpush.bf16.msra.mxu0 %v4706
    %6807 = vmatpush.bf16.msra.mxu0 %v4698
    %6808 = vmatpush.bf16.msra.mxu0 %v4690
    %6809 = vmatpush.bf16.msra.mxu0 %v4682
    %6810 = vmatpush.bf16.msra.mxu0 %v4674
    %6811 = vmatpush.bf16.msra.mxu0 %v4666
    %6812 = vmatpush.bf16.msra.mxu0 %v4658
    %6813 = vmatpush.bf16.msra.mxu0 %v4650
    %6814 = vmatmul.bf16.gmra.mxu0 %v140
    %v6815 = vpop.f32.mrf.mxu0
    %v6816 = vadd.f32 %v6803, %v6815
    %v6817 = vpop.f32.mrf.mxu0
    %6818 = vdwg.mxu0
    %6819 = vmatpush.bf16.msra.mxu0 %v4770
    %6820 = vmatpush.bf16.msra.mxu0 %v4762
    %6821 = vmatpush.bf16.msra.mxu0 %v4754
    %6822 = vmatpush.bf16.msra.mxu0 %v4746
    %6823 = vmatpush.bf16.msra.mxu0 %v4738
    %6824 = vmatpush.bf16.msra.mxu0 %v4730
    %6825 = vmatpush.bf16.msra.mxu0 %v4722
    %6826 = vmatpush.bf16.msra.mxu0 %v4714
    %6827 = vmatmul.bf16.gmra.mxu0 %v141
    %v6828 = vpop.f32.mrf.mxu0
    %v6829 = vadd.f32 %v6816, %v6828
    %v6830 = vpop.f32.mrf.mxu0
    %6831 = vdwg.mxu0
    %6832 = vmatpush.bf16.msra.mxu0 %v4834
    %6833 = vmatpush.bf16.msra.mxu0 %v4826
    %6834 = vmatpush.bf16.msra.mxu0 %v4818
    %6835 = vmatpush.bf16.msra.mxu0 %v4810
    %6836 = vmatpush.bf16.msra.mxu0 %v4802
    %6837 = vmatpush.bf16.msra.mxu0 %v4794
    %6838 = vmatpush.bf16.msra.mxu0 %v4786
    %6839 = vmatpush.bf16.msra.mxu0 %v4778
    %6840 = vmatmul.bf16.gmra.mxu0 %v142
    %v6841 = vpop.f32.mrf.mxu0
    %v6842 = vadd.f32 %v6829, %v6841
    %v6843 = vpop.f32.mrf.mxu0
    %6844 = vdwg.mxu0
    %6845 = vmatpush.bf16.msra.mxu0 %v4898
    %6846 = vmatpush.bf16.msra.mxu0 %v4890
    %6847 = vmatpush.bf16.msra.mxu0 %v4882
    %6848 = vmatpush.bf16.msra.mxu0 %v4874
    %6849 = vmatpush.bf16.msra.mxu0 %v4866
    %6850 = vmatpush.bf16.msra.mxu0 %v4858
    %6851 = vmatpush.bf16.msra.mxu0 %v4850
    %6852 = vmatpush.bf16.msra.mxu0 %v4842
    %6853 = vmatmul.bf16.gmra.mxu0 %v143
    %v6854 = vpop.f32.mrf.mxu0
    %v6855 = vadd.f32 %v6842, %v6854
    %v6856 = vpop.f32.mrf.mxu0
    %6857 = vdwg.mxu0
    %6858 = vmatpush.bf16.msra.mxu0 %v4962
    %6859 = vmatpush.bf16.msra.mxu0 %v4954
    %6860 = vmatpush.bf16.msra.mxu0 %v4946
    %6861 = vmatpush.bf16.msra.mxu0 %v4938
    %6862 = vmatpush.bf16.msra.mxu0 %v4930
    %6863 = vmatpush.bf16.msra.mxu0 %v4922
    %6864 = vmatpush.bf16.msra.mxu0 %v4914
    %6865 = vmatpush.bf16.msra.mxu0 %v4906
    %6866 = vmatmul.bf16.gmra.mxu0 %v144
    %v6867 = vpop.f32.mrf.mxu0
    %v6868 = vadd.f32 %v6855, %v6867
    %v6869 = vpop.f32.mrf.mxu0
    %6870 = vdwg.mxu0
    %6871 = vmatpush.bf16.msra.mxu0 %v5026
    %6872 = vmatpush.bf16.msra.mxu0 %v5018
    %6873 = vmatpush.bf16.msra.mxu0 %v5010
    %6874 = vmatpush.bf16.msra.mxu0 %v5002
    %6875 = vmatpush.bf16.msra.mxu0 %v4994
    %6876 = vmatpush.bf16.msra.mxu0 %v4986
    %6877 = vmatpush.bf16.msra.mxu0 %v4978
    %6878 = vmatpush.bf16.msra.mxu0 %v4970
    %6879 = vmatmul.bf16.gmra.mxu0 %v145
    %v6880 = vpop.f32.mrf.mxu0
    %v6881 = vadd.f32 %v6868, %v6880
    %v6882 = vpop.f32.mrf.mxu0
    %6883 = vdwg.mxu0
    %6884 = vmatpush.bf16.msra.mxu0 %v5090
    %6885 = vmatpush.bf16.msra.mxu0 %v5082
    %6886 = vmatpush.bf16.msra.mxu0 %v5074
    %6887 = vmatpush.bf16.msra.mxu0 %v5066
    %6888 = vmatpush.bf16.msra.mxu0 %v5058
    %6889 = vmatpush.bf16.msra.mxu0 %v5050
    %6890 = vmatpush.bf16.msra.mxu0 %v5042
    %6891 = vmatpush.bf16.msra.mxu0 %v5034
    %6892 = vmatmul.bf16.gmra.mxu0 %v146
    %v6893 = vpop.f32.mrf.mxu0
    %v6894 = vadd.f32 %v6881, %v6893
    %v6895 = vpop.f32.mrf.mxu0
    %6896 = vdwg.mxu0
    %6897 = vmatpush.bf16.msra.mxu0 %v5154
    %6898 = vmatpush.bf16.msra.mxu0 %v5146
    %6899 = vmatpush.bf16.msra.mxu0 %v5138
    %6900 = vmatpush.bf16.msra.mxu0 %v5130
    %6901 = vmatpush.bf16.msra.mxu0 %v5122
    %6902 = vmatpush.bf16.msra.mxu0 %v5114
    %6903 = vmatpush.bf16.msra.mxu0 %v5106
    %6904 = vmatpush.bf16.msra.mxu0 %v5098
    %6905 = vmatmul.bf16.gmra.mxu0 %v147
    %v6906 = vpop.f32.mrf.mxu0
    %v6907 = vadd.f32 %v6894, %v6906
    %v6908 = vpop.f32.mrf.mxu0
    %6909 = vdwg.mxu0
    %6910 = vmatpush.bf16.msra.mxu0 %v5218
    %6911 = vmatpush.bf16.msra.mxu0 %v5210
    %6912 = vmatpush.bf16.msra.mxu0 %v5202
    %6913 = vmatpush.bf16.msra.mxu0 %v5194
    %6914 = vmatpush.bf16.msra.mxu0 %v5186
    %6915 = vmatpush.bf16.msra.mxu0 %v5178
    %6916 = vmatpush.bf16.msra.mxu0 %v5170
    %6917 = vmatpush.bf16.msra.mxu0 %v5162
    %6918 = vmatmul.bf16.gmra.mxu0 %v148
    %v6919 = vpop.f32.mrf.mxu0
    %v6920 = vadd.f32 %v6907, %v6919
    %v6921 = vpop.f32.mrf.mxu0
    %6922 = vdwg.mxu0
    %6923 = vmatpush.bf16.msra.mxu0 %v5282
    %6924 = vmatpush.bf16.msra.mxu0 %v5274
    %6925 = vmatpush.bf16.msra.mxu0 %v5266
    %6926 = vmatpush.bf16.msra.mxu0 %v5258
    %6927 = vmatpush.bf16.msra.mxu0 %v5250
    %6928 = vmatpush.bf16.msra.mxu0 %v5242
    %6929 = vmatpush.bf16.msra.mxu0 %v5234
    %6930 = vmatpush.bf16.msra.mxu0 %v5226
    %6931 = vmatmul.bf16.gmra.mxu0 %v149
    %v6932 = vpop.f32.mrf.mxu0
    %v6933 = vadd.f32 %v6920, %v6932
    %v6934 = vpop.f32.mrf.mxu0
    %6935 = vdwg.mxu0
    %6936 = vmatpush.bf16.msra.mxu0 %v4323
    %6937 = vmatpush.bf16.msra.mxu0 %v4315
    %6938 = vmatpush.bf16.msra.mxu0 %v4307
    %6939 = vmatpush.bf16.msra.mxu0 %v4299
    %6940 = vmatpush.bf16.msra.mxu0 %v4291
    %6941 = vmatpush.bf16.msra.mxu0 %v4283
    %6942 = vmatpush.bf16.msra.mxu0 %v4275
    %6943 = vmatpush.bf16.msra.mxu0 %v4267
    %6944 = vmatmul.bf16.gmra.mxu0 %v134
    %v6945 = vpop.f32.mrf.mxu0
    %v6946 = vadd.f32 %v1179, %v6945
    %v6947 = vpop.f32.mrf.mxu0
    %6948 = vdwg.mxu0
    %6949 = vmatpush.bf16.msra.mxu0 %v4387
    %6950 = vmatpush.bf16.msra.mxu0 %v4379
    %6951 = vmatpush.bf16.msra.mxu0 %v4371
    %6952 = vmatpush.bf16.msra.mxu0 %v4363
    %6953 = vmatpush.bf16.msra.mxu0 %v4355
    %6954 = vmatpush.bf16.msra.mxu0 %v4347
    %6955 = vmatpush.bf16.msra.mxu0 %v4339
    %6956 = vmatpush.bf16.msra.mxu0 %v4331
    %6957 = vmatmul.bf16.gmra.mxu0 %v135
    %v6958 = vpop.f32.mrf.mxu0
    %v6959 = vadd.f32 %v6946, %v6958
    %v6960 = vpop.f32.mrf.mxu0
    %6961 = vdwg.mxu0
    %6962 = vmatpush.bf16.msra.mxu0 %v4451
    %6963 = vmatpush.bf16.msra.mxu0 %v4443
    %6964 = vmatpush.bf16.msra.mxu0 %v4435
    %6965 = vmatpush.bf16.msra.mxu0 %v4427
    %6966 = vmatpush.bf16.msra.mxu0 %v4419
    %6967 = vmatpush.bf16.msra.mxu0 %v4411
    %6968 = vmatpush.bf16.msra.mxu0 %v4403
    %6969 = vmatpush.bf16.msra.mxu0 %v4395
    %6970 = vmatmul.bf16.gmra.mxu0 %v136
    %v6971 = vpop.f32.mrf.mxu0
    %v6972 = vadd.f32 %v6959, %v6971
    %v6973 = vpop.f32.mrf.mxu0
    %6974 = vdwg.mxu0
    %6975 = vmatpush.bf16.msra.mxu0 %v4515
    %6976 = vmatpush.bf16.msra.mxu0 %v4507
    %6977 = vmatpush.bf16.msra.mxu0 %v4499
    %6978 = vmatpush.bf16.msra.mxu0 %v4491
    %6979 = vmatpush.bf16.msra.mxu0 %v4483
    %6980 = vmatpush.bf16.msra.mxu0 %v4475
    %6981 = vmatpush.bf16.msra.mxu0 %v4467
    %6982 = vmatpush.bf16.msra.mxu0 %v4459
    %6983 = vmatmul.bf16.gmra.mxu0 %v137
    %v6984 = vpop.f32.mrf.mxu0
    %v6985 = vadd.f32 %v6972, %v6984
    %v6986 = vpop.f32.mrf.mxu0
    %6987 = vdwg.mxu0
    %6988 = vmatpush.bf16.msra.mxu0 %v4579
    %6989 = vmatpush.bf16.msra.mxu0 %v4571
    %6990 = vmatpush.bf16.msra.mxu0 %v4563
    %6991 = vmatpush.bf16.msra.mxu0 %v4555
    %6992 = vmatpush.bf16.msra.mxu0 %v4547
    %6993 = vmatpush.bf16.msra.mxu0 %v4539
    %6994 = vmatpush.bf16.msra.mxu0 %v4531
    %6995 = vmatpush.bf16.msra.mxu0 %v4523
    %6996 = vmatmul.bf16.gmra.mxu0 %v138
    %v6997 = vpop.f32.mrf.mxu0
    %v6998 = vadd.f32 %v6985, %v6997
    %v6999 = vpop.f32.mrf.mxu0
    %7000 = vdwg.mxu0
    %7001 = vmatpush.bf16.msra.mxu0 %v4643
    %7002 = vmatpush.bf16.msra.mxu0 %v4635
    %7003 = vmatpush.bf16.msra.mxu0 %v4627
    %7004 = vmatpush.bf16.msra.mxu0 %v4619
    %7005 = vmatpush.bf16.msra.mxu0 %v4611
    %7006 = vmatpush.bf16.msra.mxu0 %v4603
    %7007 = vmatpush.bf16.msra.mxu0 %v4595
    %7008 = vmatpush.bf16.msra.mxu0 %v4587
    %7009 = vmatmul.bf16.gmra.mxu0 %v139
    %v7010 = vpop.f32.mrf.mxu0
    %v7011 = vadd.f32 %v6998, %v7010
    %v7012 = vpop.f32.mrf.mxu0
    %7013 = vdwg.mxu0
    %7014 = vmatpush.bf16.msra.mxu0 %v4707
    %7015 = vmatpush.bf16.msra.mxu0 %v4699
    %7016 = vmatpush.bf16.msra.mxu0 %v4691
    %7017 = vmatpush.bf16.msra.mxu0 %v4683
    %7018 = vmatpush.bf16.msra.mxu0 %v4675
    %7019 = vmatpush.bf16.msra.mxu0 %v4667
    %7020 = vmatpush.bf16.msra.mxu0 %v4659
    %7021 = vmatpush.bf16.msra.mxu0 %v4651
    %7022 = vmatmul.bf16.gmra.mxu0 %v140
    %v7023 = vpop.f32.mrf.mxu0
    %v7024 = vadd.f32 %v7011, %v7023
    %v7025 = vpop.f32.mrf.mxu0
    %7026 = vdwg.mxu0
    %7027 = vmatpush.bf16.msra.mxu0 %v4771
    %7028 = vmatpush.bf16.msra.mxu0 %v4763
    %7029 = vmatpush.bf16.msra.mxu0 %v4755
    %7030 = vmatpush.bf16.msra.mxu0 %v4747
    %7031 = vmatpush.bf16.msra.mxu0 %v4739
    %7032 = vmatpush.bf16.msra.mxu0 %v4731
    %7033 = vmatpush.bf16.msra.mxu0 %v4723
    %7034 = vmatpush.bf16.msra.mxu0 %v4715
    %7035 = vmatmul.bf16.gmra.mxu0 %v141
    %v7036 = vpop.f32.mrf.mxu0
    %v7037 = vadd.f32 %v7024, %v7036
    %v7038 = vpop.f32.mrf.mxu0
    %7039 = vdwg.mxu0
    %7040 = vmatpush.bf16.msra.mxu0 %v4835
    %7041 = vmatpush.bf16.msra.mxu0 %v4827
    %7042 = vmatpush.bf16.msra.mxu0 %v4819
    %7043 = vmatpush.bf16.msra.mxu0 %v4811
    %7044 = vmatpush.bf16.msra.mxu0 %v4803
    %7045 = vmatpush.bf16.msra.mxu0 %v4795
    %7046 = vmatpush.bf16.msra.mxu0 %v4787
    %7047 = vmatpush.bf16.msra.mxu0 %v4779
    %7048 = vmatmul.bf16.gmra.mxu0 %v142
    %v7049 = vpop.f32.mrf.mxu0
    %v7050 = vadd.f32 %v7037, %v7049
    %v7051 = vpop.f32.mrf.mxu0
    %7052 = vdwg.mxu0
    %7053 = vmatpush.bf16.msra.mxu0 %v4899
    %7054 = vmatpush.bf16.msra.mxu0 %v4891
    %7055 = vmatpush.bf16.msra.mxu0 %v4883
    %7056 = vmatpush.bf16.msra.mxu0 %v4875
    %7057 = vmatpush.bf16.msra.mxu0 %v4867
    %7058 = vmatpush.bf16.msra.mxu0 %v4859
    %7059 = vmatpush.bf16.msra.mxu0 %v4851
    %7060 = vmatpush.bf16.msra.mxu0 %v4843
    %7061 = vmatmul.bf16.gmra.mxu0 %v143
    %v7062 = vpop.f32.mrf.mxu0
    %v7063 = vadd.f32 %v7050, %v7062
    %v7064 = vpop.f32.mrf.mxu0
    %7065 = vdwg.mxu0
    %7066 = vmatpush.bf16.msra.mxu0 %v4963
    %7067 = vmatpush.bf16.msra.mxu0 %v4955
    %7068 = vmatpush.bf16.msra.mxu0 %v4947
    %7069 = vmatpush.bf16.msra.mxu0 %v4939
    %7070 = vmatpush.bf16.msra.mxu0 %v4931
    %7071 = vmatpush.bf16.msra.mxu0 %v4923
    %7072 = vmatpush.bf16.msra.mxu0 %v4915
    %7073 = vmatpush.bf16.msra.mxu0 %v4907
    %7074 = vmatmul.bf16.gmra.mxu0 %v144
    %v7075 = vpop.f32.mrf.mxu0
    %v7076 = vadd.f32 %v7063, %v7075
    %v7077 = vpop.f32.mrf.mxu0
    %7078 = vdwg.mxu0
    %7079 = vmatpush.bf16.msra.mxu0 %v5027
    %7080 = vmatpush.bf16.msra.mxu0 %v5019
    %7081 = vmatpush.bf16.msra.mxu0 %v5011
    %7082 = vmatpush.bf16.msra.mxu0 %v5003
    %7083 = vmatpush.bf16.msra.mxu0 %v4995
    %7084 = vmatpush.bf16.msra.mxu0 %v4987
    %7085 = vmatpush.bf16.msra.mxu0 %v4979
    %7086 = vmatpush.bf16.msra.mxu0 %v4971
    %7087 = vmatmul.bf16.gmra.mxu0 %v145
    %v7088 = vpop.f32.mrf.mxu0
    %v7089 = vadd.f32 %v7076, %v7088
    %v7090 = vpop.f32.mrf.mxu0
    %7091 = vdwg.mxu0
    %7092 = vmatpush.bf16.msra.mxu0 %v5091
    %7093 = vmatpush.bf16.msra.mxu0 %v5083
    %7094 = vmatpush.bf16.msra.mxu0 %v5075
    %7095 = vmatpush.bf16.msra.mxu0 %v5067
    %7096 = vmatpush.bf16.msra.mxu0 %v5059
    %7097 = vmatpush.bf16.msra.mxu0 %v5051
    %7098 = vmatpush.bf16.msra.mxu0 %v5043
    %7099 = vmatpush.bf16.msra.mxu0 %v5035
    %7100 = vmatmul.bf16.gmra.mxu0 %v146
    %v7101 = vpop.f32.mrf.mxu0
    %v7102 = vadd.f32 %v7089, %v7101
    %v7103 = vpop.f32.mrf.mxu0
    %7104 = vdwg.mxu0
    %7105 = vmatpush.bf16.msra.mxu0 %v5155
    %7106 = vmatpush.bf16.msra.mxu0 %v5147
    %7107 = vmatpush.bf16.msra.mxu0 %v5139
    %7108 = vmatpush.bf16.msra.mxu0 %v5131
    %7109 = vmatpush.bf16.msra.mxu0 %v5123
    %7110 = vmatpush.bf16.msra.mxu0 %v5115
    %7111 = vmatpush.bf16.msra.mxu0 %v5107
    %7112 = vmatpush.bf16.msra.mxu0 %v5099
    %7113 = vmatmul.bf16.gmra.mxu0 %v147
    %v7114 = vpop.f32.mrf.mxu0
    %v7115 = vadd.f32 %v7102, %v7114
    %v7116 = vpop.f32.mrf.mxu0
    %7117 = vdwg.mxu0
    %7118 = vmatpush.bf16.msra.mxu0 %v5219
    %7119 = vmatpush.bf16.msra.mxu0 %v5211
    %7120 = vmatpush.bf16.msra.mxu0 %v5203
    %7121 = vmatpush.bf16.msra.mxu0 %v5195
    %7122 = vmatpush.bf16.msra.mxu0 %v5187
    %7123 = vmatpush.bf16.msra.mxu0 %v5179
    %7124 = vmatpush.bf16.msra.mxu0 %v5171
    %7125 = vmatpush.bf16.msra.mxu0 %v5163
    %7126 = vmatmul.bf16.gmra.mxu0 %v148
    %v7127 = vpop.f32.mrf.mxu0
    %v7128 = vadd.f32 %v7115, %v7127
    %v7129 = vpop.f32.mrf.mxu0
    %7130 = vdwg.mxu0
    %7131 = vmatpush.bf16.msra.mxu0 %v5283
    %7132 = vmatpush.bf16.msra.mxu0 %v5275
    %7133 = vmatpush.bf16.msra.mxu0 %v5267
    %7134 = vmatpush.bf16.msra.mxu0 %v5259
    %7135 = vmatpush.bf16.msra.mxu0 %v5251
    %7136 = vmatpush.bf16.msra.mxu0 %v5243
    %7137 = vmatpush.bf16.msra.mxu0 %v5235
    %7138 = vmatpush.bf16.msra.mxu0 %v5227
    %7139 = vmatmul.bf16.gmra.mxu0 %v149
    %v7140 = vpop.f32.mrf.mxu0
    %v7141 = vadd.f32 %v7128, %v7140
    %v7142 = vpop.f32.mrf.mxu0
    %7143 = vdwg.mxu0
    %7144 = vmatpush.bf16.msra.mxu0 %v4324
    %7145 = vmatpush.bf16.msra.mxu0 %v4316
    %7146 = vmatpush.bf16.msra.mxu0 %v4308
    %7147 = vmatpush.bf16.msra.mxu0 %v4300
    %7148 = vmatpush.bf16.msra.mxu0 %v4292
    %7149 = vmatpush.bf16.msra.mxu0 %v4284
    %7150 = vmatpush.bf16.msra.mxu0 %v4276
    %7151 = vmatpush.bf16.msra.mxu0 %v4268
    %7152 = vmatmul.bf16.gmra.mxu0 %v134
    %v7153 = vpop.f32.mrf.mxu0
    %v7154 = vadd.f32 %v1180, %v7153
    %v7155 = vpop.f32.mrf.mxu0
    %7156 = vdwg.mxu0
    %7157 = vmatpush.bf16.msra.mxu0 %v4388
    %7158 = vmatpush.bf16.msra.mxu0 %v4380
    %7159 = vmatpush.bf16.msra.mxu0 %v4372
    %7160 = vmatpush.bf16.msra.mxu0 %v4364
    %7161 = vmatpush.bf16.msra.mxu0 %v4356
    %7162 = vmatpush.bf16.msra.mxu0 %v4348
    %7163 = vmatpush.bf16.msra.mxu0 %v4340
    %7164 = vmatpush.bf16.msra.mxu0 %v4332
    %7165 = vmatmul.bf16.gmra.mxu0 %v135
    %v7166 = vpop.f32.mrf.mxu0
    %v7167 = vadd.f32 %v7154, %v7166
    %v7168 = vpop.f32.mrf.mxu0
    %7169 = vdwg.mxu0
    %7170 = vmatpush.bf16.msra.mxu0 %v4452
    %7171 = vmatpush.bf16.msra.mxu0 %v4444
    %7172 = vmatpush.bf16.msra.mxu0 %v4436
    %7173 = vmatpush.bf16.msra.mxu0 %v4428
    %7174 = vmatpush.bf16.msra.mxu0 %v4420
    %7175 = vmatpush.bf16.msra.mxu0 %v4412
    %7176 = vmatpush.bf16.msra.mxu0 %v4404
    %7177 = vmatpush.bf16.msra.mxu0 %v4396
    %7178 = vmatmul.bf16.gmra.mxu0 %v136
    %v7179 = vpop.f32.mrf.mxu0
    %v7180 = vadd.f32 %v7167, %v7179
    %v7181 = vpop.f32.mrf.mxu0
    %7182 = vdwg.mxu0
    %7183 = vmatpush.bf16.msra.mxu0 %v4516
    %7184 = vmatpush.bf16.msra.mxu0 %v4508
    %7185 = vmatpush.bf16.msra.mxu0 %v4500
    %7186 = vmatpush.bf16.msra.mxu0 %v4492
    %7187 = vmatpush.bf16.msra.mxu0 %v4484
    %7188 = vmatpush.bf16.msra.mxu0 %v4476
    %7189 = vmatpush.bf16.msra.mxu0 %v4468
    %7190 = vmatpush.bf16.msra.mxu0 %v4460
    %7191 = vmatmul.bf16.gmra.mxu0 %v137
    %v7192 = vpop.f32.mrf.mxu0
    %v7193 = vadd.f32 %v7180, %v7192
    %v7194 = vpop.f32.mrf.mxu0
    %7195 = vdwg.mxu0
    %7196 = vmatpush.bf16.msra.mxu0 %v4580
    %7197 = vmatpush.bf16.msra.mxu0 %v4572
    %7198 = vmatpush.bf16.msra.mxu0 %v4564
    %7199 = vmatpush.bf16.msra.mxu0 %v4556
    %7200 = vmatpush.bf16.msra.mxu0 %v4548
    %7201 = vmatpush.bf16.msra.mxu0 %v4540
    %7202 = vmatpush.bf16.msra.mxu0 %v4532
    %7203 = vmatpush.bf16.msra.mxu0 %v4524
    %7204 = vmatmul.bf16.gmra.mxu0 %v138
    %v7205 = vpop.f32.mrf.mxu0
    %v7206 = vadd.f32 %v7193, %v7205
    %v7207 = vpop.f32.mrf.mxu0
    %7208 = vdwg.mxu0
    %7209 = vmatpush.bf16.msra.mxu0 %v4644
    %7210 = vmatpush.bf16.msra.mxu0 %v4636
    %7211 = vmatpush.bf16.msra.mxu0 %v4628
    %7212 = vmatpush.bf16.msra.mxu0 %v4620
    %7213 = vmatpush.bf16.msra.mxu0 %v4612
    %7214 = vmatpush.bf16.msra.mxu0 %v4604
    %7215 = vmatpush.bf16.msra.mxu0 %v4596
    %7216 = vmatpush.bf16.msra.mxu0 %v4588
    %7217 = vmatmul.bf16.gmra.mxu0 %v139
    %v7218 = vpop.f32.mrf.mxu0
    %v7219 = vadd.f32 %v7206, %v7218
    %v7220 = vpop.f32.mrf.mxu0
    %7221 = vdwg.mxu0
    %7222 = vmatpush.bf16.msra.mxu0 %v4708
    %7223 = vmatpush.bf16.msra.mxu0 %v4700
    %7224 = vmatpush.bf16.msra.mxu0 %v4692
    %7225 = vmatpush.bf16.msra.mxu0 %v4684
    %7226 = vmatpush.bf16.msra.mxu0 %v4676
    %7227 = vmatpush.bf16.msra.mxu0 %v4668
    %7228 = vmatpush.bf16.msra.mxu0 %v4660
    %7229 = vmatpush.bf16.msra.mxu0 %v4652
    %7230 = vmatmul.bf16.gmra.mxu0 %v140
    %v7231 = vpop.f32.mrf.mxu0
    %v7232 = vadd.f32 %v7219, %v7231
    %v7233 = vpop.f32.mrf.mxu0
    %7234 = vdwg.mxu0
    %7235 = vmatpush.bf16.msra.mxu0 %v4772
    %7236 = vmatpush.bf16.msra.mxu0 %v4764
    %7237 = vmatpush.bf16.msra.mxu0 %v4756
    %7238 = vmatpush.bf16.msra.mxu0 %v4748
    %7239 = vmatpush.bf16.msra.mxu0 %v4740
    %7240 = vmatpush.bf16.msra.mxu0 %v4732
    %7241 = vmatpush.bf16.msra.mxu0 %v4724
    %7242 = vmatpush.bf16.msra.mxu0 %v4716
    %7243 = vmatmul.bf16.gmra.mxu0 %v141
    %v7244 = vpop.f32.mrf.mxu0
    %v7245 = vadd.f32 %v7232, %v7244
    %v7246 = vpop.f32.mrf.mxu0
    %7247 = vdwg.mxu0
    %7248 = vmatpush.bf16.msra.mxu0 %v4836
    %7249 = vmatpush.bf16.msra.mxu0 %v4828
    %7250 = vmatpush.bf16.msra.mxu0 %v4820
    %7251 = vmatpush.bf16.msra.mxu0 %v4812
    %7252 = vmatpush.bf16.msra.mxu0 %v4804
    %7253 = vmatpush.bf16.msra.mxu0 %v4796
    %7254 = vmatpush.bf16.msra.mxu0 %v4788
    %7255 = vmatpush.bf16.msra.mxu0 %v4780
    %7256 = vmatmul.bf16.gmra.mxu0 %v142
    %v7257 = vpop.f32.mrf.mxu0
    %v7258 = vadd.f32 %v7245, %v7257
    %v7259 = vpop.f32.mrf.mxu0
    %7260 = vdwg.mxu0
    %7261 = vmatpush.bf16.msra.mxu0 %v4900
    %7262 = vmatpush.bf16.msra.mxu0 %v4892
    %7263 = vmatpush.bf16.msra.mxu0 %v4884
    %7264 = vmatpush.bf16.msra.mxu0 %v4876
    %7265 = vmatpush.bf16.msra.mxu0 %v4868
    %7266 = vmatpush.bf16.msra.mxu0 %v4860
    %7267 = vmatpush.bf16.msra.mxu0 %v4852
    %7268 = vmatpush.bf16.msra.mxu0 %v4844
    %7269 = vmatmul.bf16.gmra.mxu0 %v143
    %v7270 = vpop.f32.mrf.mxu0
    %v7271 = vadd.f32 %v7258, %v7270
    %v7272 = vpop.f32.mrf.mxu0
    %7273 = vdwg.mxu0
    %7274 = vmatpush.bf16.msra.mxu0 %v4964
    %7275 = vmatpush.bf16.msra.mxu0 %v4956
    %7276 = vmatpush.bf16.msra.mxu0 %v4948
    %7277 = vmatpush.bf16.msra.mxu0 %v4940
    %7278 = vmatpush.bf16.msra.mxu0 %v4932
    %7279 = vmatpush.bf16.msra.mxu0 %v4924
    %7280 = vmatpush.bf16.msra.mxu0 %v4916
    %7281 = vmatpush.bf16.msra.mxu0 %v4908
    %7282 = vmatmul.bf16.gmra.mxu0 %v144
    %v7283 = vpop.f32.mrf.mxu0
    %v7284 = vadd.f32 %v7271, %v7283
    %v7285 = vpop.f32.mrf.mxu0
    %7286 = vdwg.mxu0
    %7287 = vmatpush.bf16.msra.mxu0 %v5028
    %7288 = vmatpush.bf16.msra.mxu0 %v5020
    %7289 = vmatpush.bf16.msra.mxu0 %v5012
    %7290 = vmatpush.bf16.msra.mxu0 %v5004
    %7291 = vmatpush.bf16.msra.mxu0 %v4996
    %7292 = vmatpush.bf16.msra.mxu0 %v4988
    %7293 = vmatpush.bf16.msra.mxu0 %v4980
    %7294 = vmatpush.bf16.msra.mxu0 %v4972
    %7295 = vmatmul.bf16.gmra.mxu0 %v145
    %v7296 = vpop.f32.mrf.mxu0
    %v7297 = vadd.f32 %v7284, %v7296
    %v7298 = vpop.f32.mrf.mxu0
    %7299 = vdwg.mxu0
    %7300 = vmatpush.bf16.msra.mxu0 %v5092
    %7301 = vmatpush.bf16.msra.mxu0 %v5084
    %7302 = vmatpush.bf16.msra.mxu0 %v5076
    %7303 = vmatpush.bf16.msra.mxu0 %v5068
    %7304 = vmatpush.bf16.msra.mxu0 %v5060
    %7305 = vmatpush.bf16.msra.mxu0 %v5052
    %7306 = vmatpush.bf16.msra.mxu0 %v5044
    %7307 = vmatpush.bf16.msra.mxu0 %v5036
    %7308 = vmatmul.bf16.gmra.mxu0 %v146
    %v7309 = vpop.f32.mrf.mxu0
    %v7310 = vadd.f32 %v7297, %v7309
    %v7311 = vpop.f32.mrf.mxu0
    %7312 = vdwg.mxu0
    %7313 = vmatpush.bf16.msra.mxu0 %v5156
    %7314 = vmatpush.bf16.msra.mxu0 %v5148
    %7315 = vmatpush.bf16.msra.mxu0 %v5140
    %7316 = vmatpush.bf16.msra.mxu0 %v5132
    %7317 = vmatpush.bf16.msra.mxu0 %v5124
    %7318 = vmatpush.bf16.msra.mxu0 %v5116
    %7319 = vmatpush.bf16.msra.mxu0 %v5108
    %7320 = vmatpush.bf16.msra.mxu0 %v5100
    %7321 = vmatmul.bf16.gmra.mxu0 %v147
    %v7322 = vpop.f32.mrf.mxu0
    %v7323 = vadd.f32 %v7310, %v7322
    %v7324 = vpop.f32.mrf.mxu0
    %7325 = vdwg.mxu0
    %7326 = vmatpush.bf16.msra.mxu0 %v5220
    %7327 = vmatpush.bf16.msra.mxu0 %v5212
    %7328 = vmatpush.bf16.msra.mxu0 %v5204
    %7329 = vmatpush.bf16.msra.mxu0 %v5196
    %7330 = vmatpush.bf16.msra.mxu0 %v5188
    %7331 = vmatpush.bf16.msra.mxu0 %v5180
    %7332 = vmatpush.bf16.msra.mxu0 %v5172
    %7333 = vmatpush.bf16.msra.mxu0 %v5164
    %7334 = vmatmul.bf16.gmra.mxu0 %v148
    %v7335 = vpop.f32.mrf.mxu0
    %v7336 = vadd.f32 %v7323, %v7335
    %v7337 = vpop.f32.mrf.mxu0
    %7338 = vdwg.mxu0
    %7339 = vmatpush.bf16.msra.mxu0 %v5284
    %7340 = vmatpush.bf16.msra.mxu0 %v5276
    %7341 = vmatpush.bf16.msra.mxu0 %v5268
    %7342 = vmatpush.bf16.msra.mxu0 %v5260
    %7343 = vmatpush.bf16.msra.mxu0 %v5252
    %7344 = vmatpush.bf16.msra.mxu0 %v5244
    %7345 = vmatpush.bf16.msra.mxu0 %v5236
    %7346 = vmatpush.bf16.msra.mxu0 %v5228
    %7347 = vmatmul.bf16.gmra.mxu0 %v149
    %v7348 = vpop.f32.mrf.mxu0
    %v7349 = vadd.f32 %v7336, %v7348
    %v7350 = vpop.f32.mrf.mxu0
    %7351 = vdwg.mxu0
    %7352 = vmatpush.bf16.msra.mxu0 %v4325
    %7353 = vmatpush.bf16.msra.mxu0 %v4317
    %7354 = vmatpush.bf16.msra.mxu0 %v4309
    %7355 = vmatpush.bf16.msra.mxu0 %v4301
    %7356 = vmatpush.bf16.msra.mxu0 %v4293
    %7357 = vmatpush.bf16.msra.mxu0 %v4285
    %7358 = vmatpush.bf16.msra.mxu0 %v4277
    %7359 = vmatpush.bf16.msra.mxu0 %v4269
    %7360 = vmatmul.bf16.gmra.mxu0 %v134
    %v7361 = vpop.f32.mrf.mxu0
    %v7362 = vadd.f32 %v1181, %v7361
    %v7363 = vpop.f32.mrf.mxu0
    %7364 = vdwg.mxu0
    %7365 = vmatpush.bf16.msra.mxu0 %v4389
    %7366 = vmatpush.bf16.msra.mxu0 %v4381
    %7367 = vmatpush.bf16.msra.mxu0 %v4373
    %7368 = vmatpush.bf16.msra.mxu0 %v4365
    %7369 = vmatpush.bf16.msra.mxu0 %v4357
    %7370 = vmatpush.bf16.msra.mxu0 %v4349
    %7371 = vmatpush.bf16.msra.mxu0 %v4341
    %7372 = vmatpush.bf16.msra.mxu0 %v4333
    %7373 = vmatmul.bf16.gmra.mxu0 %v135
    %v7374 = vpop.f32.mrf.mxu0
    %v7375 = vadd.f32 %v7362, %v7374
    %v7376 = vpop.f32.mrf.mxu0
    %7377 = vdwg.mxu0
    %7378 = vmatpush.bf16.msra.mxu0 %v4453
    %7379 = vmatpush.bf16.msra.mxu0 %v4445
    %7380 = vmatpush.bf16.msra.mxu0 %v4437
    %7381 = vmatpush.bf16.msra.mxu0 %v4429
    %7382 = vmatpush.bf16.msra.mxu0 %v4421
    %7383 = vmatpush.bf16.msra.mxu0 %v4413
    %7384 = vmatpush.bf16.msra.mxu0 %v4405
    %7385 = vmatpush.bf16.msra.mxu0 %v4397
    %7386 = vmatmul.bf16.gmra.mxu0 %v136
    %v7387 = vpop.f32.mrf.mxu0
    %v7388 = vadd.f32 %v7375, %v7387
    %v7389 = vpop.f32.mrf.mxu0
    %7390 = vdwg.mxu0
    %7391 = vmatpush.bf16.msra.mxu0 %v4517
    %7392 = vmatpush.bf16.msra.mxu0 %v4509
    %7393 = vmatpush.bf16.msra.mxu0 %v4501
    %7394 = vmatpush.bf16.msra.mxu0 %v4493
    %7395 = vmatpush.bf16.msra.mxu0 %v4485
    %7396 = vmatpush.bf16.msra.mxu0 %v4477
    %7397 = vmatpush.bf16.msra.mxu0 %v4469
    %7398 = vmatpush.bf16.msra.mxu0 %v4461
    %7399 = vmatmul.bf16.gmra.mxu0 %v137
    %v7400 = vpop.f32.mrf.mxu0
    %v7401 = vadd.f32 %v7388, %v7400
    %v7402 = vpop.f32.mrf.mxu0
    %7403 = vdwg.mxu0
    %7404 = vmatpush.bf16.msra.mxu0 %v4581
    %7405 = vmatpush.bf16.msra.mxu0 %v4573
    %7406 = vmatpush.bf16.msra.mxu0 %v4565
    %7407 = vmatpush.bf16.msra.mxu0 %v4557
    %7408 = vmatpush.bf16.msra.mxu0 %v4549
    %7409 = vmatpush.bf16.msra.mxu0 %v4541
    %7410 = vmatpush.bf16.msra.mxu0 %v4533
    %7411 = vmatpush.bf16.msra.mxu0 %v4525
    %7412 = vmatmul.bf16.gmra.mxu0 %v138
    %v7413 = vpop.f32.mrf.mxu0
    %v7414 = vadd.f32 %v7401, %v7413
    %v7415 = vpop.f32.mrf.mxu0
    %7416 = vdwg.mxu0
    %7417 = vmatpush.bf16.msra.mxu0 %v4645
    %7418 = vmatpush.bf16.msra.mxu0 %v4637
    %7419 = vmatpush.bf16.msra.mxu0 %v4629
    %7420 = vmatpush.bf16.msra.mxu0 %v4621
    %7421 = vmatpush.bf16.msra.mxu0 %v4613
    %7422 = vmatpush.bf16.msra.mxu0 %v4605
    %7423 = vmatpush.bf16.msra.mxu0 %v4597
    %7424 = vmatpush.bf16.msra.mxu0 %v4589
    %7425 = vmatmul.bf16.gmra.mxu0 %v139
    %v7426 = vpop.f32.mrf.mxu0
    %v7427 = vadd.f32 %v7414, %v7426
    %v7428 = vpop.f32.mrf.mxu0
    %7429 = vdwg.mxu0
    %7430 = vmatpush.bf16.msra.mxu0 %v4709
    %7431 = vmatpush.bf16.msra.mxu0 %v4701
    %7432 = vmatpush.bf16.msra.mxu0 %v4693
    %7433 = vmatpush.bf16.msra.mxu0 %v4685
    %7434 = vmatpush.bf16.msra.mxu0 %v4677
    %7435 = vmatpush.bf16.msra.mxu0 %v4669
    %7436 = vmatpush.bf16.msra.mxu0 %v4661
    %7437 = vmatpush.bf16.msra.mxu0 %v4653
    %7438 = vmatmul.bf16.gmra.mxu0 %v140
    %v7439 = vpop.f32.mrf.mxu0
    %v7440 = vadd.f32 %v7427, %v7439
    %v7441 = vpop.f32.mrf.mxu0
    %7442 = vdwg.mxu0
    %7443 = vmatpush.bf16.msra.mxu0 %v4773
    %7444 = vmatpush.bf16.msra.mxu0 %v4765
    %7445 = vmatpush.bf16.msra.mxu0 %v4757
    %7446 = vmatpush.bf16.msra.mxu0 %v4749
    %7447 = vmatpush.bf16.msra.mxu0 %v4741
    %7448 = vmatpush.bf16.msra.mxu0 %v4733
    %7449 = vmatpush.bf16.msra.mxu0 %v4725
    %7450 = vmatpush.bf16.msra.mxu0 %v4717
    %7451 = vmatmul.bf16.gmra.mxu0 %v141
    %v7452 = vpop.f32.mrf.mxu0
    %v7453 = vadd.f32 %v7440, %v7452
    %v7454 = vpop.f32.mrf.mxu0
    %7455 = vdwg.mxu0
    %7456 = vmatpush.bf16.msra.mxu0 %v4837
    %7457 = vmatpush.bf16.msra.mxu0 %v4829
    %7458 = vmatpush.bf16.msra.mxu0 %v4821
    %7459 = vmatpush.bf16.msra.mxu0 %v4813
    %7460 = vmatpush.bf16.msra.mxu0 %v4805
    %7461 = vmatpush.bf16.msra.mxu0 %v4797
    %7462 = vmatpush.bf16.msra.mxu0 %v4789
    %7463 = vmatpush.bf16.msra.mxu0 %v4781
    %7464 = vmatmul.bf16.gmra.mxu0 %v142
    %v7465 = vpop.f32.mrf.mxu0
    %v7466 = vadd.f32 %v7453, %v7465
    %v7467 = vpop.f32.mrf.mxu0
    %7468 = vdwg.mxu0
    %7469 = vmatpush.bf16.msra.mxu0 %v4901
    %7470 = vmatpush.bf16.msra.mxu0 %v4893
    %7471 = vmatpush.bf16.msra.mxu0 %v4885
    %7472 = vmatpush.bf16.msra.mxu0 %v4877
    %7473 = vmatpush.bf16.msra.mxu0 %v4869
    %7474 = vmatpush.bf16.msra.mxu0 %v4861
    %7475 = vmatpush.bf16.msra.mxu0 %v4853
    %7476 = vmatpush.bf16.msra.mxu0 %v4845
    %7477 = vmatmul.bf16.gmra.mxu0 %v143
    %v7478 = vpop.f32.mrf.mxu0
    %v7479 = vadd.f32 %v7466, %v7478
    %v7480 = vpop.f32.mrf.mxu0
    %7481 = vdwg.mxu0
    %7482 = vmatpush.bf16.msra.mxu0 %v4965
    %7483 = vmatpush.bf16.msra.mxu0 %v4957
    %7484 = vmatpush.bf16.msra.mxu0 %v4949
    %7485 = vmatpush.bf16.msra.mxu0 %v4941
    %7486 = vmatpush.bf16.msra.mxu0 %v4933
    %7487 = vmatpush.bf16.msra.mxu0 %v4925
    %7488 = vmatpush.bf16.msra.mxu0 %v4917
    %7489 = vmatpush.bf16.msra.mxu0 %v4909
    %7490 = vmatmul.bf16.gmra.mxu0 %v144
    %v7491 = vpop.f32.mrf.mxu0
    %v7492 = vadd.f32 %v7479, %v7491
    %v7493 = vpop.f32.mrf.mxu0
    %7494 = vdwg.mxu0
    %7495 = vmatpush.bf16.msra.mxu0 %v5029
    %7496 = vmatpush.bf16.msra.mxu0 %v5021
    %7497 = vmatpush.bf16.msra.mxu0 %v5013
    %7498 = vmatpush.bf16.msra.mxu0 %v5005
    %7499 = vmatpush.bf16.msra.mxu0 %v4997
    %7500 = vmatpush.bf16.msra.mxu0 %v4989
    %7501 = vmatpush.bf16.msra.mxu0 %v4981
    %7502 = vmatpush.bf16.msra.mxu0 %v4973
    %7503 = vmatmul.bf16.gmra.mxu0 %v145
    %v7504 = vpop.f32.mrf.mxu0
    %v7505 = vadd.f32 %v7492, %v7504
    %v7506 = vpop.f32.mrf.mxu0
    %7507 = vdwg.mxu0
    %7508 = vmatpush.bf16.msra.mxu0 %v5093
    %7509 = vmatpush.bf16.msra.mxu0 %v5085
    %7510 = vmatpush.bf16.msra.mxu0 %v5077
    %7511 = vmatpush.bf16.msra.mxu0 %v5069
    %7512 = vmatpush.bf16.msra.mxu0 %v5061
    %7513 = vmatpush.bf16.msra.mxu0 %v5053
    %7514 = vmatpush.bf16.msra.mxu0 %v5045
    %7515 = vmatpush.bf16.msra.mxu0 %v5037
    %7516 = vmatmul.bf16.gmra.mxu0 %v146
    %v7517 = vpop.f32.mrf.mxu0
    %v7518 = vadd.f32 %v7505, %v7517
    %v7519 = vpop.f32.mrf.mxu0
    %7520 = vdwg.mxu0
    %7521 = vmatpush.bf16.msra.mxu0 %v5157
    %7522 = vmatpush.bf16.msra.mxu0 %v5149
    %7523 = vmatpush.bf16.msra.mxu0 %v5141
    %7524 = vmatpush.bf16.msra.mxu0 %v5133
    %7525 = vmatpush.bf16.msra.mxu0 %v5125
    %7526 = vmatpush.bf16.msra.mxu0 %v5117
    %7527 = vmatpush.bf16.msra.mxu0 %v5109
    %7528 = vmatpush.bf16.msra.mxu0 %v5101
    %7529 = vmatmul.bf16.gmra.mxu0 %v147
    %v7530 = vpop.f32.mrf.mxu0
    %v7531 = vadd.f32 %v7518, %v7530
    %v7532 = vpop.f32.mrf.mxu0
    %7533 = vdwg.mxu0
    %7534 = vmatpush.bf16.msra.mxu0 %v5221
    %7535 = vmatpush.bf16.msra.mxu0 %v5213
    %7536 = vmatpush.bf16.msra.mxu0 %v5205
    %7537 = vmatpush.bf16.msra.mxu0 %v5197
    %7538 = vmatpush.bf16.msra.mxu0 %v5189
    %7539 = vmatpush.bf16.msra.mxu0 %v5181
    %7540 = vmatpush.bf16.msra.mxu0 %v5173
    %7541 = vmatpush.bf16.msra.mxu0 %v5165
    %7542 = vmatmul.bf16.gmra.mxu0 %v148
    %v7543 = vpop.f32.mrf.mxu0
    %v7544 = vadd.f32 %v7531, %v7543
    %v7545 = vpop.f32.mrf.mxu0
    %7546 = vdwg.mxu0
    %7547 = vmatpush.bf16.msra.mxu0 %v5285
    %7548 = vmatpush.bf16.msra.mxu0 %v5277
    %7549 = vmatpush.bf16.msra.mxu0 %v5269
    %7550 = vmatpush.bf16.msra.mxu0 %v5261
    %7551 = vmatpush.bf16.msra.mxu0 %v5253
    %7552 = vmatpush.bf16.msra.mxu0 %v5245
    %7553 = vmatpush.bf16.msra.mxu0 %v5237
    %7554 = vmatpush.bf16.msra.mxu0 %v5229
    %7555 = vmatmul.bf16.gmra.mxu0 %v149
    %v7556 = vpop.f32.mrf.mxu0
    %v7557 = vadd.f32 %v7544, %v7556
    %v7558 = vpop.f32.mrf.mxu0
    %7559 = vdwg.mxu0
    %7560 = vmatpush.bf16.msra.mxu0 %v4326
    %7561 = vmatpush.bf16.msra.mxu0 %v4318
    %7562 = vmatpush.bf16.msra.mxu0 %v4310
    %7563 = vmatpush.bf16.msra.mxu0 %v4302
    %7564 = vmatpush.bf16.msra.mxu0 %v4294
    %7565 = vmatpush.bf16.msra.mxu0 %v4286
    %7566 = vmatpush.bf16.msra.mxu0 %v4278
    %7567 = vmatpush.bf16.msra.mxu0 %v4270
    %7568 = vmatmul.bf16.gmra.mxu0 %v134
    %v7569 = vpop.f32.mrf.mxu0
    %v7570 = vadd.f32 %v1182, %v7569
    %v7571 = vpop.f32.mrf.mxu0
    %7572 = vdwg.mxu0
    %7573 = vmatpush.bf16.msra.mxu0 %v4390
    %7574 = vmatpush.bf16.msra.mxu0 %v4382
    %7575 = vmatpush.bf16.msra.mxu0 %v4374
    %7576 = vmatpush.bf16.msra.mxu0 %v4366
    %7577 = vmatpush.bf16.msra.mxu0 %v4358
    %7578 = vmatpush.bf16.msra.mxu0 %v4350
    %7579 = vmatpush.bf16.msra.mxu0 %v4342
    %7580 = vmatpush.bf16.msra.mxu0 %v4334
    %7581 = vmatmul.bf16.gmra.mxu0 %v135
    %v7582 = vpop.f32.mrf.mxu0
    %v7583 = vadd.f32 %v7570, %v7582
    %v7584 = vpop.f32.mrf.mxu0
    %7585 = vdwg.mxu0
    %7586 = vmatpush.bf16.msra.mxu0 %v4454
    %7587 = vmatpush.bf16.msra.mxu0 %v4446
    %7588 = vmatpush.bf16.msra.mxu0 %v4438
    %7589 = vmatpush.bf16.msra.mxu0 %v4430
    %7590 = vmatpush.bf16.msra.mxu0 %v4422
    %7591 = vmatpush.bf16.msra.mxu0 %v4414
    %7592 = vmatpush.bf16.msra.mxu0 %v4406
    %7593 = vmatpush.bf16.msra.mxu0 %v4398
    %7594 = vmatmul.bf16.gmra.mxu0 %v136
    %v7595 = vpop.f32.mrf.mxu0
    %v7596 = vadd.f32 %v7583, %v7595
    %v7597 = vpop.f32.mrf.mxu0
    %7598 = vdwg.mxu0
    %7599 = vmatpush.bf16.msra.mxu0 %v4518
    %7600 = vmatpush.bf16.msra.mxu0 %v4510
    %7601 = vmatpush.bf16.msra.mxu0 %v4502
    %7602 = vmatpush.bf16.msra.mxu0 %v4494
    %7603 = vmatpush.bf16.msra.mxu0 %v4486
    %7604 = vmatpush.bf16.msra.mxu0 %v4478
    %7605 = vmatpush.bf16.msra.mxu0 %v4470
    %7606 = vmatpush.bf16.msra.mxu0 %v4462
    %7607 = vmatmul.bf16.gmra.mxu0 %v137
    %v7608 = vpop.f32.mrf.mxu0
    %v7609 = vadd.f32 %v7596, %v7608
    %v7610 = vpop.f32.mrf.mxu0
    %7611 = vdwg.mxu0
    %7612 = vmatpush.bf16.msra.mxu0 %v4582
    %7613 = vmatpush.bf16.msra.mxu0 %v4574
    %7614 = vmatpush.bf16.msra.mxu0 %v4566
    %7615 = vmatpush.bf16.msra.mxu0 %v4558
    %7616 = vmatpush.bf16.msra.mxu0 %v4550
    %7617 = vmatpush.bf16.msra.mxu0 %v4542
    %7618 = vmatpush.bf16.msra.mxu0 %v4534
    %7619 = vmatpush.bf16.msra.mxu0 %v4526
    %7620 = vmatmul.bf16.gmra.mxu0 %v138
    %v7621 = vpop.f32.mrf.mxu0
    %v7622 = vadd.f32 %v7609, %v7621
    %v7623 = vpop.f32.mrf.mxu0
    %7624 = vdwg.mxu0
    %7625 = vmatpush.bf16.msra.mxu0 %v4646
    %7626 = vmatpush.bf16.msra.mxu0 %v4638
    %7627 = vmatpush.bf16.msra.mxu0 %v4630
    %7628 = vmatpush.bf16.msra.mxu0 %v4622
    %7629 = vmatpush.bf16.msra.mxu0 %v4614
    %7630 = vmatpush.bf16.msra.mxu0 %v4606
    %7631 = vmatpush.bf16.msra.mxu0 %v4598
    %7632 = vmatpush.bf16.msra.mxu0 %v4590
    %7633 = vmatmul.bf16.gmra.mxu0 %v139
    %v7634 = vpop.f32.mrf.mxu0
    %v7635 = vadd.f32 %v7622, %v7634
    %v7636 = vpop.f32.mrf.mxu0
    %7637 = vdwg.mxu0
    %7638 = vmatpush.bf16.msra.mxu0 %v4710
    %7639 = vmatpush.bf16.msra.mxu0 %v4702
    %7640 = vmatpush.bf16.msra.mxu0 %v4694
    %7641 = vmatpush.bf16.msra.mxu0 %v4686
    %7642 = vmatpush.bf16.msra.mxu0 %v4678
    %7643 = vmatpush.bf16.msra.mxu0 %v4670
    %7644 = vmatpush.bf16.msra.mxu0 %v4662
    %7645 = vmatpush.bf16.msra.mxu0 %v4654
    %7646 = vmatmul.bf16.gmra.mxu0 %v140
    %v7647 = vpop.f32.mrf.mxu0
    %v7648 = vadd.f32 %v7635, %v7647
    %v7649 = vpop.f32.mrf.mxu0
    %7650 = vdwg.mxu0
    %7651 = vmatpush.bf16.msra.mxu0 %v4774
    %7652 = vmatpush.bf16.msra.mxu0 %v4766
    %7653 = vmatpush.bf16.msra.mxu0 %v4758
    %7654 = vmatpush.bf16.msra.mxu0 %v4750
    %7655 = vmatpush.bf16.msra.mxu0 %v4742
    %7656 = vmatpush.bf16.msra.mxu0 %v4734
    %7657 = vmatpush.bf16.msra.mxu0 %v4726
    %7658 = vmatpush.bf16.msra.mxu0 %v4718
    %7659 = vmatmul.bf16.gmra.mxu0 %v141
    %v7660 = vpop.f32.mrf.mxu0
    %v7661 = vadd.f32 %v7648, %v7660
    %v7662 = vpop.f32.mrf.mxu0
    %7663 = vdwg.mxu0
    %7664 = vmatpush.bf16.msra.mxu0 %v4838
    %7665 = vmatpush.bf16.msra.mxu0 %v4830
    %7666 = vmatpush.bf16.msra.mxu0 %v4822
    %7667 = vmatpush.bf16.msra.mxu0 %v4814
    %7668 = vmatpush.bf16.msra.mxu0 %v4806
    %7669 = vmatpush.bf16.msra.mxu0 %v4798
    %7670 = vmatpush.bf16.msra.mxu0 %v4790
    %7671 = vmatpush.bf16.msra.mxu0 %v4782
    %7672 = vmatmul.bf16.gmra.mxu0 %v142
    %v7673 = vpop.f32.mrf.mxu0
    %v7674 = vadd.f32 %v7661, %v7673
    %v7675 = vpop.f32.mrf.mxu0
    %7676 = vdwg.mxu0
    %7677 = vmatpush.bf16.msra.mxu0 %v4902
    %7678 = vmatpush.bf16.msra.mxu0 %v4894
    %7679 = vmatpush.bf16.msra.mxu0 %v4886
    %7680 = vmatpush.bf16.msra.mxu0 %v4878
    %7681 = vmatpush.bf16.msra.mxu0 %v4870
    %7682 = vmatpush.bf16.msra.mxu0 %v4862
    %7683 = vmatpush.bf16.msra.mxu0 %v4854
    %7684 = vmatpush.bf16.msra.mxu0 %v4846
    %7685 = vmatmul.bf16.gmra.mxu0 %v143
    %v7686 = vpop.f32.mrf.mxu0
    %v7687 = vadd.f32 %v7674, %v7686
    %v7688 = vpop.f32.mrf.mxu0
    %7689 = vdwg.mxu0
    %7690 = vmatpush.bf16.msra.mxu0 %v4966
    %7691 = vmatpush.bf16.msra.mxu0 %v4958
    %7692 = vmatpush.bf16.msra.mxu0 %v4950
    %7693 = vmatpush.bf16.msra.mxu0 %v4942
    %7694 = vmatpush.bf16.msra.mxu0 %v4934
    %7695 = vmatpush.bf16.msra.mxu0 %v4926
    %7696 = vmatpush.bf16.msra.mxu0 %v4918
    %7697 = vmatpush.bf16.msra.mxu0 %v4910
    %7698 = vmatmul.bf16.gmra.mxu0 %v144
    %v7699 = vpop.f32.mrf.mxu0
    %v7700 = vadd.f32 %v7687, %v7699
    %v7701 = vpop.f32.mrf.mxu0
    %7702 = vdwg.mxu0
    %7703 = vmatpush.bf16.msra.mxu0 %v5030
    %7704 = vmatpush.bf16.msra.mxu0 %v5022
    %7705 = vmatpush.bf16.msra.mxu0 %v5014
    %7706 = vmatpush.bf16.msra.mxu0 %v5006
    %7707 = vmatpush.bf16.msra.mxu0 %v4998
    %7708 = vmatpush.bf16.msra.mxu0 %v4990
    %7709 = vmatpush.bf16.msra.mxu0 %v4982
    %7710 = vmatpush.bf16.msra.mxu0 %v4974
    %7711 = vmatmul.bf16.gmra.mxu0 %v145
    %v7712 = vpop.f32.mrf.mxu0
    %v7713 = vadd.f32 %v7700, %v7712
    %v7714 = vpop.f32.mrf.mxu0
    %7715 = vdwg.mxu0
    %7716 = vmatpush.bf16.msra.mxu0 %v5094
    %7717 = vmatpush.bf16.msra.mxu0 %v5086
    %7718 = vmatpush.bf16.msra.mxu0 %v5078
    %7719 = vmatpush.bf16.msra.mxu0 %v5070
    %7720 = vmatpush.bf16.msra.mxu0 %v5062
    %7721 = vmatpush.bf16.msra.mxu0 %v5054
    %7722 = vmatpush.bf16.msra.mxu0 %v5046
    %7723 = vmatpush.bf16.msra.mxu0 %v5038
    %7724 = vmatmul.bf16.gmra.mxu0 %v146
    %v7725 = vpop.f32.mrf.mxu0
    %v7726 = vadd.f32 %v7713, %v7725
    %v7727 = vpop.f32.mrf.mxu0
    %7728 = vdwg.mxu0
    %7729 = vmatpush.bf16.msra.mxu0 %v5158
    %7730 = vmatpush.bf16.msra.mxu0 %v5150
    %7731 = vmatpush.bf16.msra.mxu0 %v5142
    %7732 = vmatpush.bf16.msra.mxu0 %v5134
    %7733 = vmatpush.bf16.msra.mxu0 %v5126
    %7734 = vmatpush.bf16.msra.mxu0 %v5118
    %7735 = vmatpush.bf16.msra.mxu0 %v5110
    %7736 = vmatpush.bf16.msra.mxu0 %v5102
    %7737 = vmatmul.bf16.gmra.mxu0 %v147
    %v7738 = vpop.f32.mrf.mxu0
    %v7739 = vadd.f32 %v7726, %v7738
    %v7740 = vpop.f32.mrf.mxu0
    %7741 = vdwg.mxu0
    %7742 = vmatpush.bf16.msra.mxu0 %v5222
    %7743 = vmatpush.bf16.msra.mxu0 %v5214
    %7744 = vmatpush.bf16.msra.mxu0 %v5206
    %7745 = vmatpush.bf16.msra.mxu0 %v5198
    %7746 = vmatpush.bf16.msra.mxu0 %v5190
    %7747 = vmatpush.bf16.msra.mxu0 %v5182
    %7748 = vmatpush.bf16.msra.mxu0 %v5174
    %7749 = vmatpush.bf16.msra.mxu0 %v5166
    %7750 = vmatmul.bf16.gmra.mxu0 %v148
    %v7751 = vpop.f32.mrf.mxu0
    %v7752 = vadd.f32 %v7739, %v7751
    %v7753 = vpop.f32.mrf.mxu0
    %7754 = vdwg.mxu0
    %7755 = vmatpush.bf16.msra.mxu0 %v5286
    %7756 = vmatpush.bf16.msra.mxu0 %v5278
    %7757 = vmatpush.bf16.msra.mxu0 %v5270
    %7758 = vmatpush.bf16.msra.mxu0 %v5262
    %7759 = vmatpush.bf16.msra.mxu0 %v5254
    %7760 = vmatpush.bf16.msra.mxu0 %v5246
    %7761 = vmatpush.bf16.msra.mxu0 %v5238
    %7762 = vmatpush.bf16.msra.mxu0 %v5230
    %7763 = vmatmul.bf16.gmra.mxu0 %v149
    %v7764 = vpop.f32.mrf.mxu0
    %v7765 = vadd.f32 %v7752, %v7764
    %v7766 = vpop.f32.mrf.mxu0
    %7767 = vdwg.mxu0
    %7768 = vmatpush.bf16.msra.mxu0 %v4327
    %7769 = vmatpush.bf16.msra.mxu0 %v4319
    %7770 = vmatpush.bf16.msra.mxu0 %v4311
    %7771 = vmatpush.bf16.msra.mxu0 %v4303
    %7772 = vmatpush.bf16.msra.mxu0 %v4295
    %7773 = vmatpush.bf16.msra.mxu0 %v4287
    %7774 = vmatpush.bf16.msra.mxu0 %v4279
    %7775 = vmatpush.bf16.msra.mxu0 %v4271
    %7776 = vmatmul.bf16.gmra.mxu0 %v134
    %v7777 = vpop.f32.mrf.mxu0
    %v7778 = vadd.f32 %v1183, %v7777
    %v7779 = vpop.f32.mrf.mxu0
    %7780 = vdwg.mxu0
    %7781 = vmatpush.bf16.msra.mxu0 %v4391
    %7782 = vmatpush.bf16.msra.mxu0 %v4383
    %7783 = vmatpush.bf16.msra.mxu0 %v4375
    %7784 = vmatpush.bf16.msra.mxu0 %v4367
    %7785 = vmatpush.bf16.msra.mxu0 %v4359
    %7786 = vmatpush.bf16.msra.mxu0 %v4351
    %7787 = vmatpush.bf16.msra.mxu0 %v4343
    %7788 = vmatpush.bf16.msra.mxu0 %v4335
    %7789 = vmatmul.bf16.gmra.mxu0 %v135
    %v7790 = vpop.f32.mrf.mxu0
    %v7791 = vadd.f32 %v7778, %v7790
    %v7792 = vpop.f32.mrf.mxu0
    %7793 = vdwg.mxu0
    %7794 = vmatpush.bf16.msra.mxu0 %v4455
    %7795 = vmatpush.bf16.msra.mxu0 %v4447
    %7796 = vmatpush.bf16.msra.mxu0 %v4439
    %7797 = vmatpush.bf16.msra.mxu0 %v4431
    %7798 = vmatpush.bf16.msra.mxu0 %v4423
    %7799 = vmatpush.bf16.msra.mxu0 %v4415
    %7800 = vmatpush.bf16.msra.mxu0 %v4407
    %7801 = vmatpush.bf16.msra.mxu0 %v4399
    %7802 = vmatmul.bf16.gmra.mxu0 %v136
    %v7803 = vpop.f32.mrf.mxu0
    %v7804 = vadd.f32 %v7791, %v7803
    %v7805 = vpop.f32.mrf.mxu0
    %7806 = vdwg.mxu0
    %7807 = vmatpush.bf16.msra.mxu0 %v4519
    %7808 = vmatpush.bf16.msra.mxu0 %v4511
    %7809 = vmatpush.bf16.msra.mxu0 %v4503
    %7810 = vmatpush.bf16.msra.mxu0 %v4495
    %7811 = vmatpush.bf16.msra.mxu0 %v4487
    %7812 = vmatpush.bf16.msra.mxu0 %v4479
    %7813 = vmatpush.bf16.msra.mxu0 %v4471
    %7814 = vmatpush.bf16.msra.mxu0 %v4463
    %7815 = vmatmul.bf16.gmra.mxu0 %v137
    %v7816 = vpop.f32.mrf.mxu0
    %v7817 = vadd.f32 %v7804, %v7816
    %v7818 = vpop.f32.mrf.mxu0
    %7819 = vdwg.mxu0
    %7820 = vmatpush.bf16.msra.mxu0 %v4583
    %7821 = vmatpush.bf16.msra.mxu0 %v4575
    %7822 = vmatpush.bf16.msra.mxu0 %v4567
    %7823 = vmatpush.bf16.msra.mxu0 %v4559
    %7824 = vmatpush.bf16.msra.mxu0 %v4551
    %7825 = vmatpush.bf16.msra.mxu0 %v4543
    %7826 = vmatpush.bf16.msra.mxu0 %v4535
    %7827 = vmatpush.bf16.msra.mxu0 %v4527
    %7828 = vmatmul.bf16.gmra.mxu0 %v138
    %v7829 = vpop.f32.mrf.mxu0
    %v7830 = vadd.f32 %v7817, %v7829
    %v7831 = vpop.f32.mrf.mxu0
    %7832 = vdwg.mxu0
    %7833 = vmatpush.bf16.msra.mxu0 %v4647
    %7834 = vmatpush.bf16.msra.mxu0 %v4639
    %7835 = vmatpush.bf16.msra.mxu0 %v4631
    %7836 = vmatpush.bf16.msra.mxu0 %v4623
    %7837 = vmatpush.bf16.msra.mxu0 %v4615
    %7838 = vmatpush.bf16.msra.mxu0 %v4607
    %7839 = vmatpush.bf16.msra.mxu0 %v4599
    %7840 = vmatpush.bf16.msra.mxu0 %v4591
    %7841 = vmatmul.bf16.gmra.mxu0 %v139
    %v7842 = vpop.f32.mrf.mxu0
    %v7843 = vadd.f32 %v7830, %v7842
    %v7844 = vpop.f32.mrf.mxu0
    %7845 = vdwg.mxu0
    %7846 = vmatpush.bf16.msra.mxu0 %v4711
    %7847 = vmatpush.bf16.msra.mxu0 %v4703
    %7848 = vmatpush.bf16.msra.mxu0 %v4695
    %7849 = vmatpush.bf16.msra.mxu0 %v4687
    %7850 = vmatpush.bf16.msra.mxu0 %v4679
    %7851 = vmatpush.bf16.msra.mxu0 %v4671
    %7852 = vmatpush.bf16.msra.mxu0 %v4663
    %7853 = vmatpush.bf16.msra.mxu0 %v4655
    %7854 = vmatmul.bf16.gmra.mxu0 %v140
    %v7855 = vpop.f32.mrf.mxu0
    %v7856 = vadd.f32 %v7843, %v7855
    %v7857 = vpop.f32.mrf.mxu0
    %7858 = vdwg.mxu0
    %7859 = vmatpush.bf16.msra.mxu0 %v4775
    %7860 = vmatpush.bf16.msra.mxu0 %v4767
    %7861 = vmatpush.bf16.msra.mxu0 %v4759
    %7862 = vmatpush.bf16.msra.mxu0 %v4751
    %7863 = vmatpush.bf16.msra.mxu0 %v4743
    %7864 = vmatpush.bf16.msra.mxu0 %v4735
    %7865 = vmatpush.bf16.msra.mxu0 %v4727
    %7866 = vmatpush.bf16.msra.mxu0 %v4719
    %7867 = vmatmul.bf16.gmra.mxu0 %v141
    %v7868 = vpop.f32.mrf.mxu0
    %v7869 = vadd.f32 %v7856, %v7868
    %v7870 = vpop.f32.mrf.mxu0
    %7871 = vdwg.mxu0
    %7872 = vmatpush.bf16.msra.mxu0 %v4839
    %7873 = vmatpush.bf16.msra.mxu0 %v4831
    %7874 = vmatpush.bf16.msra.mxu0 %v4823
    %7875 = vmatpush.bf16.msra.mxu0 %v4815
    %7876 = vmatpush.bf16.msra.mxu0 %v4807
    %7877 = vmatpush.bf16.msra.mxu0 %v4799
    %7878 = vmatpush.bf16.msra.mxu0 %v4791
    %7879 = vmatpush.bf16.msra.mxu0 %v4783
    %7880 = vmatmul.bf16.gmra.mxu0 %v142
    %v7881 = vpop.f32.mrf.mxu0
    %v7882 = vadd.f32 %v7869, %v7881
    %v7883 = vpop.f32.mrf.mxu0
    %7884 = vdwg.mxu0
    %7885 = vmatpush.bf16.msra.mxu0 %v4903
    %7886 = vmatpush.bf16.msra.mxu0 %v4895
    %7887 = vmatpush.bf16.msra.mxu0 %v4887
    %7888 = vmatpush.bf16.msra.mxu0 %v4879
    %7889 = vmatpush.bf16.msra.mxu0 %v4871
    %7890 = vmatpush.bf16.msra.mxu0 %v4863
    %7891 = vmatpush.bf16.msra.mxu0 %v4855
    %7892 = vmatpush.bf16.msra.mxu0 %v4847
    %7893 = vmatmul.bf16.gmra.mxu0 %v143
    %v7894 = vpop.f32.mrf.mxu0
    %v7895 = vadd.f32 %v7882, %v7894
    %v7896 = vpop.f32.mrf.mxu0
    %7897 = vdwg.mxu0
    %7898 = vmatpush.bf16.msra.mxu0 %v4967
    %7899 = vmatpush.bf16.msra.mxu0 %v4959
    %7900 = vmatpush.bf16.msra.mxu0 %v4951
    %7901 = vmatpush.bf16.msra.mxu0 %v4943
    %7902 = vmatpush.bf16.msra.mxu0 %v4935
    %7903 = vmatpush.bf16.msra.mxu0 %v4927
    %7904 = vmatpush.bf16.msra.mxu0 %v4919
    %7905 = vmatpush.bf16.msra.mxu0 %v4911
    %7906 = vmatmul.bf16.gmra.mxu0 %v144
    %v7907 = vpop.f32.mrf.mxu0
    %v7908 = vadd.f32 %v7895, %v7907
    %v7909 = vpop.f32.mrf.mxu0
    %7910 = vdwg.mxu0
    %7911 = vmatpush.bf16.msra.mxu0 %v5031
    %7912 = vmatpush.bf16.msra.mxu0 %v5023
    %7913 = vmatpush.bf16.msra.mxu0 %v5015
    %7914 = vmatpush.bf16.msra.mxu0 %v5007
    %7915 = vmatpush.bf16.msra.mxu0 %v4999
    %7916 = vmatpush.bf16.msra.mxu0 %v4991
    %7917 = vmatpush.bf16.msra.mxu0 %v4983
    %7918 = vmatpush.bf16.msra.mxu0 %v4975
    %7919 = vmatmul.bf16.gmra.mxu0 %v145
    %v7920 = vpop.f32.mrf.mxu0
    %v7921 = vadd.f32 %v7908, %v7920
    %v7922 = vpop.f32.mrf.mxu0
    %7923 = vdwg.mxu0
    %7924 = vmatpush.bf16.msra.mxu0 %v5095
    %7925 = vmatpush.bf16.msra.mxu0 %v5087
    %7926 = vmatpush.bf16.msra.mxu0 %v5079
    %7927 = vmatpush.bf16.msra.mxu0 %v5071
    %7928 = vmatpush.bf16.msra.mxu0 %v5063
    %7929 = vmatpush.bf16.msra.mxu0 %v5055
    %7930 = vmatpush.bf16.msra.mxu0 %v5047
    %7931 = vmatpush.bf16.msra.mxu0 %v5039
    %7932 = vmatmul.bf16.gmra.mxu0 %v146
    %v7933 = vpop.f32.mrf.mxu0
    %v7934 = vadd.f32 %v7921, %v7933
    %v7935 = vpop.f32.mrf.mxu0
    %7936 = vdwg.mxu0
    %7937 = vmatpush.bf16.msra.mxu0 %v5159
    %7938 = vmatpush.bf16.msra.mxu0 %v5151
    %7939 = vmatpush.bf16.msra.mxu0 %v5143
    %7940 = vmatpush.bf16.msra.mxu0 %v5135
    %7941 = vmatpush.bf16.msra.mxu0 %v5127
    %7942 = vmatpush.bf16.msra.mxu0 %v5119
    %7943 = vmatpush.bf16.msra.mxu0 %v5111
    %7944 = vmatpush.bf16.msra.mxu0 %v5103
    %7945 = vmatmul.bf16.gmra.mxu0 %v147
    %v7946 = vpop.f32.mrf.mxu0
    %v7947 = vadd.f32 %v7934, %v7946
    %v7948 = vpop.f32.mrf.mxu0
    %7949 = vdwg.mxu0
    %7950 = vmatpush.bf16.msra.mxu0 %v5223
    %7951 = vmatpush.bf16.msra.mxu0 %v5215
    %7952 = vmatpush.bf16.msra.mxu0 %v5207
    %7953 = vmatpush.bf16.msra.mxu0 %v5199
    %7954 = vmatpush.bf16.msra.mxu0 %v5191
    %7955 = vmatpush.bf16.msra.mxu0 %v5183
    %7956 = vmatpush.bf16.msra.mxu0 %v5175
    %7957 = vmatpush.bf16.msra.mxu0 %v5167
    %7958 = vmatmul.bf16.gmra.mxu0 %v148
    %v7959 = vpop.f32.mrf.mxu0
    %v7960 = vadd.f32 %v7947, %v7959
    %v7961 = vpop.f32.mrf.mxu0
    %7962 = vdwg.mxu0
    %7963 = vmatpush.bf16.msra.mxu0 %v5287
    %7964 = vmatpush.bf16.msra.mxu0 %v5279
    %7965 = vmatpush.bf16.msra.mxu0 %v5271
    %7966 = vmatpush.bf16.msra.mxu0 %v5263
    %7967 = vmatpush.bf16.msra.mxu0 %v5255
    %7968 = vmatpush.bf16.msra.mxu0 %v5247
    %7969 = vmatpush.bf16.msra.mxu0 %v5239
    %7970 = vmatpush.bf16.msra.mxu0 %v5231
    %7971 = vmatmul.bf16.gmra.mxu0 %v149
    %v7972 = vpop.f32.mrf.mxu0
    %v7973 = vadd.f32 %v7960, %v7972
    %v7974 = vpop.f32.mrf.mxu0
    %7975 = vdwg.mxu0
    %v7976 = vmax.f32 %v6517, 0.0
    %v7977 = vmax.f32 %v6725, 0.0
    %v7978 = vmax.f32 %v6933, 0.0
    %v7979 = vmax.f32 %v7141, 0.0
    %v7980 = vmax.f32 %v7349, 0.0
    %v7981 = vmax.f32 %v7557, 0.0
    %v7982 = vmax.f32 %v7765, 0.0
    %v7983 = vmax.f32 %v7973, 0.0
    %v7984 = vld [vmem:[#allocation10] sm:$0x3]
    %v7985 = vpack.c.bf16 %v7976, %v7976
    %v7986 = vpack.c.bf16 %v7977, %v7977
    %v7987 = vpack.c.bf16 %v7978, %v7978
    %v7988 = vpack.c.bf16 %v7979, %v7979
    %v7989 = vpack.c.bf16 %v7980, %v7980
    %v7990 = vpack.c.bf16 %v7981, %v7981
    %v7991 = vpack.c.bf16 %v7982, %v7982
    %v7992 = vpack.c.bf16 %v7983, %v7983
    %v7993 = vld [vmem:[#allocation7] sm:$0xf]
    %v7994 = vld [vmem:[#allocation7 + $0x4] sm:$0xf]
    %v7995 = vld [vmem:[#allocation7 + $0x8] sm:$0xf]
    %v7996 = vld [vmem:[#allocation7 + $0xc] sm:$0xf]
    %v7997 = vld [vmem:[#allocation7 + $0x10] sm:$0xf]
    %v7998 = vld [vmem:[#allocation7 + $0x14] sm:$0xf]
    %v7999 = vld [vmem:[#allocation7 + $0x18] sm:$0xf]
    %v8000 = vld [vmem:[#allocation7 + $0x1c] sm:$0xf]
    %v8001 = vld [vmem:[#allocation7 + $0x20] sm:$0xf]
    %v8002 = vld [vmem:[#allocation7 + $0x24] sm:$0xf]
    %v8003 = vld [vmem:[#allocation7 + $0x28] sm:$0xf]
    %v8004 = vld [vmem:[#allocation7 + $0x2c] sm:$0xf]
    %v8005 = vld [vmem:[#allocation7 + $0x30] sm:$0xf]
    %v8006 = vld [vmem:[#allocation7 + $0x34] sm:$0xf]
    %v8007 = vld [vmem:[#allocation7 + $0x38] sm:$0xf]
    %v8008 = vld [vmem:[#allocation7 + $0x3c] sm:$0xf]
    %v8009 = vld [vmem:[#allocation7 + $0x40] sm:$0xf]
    %v8010 = vld [vmem:[#allocation7 + $0x44] sm:$0xf]
    %v8011 = vld [vmem:[#allocation7 + $0x48] sm:$0xf]
    %v8012 = vld [vmem:[#allocation7 + $0x4c] sm:$0xf]
    %v8013 = vld [vmem:[#allocation7 + $0x50] sm:$0xf]
    %v8014 = vld [vmem:[#allocation7 + $0x54] sm:$0xf]
    %v8015 = vld [vmem:[#allocation7 + $0x58] sm:$0xf]
    %v8016 = vld [vmem:[#allocation7 + $0x5c] sm:$0xf]
    %v8017 = vld [vmem:[#allocation7 + $0x60] sm:$0xf]
    %v8018 = vld [vmem:[#allocation7 + $0x64] sm:$0xf]
    %v8019 = vld [vmem:[#allocation7 + $0x68] sm:$0xf]
    %v8020 = vld [vmem:[#allocation7 + $0x6c] sm:$0xf]
    %v8021 = vld [vmem:[#allocation7 + $0x70] sm:$0xf]
    %v8022 = vld [vmem:[#allocation7 + $0x74] sm:$0xf]
    %v8023 = vld [vmem:[#allocation7 + $0x78] sm:$0xf]
    %v8024 = vld [vmem:[#allocation7 + $0x7c] sm:$0xf]
    %v8025 = vld [vmem:[#allocation7 + $0x80] sm:$0xf]
    %v8026 = vld [vmem:[#allocation7 + $0x84] sm:$0xf]
    %v8027 = vld [vmem:[#allocation7 + $0x88] sm:$0xf]
    %v8028 = vld [vmem:[#allocation7 + $0x8c] sm:$0xf]
    %v8029 = vld [vmem:[#allocation7 + $0x90] sm:$0xf]
    %v8030 = vld [vmem:[#allocation7 + $0x94] sm:$0xf]
    %v8031 = vld [vmem:[#allocation7 + $0x98] sm:$0xf]
    %v8032 = vld [vmem:[#allocation7 + $0x9c] sm:$0xf]
    %v8033 = vld [vmem:[#allocation7 + $0xa0] sm:$0xf]
    %v8034 = vld [vmem:[#allocation7 + $0xa4] sm:$0xf]
    %v8035 = vld [vmem:[#allocation7 + $0xa8] sm:$0xf]
    %v8036 = vld [vmem:[#allocation7 + $0xac] sm:$0xf]
    %v8037 = vld [vmem:[#allocation7 + $0xb0] sm:$0xf]
    %v8038 = vld [vmem:[#allocation7 + $0xb4] sm:$0xf]
    %v8039 = vld [vmem:[#allocation7 + $0xb8] sm:$0xf]
    %v8040 = vld [vmem:[#allocation7 + $0xbc] sm:$0xf]
    %v8041 = vld [vmem:[#allocation7 + $0xc0] sm:$0xf]
    %v8042 = vld [vmem:[#allocation7 + $0xc4] sm:$0xf]
    %v8043 = vld [vmem:[#allocation7 + $0xc8] sm:$0xf]
    %v8044 = vld [vmem:[#allocation7 + $0xcc] sm:$0xf]
    %v8045 = vld [vmem:[#allocation7 + $0xd0] sm:$0xf]
    %v8046 = vld [vmem:[#allocation7 + $0xd4] sm:$0xf]
    %v8047 = vld [vmem:[#allocation7 + $0xd8] sm:$0xf]
    %v8048 = vld [vmem:[#allocation7 + $0xdc] sm:$0xf]
    %v8049 = vld [vmem:[#allocation7 + $0xe0] sm:$0xf]
    %v8050 = vld [vmem:[#allocation7 + $0xe4] sm:$0xf]
    %v8051 = vld [vmem:[#allocation7 + $0xe8] sm:$0xf]
    %v8052 = vld [vmem:[#allocation7 + $0xec] sm:$0xf]
    %v8053 = vld [vmem:[#allocation7 + $0xf0] sm:$0xf]
    %v8054 = vld [vmem:[#allocation7 + $0xf4] sm:$0xf]
    %v8055 = vld [vmem:[#allocation7 + $0xf8] sm:$0xf]
    %v8056 = vld [vmem:[#allocation7 + $0xfc] sm:$0xf]
    %v8057 = vld [vmem:[#allocation7 + $0x100] sm:$0xf]
    %v8058 = vld [vmem:[#allocation7 + $0x104] sm:$0xf]
    %v8059 = vld [vmem:[#allocation7 + $0x108] sm:$0xf]
    %v8060 = vld [vmem:[#allocation7 + $0x10c] sm:$0xf]
    %v8061 = vld [vmem:[#allocation7 + $0x110] sm:$0xf]
    %v8062 = vld [vmem:[#allocation7 + $0x114] sm:$0xf]
    %v8063 = vld [vmem:[#allocation7 + $0x118] sm:$0xf]
    %v8064 = vld [vmem:[#allocation7 + $0x11c] sm:$0xf]
    %v8065 = vld [vmem:[#allocation7 + $0x120] sm:$0xf]
    %v8066 = vld [vmem:[#allocation7 + $0x124] sm:$0xf]
    %v8067 = vld [vmem:[#allocation7 + $0x128] sm:$0xf]
    %v8068 = vld [vmem:[#allocation7 + $0x12c] sm:$0xf]
    %v8069 = vld [vmem:[#allocation7 + $0x130] sm:$0xf]
    %v8070 = vld [vmem:[#allocation7 + $0x134] sm:$0xf]
    %v8071 = vld [vmem:[#allocation7 + $0x138] sm:$0xf]
    %v8072 = vld [vmem:[#allocation7 + $0x13c] sm:$0xf]
    %v8073 = vld [vmem:[#allocation7 + $0x140] sm:$0xf]
    %v8074 = vld [vmem:[#allocation7 + $0x144] sm:$0xf]
    %v8075 = vld [vmem:[#allocation7 + $0x148] sm:$0xf]
    %v8076 = vld [vmem:[#allocation7 + $0x14c] sm:$0xf]
    %v8077 = vld [vmem:[#allocation7 + $0x150] sm:$0xf]
    %v8078 = vld [vmem:[#allocation7 + $0x154] sm:$0xf]
    %v8079 = vld [vmem:[#allocation7 + $0x158] sm:$0xf]
    %v8080 = vld [vmem:[#allocation7 + $0x15c] sm:$0xf]
    %v8081 = vld [vmem:[#allocation7 + $0x160] sm:$0xf]
    %v8082 = vld [vmem:[#allocation7 + $0x164] sm:$0xf]
    %v8083 = vld [vmem:[#allocation7 + $0x168] sm:$0xf]
    %v8084 = vld [vmem:[#allocation7 + $0x16c] sm:$0xf]
    %v8085 = vld [vmem:[#allocation7 + $0x170] sm:$0xf]
    %v8086 = vld [vmem:[#allocation7 + $0x174] sm:$0xf]
    %v8087 = vld [vmem:[#allocation7 + $0x178] sm:$0xf]
    %v8088 = vld [vmem:[#allocation7 + $0x17c] sm:$0xf]
    %v8089 = vld [vmem:[#allocation7 + $0x180] sm:$0xf]
    %v8090 = vld [vmem:[#allocation7 + $0x184] sm:$0xf]
    %v8091 = vld [vmem:[#allocation7 + $0x188] sm:$0xf]
    %v8092 = vld [vmem:[#allocation7 + $0x18c] sm:$0xf]
    %v8093 = vld [vmem:[#allocation7 + $0x190] sm:$0xf]
    %v8094 = vld [vmem:[#allocation7 + $0x194] sm:$0xf]
    %v8095 = vld [vmem:[#allocation7 + $0x198] sm:$0xf]
    %v8096 = vld [vmem:[#allocation7 + $0x19c] sm:$0xf]
    %v8097 = vld [vmem:[#allocation7 + $0x1a0] sm:$0xf]
    %v8098 = vld [vmem:[#allocation7 + $0x1a4] sm:$0xf]
    %v8099 = vld [vmem:[#allocation7 + $0x1a8] sm:$0xf]
    %v8100 = vld [vmem:[#allocation7 + $0x1ac] sm:$0xf]
    %v8101 = vld [vmem:[#allocation7 + $0x1b0] sm:$0xf]
    %v8102 = vld [vmem:[#allocation7 + $0x1b4] sm:$0xf]
    %v8103 = vld [vmem:[#allocation7 + $0x1b8] sm:$0xf]
    %v8104 = vld [vmem:[#allocation7 + $0x1bc] sm:$0xf]
    %v8105 = vld [vmem:[#allocation7 + $0x1c0] sm:$0xf]
    %v8106 = vld [vmem:[#allocation7 + $0x1c4] sm:$0xf]
    %v8107 = vld [vmem:[#allocation7 + $0x1c8] sm:$0xf]
    %v8108 = vld [vmem:[#allocation7 + $0x1cc] sm:$0xf]
    %v8109 = vld [vmem:[#allocation7 + $0x1d0] sm:$0xf]
    %v8110 = vld [vmem:[#allocation7 + $0x1d4] sm:$0xf]
    %v8111 = vld [vmem:[#allocation7 + $0x1d8] sm:$0xf]
    %v8112 = vld [vmem:[#allocation7 + $0x1dc] sm:$0xf]
    %v8113 = vld [vmem:[#allocation7 + $0x1e0] sm:$0xf]
    %v8114 = vld [vmem:[#allocation7 + $0x1e4] sm:$0xf]
    %v8115 = vld [vmem:[#allocation7 + $0x1e8] sm:$0xf]
    %v8116 = vld [vmem:[#allocation7 + $0x1ec] sm:$0xf]
    %v8117 = vld [vmem:[#allocation7 + $0x1f0] sm:$0xf]
    %v8118 = vld [vmem:[#allocation7 + $0x1f4] sm:$0xf]
    %v8119 = vld [vmem:[#allocation7 + $0x1f8] sm:$0xf]
    %v8120 = vld [vmem:[#allocation7 + $0x1fc] sm:$0xf]
    %v8249 = vunpack.c.l.b16 %v7993
    %v8250 = vunpack.c.l.b16 %v7994
    %v8251 = vunpack.c.l.b16 %v7995
    %v8252 = vunpack.c.l.b16 %v7996
    %v8253 = vunpack.c.l.b16 %v7997
    %v8254 = vunpack.c.l.b16 %v7998
    %v8255 = vunpack.c.l.b16 %v7999
    %v8256 = vunpack.c.l.b16 %v8000
    %v8257 = vunpack.c.l.b16 %v8001
    %v8258 = vunpack.c.l.b16 %v8002
    %v8259 = vunpack.c.l.b16 %v8003
    %v8260 = vunpack.c.l.b16 %v8004
    %v8261 = vunpack.c.l.b16 %v8005
    %v8262 = vunpack.c.l.b16 %v8006
    %v8263 = vunpack.c.l.b16 %v8007
    %v8264 = vunpack.c.l.b16 %v8008
    %v8265 = vunpack.c.l.b16 %v8009
    %v8266 = vunpack.c.l.b16 %v8010
    %v8267 = vunpack.c.l.b16 %v8011
    %v8268 = vunpack.c.l.b16 %v8012
    %v8269 = vunpack.c.l.b16 %v8013
    %v8270 = vunpack.c.l.b16 %v8014
    %v8271 = vunpack.c.l.b16 %v8015
    %v8272 = vunpack.c.l.b16 %v8016
    %v8273 = vunpack.c.l.b16 %v8017
    %v8274 = vunpack.c.l.b16 %v8018
    %v8275 = vunpack.c.l.b16 %v8019
    %v8276 = vunpack.c.l.b16 %v8020
    %v8277 = vunpack.c.l.b16 %v8021
    %v8278 = vunpack.c.l.b16 %v8022
    %v8279 = vunpack.c.l.b16 %v8023
    %v8280 = vunpack.c.l.b16 %v8024
    %v8281 = vunpack.c.l.b16 %v8025
    %v8282 = vunpack.c.l.b16 %v8026
    %v8283 = vunpack.c.l.b16 %v8027
    %v8284 = vunpack.c.l.b16 %v8028
    %v8285 = vunpack.c.l.b16 %v8029
    %v8286 = vunpack.c.l.b16 %v8030
    %v8287 = vunpack.c.l.b16 %v8031
    %v8288 = vunpack.c.l.b16 %v8032
    %v8289 = vunpack.c.l.b16 %v8033
    %v8290 = vunpack.c.l.b16 %v8034
    %v8291 = vunpack.c.l.b16 %v8035
    %v8292 = vunpack.c.l.b16 %v8036
    %v8293 = vunpack.c.l.b16 %v8037
    %v8294 = vunpack.c.l.b16 %v8038
    %v8295 = vunpack.c.l.b16 %v8039
    %v8296 = vunpack.c.l.b16 %v8040
    %v8297 = vunpack.c.l.b16 %v8041
    %v8298 = vunpack.c.l.b16 %v8042
    %v8299 = vunpack.c.l.b16 %v8043
    %v8300 = vunpack.c.l.b16 %v8044
    %v8301 = vunpack.c.l.b16 %v8045
    %v8302 = vunpack.c.l.b16 %v8046
    %v8303 = vunpack.c.l.b16 %v8047
    %v8304 = vunpack.c.l.b16 %v8048
    %v8305 = vunpack.c.l.b16 %v8049
    %v8306 = vunpack.c.l.b16 %v8050
    %v8307 = vunpack.c.l.b16 %v8051
    %v8308 = vunpack.c.l.b16 %v8052
    %v8309 = vunpack.c.l.b16 %v8053
    %v8310 = vunpack.c.l.b16 %v8054
    %v8311 = vunpack.c.l.b16 %v8055
    %v8312 = vunpack.c.l.b16 %v8056
    %v8313 = vunpack.c.l.b16 %v8057
    %v8314 = vunpack.c.l.b16 %v8058
    %v8315 = vunpack.c.l.b16 %v8059
    %v8316 = vunpack.c.l.b16 %v8060
    %v8317 = vunpack.c.l.b16 %v8061
    %v8318 = vunpack.c.l.b16 %v8062
    %v8319 = vunpack.c.l.b16 %v8063
    %v8320 = vunpack.c.l.b16 %v8064
    %v8321 = vunpack.c.l.b16 %v8065
    %v8322 = vunpack.c.l.b16 %v8066
    %v8323 = vunpack.c.l.b16 %v8067
    %v8324 = vunpack.c.l.b16 %v8068
    %v8325 = vunpack.c.l.b16 %v8069
    %v8326 = vunpack.c.l.b16 %v8070
    %v8327 = vunpack.c.l.b16 %v8071
    %v8328 = vunpack.c.l.b16 %v8072
    %v8329 = vunpack.c.l.b16 %v8073
    %v8330 = vunpack.c.l.b16 %v8074
    %v8331 = vunpack.c.l.b16 %v8075
    %v8332 = vunpack.c.l.b16 %v8076
    %v8333 = vunpack.c.l.b16 %v8077
    %v8334 = vunpack.c.l.b16 %v8078
    %v8335 = vunpack.c.l.b16 %v8079
    %v8336 = vunpack.c.l.b16 %v8080
    %v8337 = vunpack.c.l.b16 %v8081
    %v8338 = vunpack.c.l.b16 %v8082
    %v8339 = vunpack.c.l.b16 %v8083
    %v8340 = vunpack.c.l.b16 %v8084
    %v8341 = vunpack.c.l.b16 %v8085
    %v8342 = vunpack.c.l.b16 %v8086
    %v8343 = vunpack.c.l.b16 %v8087
    %v8344 = vunpack.c.l.b16 %v8088
    %v8345 = vunpack.c.l.b16 %v8089
    %v8346 = vunpack.c.l.b16 %v8090
    %v8347 = vunpack.c.l.b16 %v8091
    %v8348 = vunpack.c.l.b16 %v8092
    %v8349 = vunpack.c.l.b16 %v8093
    %v8350 = vunpack.c.l.b16 %v8094
    %v8351 = vunpack.c.l.b16 %v8095
    %v8352 = vunpack.c.l.b16 %v8096
    %v8353 = vunpack.c.l.b16 %v8097
    %v8354 = vunpack.c.l.b16 %v8098
    %v8355 = vunpack.c.l.b16 %v8099
    %v8356 = vunpack.c.l.b16 %v8100
    %v8357 = vunpack.c.l.b16 %v8101
    %v8358 = vunpack.c.l.b16 %v8102
    %v8359 = vunpack.c.l.b16 %v8103
    %v8360 = vunpack.c.l.b16 %v8104
    %v8361 = vunpack.c.l.b16 %v8105
    %v8362 = vunpack.c.l.b16 %v8106
    %v8363 = vunpack.c.l.b16 %v8107
    %v8364 = vunpack.c.l.b16 %v8108
    %v8365 = vunpack.c.l.b16 %v8109
    %v8366 = vunpack.c.l.b16 %v8110
    %v8367 = vunpack.c.l.b16 %v8111
    %v8368 = vunpack.c.l.b16 %v8112
    %v8369 = vunpack.c.l.b16 %v8113
    %v8370 = vunpack.c.l.b16 %v8114
    %v8371 = vunpack.c.l.b16 %v8115
    %v8372 = vunpack.c.l.b16 %v8116
    %v8373 = vunpack.c.l.b16 %v8117
    %v8374 = vunpack.c.l.b16 %v8118
    %v8375 = vunpack.c.l.b16 %v8119
    %v8376 = vunpack.c.l.b16 %v8120
    %v8377 = vpack.c.b16 %v8250, %v8249
    %v8378 = vpack.c.b16 %v8252, %v8251
    %v8379 = vpack.c.b16 %v8254, %v8253
    %v8380 = vpack.c.b16 %v8256, %v8255
    %v8381 = vpack.c.b16 %v8258, %v8257
    %v8382 = vpack.c.b16 %v8260, %v8259
    %v8383 = vpack.c.b16 %v8262, %v8261
    %v8384 = vpack.c.b16 %v8264, %v8263
    %v8385 = vpack.c.b16 %v8266, %v8265
    %v8386 = vpack.c.b16 %v8268, %v8267
    %v8387 = vpack.c.b16 %v8270, %v8269
    %v8388 = vpack.c.b16 %v8272, %v8271
    %v8389 = vpack.c.b16 %v8274, %v8273
    %v8390 = vpack.c.b16 %v8276, %v8275
    %v8391 = vpack.c.b16 %v8278, %v8277
    %v8392 = vpack.c.b16 %v8280, %v8279
    %v8393 = vpack.c.b16 %v8282, %v8281
    %v8394 = vpack.c.b16 %v8284, %v8283
    %v8395 = vpack.c.b16 %v8286, %v8285
    %v8396 = vpack.c.b16 %v8288, %v8287
    %v8397 = vpack.c.b16 %v8290, %v8289
    %v8398 = vpack.c.b16 %v8292, %v8291
    %v8399 = vpack.c.b16 %v8294, %v8293
    %v8400 = vpack.c.b16 %v8296, %v8295
    %v8401 = vpack.c.b16 %v8298, %v8297
    %v8402 = vpack.c.b16 %v8300, %v8299
    %v8403 = vpack.c.b16 %v8302, %v8301
    %v8404 = vpack.c.b16 %v8304, %v8303
    %v8405 = vpack.c.b16 %v8306, %v8305
    %v8406 = vpack.c.b16 %v8308, %v8307
    %v8407 = vpack.c.b16 %v8310, %v8309
    %v8408 = vpack.c.b16 %v8312, %v8311
    %v8409 = vpack.c.b16 %v8314, %v8313
    %v8410 = vpack.c.b16 %v8316, %v8315
    %v8411 = vpack.c.b16 %v8318, %v8317
    %v8412 = vpack.c.b16 %v8320, %v8319
    %v8413 = vpack.c.b16 %v8322, %v8321
    %v8414 = vpack.c.b16 %v8324, %v8323
    %v8415 = vpack.c.b16 %v8326, %v8325
    %v8416 = vpack.c.b16 %v8328, %v8327
    %v8417 = vpack.c.b16 %v8330, %v8329
    %v8418 = vpack.c.b16 %v8332, %v8331
    %v8419 = vpack.c.b16 %v8334, %v8333
    %v8420 = vpack.c.b16 %v8336, %v8335
    %v8421 = vpack.c.b16 %v8338, %v8337
    %v8422 = vpack.c.b16 %v8340, %v8339
    %v8423 = vpack.c.b16 %v8342, %v8341
    %v8424 = vpack.c.b16 %v8344, %v8343
    %v8425 = vpack.c.b16 %v8346, %v8345
    %v8426 = vpack.c.b16 %v8348, %v8347
    %v8427 = vpack.c.b16 %v8350, %v8349
    %v8428 = vpack.c.b16 %v8352, %v8351
    %v8429 = vpack.c.b16 %v8354, %v8353
    %v8430 = vpack.c.b16 %v8356, %v8355
    %v8431 = vpack.c.b16 %v8358, %v8357
    %v8432 = vpack.c.b16 %v8360, %v8359
    %v8433 = vpack.c.b16 %v8362, %v8361
    %v8434 = vpack.c.b16 %v8364, %v8363
    %v8435 = vpack.c.b16 %v8366, %v8365
    %v8436 = vpack.c.b16 %v8368, %v8367
    %v8437 = vpack.c.b16 %v8370, %v8369
    %v8438 = vpack.c.b16 %v8372, %v8371
    %v8439 = vpack.c.b16 %v8374, %v8373
    %v8440 = vpack.c.b16 %v8376, %v8375
    %8505 = vmatpush.bf16.msra.mxu0 %v8384
    %8506 = vmatpush.bf16.msra.mxu0 %v8383
    %8507 = vmatpush.bf16.msra.mxu0 %v8382
    %8508 = vmatpush.bf16.msra.mxu0 %v8381
    %8509 = vmatpush.bf16.msra.mxu0 %v8380
    %8510 = vmatpush.bf16.msra.mxu0 %v8379
    %8511 = vmatpush.bf16.msra.mxu0 %v8378
    %8512 = vmatpush.bf16.msra.mxu0 %v8377
    %8513 = vmatmul.bf16.gmra.mxu0 %v7985
    %v8514 = vpop.f32.mrf.mxu0
    %v8515 = vadd.f32 0.0, %v8514
    %v8516 = vpop.f32.mrf.mxu0
    %8517 = vdwg.mxu0
    %8518 = vmatpush.bf16.msra.mxu0 %v8392
    %8519 = vmatpush.bf16.msra.mxu0 %v8391
    %8520 = vmatpush.bf16.msra.mxu0 %v8390
    %8521 = vmatpush.bf16.msra.mxu0 %v8389
    %8522 = vmatpush.bf16.msra.mxu0 %v8388
    %8523 = vmatpush.bf16.msra.mxu0 %v8387
    %8524 = vmatpush.bf16.msra.mxu0 %v8386
    %8525 = vmatpush.bf16.msra.mxu0 %v8385
    %8526 = vmatmul.bf16.gmra.mxu0 %v7986
    %v8527 = vpop.f32.mrf.mxu0
    %v8528 = vadd.f32 %v8515, %v8527
    %v8529 = vpop.f32.mrf.mxu0
    %8530 = vdwg.mxu0
    %8531 = vmatpush.bf16.msra.mxu0 %v8400
    %8532 = vmatpush.bf16.msra.mxu0 %v8399
    %8533 = vmatpush.bf16.msra.mxu0 %v8398
    %8534 = vmatpush.bf16.msra.mxu0 %v8397
    %8535 = vmatpush.bf16.msra.mxu0 %v8396
    %8536 = vmatpush.bf16.msra.mxu0 %v8395
    %8537 = vmatpush.bf16.msra.mxu0 %v8394
    %8538 = vmatpush.bf16.msra.mxu0 %v8393
    %8539 = vmatmul.bf16.gmra.mxu0 %v7987
    %v8540 = vpop.f32.mrf.mxu0
    %v8541 = vadd.f32 %v8528, %v8540
    %v8542 = vpop.f32.mrf.mxu0
    %8543 = vdwg.mxu0
    %8544 = vmatpush.bf16.msra.mxu0 %v8408
    %8545 = vmatpush.bf16.msra.mxu0 %v8407
    %8546 = vmatpush.bf16.msra.mxu0 %v8406
    %8547 = vmatpush.bf16.msra.mxu0 %v8405
    %8548 = vmatpush.bf16.msra.mxu0 %v8404
    %8549 = vmatpush.bf16.msra.mxu0 %v8403
    %8550 = vmatpush.bf16.msra.mxu0 %v8402
    %8551 = vmatpush.bf16.msra.mxu0 %v8401
    %8552 = vmatmul.bf16.gmra.mxu0 %v7988
    %v8553 = vpop.f32.mrf.mxu0
    %v8554 = vadd.f32 %v8541, %v8553
    %v8555 = vpop.f32.mrf.mxu0
    %8556 = vdwg.mxu0
    %8557 = vmatpush.bf16.msra.mxu0 %v8416
    %8558 = vmatpush.bf16.msra.mxu0 %v8415
    %8559 = vmatpush.bf16.msra.mxu0 %v8414
    %8560 = vmatpush.bf16.msra.mxu0 %v8413
    %8561 = vmatpush.bf16.msra.mxu0 %v8412
    %8562 = vmatpush.bf16.msra.mxu0 %v8411
    %8563 = vmatpush.bf16.msra.mxu0 %v8410
    %8564 = vmatpush.bf16.msra.mxu0 %v8409
    %8565 = vmatmul.bf16.gmra.mxu0 %v7989
    %v8566 = vpop.f32.mrf.mxu0
    %v8567 = vadd.f32 %v8554, %v8566
    %v8568 = vpop.f32.mrf.mxu0
    %8569 = vdwg.mxu0
    %8570 = vmatpush.bf16.msra.mxu0 %v8424
    %8571 = vmatpush.bf16.msra.mxu0 %v8423
    %8572 = vmatpush.bf16.msra.mxu0 %v8422
    %8573 = vmatpush.bf16.msra.mxu0 %v8421
    %8574 = vmatpush.bf16.msra.mxu0 %v8420
    %8575 = vmatpush.bf16.msra.mxu0 %v8419
    %8576 = vmatpush.bf16.msra.mxu0 %v8418
    %8577 = vmatpush.bf16.msra.mxu0 %v8417
    %8578 = vmatmul.bf16.gmra.mxu0 %v7990
    %v8579 = vpop.f32.mrf.mxu0
    %v8580 = vadd.f32 %v8567, %v8579
    %v8581 = vpop.f32.mrf.mxu0
    %8582 = vdwg.mxu0
    %8583 = vmatpush.bf16.msra.mxu0 %v8432
    %8584 = vmatpush.bf16.msra.mxu0 %v8431
    %8585 = vmatpush.bf16.msra.mxu0 %v8430
    %8586 = vmatpush.bf16.msra.mxu0 %v8429
    %8587 = vmatpush.bf16.msra.mxu0 %v8428
    %8588 = vmatpush.bf16.msra.mxu0 %v8427
    %8589 = vmatpush.bf16.msra.mxu0 %v8426
    %8590 = vmatpush.bf16.msra.mxu0 %v8425
    %8591 = vmatmul.bf16.gmra.mxu0 %v7991
    %v8592 = vpop.f32.mrf.mxu0
    %v8593 = vadd.f32 %v8580, %v8592
    %v8594 = vpop.f32.mrf.mxu0
    %8595 = vdwg.mxu0
    %8596 = vmatpush.bf16.msra.mxu0 %v8440
    %8597 = vmatpush.bf16.msra.mxu0 %v8439
    %8598 = vmatpush.bf16.msra.mxu0 %v8438
    %8599 = vmatpush.bf16.msra.mxu0 %v8437
    %8600 = vmatpush.bf16.msra.mxu0 %v8436
    %8601 = vmatpush.bf16.msra.mxu0 %v8435
    %8602 = vmatpush.bf16.msra.mxu0 %v8434
    %8603 = vmatpush.bf16.msra.mxu0 %v8433
    %8604 = vmatmul.bf16.gmra.mxu0 %v7992
    %v8605 = vpop.f32.mrf.mxu0
    %v8606 = vadd.f32 %v8593, %v8605
    %v8607 = vpop.f32.mrf.mxu0
    %8608 = vdwg.mxu0
    %v8609 = vadd.f32 %v7984, %v8606
    %8610 = vst [vmem:[#allocation10] sm:$0x3] %v8609
    // Predicated region
    $region42: #{inception_aux_forward.3} parent=1 // pred_check
      _
    $region43: #{inception_aux_forward.3} parent=1 // pred_check_branch
      %8612 = sbr.rel (0) target = $region45
    $region44: #{inception_aux_forward.3} parent=1 // pred_region
      %8614 = vsyncadd [#allocation4], 0
      %s8616 = sshll.u32 [#allocation10], 4
      %s8617 = int_to_ptr.vmem [resolvable:$true] %s8616
      %s8618 = sshll.u32 %s5, 4
      %s8619 = int_to_ptr.hbm [resolvable:$true] %s8618
      %8621 = dma.vmem_to_hbm [thread:$0]  %s8617, 32, %s8619, [#allocation4]
    $region45: #{inception_aux_forward.3} parent=1 // pred_fallthru
      _
    // Predicated region
    $region46: #{inception_aux_forward.3} parent=1 // pred_check
      _
    $region47: #{inception_aux_forward.3} parent=1 // pred_check_branch
      %8623 = sbr.rel (0) target = $region49
    $region48: #{inception_aux_forward.3} parent=1 // pred_region
      %8625 = dma.done [#allocation4], 32
    $region49: #{inception_aux_forward.3} parent=1 // pred_fallthru
      _
    %8626 = vsyncpa [#allocation3], 1
    %8627 = vsyncpa [#allocation6], 1
    %8628 = vsyncpa [#allocation9], 1
    %8629 = vsyncpa [#allocation4], 1

</llo_original>
